<compile_context>
chip_gen: v6e
topology: v6e:2x2x1
jax: 0.10.0
libtpu: 0.0.40
codegen_flags: <defaults>
</compile_context>

<pallas_src>
import functools

import jax
import jax.numpy as jnp
from jax import lax
from jax.experimental import pallas as pl
from jax.experimental.pallas import tpu as pltpu


def _round_up(n, m):
    return (n + m - 1) // m * m


# ----------------------------------------------------------------------------
# Tiled matmul (+bias, +optional ReLU): bf16 MXU inputs, f32 VMEM accumulator.
# ----------------------------------------------------------------------------
def _matmul_bias_kernel(x_ref, w_ref, b_ref, o_ref, acc_ref, *, relu):
    k = pl.program_id(2)

    @pl.when(k == 0)
    def _():
        acc_ref[...] = jnp.zeros_like(acc_ref)

    acc_ref[...] += jnp.dot(x_ref[...], w_ref[...],
                            preferred_element_type=jnp.float32)

    @pl.when(k == pl.num_programs(2) - 1)
    def _():
        out = acc_ref[...] + b_ref[...]          # f32 epilogue (v5e-friendly)
        if relu:
            out = jnp.maximum(out, 0.0)
        o_ref[...] = out.astype(o_ref.dtype)


def _fit_tile(dim, align, target):
    """Pick (tile, padded_dim): tile % align == 0, tile | padded_dim, tile <= target."""
    dp = _round_up(dim, align)
    if dp <= target:
        return dp, dp
    nblk = -(-dp // target)                      # ceil
    tile = _round_up(-(-dp // nblk), align)
    return tile, tile * nblk


def matmul_bias(x, w, b, relu=False):
    """(M,K) @ (K,N) + b[N] (+ ReLU) as a tiled, software-pipelined Pallas TPU kernel."""
    M, K = x.shape
    K2, N = w.shape
    assert K == K2
    # Tiles aligned to (8,128); 256x256 output tiles feed both the 4x128^2 (v5e) and
    # 2x256^2 (v6e/v7x) MXUs. Worst-case double-buffered footprint (bf16 inputs,
    # f32 acc) is < 5 MiB, well below the 32 MiB scoped-VMEM limit set below (v7x-safe).
    tm, Mp = _fit_tile(M, 8, 256)
    tn, Np = _fit_tile(N, 128, 256)
    tk, Kp = _fit_tile(K, 128, 2048)

    xp = jnp.pad(x.astype(jnp.bfloat16), ((0, Mp - M), (0, Kp - K)))
    wp = jnp.pad(w.astype(jnp.bfloat16), ((0, Kp - K), (0, Np - N)))
    bp = jnp.pad(b.astype(jnp.float32).reshape(1, N), ((0, 0), (0, Np - N)))

    out = pl.pallas_call(
        functools.partial(_matmul_bias_kernel, relu=relu),
        out_shape=jax.ShapeDtypeStruct((Mp, Np), jnp.float32),
        grid=(Mp // tm, Np // tn, Kp // tk),
        in_specs=[
            pl.BlockSpec((tm, tk), lambda i, j, k: (i, k)),
            pl.BlockSpec((tk, tn), lambda i, j, k: (k, j)),
            pl.BlockSpec((1, tn), lambda i, j, k: (0, j)),
        ],
        out_specs=pl.BlockSpec((tm, tn), lambda i, j, k: (i, j)),
        scratch_shapes=[pltpu.VMEM((tm, tn), jnp.float32)],
        compiler_params=pltpu.CompilerParams(
            dimension_semantics=("parallel", "parallel", "arbitrary"),
            vmem_limit_bytes=32 * 1024 * 1024),
    )(xp, wp, bp)
    if (Mp, Np) != (M, N):
        out = out[:M, :N]
    return out


# ----------------------------------------------------------------------------
# Fused bidirectional LSTM recurrence: one kernel, fori_loop over time,
# both directions per iteration, lane-aligned (128-padded) gate slabs.
# ----------------------------------------------------------------------------
def _bilstm_kernel(xg_ref, whhf_ref, whhb_ref, hf_out, hb_out,
                   hf, cf, hb, cb, *, Hp, T):
    hf[...] = jnp.zeros_like(hf)
    cf[...] = jnp.zeros_like(cf)
    hb[...] = jnp.zeros_like(hb)
    cb[...] = jnp.zeros_like(cb)
    G = 4 * Hp

    def cell(pre, c_prev):
        # PyTorch gate order: i, f, g, o ; each slab is Hp (=k*128) lanes wide.
        i = jax.nn.sigmoid(pre[:, 0 * Hp:1 * Hp])
        f = jax.nn.sigmoid(pre[:, 1 * Hp:2 * Hp])
        g = jnp.tanh(pre[:, 2 * Hp:3 * Hp])
        o = jax.nn.sigmoid(pre[:, 3 * Hp:4 * Hp])
        c = f * c_prev + i * g
        h = o * jnp.tanh(c)
        return h, c

    def step(t, carry):
        # forward direction, time t
        pre_f = xg_ref[t][:, :G] + jnp.dot(hf[...], whhf_ref[...],
                                           preferred_element_type=jnp.float32)
        h, c = cell(pre_f, cf[...])
        hf[...] = h
        cf[...] = c
        hf_out[t] = h
        # backward direction, time T-1-t (reversed indexing instead of array flips)
        tb = T - 1 - t
        pre_b = xg_ref[tb][:, G:] + jnp.dot(hb[...], whhb_ref[...],
                                            preferred_element_type=jnp.float32)
        h2, c2 = cell(pre_b, cb[...])
        hb[...] = h2
        cb[...] = c2
        hb_out[tb] = h2
        return carry

    lax.fori_loop(0, T, step, 0, unroll=T <= 8)


def _bilstm_recurrence(xg, whh_f, whh_b, Hp):
    """xg: (T, B, 8*Hp) = fused fwd|bwd input projections (time-major).
    Returns (h_fwd, h_bwd), each (T, B, Hp)."""
    T, B, _ = xg.shape
    out_shape = jax.ShapeDtypeStruct((T, B, Hp), jnp.float32)
    return pl.pallas_call(
        functools.partial(_bilstm_kernel, Hp=Hp, T=T),
        out_shape=(out_shape, out_shape),
        grid=(1,),
        in_specs=[pl.BlockSpec((T, B, 8 * Hp), lambda i: (0, 0, 0)),
                  pl.BlockSpec((Hp, 4 * Hp), lambda i: (0, 0)),
                  pl.BlockSpec((Hp, 4 * Hp), lambda i: (0, 0))],
        out_specs=(pl.BlockSpec((T, B, Hp), lambda i: (0, 0, 0)),
                   pl.BlockSpec((T, B, Hp), lambda i: (0, 0, 0))),
        scratch_shapes=[pltpu.VMEM((B, Hp), jnp.float32)] * 4,
        compiler_params=pltpu.CompilerParams(
            dimension_semantics=("arbitrary",)),
    )(xg, whh_f, whh_b)


# ----------------------------------------------------------------------------
# Layers (glue: NHWC im2col / pooling; all hot-path matmuls + recurrence in Pallas)
# ----------------------------------------------------------------------------
def conv2d(x, w, b, pad, relu):
    """x: (B, H, W, Cin) NHWC; w: (Cout, Cin, kh, kw) PyTorch layout; b: (Cout,)."""
    B, H, W, Cin = x.shape
    Cout, Cin2, kh, kw = w.shape
    assert Cin == Cin2
    if pad > 0:
        x = jnp.pad(x, ((0, 0), (pad, pad), (pad, pad), (0, 0)))
    Hp_, Wp_ = x.shape[1], x.shape[2]
    Ho, Wo = Hp_ - kh + 1, Wp_ - kw + 1
    # im2col ordered (kh, kw, Cin) on NHWC: no feature-map transpose, output stays
    # lane-dense (Cout on the lane axis).
    cols = [x[:, i:i + Ho, j:j + Wo, :] for i in range(kh) for j in range(kw)]
    patches = jnp.concatenate(cols, axis=-1).reshape(B * Ho * Wo, kh * kw * Cin)
    w2 = jnp.transpose(w, (2, 3, 1, 0)).reshape(kh * kw * Cin, Cout)
    out = matmul_bias(patches, w2, b, relu=relu)                 # Pallas hot path
    return out.reshape(B, Ho, Wo, Cout)


def maxpool(x, kh, kw):
    # stride == kernel and dims divide exactly in this extractor (NHWC)
    B, H, W, C = x.shape
    x = x.reshape(B, H // kh, kh, W // kw, kw, C)
    return x.max(axis=(2, 4))


def bidirectional_lstm(x_tm, p, H):
    """x_tm: (T, B, In) time-major -> (T, B, out).
    Matches nn.LSTM(bidirectional=True, batch_first) + Linear(2H -> out)."""
    T, B, In = x_tm.shape
    Hp = _round_up(H, 128)                     # lane-aligned gate/hidden slabs

    # --- pack params into fused, 128-padded layouts (pure relayout; folded by jit) ---
    w_ih_cat, b_cat, whh_p = [], [], []
    for d in ("fwd", "bwd"):
        w_ih, w_hh, b_ih, b_hh = p[d]
        wi = jnp.zeros((In, 4 * Hp), jnp.float32)
        bi = jnp.zeros((4 * Hp,), jnp.float32)
        wh = jnp.zeros((Hp, 4 * Hp), jnp.float32)
        for g in range(4):
            wi = wi.at[:, g * Hp:g * Hp + H].set(w_ih[g * H:(g + 1) * H, :].T)
            bi = bi.at[g * Hp:g * Hp + H].set(
                b_ih[g * H:(g + 1) * H] + b_hh[g * H:(g + 1) * H])
            wh = wh.at[:H, g * Hp:g * Hp + H].set(w_hh[g * H:(g + 1) * H, :].T)
        w_ih_cat.append(wi)
        b_cat.append(bi)
        whh_p.append(wh)
    w_ih_cat = jnp.concatenate(w_ih_cat, axis=1)      # (In, 8*Hp): fwd | bwd
    b_cat = jnp.concatenate(b_cat, axis=0)            # (8*Hp,)

    # --- one fused input-projection matmul for both directions, all time steps ---
    xg = matmul_bias(x_tm.reshape(T * B, In), w_ih_cat, b_cat, relu=False)
    xg = xg.reshape(T, B, 8 * Hp)

    # --- single-kernel recurrence, both directions ---
    h_f, h_b = _bilstm_recurrence(xg, whh_p[0], whh_p[1], Hp)

    # --- Linear(2H -> out): zero-padded weight consumes the padded hidden state ---
    w_lin, b_lin = p["linear"]
    out_sz = w_lin.shape[0]
    w_lin_p = jnp.zeros((2 * Hp, out_sz), jnp.float32)
    w_lin_p = w_lin_p.at[:H, :].set(w_lin[:, :H].T)
    w_lin_p = w_lin_p.at[Hp:Hp + H, :].set(w_lin[:, H:].T)
    rec = jnp.concatenate([h_f, h_b], axis=-1).reshape(T * B, 2 * Hp)
    out = matmul_bias(rec, w_lin_p, b_lin, relu=False)
    return out.reshape(T, B, out_sz)


def vgg_crnn_forward(x, params):
    # input arrives NCHW (PyTorch convention); convert once to NHWC (lane-dense channels)
    vf = jnp.transpose(x, (0, 2, 3, 1))
    for layer in params["convs"]:
        if layer[0] == "conv":
            _, w, b, pad, relu = layer
            vf = conv2d(vf, w, b, pad, relu)
        else:
            _, kh, kw = layer
            vf = maxpool(vf, kh, kw)
    B, Hh, Ww, C = vf.shape
    assert Hh == 1, "the height of conv must be 1"
    # AdaptiveAvgPool2d((None, 1)) on permute(0,3,1,2): mean over the size-1 height == squeeze
    seq = jnp.transpose(vf[:, 0, :, :], (1, 0, 2))    # (T=W, B, C) time-major
    Hd = params["hidden"]
    seq = bidirectional_lstm(seq, params["lstm1"], Hd)
    seq = bidirectional_lstm(seq, params["lstm2"], Hd)
    # Prediction (Softmax is defined in the module but never applied in forward -> logits)
    w, b = params["pred"]
    T, B2, Fh = seq.shape
    pred = matmul_bias(seq.reshape(T * B2, Fh), w.T, b, relu=False)
    return jnp.transpose(pred.reshape(T, B2, -1), (1, 0, 2))   # batch-first (B, T, num_class)


# ----------------------------------------------------------------------------
# Deterministic synthetic parameters (shapes from the module's __init__)
# ----------------------------------------------------------------------------
def init_params(key, in_ch, out_ch, hidden, num_class):
    oc = [out_ch // 8, out_ch // 4, out_ch // 2, out_ch]
    keys = iter(jax.random.split(key, 128))

    def nrm(shape, scale):
        return jax.random.normal(next(keys), shape, jnp.float32) * scale

    def conv(cin, cout, k, pad, bias=True, bn=False):
        fan_in = cin * k * k
        w = nrm((cout, cin, k, k), 1.0 / float(fan_in) ** 0.5)
        b = nrm((cout,), 0.1) if bias else jnp.zeros((cout,), jnp.float32)
        if bn:  # eval-mode BatchNorm folded into the conv
            gamma = 1.0 + 0.1 * jax.random.normal(next(keys), (cout,), jnp.float32)
            beta = 0.1 * jax.random.normal(next(keys), (cout,), jnp.float32)
            mean = 0.1 * jax.random.normal(next(keys), (cout,), jnp.float32)
            var = jnp.abs(1.0 + 0.1 * jax.random.normal(next(keys), (cout,), jnp.float32))
            scale = gamma / jnp.sqrt(var + 1e-5)
            w = w * scale[:, None, None, None]
            b = beta + (b - mean) * scale
        return ("conv", w, b, pad, True)  # every conv in this extractor is followed by ReLU

    convs = [
        conv(in_ch, oc[0], 3, 1), ("pool", 2, 2),
        conv(oc[0], oc[1], 3, 1), ("pool", 2, 2),
        conv(oc[1], oc[2], 3, 1),
        conv(oc[2], oc[2], 3, 1), ("pool", 2, 1),
        conv(oc[2], oc[3], 3, 1, bias=False, bn=True),
        conv(oc[3], oc[3], 3, 1, bias=False, bn=True), ("pool", 2, 1),
        conv(oc[3], oc[3], 2, 0),
    ]

    def lstm(in_size, H, out_size):
        s = 1.0 / float(H) ** 0.5
        p = {}
        for d in ("fwd", "bwd"):
            p[d] = (nrm((4 * H, in_size), s), nrm((4 * H, H), s),
                    nrm((4 * H,), s), nrm((4 * H,), s))
        p["linear"] = (nrm((out_size, 2 * H), 1.0 / float(2 * H) ** 0.5),
                       nrm((out_size,), 0.1))
        return p

    return {
        "convs": convs,
        "hidden": hidden,
        "lstm1": lstm(out_ch, hidden, hidden),
        "lstm2": lstm(hidden, hidden, hidden),
        "pred": (nrm((num_class, hidden), 1.0 / float(hidden) ** 0.5),
                 nrm((num_class,), 0.1)),
    }


if __name__ == "__main__":
    key = jax.random.PRNGKey(0)
    kp, kx = jax.random.split(key)

    # small shapes: height 32 is required so the conv stack ends with h == 1
    B, in_ch, Himg, Wimg = 2, 1, 32, 32
    out_ch, hidden, num_class = 64, 32, 10

    params = init_params(kp, in_ch, out_ch, hidden, num_class)
    x = jax.random.normal(kx, (B, in_ch, Himg, Wimg), jnp.float32)

    fwd = jax.jit(lambda inp: vgg_crnn_forward(inp, params))
    pred = jax.block_until_ready(fwd(x))

    # width: 32 -> 16 -> 8 -> 8 -> 8 -> 7 after final 2x2 valid conv  =>  T = 7
    assert pred.shape == (B, 7, num_class), pred.shape
    assert bool(jnp.all(jnp.isfinite(pred)))
    print("KERNEL_OK")
</pallas_src>

<mosaic_0001>
module attributes {stable_mosaic.version = 11 : i64} {
  func.func @_matmul_bias_kernel(%arg0: i32, %arg1: i32, %arg2: i32, %arg3: memref<256x128xbf16, #tpu.memory_space<vmem>>, %arg4: memref<128x128xbf16, #tpu.memory_space<vmem>>, %arg5: memref<1x128xf32, #tpu.memory_space<vmem>>, %arg6: memref<256x128xf32, #tpu.memory_space<vmem>>, %arg7: memref<256x128xf32, #tpu.memory_space<vmem>>) attributes {dimension_semantics = [#tpu.dimension_semantics<parallel>, #tpu.dimension_semantics<parallel>, #tpu.dimension_semantics<arbitrary>], iteration_bounds = array<i64: 8, 1, 1>, scalar_prefetch = 0 : i64, scratch_operands = 1 : i64, tpu.core_type = #tpu.core_type<tc>, window_params = [{transform_indices = @transform_0, window_bounds = array<i64: 256, 128>}, {transform_indices = @transform_1, window_bounds = array<i64: 128, 128>}, {transform_indices = @transform_2, window_bounds = array<i64: 1, 128>}, {transform_indices = @transform_3, window_bounds = array<i64: 256, 128>}]} {
    %c0_i32 = arith.constant 0 : i32
    %0 = arith.cmpi eq, %arg2, %c0_i32 : i32
    %1 = arith.extui %0 : i1 to i32
    %c0_i32_0 = arith.constant 0 : i32
    %2 = arith.cmpi ne, %1, %c0_i32_0 : i32
    scf.if %2 {
      %cst_10 = arith.constant 0.000000e+00 : f32
      %12 = vector.broadcast %cst_10 : f32 to vector<256x128xf32>
      %c0_11 = arith.constant 0 : index
      %c0_12 = arith.constant 0 : index
      %13 = vector.load %arg7[%c0_11, %c0_12] : memref<256x128xf32, #tpu.memory_space<vmem>>, vector<256x128xf32>
      tpu.vector_store %arg7[%c0_11, %c0_12], %12 {strides = array<i32>} : memref<256x128xf32, #tpu.memory_space<vmem>>, vector<256x128xf32>,
    } else {
    }
    %c0 = arith.constant 0 : index
    %c0_1 = arith.constant 0 : index
    %3 = vector.load %arg7[%c0, %c0_1] : memref<256x128xf32, #tpu.memory_space<vmem>>, vector<256x128xf32>
    %c0_2 = arith.constant 0 : index
    %c0_3 = arith.constant 0 : index
    %4 = vector.load %arg3[%c0_2, %c0_3] : memref<256x128xbf16, #tpu.memory_space<vmem>>, vector<256x128xbf16>
    %c0_4 = arith.constant 0 : index
    %c0_5 = arith.constant 0 : index
    %5 = vector.load %arg4[%c0_4, %c0_5] : memref<128x128xbf16, #tpu.memory_space<vmem>>, vector<128x128xbf16>
    %cst = arith.constant dense<0.000000e+00> : vector<256x128xf32>
    %6 = tpu.matmul %4, %5, %cst {dimension_numbers = #tpu.dot_dimension_numbers<[1], [0], [0], [1], [0, 0, 1, 1], [], []>} : vector<256x128xbf16>, vector<128x128xbf16>, vector<256x128xf32> -> vector<256x128xf32>
    %7 = arith.addf %3, %6 : vector<256x128xf32>
    %c0_6 = arith.constant 0 : index
    %c0_7 = arith.constant 0 : index
    %8 = vector.load %arg7[%c0_6, %c0_7] : memref<256x128xf32, #tpu.memory_space<vmem>>, vector<256x128xf32>
    tpu.vector_store %arg7[%c0_6, %c0_7], %7 {strides = array<i32>} : memref<256x128xf32, #tpu.memory_space<vmem>>, vector<256x128xf32>,
    %c0_i32_8 = arith.constant 0 : i32
    %9 = arith.cmpi eq, %arg2, %c0_i32_8 : i32
    %10 = arith.extui %9 : i1 to i32
    %c0_i32_9 = arith.constant 0 : i32
    %11 = arith.cmpi ne, %10, %c0_i32_9 : i32
    scf.if %11 {
      %c0_10 = arith.constant 0 : index
      %c0_11 = arith.constant 0 : index
      %12 = vector.load %arg7[%c0_10, %c0_11] : memref<256x128xf32, #tpu.memory_space<vmem>>, vector<256x128xf32>
      %c0_12 = arith.constant 0 : index
      %c0_13 = arith.constant 0 : index
      %13 = vector.load %arg5[%c0_12, %c0_13] : memref<1x128xf32, #tpu.memory_space<vmem>>, vector<1x128xf32>
      %14 = vector.broadcast %13 : vector<1x128xf32> to vector<256x128xf32>
      %15 = arith.addf %12, %14 : vector<256x128xf32>
      %cst_14 = arith.constant 0.000000e+00 : f32
      %16 = vector.broadcast %cst_14 : f32 to vector<256x128xf32>
      %17 = arith.maximumf %15, %16 : vector<256x128xf32>
      %c0_15 = arith.constant 0 : index
      %c0_16 = arith.constant 0 : index
      %18 = vector.load %arg6[%c0_15, %c0_16] : memref<256x128xf32, #tpu.memory_space<vmem>>, vector<256x128xf32>
      tpu.vector_store %arg6[%c0_15, %c0_16], %17 {strides = array<i32>} : memref<256x128xf32, #tpu.memory_space<vmem>>, vector<256x128xf32>,
    } else {
    }
    return
  }
  func.func @transform_0(%arg0: i32, %arg1: i32, %arg2: i32) -> (i32, i32) {
    %c0_i32 = arith.constant 0 : i32
    return %arg0, %arg2 : i32, i32
  }
  func.func @transform_1(%arg0: i32, %arg1: i32, %arg2: i32) -> (i32, i32) {
    %c0_i32 = arith.constant 0 : i32
    return %arg2, %arg1 : i32, i32
  }
  func.func @transform_2(%arg0: i32, %arg1: i32, %arg2: i32) -> (i32, i32) {
    %c0_i32 = arith.constant 0 : i32
    %c0_i32_0 = arith.constant 0 : i32
    return %c0_i32, %arg1 : i32, i32
  }
  func.func @transform_3(%arg0: i32, %arg1: i32, %arg2: i32) -> (i32, i32) {
    %c0_i32 = arith.constant 0 : i32
    return %arg0, %arg1 : i32, i32
  }
}

module attributes {stable_mosaic.version = 11 : i64} {
  func.func @_matmul_bias_kernel(%arg0: i32, %arg1: i32, %arg2: i32, %arg3: memref<256x128xbf16, #tpu.memory_space<vmem>>, %arg4: memref<128x128xbf16, #tpu.memory_space<vmem>>, %arg5: memref<1x128xf32, #tpu.memory_space<vmem>>, %arg6: memref<256x128xf32, #tpu.memory_space<vmem>>, %arg7: memref<256x128xf32, #tpu.memory_space<vmem>>) attributes {dimension_semantics = [#tpu.dimension_semantics<parallel>, #tpu.dimension_semantics<parallel>, #tpu.dimension_semantics<arbitrary>], iteration_bounds = array<i64: 2, 1, 1>, scalar_prefetch = 0 : i64, scratch_operands = 1 : i64, tpu.core_type = #tpu.core_type<tc>, window_params = [{transform_indices = @transform_0, window_bounds = array<i64: 256, 128>}, {transform_indices = @transform_1, window_bounds = array<i64: 128, 128>}, {transform_indices = @transform_2, window_bounds = array<i64: 1, 128>}, {transform_indices = @transform_3, window_bounds = array<i64: 256, 128>}]} {
    %c0_i32 = arith.constant 0 : i32
    %0 = arith.cmpi eq, %arg2, %c0_i32 : i32
    %1 = arith.extui %0 : i1 to i32
    %c0_i32_0 = arith.constant 0 : i32
    %2 = arith.cmpi ne, %1, %c0_i32_0 : i32
    scf.if %2 {
      %cst_10 = arith.constant 0.000000e+00 : f32
      %12 = vector.broadcast %cst_10 : f32 to vector<256x128xf32>
      %c0_11 = arith.constant 0 : index
      %c0_12 = arith.constant 0 : index
      %13 = vector.load %arg7[%c0_11, %c0_12] : memref<256x128xf32, #tpu.memory_space<vmem>>, vector<256x128xf32>
      tpu.vector_store %arg7[%c0_11, %c0_12], %12 {strides = array<i32>} : memref<256x128xf32, #tpu.memory_space<vmem>>, vector<256x128xf32>,
    } else {
    }
    %c0 = arith.constant 0 : index
    %c0_1 = arith.constant 0 : index
    %3 = vector.load %arg7[%c0, %c0_1] : memref<256x128xf32, #tpu.memory_space<vmem>>, vector<256x128xf32>
    %c0_2 = arith.constant 0 : index
    %c0_3 = arith.constant 0 : index
    %4 = vector.load %arg3[%c0_2, %c0_3] : memref<256x128xbf16, #tpu.memory_space<vmem>>, vector<256x128xbf16>
    %c0_4 = arith.constant 0 : index
    %c0_5 = arith.constant 0 : index
    %5 = vector.load %arg4[%c0_4, %c0_5] : memref<128x128xbf16, #tpu.memory_space<vmem>>, vector<128x128xbf16>
    %cst = arith.constant dense<0.000000e+00> : vector<256x128xf32>
    %6 = tpu.matmul %4, %5, %cst {dimension_numbers = #tpu.dot_dimension_numbers<[1], [0], [0], [1], [0, 0, 1, 1], [], []>} : vector<256x128xbf16>, vector<128x128xbf16>, vector<256x128xf32> -> vector<256x128xf32>
    %7 = arith.addf %3, %6 : vector<256x128xf32>
    %c0_6 = arith.constant 0 : index
    %c0_7 = arith.constant 0 : index
    %8 = vector.load %arg7[%c0_6, %c0_7] : memref<256x128xf32, #tpu.memory_space<vmem>>, vector<256x128xf32>
    tpu.vector_store %arg7[%c0_6, %c0_7], %7 {strides = array<i32>} : memref<256x128xf32, #tpu.memory_space<vmem>>, vector<256x128xf32>,
    %c0_i32_8 = arith.constant 0 : i32
    %9 = arith.cmpi eq, %arg2, %c0_i32_8 : i32
    %10 = arith.extui %9 : i1 to i32
    %c0_i32_9 = arith.constant 0 : i32
    %11 = arith.cmpi ne, %10, %c0_i32_9 : i32
    scf.if %11 {
      %c0_10 = arith.constant 0 : index
      %c0_11 = arith.constant 0 : index
      %12 = vector.load %arg7[%c0_10, %c0_11] : memref<256x128xf32, #tpu.memory_space<vmem>>, vector<256x128xf32>
      %c0_12 = arith.constant 0 : index
      %c0_13 = arith.constant 0 : index
      %13 = vector.load %arg5[%c0_12, %c0_13] : memref<1x128xf32, #tpu.memory_space<vmem>>, vector<1x128xf32>
      %14 = vector.broadcast %13 : vector<1x128xf32> to vector<256x128xf32>
      %15 = arith.addf %12, %14 : vector<256x128xf32>
      %cst_14 = arith.constant 0.000000e+00 : f32
      %16 = vector.broadcast %cst_14 : f32 to vector<256x128xf32>
      %17 = arith.maximumf %15, %16 : vector<256x128xf32>
      %c0_15 = arith.constant 0 : index
      %c0_16 = arith.constant 0 : index
      %18 = vector.load %arg6[%c0_15, %c0_16] : memref<256x128xf32, #tpu.memory_space<vmem>>, vector<256x128xf32>
      tpu.vector_store %arg6[%c0_15, %c0_16], %17 {strides = array<i32>} : memref<256x128xf32, #tpu.memory_space<vmem>>, vector<256x128xf32>,
    } else {
    }
    return
  }
  func.func @transform_0(%arg0: i32, %arg1: i32, %arg2: i32) -> (i32, i32) {
    %c0_i32 = arith.constant 0 : i32
    return %arg0, %arg2 : i32, i32
  }
  func.func @transform_1(%arg0: i32, %arg1: i32, %arg2: i32) -> (i32, i32) {
    %c0_i32 = arith.constant 0 : i32
    return %arg2, %arg1 : i32, i32
  }
  func.func @transform_2(%arg0: i32, %arg1: i32, %arg2: i32) -> (i32, i32) {
    %c0_i32 = arith.constant 0 : i32
    %c0_i32_0 = arith.constant 0 : i32
    return %c0_i32, %arg1 : i32, i32
  }
  func.func @transform_3(%arg0: i32, %arg1: i32, %arg2: i32) -> (i32, i32) {
    %c0_i32 = arith.constant 0 : i32
    return %arg0, %arg1 : i32, i32
  }
}

module attributes {stable_mosaic.version = 11 : i64} {
  func.func @_matmul_bias_kernel(%arg0: i32, %arg1: i32, %arg2: i32, %arg3: memref<128x256xbf16, #tpu.memory_space<vmem>>, %arg4: memref<256x128xbf16, #tpu.memory_space<vmem>>, %arg5: memref<1x128xf32, #tpu.memory_space<vmem>>, %arg6: memref<128x128xf32, #tpu.memory_space<vmem>>, %arg7: memref<128x128xf32, #tpu.memory_space<vmem>>) attributes {dimension_semantics = [#tpu.dimension_semantics<parallel>, #tpu.dimension_semantics<parallel>, #tpu.dimension_semantics<arbitrary>], iteration_bounds = array<i64: 1, 1, 1>, scalar_prefetch = 0 : i64, scratch_operands = 1 : i64, tpu.core_type = #tpu.core_type<tc>, window_params = [{transform_indices = @transform_0, window_bounds = array<i64: 128, 256>}, {transform_indices = @transform_1, window_bounds = array<i64: 256, 128>}, {transform_indices = @transform_2, window_bounds = array<i64: 1, 128>}, {transform_indices = @transform_3, window_bounds = array<i64: 128, 128>}]} {
    %c0_i32 = arith.constant 0 : i32
    %0 = arith.cmpi eq, %arg2, %c0_i32 : i32
    %1 = arith.extui %0 : i1 to i32
    %c0_i32_0 = arith.constant 0 : i32
    %2 = arith.cmpi ne, %1, %c0_i32_0 : i32
    scf.if %2 {
      %cst_10 = arith.constant 0.000000e+00 : f32
      %12 = vector.broadcast %cst_10 : f32 to vector<128x128xf32>
      %c0_11 = arith.constant 0 : index
      %c0_12 = arith.constant 0 : index
      %13 = vector.load %arg7[%c0_11, %c0_12] : memref<128x128xf32, #tpu.memory_space<vmem>>, vector<128x128xf32>
      tpu.vector_store %arg7[%c0_11, %c0_12], %12 {strides = array<i32>} : memref<128x128xf32, #tpu.memory_space<vmem>>, vector<128x128xf32>,
    } else {
    }
    %c0 = arith.constant 0 : index
    %c0_1 = arith.constant 0 : index
    %3 = vector.load %arg7[%c0, %c0_1] : memref<128x128xf32, #tpu.memory_space<vmem>>, vector<128x128xf32>
    %c0_2 = arith.constant 0 : index
    %c0_3 = arith.constant 0 : index
    %4 = vector.load %arg3[%c0_2, %c0_3] : memref<128x256xbf16, #tpu.memory_space<vmem>>, vector<128x256xbf16>
    %c0_4 = arith.constant 0 : index
    %c0_5 = arith.constant 0 : index
    %5 = vector.load %arg4[%c0_4, %c0_5] : memref<256x128xbf16, #tpu.memory_space<vmem>>, vector<256x128xbf16>
    %cst = arith.constant dense<0.000000e+00> : vector<128x128xf32>
    %6 = tpu.matmul %4, %5, %cst {dimension_numbers = #tpu.dot_dimension_numbers<[1], [0], [0], [1], [0, 0, 1, 1], [], []>} : vector<128x256xbf16>, vector<256x128xbf16>, vector<128x128xf32> -> vector<128x128xf32>
    %7 = arith.addf %3, %6 : vector<128x128xf32>
    %c0_6 = arith.constant 0 : index
    %c0_7 = arith.constant 0 : index
    %8 = vector.load %arg7[%c0_6, %c0_7] : memref<128x128xf32, #tpu.memory_space<vmem>>, vector<128x128xf32>
    tpu.vector_store %arg7[%c0_6, %c0_7], %7 {strides = array<i32>} : memref<128x128xf32, #tpu.memory_space<vmem>>, vector<128x128xf32>,
    %c0_i32_8 = arith.constant 0 : i32
    %9 = arith.cmpi eq, %arg2, %c0_i32_8 : i32
    %10 = arith.extui %9 : i1 to i32
    %c0_i32_9 = arith.constant 0 : i32
    %11 = arith.cmpi ne, %10, %c0_i32_9 : i32
    scf.if %11 {
      %c0_10 = arith.constant 0 : index
      %c0_11 = arith.constant 0 : index
      %12 = vector.load %arg7[%c0_10, %c0_11] : memref<128x128xf32, #tpu.memory_space<vmem>>, vector<128x128xf32>
      %c0_12 = arith.constant 0 : index
      %c0_13 = arith.constant 0 : index
      %13 = vector.load %arg5[%c0_12, %c0_13] : memref<1x128xf32, #tpu.memory_space<vmem>>, vector<1x128xf32>
      %14 = vector.broadcast %13 : vector<1x128xf32> to vector<128x128xf32>
      %15 = arith.addf %12, %14 : vector<128x128xf32>
      %cst_14 = arith.constant 0.000000e+00 : f32
      %16 = vector.broadcast %cst_14 : f32 to vector<128x128xf32>
      %17 = arith.maximumf %15, %16 : vector<128x128xf32>
      %c0_15 = arith.constant 0 : index
      %c0_16 = arith.constant 0 : index
      %18 = vector.load %arg6[%c0_15, %c0_16] : memref<128x128xf32, #tpu.memory_space<vmem>>, vector<128x128xf32>
      tpu.vector_store %arg6[%c0_15, %c0_16], %17 {strides = array<i32>} : memref<128x128xf32, #tpu.memory_space<vmem>>, vector<128x128xf32>,
    } else {
    }
    return
  }
  func.func @transform_0(%arg0: i32, %arg1: i32, %arg2: i32) -> (i32, i32) {
    %c0_i32 = arith.constant 0 : i32
    return %arg0, %arg2 : i32, i32
  }
  func.func @transform_1(%arg0: i32, %arg1: i32, %arg2: i32) -> (i32, i32) {
    %c0_i32 = arith.constant 0 : i32
    return %arg2, %arg1 : i32, i32
  }
  func.func @transform_2(%arg0: i32, %arg1: i32, %arg2: i32) -> (i32, i32) {
    %c0_i32 = arith.constant 0 : i32
    %c0_i32_0 = arith.constant 0 : i32
    return %c0_i32, %arg1 : i32, i32
  }
  func.func @transform_3(%arg0: i32, %arg1: i32, %arg2: i32) -> (i32, i32) {
    %c0_i32 = arith.constant 0 : i32
    return %arg0, %arg1 : i32, i32
  }
}

module attributes {stable_mosaic.version = 11 : i64} {
  func.func @_matmul_bias_kernel(%arg0: i32, %arg1: i32, %arg2: i32, %arg3: memref<128x384xbf16, #tpu.memory_space<vmem>>, %arg4: memref<384x128xbf16, #tpu.memory_space<vmem>>, %arg5: memref<1x128xf32, #tpu.memory_space<vmem>>, %arg6: memref<128x128xf32, #tpu.memory_space<vmem>>, %arg7: memref<128x128xf32, #tpu.memory_space<vmem>>) attributes {dimension_semantics = [#tpu.dimension_semantics<parallel>, #tpu.dimension_semantics<parallel>, #tpu.dimension_semantics<arbitrary>], iteration_bounds = array<i64: 1, 1, 1>, scalar_prefetch = 0 : i64, scratch_operands = 1 : i64, tpu.core_type = #tpu.core_type<tc>, window_params = [{transform_indices = @transform_0, window_bounds = array<i64: 128, 384>}, {transform_indices = @transform_1, window_bounds = array<i64: 384, 128>}, {transform_indices = @transform_2, window_bounds = array<i64: 1, 128>}, {transform_indices = @transform_3, window_bounds = array<i64: 128, 128>}]} {
    %c0_i32 = arith.constant 0 : i32
    %0 = arith.cmpi eq, %arg2, %c0_i32 : i32
    %1 = arith.extui %0 : i1 to i32
    %c0_i32_0 = arith.constant 0 : i32
    %2 = arith.cmpi ne, %1, %c0_i32_0 : i32
    scf.if %2 {
      %cst_10 = arith.constant 0.000000e+00 : f32
      %12 = vector.broadcast %cst_10 : f32 to vector<128x128xf32>
      %c0_11 = arith.constant 0 : index
      %c0_12 = arith.constant 0 : index
      %13 = vector.load %arg7[%c0_11, %c0_12] : memref<128x128xf32, #tpu.memory_space<vmem>>, vector<128x128xf32>
      tpu.vector_store %arg7[%c0_11, %c0_12], %12 {strides = array<i32>} : memref<128x128xf32, #tpu.memory_space<vmem>>, vector<128x128xf32>,
    } else {
    }
    %c0 = arith.constant 0 : index
    %c0_1 = arith.constant 0 : index
    %3 = vector.load %arg7[%c0, %c0_1] : memref<128x128xf32, #tpu.memory_space<vmem>>, vector<128x128xf32>
    %c0_2 = arith.constant 0 : index
    %c0_3 = arith.constant 0 : index
    %4 = vector.load %arg3[%c0_2, %c0_3] : memref<128x384xbf16, #tpu.memory_space<vmem>>, vector<128x384xbf16>
    %c0_4 = arith.constant 0 : index
    %c0_5 = arith.constant 0 : index
    %5 = vector.load %arg4[%c0_4, %c0_5] : memref<384x128xbf16, #tpu.memory_space<vmem>>, vector<384x128xbf16>
    %cst = arith.constant dense<0.000000e+00> : vector<128x128xf32>
    %6 = tpu.matmul %4, %5, %cst {dimension_numbers = #tpu.dot_dimension_numbers<[1], [0], [0], [1], [0, 0, 1, 1], [], []>} : vector<128x384xbf16>, vector<384x128xbf16>, vector<128x128xf32> -> vector<128x128xf32>
    %7 = arith.addf %3, %6 : vector<128x128xf32>
    %c0_6 = arith.constant 0 : index
    %c0_7 = arith.constant 0 : index
    %8 = vector.load %arg7[%c0_6, %c0_7] : memref<128x128xf32, #tpu.memory_space<vmem>>, vector<128x128xf32>
    tpu.vector_store %arg7[%c0_6, %c0_7], %7 {strides = array<i32>} : memref<128x128xf32, #tpu.memory_space<vmem>>, vector<128x128xf32>,
    %c0_i32_8 = arith.constant 0 : i32
    %9 = arith.cmpi eq, %arg2, %c0_i32_8 : i32
    %10 = arith.extui %9 : i1 to i32
    %c0_i32_9 = arith.constant 0 : i32
    %11 = arith.cmpi ne, %10, %c0_i32_9 : i32
    scf.if %11 {
      %c0_10 = arith.constant 0 : index
      %c0_11 = arith.constant 0 : index
      %12 = vector.load %arg7[%c0_10, %c0_11] : memref<128x128xf32, #tpu.memory_space<vmem>>, vector<128x128xf32>
      %c0_12 = arith.constant 0 : index
      %c0_13 = arith.constant 0 : index
      %13 = vector.load %arg5[%c0_12, %c0_13] : memref<1x128xf32, #tpu.memory_space<vmem>>, vector<1x128xf32>
      %14 = vector.broadcast %13 : vector<1x128xf32> to vector<128x128xf32>
      %15 = arith.addf %12, %14 : vector<128x128xf32>
      %cst_14 = arith.constant 0.000000e+00 : f32
      %16 = vector.broadcast %cst_14 : f32 to vector<128x128xf32>
      %17 = arith.maximumf %15, %16 : vector<128x128xf32>
      %c0_15 = arith.constant 0 : index
      %c0_16 = arith.constant 0 : index
      %18 = vector.load %arg6[%c0_15, %c0_16] : memref<128x128xf32, #tpu.memory_space<vmem>>, vector<128x128xf32>
      tpu.vector_store %arg6[%c0_15, %c0_16], %17 {strides = array<i32>} : memref<128x128xf32, #tpu.memory_space<vmem>>, vector<128x128xf32>,
    } else {
    }
    return
  }
  func.func @transform_0(%arg0: i32, %arg1: i32, %arg2: i32) -> (i32, i32) {
    %c0_i32 = arith.constant 0 : i32
    return %arg0, %arg2 : i32, i32
  }
  func.func @transform_1(%arg0: i32, %arg1: i32, %arg2: i32) -> (i32, i32) {
    %c0_i32 = arith.constant 0 : i32
    return %arg2, %arg1 : i32, i32
  }
  func.func @transform_2(%arg0: i32, %arg1: i32, %arg2: i32) -> (i32, i32) {
    %c0_i32 = arith.constant 0 : i32
    %c0_i32_0 = arith.constant 0 : i32
    return %c0_i32, %arg1 : i32, i32
  }
  func.func @transform_3(%arg0: i32, %arg1: i32, %arg2: i32) -> (i32, i32) {
    %c0_i32 = arith.constant 0 : i32
    return %arg0, %arg1 : i32, i32
  }
}

module attributes {stable_mosaic.version = 11 : i64} {
  func.func @_matmul_bias_kernel(%arg0: i32, %arg1: i32, %arg2: i32, %arg3: memref<64x384xbf16, #tpu.memory_space<vmem>>, %arg4: memref<384x128xbf16, #tpu.memory_space<vmem>>, %arg5: memref<1x128xf32, #tpu.memory_space<vmem>>, %arg6: memref<64x128xf32, #tpu.memory_space<vmem>>, %arg7: memref<64x128xf32, #tpu.memory_space<vmem>>) attributes {dimension_semantics = [#tpu.dimension_semantics<parallel>, #tpu.dimension_semantics<parallel>, #tpu.dimension_semantics<arbitrary>], iteration_bounds = array<i64: 1, 1, 1>, scalar_prefetch = 0 : i64, scratch_operands = 1 : i64, tpu.core_type = #tpu.core_type<tc>, window_params = [{transform_indices = @transform_0, window_bounds = array<i64: 64, 384>}, {transform_indices = @transform_1, window_bounds = array<i64: 384, 128>}, {transform_indices = @transform_2, window_bounds = array<i64: 1, 128>}, {transform_indices = @transform_3, window_bounds = array<i64: 64, 128>}]} {
    %c0_i32 = arith.constant 0 : i32
    %0 = arith.cmpi eq, %arg2, %c0_i32 : i32
    %1 = arith.extui %0 : i1 to i32
    %c0_i32_0 = arith.constant 0 : i32
    %2 = arith.cmpi ne, %1, %c0_i32_0 : i32
    scf.if %2 {
      %cst_10 = arith.constant 0.000000e+00 : f32
      %12 = vector.broadcast %cst_10 : f32 to vector<64x128xf32>
      %c0_11 = arith.constant 0 : index
      %c0_12 = arith.constant 0 : index
      %13 = vector.load %arg7[%c0_11, %c0_12] : memref<64x128xf32, #tpu.memory_space<vmem>>, vector<64x128xf32>
      tpu.vector_store %arg7[%c0_11, %c0_12], %12 {strides = array<i32>} : memref<64x128xf32, #tpu.memory_space<vmem>>, vector<64x128xf32>,
    } else {
    }
    %c0 = arith.constant 0 : index
    %c0_1 = arith.constant 0 : index
    %3 = vector.load %arg7[%c0, %c0_1] : memref<64x128xf32, #tpu.memory_space<vmem>>, vector<64x128xf32>
    %c0_2 = arith.constant 0 : index
    %c0_3 = arith.constant 0 : index
    %4 = vector.load %arg3[%c0_2, %c0_3] : memref<64x384xbf16, #tpu.memory_space<vmem>>, vector<64x384xbf16>
    %c0_4 = arith.constant 0 : index
    %c0_5 = arith.constant 0 : index
    %5 = vector.load %arg4[%c0_4, %c0_5] : memref<384x128xbf16, #tpu.memory_space<vmem>>, vector<384x128xbf16>
    %cst = arith.constant dense<0.000000e+00> : vector<64x128xf32>
    %6 = tpu.matmul %4, %5, %cst {dimension_numbers = #tpu.dot_dimension_numbers<[1], [0], [0], [1], [0, 0, 1, 1], [], []>} : vector<64x384xbf16>, vector<384x128xbf16>, vector<64x128xf32> -> vector<64x128xf32>
    %7 = arith.addf %3, %6 : vector<64x128xf32>
    %c0_6 = arith.constant 0 : index
    %c0_7 = arith.constant 0 : index
    %8 = vector.load %arg7[%c0_6, %c0_7] : memref<64x128xf32, #tpu.memory_space<vmem>>, vector<64x128xf32>
    tpu.vector_store %arg7[%c0_6, %c0_7], %7 {strides = array<i32>} : memref<64x128xf32, #tpu.memory_space<vmem>>, vector<64x128xf32>,
    %c0_i32_8 = arith.constant 0 : i32
    %9 = arith.cmpi eq, %arg2, %c0_i32_8 : i32
    %10 = arith.extui %9 : i1 to i32
    %c0_i32_9 = arith.constant 0 : i32
    %11 = arith.cmpi ne, %10, %c0_i32_9 : i32
    scf.if %11 {
      %c0_10 = arith.constant 0 : index
      %c0_11 = arith.constant 0 : index
      %12 = vector.load %arg7[%c0_10, %c0_11] : memref<64x128xf32, #tpu.memory_space<vmem>>, vector<64x128xf32>
      %c0_12 = arith.constant 0 : index
      %c0_13 = arith.constant 0 : index
      %13 = vector.load %arg5[%c0_12, %c0_13] : memref<1x128xf32, #tpu.memory_space<vmem>>, vector<1x128xf32>
      %14 = vector.broadcast %13 : vector<1x128xf32> to vector<64x128xf32>
      %15 = arith.addf %12, %14 : vector<64x128xf32>
      %cst_14 = arith.constant 0.000000e+00 : f32
      %16 = vector.broadcast %cst_14 : f32 to vector<64x128xf32>
      %17 = arith.maximumf %15, %16 : vector<64x128xf32>
      %c0_15 = arith.constant 0 : index
      %c0_16 = arith.constant 0 : index
      %18 = vector.load %arg6[%c0_15, %c0_16] : memref<64x128xf32, #tpu.memory_space<vmem>>, vector<64x128xf32>
      tpu.vector_store %arg6[%c0_15, %c0_16], %17 {strides = array<i32>} : memref<64x128xf32, #tpu.memory_space<vmem>>, vector<64x128xf32>,
    } else {
    }
    return
  }
  func.func @transform_0(%arg0: i32, %arg1: i32, %arg2: i32) -> (i32, i32) {
    %c0_i32 = arith.constant 0 : i32
    return %arg0, %arg2 : i32, i32
  }
  func.func @transform_1(%arg0: i32, %arg1: i32, %arg2: i32) -> (i32, i32) {
    %c0_i32 = arith.constant 0 : i32
    return %arg2, %arg1 : i32, i32
  }
  func.func @transform_2(%arg0: i32, %arg1: i32, %arg2: i32) -> (i32, i32) {
    %c0_i32 = arith.constant 0 : i32
    %c0_i32_0 = arith.constant 0 : i32
    return %c0_i32, %arg1 : i32, i32
  }
  func.func @transform_3(%arg0: i32, %arg1: i32, %arg2: i32) -> (i32, i32) {
    %c0_i32 = arith.constant 0 : i32
    return %arg0, %arg1 : i32, i32
  }
}

module attributes {stable_mosaic.version = 11 : i64} {
  func.func @_matmul_bias_kernel(%arg0: i32, %arg1: i32, %arg2: i32, %arg3: memref<64x640xbf16, #tpu.memory_space<vmem>>, %arg4: memref<640x128xbf16, #tpu.memory_space<vmem>>, %arg5: memref<1x128xf32, #tpu.memory_space<vmem>>, %arg6: memref<64x128xf32, #tpu.memory_space<vmem>>, %arg7: memref<64x128xf32, #tpu.memory_space<vmem>>) attributes {dimension_semantics = [#tpu.dimension_semantics<parallel>, #tpu.dimension_semantics<parallel>, #tpu.dimension_semantics<arbitrary>], iteration_bounds = array<i64: 1, 1, 1>, scalar_prefetch = 0 : i64, scratch_operands = 1 : i64, tpu.core_type = #tpu.core_type<tc>, window_params = [{transform_indices = @transform_0, window_bounds = array<i64: 64, 640>}, {transform_indices = @transform_1, window_bounds = array<i64: 640, 128>}, {transform_indices = @transform_2, window_bounds = array<i64: 1, 128>}, {transform_indices = @transform_3, window_bounds = array<i64: 64, 128>}]} {
    %c0_i32 = arith.constant 0 : i32
    %0 = arith.cmpi eq, %arg2, %c0_i32 : i32
    %1 = arith.extui %0 : i1 to i32
    %c0_i32_0 = arith.constant 0 : i32
    %2 = arith.cmpi ne, %1, %c0_i32_0 : i32
    scf.if %2 {
      %cst_10 = arith.constant 0.000000e+00 : f32
      %12 = vector.broadcast %cst_10 : f32 to vector<64x128xf32>
      %c0_11 = arith.constant 0 : index
      %c0_12 = arith.constant 0 : index
      %13 = vector.load %arg7[%c0_11, %c0_12] : memref<64x128xf32, #tpu.memory_space<vmem>>, vector<64x128xf32>
      tpu.vector_store %arg7[%c0_11, %c0_12], %12 {strides = array<i32>} : memref<64x128xf32, #tpu.memory_space<vmem>>, vector<64x128xf32>,
    } else {
    }
    %c0 = arith.constant 0 : index
    %c0_1 = arith.constant 0 : index
    %3 = vector.load %arg7[%c0, %c0_1] : memref<64x128xf32, #tpu.memory_space<vmem>>, vector<64x128xf32>
    %c0_2 = arith.constant 0 : index
    %c0_3 = arith.constant 0 : index
    %4 = vector.load %arg3[%c0_2, %c0_3] : memref<64x640xbf16, #tpu.memory_space<vmem>>, vector<64x640xbf16>
    %c0_4 = arith.constant 0 : index
    %c0_5 = arith.constant 0 : index
    %5 = vector.load %arg4[%c0_4, %c0_5] : memref<640x128xbf16, #tpu.memory_space<vmem>>, vector<640x128xbf16>
    %cst = arith.constant dense<0.000000e+00> : vector<64x128xf32>
    %6 = tpu.matmul %4, %5, %cst {dimension_numbers = #tpu.dot_dimension_numbers<[1], [0], [0], [1], [0, 0, 1, 1], [], []>} : vector<64x640xbf16>, vector<640x128xbf16>, vector<64x128xf32> -> vector<64x128xf32>
    %7 = arith.addf %3, %6 : vector<64x128xf32>
    %c0_6 = arith.constant 0 : index
    %c0_7 = arith.constant 0 : index
    %8 = vector.load %arg7[%c0_6, %c0_7] : memref<64x128xf32, #tpu.memory_space<vmem>>, vector<64x128xf32>
    tpu.vector_store %arg7[%c0_6, %c0_7], %7 {strides = array<i32>} : memref<64x128xf32, #tpu.memory_space<vmem>>, vector<64x128xf32>,
    %c0_i32_8 = arith.constant 0 : i32
    %9 = arith.cmpi eq, %arg2, %c0_i32_8 : i32
    %10 = arith.extui %9 : i1 to i32
    %c0_i32_9 = arith.constant 0 : i32
    %11 = arith.cmpi ne, %10, %c0_i32_9 : i32
    scf.if %11 {
      %c0_10 = arith.constant 0 : index
      %c0_11 = arith.constant 0 : index
      %12 = vector.load %arg7[%c0_10, %c0_11] : memref<64x128xf32, #tpu.memory_space<vmem>>, vector<64x128xf32>
      %c0_12 = arith.constant 0 : index
      %c0_13 = arith.constant 0 : index
      %13 = vector.load %arg5[%c0_12, %c0_13] : memref<1x128xf32, #tpu.memory_space<vmem>>, vector<1x128xf32>
      %14 = vector.broadcast %13 : vector<1x128xf32> to vector<64x128xf32>
      %15 = arith.addf %12, %14 : vector<64x128xf32>
      %cst_14 = arith.constant 0.000000e+00 : f32
      %16 = vector.broadcast %cst_14 : f32 to vector<64x128xf32>
      %17 = arith.maximumf %15, %16 : vector<64x128xf32>
      %c0_15 = arith.constant 0 : index
      %c0_16 = arith.constant 0 : index
      %18 = vector.load %arg6[%c0_15, %c0_16] : memref<64x128xf32, #tpu.memory_space<vmem>>, vector<64x128xf32>
      tpu.vector_store %arg6[%c0_15, %c0_16], %17 {strides = array<i32>} : memref<64x128xf32, #tpu.memory_space<vmem>>, vector<64x128xf32>,
    } else {
    }
    return
  }
  func.func @transform_0(%arg0: i32, %arg1: i32, %arg2: i32) -> (i32, i32) {
    %c0_i32 = arith.constant 0 : i32
    return %arg0, %arg2 : i32, i32
  }
  func.func @transform_1(%arg0: i32, %arg1: i32, %arg2: i32) -> (i32, i32) {
    %c0_i32 = arith.constant 0 : i32
    return %arg2, %arg1 : i32, i32
  }
  func.func @transform_2(%arg0: i32, %arg1: i32, %arg2: i32) -> (i32, i32) {
    %c0_i32 = arith.constant 0 : i32
    %c0_i32_0 = arith.constant 0 : i32
    return %c0_i32, %arg1 : i32, i32
  }
  func.func @transform_3(%arg0: i32, %arg1: i32, %arg2: i32) -> (i32, i32) {
    %c0_i32 = arith.constant 0 : i32
    return %arg0, %arg1 : i32, i32
  }
}

module attributes {stable_mosaic.version = 11 : i64} {
  func.func @_matmul_bias_kernel(%arg0: i32, %arg1: i32, %arg2: i32, %arg3: memref<16x256xbf16, #tpu.memory_space<vmem>>, %arg4: memref<256x128xbf16, #tpu.memory_space<vmem>>, %arg5: memref<1x128xf32, #tpu.memory_space<vmem>>, %arg6: memref<16x128xf32, #tpu.memory_space<vmem>>, %arg7: memref<16x128xf32, #tpu.memory_space<vmem>>) attributes {dimension_semantics = [#tpu.dimension_semantics<parallel>, #tpu.dimension_semantics<parallel>, #tpu.dimension_semantics<arbitrary>], iteration_bounds = array<i64: 1, 1, 1>, scalar_prefetch = 0 : i64, scratch_operands = 1 : i64, tpu.core_type = #tpu.core_type<tc>, window_params = [{transform_indices = @transform_0, window_bounds = array<i64: 16, 256>}, {transform_indices = @transform_1, window_bounds = array<i64: 256, 128>}, {transform_indices = @transform_2, window_bounds = array<i64: 1, 128>}, {transform_indices = @transform_3, window_bounds = array<i64: 16, 128>}]} {
    %c0_i32 = arith.constant 0 : i32
    %0 = arith.cmpi eq, %arg2, %c0_i32 : i32
    %1 = arith.extui %0 : i1 to i32
    %c0_i32_0 = arith.constant 0 : i32
    %2 = arith.cmpi ne, %1, %c0_i32_0 : i32
    scf.if %2 {
      %cst_10 = arith.constant 0.000000e+00 : f32
      %12 = vector.broadcast %cst_10 : f32 to vector<16x128xf32>
      %c0_11 = arith.constant 0 : index
      %c0_12 = arith.constant 0 : index
      %13 = vector.load %arg7[%c0_11, %c0_12] : memref<16x128xf32, #tpu.memory_space<vmem>>, vector<16x128xf32>
      tpu.vector_store %arg7[%c0_11, %c0_12], %12 {strides = array<i32>} : memref<16x128xf32, #tpu.memory_space<vmem>>, vector<16x128xf32>,
    } else {
    }
    %c0 = arith.constant 0 : index
    %c0_1 = arith.constant 0 : index
    %3 = vector.load %arg7[%c0, %c0_1] : memref<16x128xf32, #tpu.memory_space<vmem>>, vector<16x128xf32>
    %c0_2 = arith.constant 0 : index
    %c0_3 = arith.constant 0 : index
    %4 = vector.load %arg3[%c0_2, %c0_3] : memref<16x256xbf16, #tpu.memory_space<vmem>>, vector<16x256xbf16>
    %c0_4 = arith.constant 0 : index
    %c0_5 = arith.constant 0 : index
    %5 = vector.load %arg4[%c0_4, %c0_5] : memref<256x128xbf16, #tpu.memory_space<vmem>>, vector<256x128xbf16>
    %cst = arith.constant dense<0.000000e+00> : vector<16x128xf32>
    %6 = tpu.matmul %4, %5, %cst {dimension_numbers = #tpu.dot_dimension_numbers<[1], [0], [0], [1], [0, 0, 1, 1], [], []>} : vector<16x256xbf16>, vector<256x128xbf16>, vector<16x128xf32> -> vector<16x128xf32>
    %7 = arith.addf %3, %6 : vector<16x128xf32>
    %c0_6 = arith.constant 0 : index
    %c0_7 = arith.constant 0 : index
    %8 = vector.load %arg7[%c0_6, %c0_7] : memref<16x128xf32, #tpu.memory_space<vmem>>, vector<16x128xf32>
    tpu.vector_store %arg7[%c0_6, %c0_7], %7 {strides = array<i32>} : memref<16x128xf32, #tpu.memory_space<vmem>>, vector<16x128xf32>,
    %c0_i32_8 = arith.constant 0 : i32
    %9 = arith.cmpi eq, %arg2, %c0_i32_8 : i32
    %10 = arith.extui %9 : i1 to i32
    %c0_i32_9 = arith.constant 0 : i32
    %11 = arith.cmpi ne, %10, %c0_i32_9 : i32
    scf.if %11 {
      %c0_10 = arith.constant 0 : index
      %c0_11 = arith.constant 0 : index
      %12 = vector.load %arg7[%c0_10, %c0_11] : memref<16x128xf32, #tpu.memory_space<vmem>>, vector<16x128xf32>
      %c0_12 = arith.constant 0 : index
      %c0_13 = arith.constant 0 : index
      %13 = vector.load %arg5[%c0_12, %c0_13] : memref<1x128xf32, #tpu.memory_space<vmem>>, vector<1x128xf32>
      %14 = vector.broadcast %13 : vector<1x128xf32> to vector<16x128xf32>
      %15 = arith.addf %12, %14 : vector<16x128xf32>
      %cst_14 = arith.constant 0.000000e+00 : f32
      %16 = vector.broadcast %cst_14 : f32 to vector<16x128xf32>
      %17 = arith.maximumf %15, %16 : vector<16x128xf32>
      %c0_15 = arith.constant 0 : index
      %c0_16 = arith.constant 0 : index
      %18 = vector.load %arg6[%c0_15, %c0_16] : memref<16x128xf32, #tpu.memory_space<vmem>>, vector<16x128xf32>
      tpu.vector_store %arg6[%c0_15, %c0_16], %17 {strides = array<i32>} : memref<16x128xf32, #tpu.memory_space<vmem>>, vector<16x128xf32>,
    } else {
    }
    return
  }
  func.func @transform_0(%arg0: i32, %arg1: i32, %arg2: i32) -> (i32, i32) {
    %c0_i32 = arith.constant 0 : i32
    return %arg0, %arg2 : i32, i32
  }
  func.func @transform_1(%arg0: i32, %arg1: i32, %arg2: i32) -> (i32, i32) {
    %c0_i32 = arith.constant 0 : i32
    return %arg2, %arg1 : i32, i32
  }
  func.func @transform_2(%arg0: i32, %arg1: i32, %arg2: i32) -> (i32, i32) {
    %c0_i32 = arith.constant 0 : i32
    %c0_i32_0 = arith.constant 0 : i32
    return %c0_i32, %arg1 : i32, i32
  }
  func.func @transform_3(%arg0: i32, %arg1: i32, %arg2: i32) -> (i32, i32) {
    %c0_i32 = arith.constant 0 : i32
    return %arg0, %arg1 : i32, i32
  }
}

module attributes {stable_mosaic.version = 11 : i64} {
  func.func @_matmul_bias_kernel(%arg0: i32, %arg1: i32, %arg2: i32, %arg3: memref<16x128xbf16, #tpu.memory_space<vmem>>, %arg4: memref<128x256xbf16, #tpu.memory_space<vmem>>, %arg5: memref<1x256xf32, #tpu.memory_space<vmem>>, %arg6: memref<16x256xf32, #tpu.memory_space<vmem>>, %arg7: memref<16x256xf32, #tpu.memory_space<vmem>>) attributes {dimension_semantics = [#tpu.dimension_semantics<parallel>, #tpu.dimension_semantics<parallel>, #tpu.dimension_semantics<arbitrary>], iteration_bounds = array<i64: 1, 4, 1>, scalar_prefetch = 0 : i64, scratch_operands = 1 : i64, tpu.core_type = #tpu.core_type<tc>, window_params = [{transform_indices = @transform_0, window_bounds = array<i64: 16, 128>}, {transform_indices = @transform_1, window_bounds = array<i64: 128, 256>}, {transform_indices = @transform_2, window_bounds = array<i64: 1, 256>}, {transform_indices = @transform_3, window_bounds = array<i64: 16, 256>}]} {
    %c0_i32 = arith.constant 0 : i32
    %0 = arith.cmpi eq, %arg2, %c0_i32 : i32
    %1 = arith.extui %0 : i1 to i32
    %c0_i32_0 = arith.constant 0 : i32
    %2 = arith.cmpi ne, %1, %c0_i32_0 : i32
    scf.if %2 {
      %cst_10 = arith.constant 0.000000e+00 : f32
      %12 = vector.broadcast %cst_10 : f32 to vector<16x256xf32>
      %c0_11 = arith.constant 0 : index
      %c0_12 = arith.constant 0 : index
      %13 = vector.load %arg7[%c0_11, %c0_12] : memref<16x256xf32, #tpu.memory_space<vmem>>, vector<16x256xf32>
      tpu.vector_store %arg7[%c0_11, %c0_12], %12 {strides = array<i32>} : memref<16x256xf32, #tpu.memory_space<vmem>>, vector<16x256xf32>,
    } else {
    }
    %c0 = arith.constant 0 : index
    %c0_1 = arith.constant 0 : index
    %3 = vector.load %arg7[%c0, %c0_1] : memref<16x256xf32, #tpu.memory_space<vmem>>, vector<16x256xf32>
    %c0_2 = arith.constant 0 : index
    %c0_3 = arith.constant 0 : index
    %4 = vector.load %arg3[%c0_2, %c0_3] : memref<16x128xbf16, #tpu.memory_space<vmem>>, vector<16x128xbf16>
    %c0_4 = arith.constant 0 : index
    %c0_5 = arith.constant 0 : index
    %5 = vector.load %arg4[%c0_4, %c0_5] : memref<128x256xbf16, #tpu.memory_space<vmem>>, vector<128x256xbf16>
    %cst = arith.constant dense<0.000000e+00> : vector<16x256xf32>
    %6 = tpu.matmul %4, %5, %cst {dimension_numbers = #tpu.dot_dimension_numbers<[1], [0], [0], [1], [0, 0, 1, 1], [], []>} : vector<16x128xbf16>, vector<128x256xbf16>, vector<16x256xf32> -> vector<16x256xf32>
    %7 = arith.addf %3, %6 : vector<16x256xf32>
    %c0_6 = arith.constant 0 : index
    %c0_7 = arith.constant 0 : index
    %8 = vector.load %arg7[%c0_6, %c0_7] : memref<16x256xf32, #tpu.memory_space<vmem>>, vector<16x256xf32>
    tpu.vector_store %arg7[%c0_6, %c0_7], %7 {strides = array<i32>} : memref<16x256xf32, #tpu.memory_space<vmem>>, vector<16x256xf32>,
    %c0_i32_8 = arith.constant 0 : i32
    %9 = arith.cmpi eq, %arg2, %c0_i32_8 : i32
    %10 = arith.extui %9 : i1 to i32
    %c0_i32_9 = arith.constant 0 : i32
    %11 = arith.cmpi ne, %10, %c0_i32_9 : i32
    scf.if %11 {
      %c0_10 = arith.constant 0 : index
      %c0_11 = arith.constant 0 : index
      %12 = vector.load %arg7[%c0_10, %c0_11] : memref<16x256xf32, #tpu.memory_space<vmem>>, vector<16x256xf32>
      %c0_12 = arith.constant 0 : index
      %c0_13 = arith.constant 0 : index
      %13 = vector.load %arg5[%c0_12, %c0_13] : memref<1x256xf32, #tpu.memory_space<vmem>>, vector<1x256xf32>
      %14 = vector.broadcast %13 : vector<1x256xf32> to vector<16x256xf32>
      %15 = arith.addf %12, %14 : vector<16x256xf32>
      %c0_14 = arith.constant 0 : index
      %c0_15 = arith.constant 0 : index
      %16 = vector.load %arg6[%c0_14, %c0_15] : memref<16x256xf32, #tpu.memory_space<vmem>>, vector<16x256xf32>
      tpu.vector_store %arg6[%c0_14, %c0_15], %15 {strides = array<i32>} : memref<16x256xf32, #tpu.memory_space<vmem>>, vector<16x256xf32>,
    } else {
    }
    return
  }
  func.func @transform_0(%arg0: i32, %arg1: i32, %arg2: i32) -> (i32, i32) {
    %c0_i32 = arith.constant 0 : i32
    return %arg0, %arg2 : i32, i32
  }
  func.func @transform_1(%arg0: i32, %arg1: i32, %arg2: i32) -> (i32, i32) {
    %c0_i32 = arith.constant 0 : i32
    return %arg2, %arg1 : i32, i32
  }
  func.func @transform_2(%arg0: i32, %arg1: i32, %arg2: i32) -> (i32, i32) {
    %c0_i32 = arith.constant 0 : i32
    %c0_i32_0 = arith.constant 0 : i32
    return %c0_i32, %arg1 : i32, i32
  }
  func.func @transform_3(%arg0: i32, %arg1: i32, %arg2: i32) -> (i32, i32) {
    %c0_i32 = arith.constant 0 : i32
    return %arg0, %arg1 : i32, i32
  }
}

module attributes {stable_mosaic.version = 11 : i64} {
  func.func @_bilstm_kernel(%arg0: i32, %arg1: memref<7x2x1024xf32, #tpu.memory_space<vmem>>, %arg2: memref<128x512xf32, #tpu.memory_space<vmem>>, %arg3: memref<128x512xf32, #tpu.memory_space<vmem>>, %arg4: memref<7x2x128xf32, #tpu.memory_space<vmem>>, %arg5: memref<7x2x128xf32, #tpu.memory_space<vmem>>, %arg6: memref<2x128xf32, #tpu.memory_space<vmem>>, %arg7: memref<2x128xf32, #tpu.memory_space<vmem>>, %arg8: memref<2x128xf32, #tpu.memory_space<vmem>>, %arg9: memref<2x128xf32, #tpu.memory_space<vmem>>) attributes {dimension_semantics = [#tpu.dimension_semantics<arbitrary>], iteration_bounds = array<i64: 1>, scalar_prefetch = 0 : i64, scratch_operands = 4 : i64, tpu.core_type = #tpu.core_type<tc>, window_params = [{pipeline_mode = #tpu.pipeline_mode<synchronous>, transform_indices = @transform_0, window_bounds = array<i64: 7, 2, 1024>}, {pipeline_mode = #tpu.pipeline_mode<synchronous>, transform_indices = @transform_1, window_bounds = array<i64: 128, 512>}, {pipeline_mode = #tpu.pipeline_mode<synchronous>, transform_indices = @transform_2, window_bounds = array<i64: 128, 512>}, {pipeline_mode = #tpu.pipeline_mode<synchronous>, transform_indices = @transform_3, window_bounds = array<i64: 7, 2, 128>}, {pipeline_mode = #tpu.pipeline_mode<synchronous>, transform_indices = @transform_4, window_bounds = array<i64: 7, 2, 128>}]} {
    %cst = arith.constant 0.000000e+00 : f32
    %0 = vector.broadcast %cst : f32 to vector<2x128xf32>
    %c0 = arith.constant 0 : index
    %c0_0 = arith.constant 0 : index
    %1 = vector.load %arg6[%c0, %c0_0] : memref<2x128xf32, #tpu.memory_space<vmem>>, vector<2x128xf32>
    tpu.vector_store %arg6[%c0, %c0_0], %0 {strides = array<i32>} : memref<2x128xf32, #tpu.memory_space<vmem>>, vector<2x128xf32>,
    %cst_1 = arith.constant 0.000000e+00 : f32
    %2 = vector.broadcast %cst_1 : f32 to vector<2x128xf32>
    %c0_2 = arith.constant 0 : index
    %c0_3 = arith.constant 0 : index
    %3 = vector.load %arg7[%c0_2, %c0_3] : memref<2x128xf32, #tpu.memory_space<vmem>>, vector<2x128xf32>
    tpu.vector_store %arg7[%c0_2, %c0_3], %2 {strides = array<i32>} : memref<2x128xf32, #tpu.memory_space<vmem>>, vector<2x128xf32>,
    %cst_4 = arith.constant 0.000000e+00 : f32
    %4 = vector.broadcast %cst_4 : f32 to vector<2x128xf32>
    %c0_5 = arith.constant 0 : index
    %c0_6 = arith.constant 0 : index
    %5 = vector.load %arg8[%c0_5, %c0_6] : memref<2x128xf32, #tpu.memory_space<vmem>>, vector<2x128xf32>
    tpu.vector_store %arg8[%c0_5, %c0_6], %4 {strides = array<i32>} : memref<2x128xf32, #tpu.memory_space<vmem>>, vector<2x128xf32>,
    %cst_7 = arith.constant 0.000000e+00 : f32
    %6 = vector.broadcast %cst_7 : f32 to vector<2x128xf32>
    %c0_8 = arith.constant 0 : index
    %c0_9 = arith.constant 0 : index
    %7 = vector.load %arg9[%c0_8, %c0_9] : memref<2x128xf32, #tpu.memory_space<vmem>>, vector<2x128xf32>
    tpu.vector_store %arg9[%c0_8, %c0_9], %6 {strides = array<i32>} : memref<2x128xf32, #tpu.memory_space<vmem>>, vector<2x128xf32>,
    %c0_i32 = arith.constant 0 : i32
    %8 = arith.index_cast %c0_i32 : i32 to index
    %c0_10 = arith.constant 0 : index
    %c0_11 = arith.constant 0 : index
    %9 = vector.load %arg1[%8, %c0_10, %c0_11] : memref<7x2x1024xf32, #tpu.memory_space<vmem>>, vector<1x2x1024xf32>
    %10 = vector.shape_cast %9 : vector<1x2x1024xf32> to vector<2x1024xf32>
    %11 = vector.extract_strided_slice %10 {offsets = [0, 0], sizes = [2, 512], strides = [1, 1]} : vector<2x1024xf32> to vector<2x512xf32>
    %c0_12 = arith.constant 0 : index
    %c0_13 = arith.constant 0 : index
    %12 = vector.load %arg6[%c0_12, %c0_13] : memref<2x128xf32, #tpu.memory_space<vmem>>, vector<2x128xf32>
    %c0_14 = arith.constant 0 : index
    %c0_15 = arith.constant 0 : index
    %13 = vector.load %arg2[%c0_14, %c0_15] : memref<128x512xf32, #tpu.memory_space<vmem>>, vector<128x512xf32>
    %cst_16 = arith.constant dense<0.000000e+00> : vector<2x512xf32>
    %14 = tpu.matmul %12, %13, %cst_16 {dimension_numbers = #tpu.dot_dimension_numbers<[1], [0], [0], [1], [0, 0, 1, 1], [], []>} : vector<2x128xf32>, vector<128x512xf32>, vector<2x512xf32> -> vector<2x512xf32>
    %15 = arith.addf %11, %14 : vector<2x512xf32>
    %c0_17 = arith.constant 0 : index
    %c0_18 = arith.constant 0 : index
    %16 = vector.load %arg7[%c0_17, %c0_18] : memref<2x128xf32, #tpu.memory_space<vmem>>, vector<2x128xf32>
    %17 = vector.extract_strided_slice %15 {offsets = [0, 0], sizes = [2, 128], strides = [1, 1]} : vector<2x512xf32> to vector<2x128xf32>
    %18 = arith.negf %17 : vector<2x128xf32>
    %19 = math.exp %18 : vector<2x128xf32>
    %cst_19 = arith.constant 1.000000e+00 : f32
    %20 = vector.broadcast %cst_19 : f32 to vector<2x128xf32>
    %21 = arith.addf %20, %19 : vector<2x128xf32>
    %22 = arith.divf %20, %21 : vector<2x128xf32>
    %23 = vector.extract_strided_slice %15 {offsets = [0, 128], sizes = [2, 128], strides = [1, 1]} : vector<2x512xf32> to vector<2x128xf32>
    %24 = arith.negf %23 : vector<2x128xf32>
    %25 = math.exp %24 : vector<2x128xf32>
    %cst_20 = arith.constant 1.000000e+00 : f32
    %26 = vector.broadcast %cst_20 : f32 to vector<2x128xf32>
    %27 = arith.addf %26, %25 : vector<2x128xf32>
    %28 = arith.divf %26, %27 : vector<2x128xf32>
    %29 = vector.extract_strided_slice %15 {offsets = [0, 256], sizes = [2, 128], strides = [1, 1]} : vector<2x512xf32> to vector<2x128xf32>
    %30 = math.tanh %29 : vector<2x128xf32>
    %31 = vector.extract_strided_slice %15 {offsets = [0, 384], sizes = [2, 128], strides = [1, 1]} : vector<2x512xf32> to vector<2x128xf32>
    %32 = arith.negf %31 : vector<2x128xf32>
    %33 = math.exp %32 : vector<2x128xf32>
    %cst_21 = arith.constant 1.000000e+00 : f32
    %34 = vector.broadcast %cst_21 : f32 to vector<2x128xf32>
    %35 = arith.addf %34, %33 : vector<2x128xf32>
    %36 = arith.divf %34, %35 : vector<2x128xf32>
    %37 = arith.mulf %28, %16 : vector<2x128xf32>
    %38 = arith.mulf %22, %30 : vector<2x128xf32>
    %39 = arith.addf %37, %38 : vector<2x128xf32>
    %40 = math.tanh %39 : vector<2x128xf32>
    %41 = arith.mulf %36, %40 : vector<2x128xf32>
    %c0_22 = arith.constant 0 : index
    %c0_23 = arith.constant 0 : index
    %42 = vector.load %arg6[%c0_22, %c0_23] : memref<2x128xf32, #tpu.memory_space<vmem>>, vector<2x128xf32>
    tpu.vector_store %arg6[%c0_22, %c0_23], %41 {strides = array<i32>} : memref<2x128xf32, #tpu.memory_space<vmem>>, vector<2x128xf32>,
    %c0_24 = arith.constant 0 : index
    %c0_25 = arith.constant 0 : index
    %43 = vector.load %arg7[%c0_24, %c0_25] : memref<2x128xf32, #tpu.memory_space<vmem>>, vector<2x128xf32>
    tpu.vector_store %arg7[%c0_24, %c0_25], %39 {strides = array<i32>} : memref<2x128xf32, #tpu.memory_space<vmem>>, vector<2x128xf32>,
    %44 = arith.index_cast %c0_i32 : i32 to index
    %c0_26 = arith.constant 0 : index
    %c0_27 = arith.constant 0 : index
    %45 = vector.load %arg4[%44, %c0_26, %c0_27] : memref<7x2x128xf32, #tpu.memory_space<vmem>>, vector<1x2x128xf32>
    %46 = vector.shape_cast %45 : vector<1x2x128xf32> to vector<2x128xf32>
    %47 = vector.shape_cast %41 : vector<2x128xf32> to vector<1x2x128xf32>
    tpu.vector_store %arg4[%44, %c0_26, %c0_27], %47 {strides = array<i32>} : memref<7x2x128xf32, #tpu.memory_space<vmem>>, vector<1x2x128xf32>,
    %c6_i32 = arith.constant 6 : i32
    %48 = arith.subi %c6_i32, %c0_i32 : i32
    %49 = arith.index_cast %48 : i32 to index
    %c0_28 = arith.constant 0 : index
    %c0_29 = arith.constant 0 : index
    %50 = vector.load %arg1[%49, %c0_28, %c0_29] : memref<7x2x1024xf32, #tpu.memory_space<vmem>>, vector<1x2x1024xf32>
    %51 = vector.shape_cast %50 : vector<1x2x1024xf32> to vector<2x1024xf32>
    %52 = vector.extract_strided_slice %51 {offsets = [0, 512], sizes = [2, 512], strides = [1, 1]} : vector<2x1024xf32> to vector<2x512xf32>
    %c0_30 = arith.constant 0 : index
    %c0_31 = arith.constant 0 : index
    %53 = vector.load %arg8[%c0_30, %c0_31] : memref<2x128xf32, #tpu.memory_space<vmem>>, vector<2x128xf32>
    %c0_32 = arith.constant 0 : index
    %c0_33 = arith.constant 0 : index
    %54 = vector.load %arg3[%c0_32, %c0_33] : memref<128x512xf32, #tpu.memory_space<vmem>>, vector<128x512xf32>
    %cst_34 = arith.constant dense<0.000000e+00> : vector<2x512xf32>
    %55 = tpu.matmul %53, %54, %cst_34 {dimension_numbers = #tpu.dot_dimension_numbers<[1], [0], [0], [1], [0, 0, 1, 1], [], []>} : vector<2x128xf32>, vector<128x512xf32>, vector<2x512xf32> -> vector<2x512xf32>
    %56 = arith.addf %52, %55 : vector<2x512xf32>
    %c0_35 = arith.constant 0 : index
    %c0_36 = arith.constant 0 : index
    %57 = vector.load %arg9[%c0_35, %c0_36] : memref<2x128xf32, #tpu.memory_space<vmem>>, vector<2x128xf32>
    %58 = vector.extract_strided_slice %56 {offsets = [0, 0], sizes = [2, 128], strides = [1, 1]} : vector<2x512xf32> to vector<2x128xf32>
    %59 = arith.negf %58 : vector<2x128xf32>
    %60 = math.exp %59 : vector<2x128xf32>
    %cst_37 = arith.constant 1.000000e+00 : f32
    %61 = vector.broadcast %cst_37 : f32 to vector<2x128xf32>
    %62 = arith.addf %61, %60 : vector<2x128xf32>
    %63 = arith.divf %61, %62 : vector<2x128xf32>
    %64 = vector.extract_strided_slice %56 {offsets = [0, 128], sizes = [2, 128], strides = [1, 1]} : vector<2x512xf32> to vector<2x128xf32>
    %65 = arith.negf %64 : vector<2x128xf32>
    %66 = math.exp %65 : vector<2x128xf32>
    %cst_38 = arith.constant 1.000000e+00 : f32
    %67 = vector.broadcast %cst_38 : f32 to vector<2x128xf32>
    %68 = arith.addf %67, %66 : vector<2x128xf32>
    %69 = arith.divf %67, %68 : vector<2x128xf32>
    %70 = vector.extract_strided_slice %56 {offsets = [0, 256], sizes = [2, 128], strides = [1, 1]} : vector<2x512xf32> to vector<2x128xf32>
    %71 = math.tanh %70 : vector<2x128xf32>
    %72 = vector.extract_strided_slice %56 {offsets = [0, 384], sizes = [2, 128], strides = [1, 1]} : vector<2x512xf32> to vector<2x128xf32>
    %73 = arith.negf %72 : vector<2x128xf32>
    %74 = math.exp %73 : vector<2x128xf32>
    %cst_39 = arith.constant 1.000000e+00 : f32
    %75 = vector.broadcast %cst_39 : f32 to vector<2x128xf32>
    %76 = arith.addf %75, %74 : vector<2x128xf32>
    %77 = arith.divf %75, %76 : vector<2x128xf32>
    %78 = arith.mulf %69, %57 : vector<2x128xf32>
    %79 = arith.mulf %63, %71 : vector<2x128xf32>
    %80 = arith.addf %78, %79 : vector<2x128xf32>
    %81 = math.tanh %80 : vector<2x128xf32>
    %82 = arith.mulf %77, %81 : vector<2x128xf32>
    %c0_40 = arith.constant 0 : index
    %c0_41 = arith.constant 0 : index
    %83 = vector.load %arg8[%c0_40, %c0_41] : memref<2x128xf32, #tpu.memory_space<vmem>>, vector<2x128xf32>
    tpu.vector_store %arg8[%c0_40, %c0_41], %82 {strides = array<i32>} : memref<2x128xf32, #tpu.memory_space<vmem>>, vector<2x128xf32>,
    %c0_42 = arith.constant 0 : index
    %c0_43 = arith.constant 0 : index
    %84 = vector.load %arg9[%c0_42, %c0_43] : memref<2x128xf32, #tpu.memory_space<vmem>>, vector<2x128xf32>
    tpu.vector_store %arg9[%c0_42, %c0_43], %80 {strides = array<i32>} : memref<2x128xf32, #tpu.memory_space<vmem>>, vector<2x128xf32>,
    %85 = arith.index_cast %48 : i32 to index
    %c0_44 = arith.constant 0 : index
    %c0_45 = arith.constant 0 : index
    %86 = vector.load %arg5[%85, %c0_44, %c0_45] : memref<7x2x128xf32, #tpu.memory_space<vmem>>, vector<1x2x128xf32>
    %87 = vector.shape_cast %86 : vector<1x2x128xf32> to vector<2x128xf32>
    %88 = vector.shape_cast %82 : vector<2x128xf32> to vector<1x2x128xf32>
    tpu.vector_store %arg5[%85, %c0_44, %c0_45], %88 {strides = array<i32>} : memref<7x2x128xf32, #tpu.memory_space<vmem>>, vector<1x2x128xf32>,
    %c1_i32 = arith.constant 1 : i32
    %89 = arith.index_cast %c1_i32 : i32 to index
    %c0_46 = arith.constant 0 : index
    %c0_47 = arith.constant 0 : index
    %90 = vector.load %arg1[%89, %c0_46, %c0_47] : memref<7x2x1024xf32, #tpu.memory_space<vmem>>, vector<1x2x1024xf32>
    %91 = vector.shape_cast %90 : vector<1x2x1024xf32> to vector<2x1024xf32>
    %92 = vector.extract_strided_slice %91 {offsets = [0, 0], sizes = [2, 512], strides = [1, 1]} : vector<2x1024xf32> to vector<2x512xf32>
    %c0_48 = arith.constant 0 : index
    %c0_49 = arith.constant 0 : index
    %93 = vector.load %arg6[%c0_48, %c0_49] : memref<2x128xf32, #tpu.memory_space<vmem>>, vector<2x128xf32>
    %c0_50 = arith.constant 0 : index
    %c0_51 = arith.constant 0 : index
    %94 = vector.load %arg2[%c0_50, %c0_51] : memref<128x512xf32, #tpu.memory_space<vmem>>, vector<128x512xf32>
    %cst_52 = arith.constant dense<0.000000e+00> : vector<2x512xf32>
    %95 = tpu.matmul %93, %94, %cst_52 {dimension_numbers = #tpu.dot_dimension_numbers<[1], [0], [0], [1], [0, 0, 1, 1], [], []>} : vector<2x128xf32>, vector<128x512xf32>, vector<2x512xf32> -> vector<2x512xf32>
    %96 = arith.addf %92, %95 : vector<2x512xf32>
    %c0_53 = arith.constant 0 : index
    %c0_54 = arith.constant 0 : index
    %97 = vector.load %arg7[%c0_53, %c0_54] : memref<2x128xf32, #tpu.memory_space<vmem>>, vector<2x128xf32>
    %98 = vector.extract_strided_slice %96 {offsets = [0, 0], sizes = [2, 128], strides = [1, 1]} : vector<2x512xf32> to vector<2x128xf32>
    %99 = arith.negf %98 : vector<2x128xf32>
    %100 = math.exp %99 : vector<2x128xf32>
    %cst_55 = arith.constant 1.000000e+00 : f32
    %101 = vector.broadcast %cst_55 : f32 to vector<2x128xf32>
    %102 = arith.addf %101, %100 : vector<2x128xf32>
    %103 = arith.divf %101, %102 : vector<2x128xf32>
    %104 = vector.extract_strided_slice %96 {offsets = [0, 128], sizes = [2, 128], strides = [1, 1]} : vector<2x512xf32> to vector<2x128xf32>
    %105 = arith.negf %104 : vector<2x128xf32>
    %106 = math.exp %105 : vector<2x128xf32>
    %cst_56 = arith.constant 1.000000e+00 : f32
    %107 = vector.broadcast %cst_56 : f32 to vector<2x128xf32>
    %108 = arith.addf %107, %106 : vector<2x128xf32>
    %109 = arith.divf %107, %108 : vector<2x128xf32>
    %110 = vector.extract_strided_slice %96 {offsets = [0, 256], sizes = [2, 128], strides = [1, 1]} : vector<2x512xf32> to vector<2x128xf32>
    %111 = math.tanh %110 : vector<2x128xf32>
    %112 = vector.extract_strided_slice %96 {offsets = [0, 384], sizes = [2, 128], strides = [1, 1]} : vector<2x512xf32> to vector<2x128xf32>
    %113 = arith.negf %112 : vector<2x128xf32>
    %114 = math.exp %113 : vector<2x128xf32>
    %cst_57 = arith.constant 1.000000e+00 : f32
    %115 = vector.broadcast %cst_57 : f32 to vector<2x128xf32>
    %116 = arith.addf %115, %114 : vector<2x128xf32>
    %117 = arith.divf %115, %116 : vector<2x128xf32>
    %118 = arith.mulf %109, %97 : vector<2x128xf32>
    %119 = arith.mulf %103, %111 : vector<2x128xf32>
    %120 = arith.addf %118, %119 : vector<2x128xf32>
    %121 = math.tanh %120 : vector<2x128xf32>
    %122 = arith.mulf %117, %121 : vector<2x128xf32>
    %c0_58 = arith.constant 0 : index
    %c0_59 = arith.constant 0 : index
    %123 = vector.load %arg6[%c0_58, %c0_59] : memref<2x128xf32, #tpu.memory_space<vmem>>, vector<2x128xf32>
    tpu.vector_store %arg6[%c0_58, %c0_59], %122 {strides = array<i32>} : memref<2x128xf32, #tpu.memory_space<vmem>>, vector<2x128xf32>,
    %c0_60 = arith.constant 0 : index
    %c0_61 = arith.constant 0 : index
    %124 = vector.load %arg7[%c0_60, %c0_61] : memref<2x128xf32, #tpu.memory_space<vmem>>, vector<2x128xf32>
    tpu.vector_store %arg7[%c0_60, %c0_61], %120 {strides = array<i32>} : memref<2x128xf32, #tpu.memory_space<vmem>>, vector<2x128xf32>,
    %125 = arith.index_cast %c1_i32 : i32 to index
    %c0_62 = arith.constant 0 : index
    %c0_63 = arith.constant 0 : index
    %126 = vector.load %arg4[%125, %c0_62, %c0_63] : memref<7x2x128xf32, #tpu.memory_space<vmem>>, vector<1x2x128xf32>
    %127 = vector.shape_cast %126 : vector<1x2x128xf32> to vector<2x128xf32>
    %128 = vector.shape_cast %122 : vector<2x128xf32> to vector<1x2x128xf32>
    tpu.vector_store %arg4[%125, %c0_62, %c0_63], %128 {strides = array<i32>} : memref<7x2x128xf32, #tpu.memory_space<vmem>>, vector<1x2x128xf32>,
    %c6_i32_64 = arith.constant 6 : i32
    %129 = arith.subi %c6_i32_64, %c1_i32 : i32
    %130 = arith.index_cast %129 : i32 to index
    %c0_65 = arith.constant 0 : index
    %c0_66 = arith.constant 0 : index
    %131 = vector.load %arg1[%130, %c0_65, %c0_66] : memref<7x2x1024xf32, #tpu.memory_space<vmem>>, vector<1x2x1024xf32>
    %132 = vector.shape_cast %131 : vector<1x2x1024xf32> to vector<2x1024xf32>
    %133 = vector.extract_strided_slice %132 {offsets = [0, 512], sizes = [2, 512], strides = [1, 1]} : vector<2x1024xf32> to vector<2x512xf32>
    %c0_67 = arith.constant 0 : index
    %c0_68 = arith.constant 0 : index
    %134 = vector.load %arg8[%c0_67, %c0_68] : memref<2x128xf32, #tpu.memory_space<vmem>>, vector<2x128xf32>
    %c0_69 = arith.constant 0 : index
    %c0_70 = arith.constant 0 : index
    %135 = vector.load %arg3[%c0_69, %c0_70] : memref<128x512xf32, #tpu.memory_space<vmem>>, vector<128x512xf32>
    %cst_71 = arith.constant dense<0.000000e+00> : vector<2x512xf32>
    %136 = tpu.matmul %134, %135, %cst_71 {dimension_numbers = #tpu.dot_dimension_numbers<[1], [0], [0], [1], [0, 0, 1, 1], [], []>} : vector<2x128xf32>, vector<128x512xf32>, vector<2x512xf32> -> vector<2x512xf32>
    %137 = arith.addf %133, %136 : vector<2x512xf32>
    %c0_72 = arith.constant 0 : index
    %c0_73 = arith.constant 0 : index
    %138 = vector.load %arg9[%c0_72, %c0_73] : memref<2x128xf32, #tpu.memory_space<vmem>>, vector<2x128xf32>
    %139 = vector.extract_strided_slice %137 {offsets = [0, 0], sizes = [2, 128], strides = [1, 1]} : vector<2x512xf32> to vector<2x128xf32>
    %140 = arith.negf %139 : vector<2x128xf32>
    %141 = math.exp %140 : vector<2x128xf32>
    %cst_74 = arith.constant 1.000000e+00 : f32
    %142 = vector.broadcast %cst_74 : f32 to vector<2x128xf32>
    %143 = arith.addf %142, %141 : vector<2x128xf32>
    %144 = arith.divf %142, %143 : vector<2x128xf32>
    %145 = vector.extract_strided_slice %137 {offsets = [0, 128], sizes = [2, 128], strides = [1, 1]} : vector<2x512xf32> to vector<2x128xf32>
    %146 = arith.negf %145 : vector<2x128xf32>
    %147 = math.exp %146 : vector<2x128xf32>
    %cst_75 = arith.constant 1.000000e+00 : f32
    %148 = vector.broadcast %cst_75 : f32 to vector<2x128xf32>
    %149 = arith.addf %148, %147 : vector<2x128xf32>
    %150 = arith.divf %148, %149 : vector<2x128xf32>
    %151 = vector.extract_strided_slice %137 {offsets = [0, 256], sizes = [2, 128], strides = [1, 1]} : vector<2x512xf32> to vector<2x128xf32>
    %152 = math.tanh %151 : vector<2x128xf32>
    %153 = vector.extract_strided_slice %137 {offsets = [0, 384], sizes = [2, 128], strides = [1, 1]} : vector<2x512xf32> to vector<2x128xf32>
    %154 = arith.negf %153 : vector<2x128xf32>
    %155 = math.exp %154 : vector<2x128xf32>
    %cst_76 = arith.constant 1.000000e+00 : f32
    %156 = vector.broadcast %cst_76 : f32 to vector<2x128xf32>
    %157 = arith.addf %156, %155 : vector<2x128xf32>
    %158 = arith.divf %156, %157 : vector<2x128xf32>
    %159 = arith.mulf %150, %138 : vector<2x128xf32>
    %160 = arith.mulf %144, %152 : vector<2x128xf32>
    %161 = arith.addf %159, %160 : vector<2x128xf32>
    %162 = math.tanh %161 : vector<2x128xf32>
    %163 = arith.mulf %158, %162 : vector<2x128xf32>
    %c0_77 = arith.constant 0 : index
    %c0_78 = arith.constant 0 : index
    %164 = vector.load %arg8[%c0_77, %c0_78] : memref<2x128xf32, #tpu.memory_space<vmem>>, vector<2x128xf32>
    tpu.vector_store %arg8[%c0_77, %c0_78], %163 {strides = array<i32>} : memref<2x128xf32, #tpu.memory_space<vmem>>, vector<2x128xf32>,
    %c0_79 = arith.constant 0 : index
    %c0_80 = arith.constant 0 : index
    %165 = vector.load %arg9[%c0_79, %c0_80] : memref<2x128xf32, #tpu.memory_space<vmem>>, vector<2x128xf32>
    tpu.vector_store %arg9[%c0_79, %c0_80], %161 {strides = array<i32>} : memref<2x128xf32, #tpu.memory_space<vmem>>, vector<2x128xf32>,
    %166 = arith.index_cast %129 : i32 to index
    %c0_81 = arith.constant 0 : index
    %c0_82 = arith.constant 0 : index
    %167 = vector.load %arg5[%166, %c0_81, %c0_82] : memref<7x2x128xf32, #tpu.memory_space<vmem>>, vector<1x2x128xf32>
    %168 = vector.shape_cast %167 : vector<1x2x128xf32> to vector<2x128xf32>
    %169 = vector.shape_cast %163 : vector<2x128xf32> to vector<1x2x128xf32>
    tpu.vector_store %arg5[%166, %c0_81, %c0_82], %169 {strides = array<i32>} : memref<7x2x128xf32, #tpu.memory_space<vmem>>, vector<1x2x128xf32>,
    %c2_i32 = arith.constant 2 : i32
    %170 = arith.index_cast %c2_i32 : i32 to index
    %c0_83 = arith.constant 0 : index
    %c0_84 = arith.constant 0 : index
    %171 = vector.load %arg1[%170, %c0_83, %c0_84] : memref<7x2x1024xf32, #tpu.memory_space<vmem>>, vector<1x2x1024xf32>
    %172 = vector.shape_cast %171 : vector<1x2x1024xf32> to vector<2x1024xf32>
    %173 = vector.extract_strided_slice %172 {offsets = [0, 0], sizes = [2, 512], strides = [1, 1]} : vector<2x1024xf32> to vector<2x512xf32>
    %c0_85 = arith.constant 0 : index
    %c0_86 = arith.constant 0 : index
    %174 = vector.load %arg6[%c0_85, %c0_86] : memref<2x128xf32, #tpu.memory_space<vmem>>, vector<2x128xf32>
    %c0_87 = arith.constant 0 : index
    %c0_88 = arith.constant 0 : index
    %175 = vector.load %arg2[%c0_87, %c0_88] : memref<128x512xf32, #tpu.memory_space<vmem>>, vector<128x512xf32>
    %cst_89 = arith.constant dense<0.000000e+00> : vector<2x512xf32>
    %176 = tpu.matmul %174, %175, %cst_89 {dimension_numbers = #tpu.dot_dimension_numbers<[1], [0], [0], [1], [0, 0, 1, 1], [], []>} : vector<2x128xf32>, vector<128x512xf32>, vector<2x512xf32> -> vector<2x512xf32>
    %177 = arith.addf %173, %176 : vector<2x512xf32>
    %c0_90 = arith.constant 0 : index
    %c0_91 = arith.constant 0 : index
    %178 = vector.load %arg7[%c0_90, %c0_91] : memref<2x128xf32, #tpu.memory_space<vmem>>, vector<2x128xf32>
    %179 = vector.extract_strided_slice %177 {offsets = [0, 0], sizes = [2, 128], strides = [1, 1]} : vector<2x512xf32> to vector<2x128xf32>
    %180 = arith.negf %179 : vector<2x128xf32>
    %181 = math.exp %180 : vector<2x128xf32>
    %cst_92 = arith.constant 1.000000e+00 : f32
    %182 = vector.broadcast %cst_92 : f32 to vector<2x128xf32>
    %183 = arith.addf %182, %181 : vector<2x128xf32>
    %184 = arith.divf %182, %183 : vector<2x128xf32>
    %185 = vector.extract_strided_slice %177 {offsets = [0, 128], sizes = [2, 128], strides = [1, 1]} : vector<2x512xf32> to vector<2x128xf32>
    %186 = arith.negf %185 : vector<2x128xf32>
    %187 = math.exp %186 : vector<2x128xf32>
    %cst_93 = arith.constant 1.000000e+00 : f32
    %188 = vector.broadcast %cst_93 : f32 to vector<2x128xf32>
    %189 = arith.addf %188, %187 : vector<2x128xf32>
    %190 = arith.divf %188, %189 : vector<2x128xf32>
    %191 = vector.extract_strided_slice %177 {offsets = [0, 256], sizes = [2, 128], strides = [1, 1]} : vector<2x512xf32> to vector<2x128xf32>
    %192 = math.tanh %191 : vector<2x128xf32>
    %193 = vector.extract_strided_slice %177 {offsets = [0, 384], sizes = [2, 128], strides = [1, 1]} : vector<2x512xf32> to vector<2x128xf32>
    %194 = arith.negf %193 : vector<2x128xf32>
    %195 = math.exp %194 : vector<2x128xf32>
    %cst_94 = arith.constant 1.000000e+00 : f32
    %196 = vector.broadcast %cst_94 : f32 to vector<2x128xf32>
    %197 = arith.addf %196, %195 : vector<2x128xf32>
    %198 = arith.divf %196, %197 : vector<2x128xf32>
    %199 = arith.mulf %190, %178 : vector<2x128xf32>
    %200 = arith.mulf %184, %192 : vector<2x128xf32>
    %201 = arith.addf %199, %200 : vector<2x128xf32>
    %202 = math.tanh %201 : vector<2x128xf32>
    %203 = arith.mulf %198, %202 : vector<2x128xf32>
    %c0_95 = arith.constant 0 : index
    %c0_96 = arith.constant 0 : index
    %204 = vector.load %arg6[%c0_95, %c0_96] : memref<2x128xf32, #tpu.memory_space<vmem>>, vector<2x128xf32>
    tpu.vector_store %arg6[%c0_95, %c0_96], %203 {strides = array<i32>} : memref<2x128xf32, #tpu.memory_space<vmem>>, vector<2x128xf32>,
    %c0_97 = arith.constant 0 : index
    %c0_98 = arith.constant 0 : index
    %205 = vector.load %arg7[%c0_97, %c0_98] : memref<2x128xf32, #tpu.memory_space<vmem>>, vector<2x128xf32>
    tpu.vector_store %arg7[%c0_97, %c0_98], %201 {strides = array<i32>} : memref<2x128xf32, #tpu.memory_space<vmem>>, vector<2x128xf32>,
    %206 = arith.index_cast %c2_i32 : i32 to index
    %c0_99 = arith.constant 0 : index
    %c0_100 = arith.constant 0 : index
    %207 = vector.load %arg4[%206, %c0_99, %c0_100] : memref<7x2x128xf32, #tpu.memory_space<vmem>>, vector<1x2x128xf32>
    %208 = vector.shape_cast %207 : vector<1x2x128xf32> to vector<2x128xf32>
    %209 = vector.shape_cast %203 : vector<2x128xf32> to vector<1x2x128xf32>
    tpu.vector_store %arg4[%206, %c0_99, %c0_100], %209 {strides = array<i32>} : memref<7x2x128xf32, #tpu.memory_space<vmem>>, vector<1x2x128xf32>,
    %c6_i32_101 = arith.constant 6 : i32
    %210 = arith.subi %c6_i32_101, %c2_i32 : i32
    %211 = arith.index_cast %210 : i32 to index
    %c0_102 = arith.constant 0 : index
    %c0_103 = arith.constant 0 : index
    %212 = vector.load %arg1[%211, %c0_102, %c0_103] : memref<7x2x1024xf32, #tpu.memory_space<vmem>>, vector<1x2x1024xf32>
    %213 = vector.shape_cast %212 : vector<1x2x1024xf32> to vector<2x1024xf32>
    %214 = vector.extract_strided_slice %213 {offsets = [0, 512], sizes = [2, 512], strides = [1, 1]} : vector<2x1024xf32> to vector<2x512xf32>
    %c0_104 = arith.constant 0 : index
    %c0_105 = arith.constant 0 : index
    %215 = vector.load %arg8[%c0_104, %c0_105] : memref<2x128xf32, #tpu.memory_space<vmem>>, vector<2x128xf32>
    %c0_106 = arith.constant 0 : index
    %c0_107 = arith.constant 0 : index
    %216 = vector.load %arg3[%c0_106, %c0_107] : memref<128x512xf32, #tpu.memory_space<vmem>>, vector<128x512xf32>
    %cst_108 = arith.constant dense<0.000000e+00> : vector<2x512xf32>
    %217 = tpu.matmul %215, %216, %cst_108 {dimension_numbers = #tpu.dot_dimension_numbers<[1], [0], [0], [1], [0, 0, 1, 1], [], []>} : vector<2x128xf32>, vector<128x512xf32>, vector<2x512xf32> -> vector<2x512xf32>
    %218 = arith.addf %214, %217 : vector<2x512xf32>
    %c0_109 = arith.constant 0 : index
    %c0_110 = arith.constant 0 : index
    %219 = vector.load %arg9[%c0_109, %c0_110] : memref<2x128xf32, #tpu.memory_space<vmem>>, vector<2x128xf32>
    %220 = vector.extract_strided_slice %218 {offsets = [0, 0], sizes = [2, 128], strides = [1, 1]} : vector<2x512xf32> to vector<2x128xf32>
    %221 = arith.negf %220 : vector<2x128xf32>
    %222 = math.exp %221 : vector<2x128xf32>
    %cst_111 = arith.constant 1.000000e+00 : f32
    %223 = vector.broadcast %cst_111 : f32 to vector<2x128xf32>
    %224 = arith.addf %223, %222 : vector<2x128xf32>
    %225 = arith.divf %223, %224 : vector<2x128xf32>
    %226 = vector.extract_strided_slice %218 {offsets = [0, 128], sizes = [2, 128], strides = [1, 1]} : vector<2x512xf32> to vector<2x128xf32>
    %227 = arith.negf %226 : vector<2x128xf32>
    %228 = math.exp %227 : vector<2x128xf32>
    %cst_112 = arith.constant 1.000000e+00 : f32
    %229 = vector.broadcast %cst_112 : f32 to vector<2x128xf32>
    %230 = arith.addf %229, %228 : vector<2x128xf32>
    %231 = arith.divf %229, %230 : vector<2x128xf32>
    %232 = vector.extract_strided_slice %218 {offsets = [0, 256], sizes = [2, 128], strides = [1, 1]} : vector<2x512xf32> to vector<2x128xf32>
    %233 = math.tanh %232 : vector<2x128xf32>
    %234 = vector.extract_strided_slice %218 {offsets = [0, 384], sizes = [2, 128], strides = [1, 1]} : vector<2x512xf32> to vector<2x128xf32>
    %235 = arith.negf %234 : vector<2x128xf32>
    %236 = math.exp %235 : vector<2x128xf32>
    %cst_113 = arith.constant 1.000000e+00 : f32
    %237 = vector.broadcast %cst_113 : f32 to vector<2x128xf32>
    %238 = arith.addf %237, %236 : vector<2x128xf32>
    %239 = arith.divf %237, %238 : vector<2x128xf32>
    %240 = arith.mulf %231, %219 : vector<2x128xf32>
    %241 = arith.mulf %225, %233 : vector<2x128xf32>
    %242 = arith.addf %240, %241 : vector<2x128xf32>
    %243 = math.tanh %242 : vector<2x128xf32>
    %244 = arith.mulf %239, %243 : vector<2x128xf32>
    %c0_114 = arith.constant 0 : index
    %c0_115 = arith.constant 0 : index
    %245 = vector.load %arg8[%c0_114, %c0_115] : memref<2x128xf32, #tpu.memory_space<vmem>>, vector<2x128xf32>
    tpu.vector_store %arg8[%c0_114, %c0_115], %244 {strides = array<i32>} : memref<2x128xf32, #tpu.memory_space<vmem>>, vector<2x128xf32>,
    %c0_116 = arith.constant 0 : index
    %c0_117 = arith.constant 0 : index
    %246 = vector.load %arg9[%c0_116, %c0_117] : memref<2x128xf32, #tpu.memory_space<vmem>>, vector<2x128xf32>
    tpu.vector_store %arg9[%c0_116, %c0_117], %242 {strides = array<i32>} : memref<2x128xf32, #tpu.memory_space<vmem>>, vector<2x128xf32>,
    %247 = arith.index_cast %210 : i32 to index
    %c0_118 = arith.constant 0 : index
    %c0_119 = arith.constant 0 : index
    %248 = vector.load %arg5[%247, %c0_118, %c0_119] : memref<7x2x128xf32, #tpu.memory_space<vmem>>, vector<1x2x128xf32>
    %249 = vector.shape_cast %248 : vector<1x2x128xf32> to vector<2x128xf32>
    %250 = vector.shape_cast %244 : vector<2x128xf32> to vector<1x2x128xf32>
    tpu.vector_store %arg5[%247, %c0_118, %c0_119], %250 {strides = array<i32>} : memref<7x2x128xf32, #tpu.memory_space<vmem>>, vector<1x2x128xf32>,
    %c3_i32 = arith.constant 3 : i32
    %251 = arith.index_cast %c3_i32 : i32 to index
    %c0_120 = arith.constant 0 : index
    %c0_121 = arith.constant 0 : index
    %252 = vector.load %arg1[%251, %c0_120, %c0_121] : memref<7x2x1024xf32, #tpu.memory_space<vmem>>, vector<1x2x1024xf32>
    %253 = vector.shape_cast %252 : vector<1x2x1024xf32> to vector<2x1024xf32>
    %254 = vector.extract_strided_slice %253 {offsets = [0, 0], sizes = [2, 512], strides = [1, 1]} : vector<2x1024xf32> to vector<2x512xf32>
    %c0_122 = arith.constant 0 : index
    %c0_123 = arith.constant 0 : index
    %255 = vector.load %arg6[%c0_122, %c0_123] : memref<2x128xf32, #tpu.memory_space<vmem>>, vector<2x128xf32>
    %c0_124 = arith.constant 0 : index
    %c0_125 = arith.constant 0 : index
    %256 = vector.load %arg2[%c0_124, %c0_125] : memref<128x512xf32, #tpu.memory_space<vmem>>, vector<128x512xf32>
    %cst_126 = arith.constant dense<0.000000e+00> : vector<2x512xf32>
    %257 = tpu.matmul %255, %256, %cst_126 {dimension_numbers = #tpu.dot_dimension_numbers<[1], [0], [0], [1], [0, 0, 1, 1], [], []>} : vector<2x128xf32>, vector<128x512xf32>, vector<2x512xf32> -> vector<2x512xf32>
    %258 = arith.addf %254, %257 : vector<2x512xf32>
    %c0_127 = arith.constant 0 : index
    %c0_128 = arith.constant 0 : index
    %259 = vector.load %arg7[%c0_127, %c0_128] : memref<2x128xf32, #tpu.memory_space<vmem>>, vector<2x128xf32>
    %260 = vector.extract_strided_slice %258 {offsets = [0, 0], sizes = [2, 128], strides = [1, 1]} : vector<2x512xf32> to vector<2x128xf32>
    %261 = arith.negf %260 : vector<2x128xf32>
    %262 = math.exp %261 : vector<2x128xf32>
    %cst_129 = arith.constant 1.000000e+00 : f32
    %263 = vector.broadcast %cst_129 : f32 to vector<2x128xf32>
    %264 = arith.addf %263, %262 : vector<2x128xf32>
    %265 = arith.divf %263, %264 : vector<2x128xf32>
    %266 = vector.extract_strided_slice %258 {offsets = [0, 128], sizes = [2, 128], strides = [1, 1]} : vector<2x512xf32> to vector<2x128xf32>
    %267 = arith.negf %266 : vector<2x128xf32>
    %268 = math.exp %267 : vector<2x128xf32>
    %cst_130 = arith.constant 1.000000e+00 : f32
    %269 = vector.broadcast %cst_130 : f32 to vector<2x128xf32>
    %270 = arith.addf %269, %268 : vector<2x128xf32>
    %271 = arith.divf %269, %270 : vector<2x128xf32>
    %272 = vector.extract_strided_slice %258 {offsets = [0, 256], sizes = [2, 128], strides = [1, 1]} : vector<2x512xf32> to vector<2x128xf32>
    %273 = math.tanh %272 : vector<2x128xf32>
    %274 = vector.extract_strided_slice %258 {offsets = [0, 384], sizes = [2, 128], strides = [1, 1]} : vector<2x512xf32> to vector<2x128xf32>
    %275 = arith.negf %274 : vector<2x128xf32>
    %276 = math.exp %275 : vector<2x128xf32>
    %cst_131 = arith.constant 1.000000e+00 : f32
    %277 = vector.broadcast %cst_131 : f32 to vector<2x128xf32>
    %278 = arith.addf %277, %276 : vector<2x128xf32>
    %279 = arith.divf %277, %278 : vector<2x128xf32>
    %280 = arith.mulf %271, %259 : vector<2x128xf32>
    %281 = arith.mulf %265, %273 : vector<2x128xf32>
    %282 = arith.addf %280, %281 : vector<2x128xf32>
    %283 = math.tanh %282 : vector<2x128xf32>
    %284 = arith.mulf %279, %283 : vector<2x128xf32>
    %c0_132 = arith.constant 0 : index
    %c0_133 = arith.constant 0 : index
    %285 = vector.load %arg6[%c0_132, %c0_133] : memref<2x128xf32, #tpu.memory_space<vmem>>, vector<2x128xf32>
    tpu.vector_store %arg6[%c0_132, %c0_133], %284 {strides = array<i32>} : memref<2x128xf32, #tpu.memory_space<vmem>>, vector<2x128xf32>,
    %c0_134 = arith.constant 0 : index
    %c0_135 = arith.constant 0 : index
    %286 = vector.load %arg7[%c0_134, %c0_135] : memref<2x128xf32, #tpu.memory_space<vmem>>, vector<2x128xf32>
    tpu.vector_store %arg7[%c0_134, %c0_135], %282 {strides = array<i32>} : memref<2x128xf32, #tpu.memory_space<vmem>>, vector<2x128xf32>,
    %287 = arith.index_cast %c3_i32 : i32 to index
    %c0_136 = arith.constant 0 : index
    %c0_137 = arith.constant 0 : index
    %288 = vector.load %arg4[%287, %c0_136, %c0_137] : memref<7x2x128xf32, #tpu.memory_space<vmem>>, vector<1x2x128xf32>
    %289 = vector.shape_cast %288 : vector<1x2x128xf32> to vector<2x128xf32>
    %290 = vector.shape_cast %284 : vector<2x128xf32> to vector<1x2x128xf32>
    tpu.vector_store %arg4[%287, %c0_136, %c0_137], %290 {strides = array<i32>} : memref<7x2x128xf32, #tpu.memory_space<vmem>>, vector<1x2x128xf32>,
    %c6_i32_138 = arith.constant 6 : i32
    %291 = arith.subi %c6_i32_138, %c3_i32 : i32
    %292 = arith.index_cast %291 : i32 to index
    %c0_139 = arith.constant 0 : index
    %c0_140 = arith.constant 0 : index
    %293 = vector.load %arg1[%292, %c0_139, %c0_140] : memref<7x2x1024xf32, #tpu.memory_space<vmem>>, vector<1x2x1024xf32>
    %294 = vector.shape_cast %293 : vector<1x2x1024xf32> to vector<2x1024xf32>
    %295 = vector.extract_strided_slice %294 {offsets = [0, 512], sizes = [2, 512], strides = [1, 1]} : vector<2x1024xf32> to vector<2x512xf32>
    %c0_141 = arith.constant 0 : index
    %c0_142 = arith.constant 0 : index
    %296 = vector.load %arg8[%c0_141, %c0_142] : memref<2x128xf32, #tpu.memory_space<vmem>>, vector<2x128xf32>
    %c0_143 = arith.constant 0 : index
    %c0_144 = arith.constant 0 : index
    %297 = vector.load %arg3[%c0_143, %c0_144] : memref<128x512xf32, #tpu.memory_space<vmem>>, vector<128x512xf32>
    %cst_145 = arith.constant dense<0.000000e+00> : vector<2x512xf32>
    %298 = tpu.matmul %296, %297, %cst_145 {dimension_numbers = #tpu.dot_dimension_numbers<[1], [0], [0], [1], [0, 0, 1, 1], [], []>} : vector<2x128xf32>, vector<128x512xf32>, vector<2x512xf32> -> vector<2x512xf32>
    %299 = arith.addf %295, %298 : vector<2x512xf32>
    %c0_146 = arith.constant 0 : index
    %c0_147 = arith.constant 0 : index
    %300 = vector.load %arg9[%c0_146, %c0_147] : memref<2x128xf32, #tpu.memory_space<vmem>>, vector<2x128xf32>
    %301 = vector.extract_strided_slice %299 {offsets = [0, 0], sizes = [2, 128], strides = [1, 1]} : vector<2x512xf32> to vector<2x128xf32>
    %302 = arith.negf %301 : vector<2x128xf32>
    %303 = math.exp %302 : vector<2x128xf32>
    %cst_148 = arith.constant 1.000000e+00 : f32
    %304 = vector.broadcast %cst_148 : f32 to vector<2x128xf32>
    %305 = arith.addf %304, %303 : vector<2x128xf32>
    %306 = arith.divf %304, %305 : vector<2x128xf32>
    %307 = vector.extract_strided_slice %299 {offsets = [0, 128], sizes = [2, 128], strides = [1, 1]} : vector<2x512xf32> to vector<2x128xf32>
    %308 = arith.negf %307 : vector<2x128xf32>
    %309 = math.exp %308 : vector<2x128xf32>
    %cst_149 = arith.constant 1.000000e+00 : f32
    %310 = vector.broadcast %cst_149 : f32 to vector<2x128xf32>
    %311 = arith.addf %310, %309 : vector<2x128xf32>
    %312 = arith.divf %310, %311 : vector<2x128xf32>
    %313 = vector.extract_strided_slice %299 {offsets = [0, 256], sizes = [2, 128], strides = [1, 1]} : vector<2x512xf32> to vector<2x128xf32>
    %314 = math.tanh %313 : vector<2x128xf32>
    %315 = vector.extract_strided_slice %299 {offsets = [0, 384], sizes = [2, 128], strides = [1, 1]} : vector<2x512xf32> to vector<2x128xf32>
    %316 = arith.negf %315 : vector<2x128xf32>
    %317 = math.exp %316 : vector<2x128xf32>
    %cst_150 = arith.constant 1.000000e+00 : f32
    %318 = vector.broadcast %cst_150 : f32 to vector<2x128xf32>
    %319 = arith.addf %318, %317 : vector<2x128xf32>
    %320 = arith.divf %318, %319 : vector<2x128xf32>
    %321 = arith.mulf %312, %300 : vector<2x128xf32>
    %322 = arith.mulf %306, %314 : vector<2x128xf32>
    %323 = arith.addf %321, %322 : vector<2x128xf32>
    %324 = math.tanh %323 : vector<2x128xf32>
    %325 = arith.mulf %320, %324 : vector<2x128xf32>
    %c0_151 = arith.constant 0 : index
    %c0_152 = arith.constant 0 : index
    %326 = vector.load %arg8[%c0_151, %c0_152] : memref<2x128xf32, #tpu.memory_space<vmem>>, vector<2x128xf32>
    tpu.vector_store %arg8[%c0_151, %c0_152], %325 {strides = array<i32>} : memref<2x128xf32, #tpu.memory_space<vmem>>, vector<2x128xf32>,
    %c0_153 = arith.constant 0 : index
    %c0_154 = arith.constant 0 : index
    %327 = vector.load %arg9[%c0_153, %c0_154] : memref<2x128xf32, #tpu.memory_space<vmem>>, vector<2x128xf32>
    tpu.vector_store %arg9[%c0_153, %c0_154], %323 {strides = array<i32>} : memref<2x128xf32, #tpu.memory_space<vmem>>, vector<2x128xf32>,
    %328 = arith.index_cast %291 : i32 to index
    %c0_155 = arith.constant 0 : index
    %c0_156 = arith.constant 0 : index
    %329 = vector.load %arg5[%328, %c0_155, %c0_156] : memref<7x2x128xf32, #tpu.memory_space<vmem>>, vector<1x2x128xf32>
    %330 = vector.shape_cast %329 : vector<1x2x128xf32> to vector<2x128xf32>
    %331 = vector.shape_cast %325 : vector<2x128xf32> to vector<1x2x128xf32>
    tpu.vector_store %arg5[%328, %c0_155, %c0_156], %331 {strides = array<i32>} : memref<7x2x128xf32, #tpu.memory_space<vmem>>, vector<1x2x128xf32>,
    %c4_i32 = arith.constant 4 : i32
    %332 = arith.index_cast %c4_i32 : i32 to index
    %c0_157 = arith.constant 0 : index
    %c0_158 = arith.constant 0 : index
    %333 = vector.load %arg1[%332, %c0_157, %c0_158] : memref<7x2x1024xf32, #tpu.memory_space<vmem>>, vector<1x2x1024xf32>
    %334 = vector.shape_cast %333 : vector<1x2x1024xf32> to vector<2x1024xf32>
    %335 = vector.extract_strided_slice %334 {offsets = [0, 0], sizes = [2, 512], strides = [1, 1]} : vector<2x1024xf32> to vector<2x512xf32>
    %c0_159 = arith.constant 0 : index
    %c0_160 = arith.constant 0 : index
    %336 = vector.load %arg6[%c0_159, %c0_160] : memref<2x128xf32, #tpu.memory_space<vmem>>, vector<2x128xf32>
    %c0_161 = arith.constant 0 : index
    %c0_162 = arith.constant 0 : index
    %337 = vector.load %arg2[%c0_161, %c0_162] : memref<128x512xf32, #tpu.memory_space<vmem>>, vector<128x512xf32>
    %cst_163 = arith.constant dense<0.000000e+00> : vector<2x512xf32>
    %338 = tpu.matmul %336, %337, %cst_163 {dimension_numbers = #tpu.dot_dimension_numbers<[1], [0], [0], [1], [0, 0, 1, 1], [], []>} : vector<2x128xf32>, vector<128x512xf32>, vector<2x512xf32> -> vector<2x512xf32>
    %339 = arith.addf %335, %338 : vector<2x512xf32>
    %c0_164 = arith.constant 0 : index
    %c0_165 = arith.constant 0 : index
    %340 = vector.load %arg7[%c0_164, %c0_165] : memref<2x128xf32, #tpu.memory_space<vmem>>, vector<2x128xf32>
    %341 = vector.extract_strided_slice %339 {offsets = [0, 0], sizes = [2, 128], strides = [1, 1]} : vector<2x512xf32> to vector<2x128xf32>
    %342 = arith.negf %341 : vector<2x128xf32>
    %343 = math.exp %342 : vector<2x128xf32>
    %cst_166 = arith.constant 1.000000e+00 : f32
    %344 = vector.broadcast %cst_166 : f32 to vector<2x128xf32>
    %345 = arith.addf %344, %343 : vector<2x128xf32>
    %346 = arith.divf %344, %345 : vector<2x128xf32>
    %347 = vector.extract_strided_slice %339 {offsets = [0, 128], sizes = [2, 128], strides = [1, 1]} : vector<2x512xf32> to vector<2x128xf32>
    %348 = arith.negf %347 : vector<2x128xf32>
    %349 = math.exp %348 : vector<2x128xf32>
    %cst_167 = arith.constant 1.000000e+00 : f32
    %350 = vector.broadcast %cst_167 : f32 to vector<2x128xf32>
    %351 = arith.addf %350, %349 : vector<2x128xf32>
    %352 = arith.divf %350, %351 : vector<2x128xf32>
    %353 = vector.extract_strided_slice %339 {offsets = [0, 256], sizes = [2, 128], strides = [1, 1]} : vector<2x512xf32> to vector<2x128xf32>
    %354 = math.tanh %353 : vector<2x128xf32>
    %355 = vector.extract_strided_slice %339 {offsets = [0, 384], sizes = [2, 128], strides = [1, 1]} : vector<2x512xf32> to vector<2x128xf32>
    %356 = arith.negf %355 : vector<2x128xf32>
    %357 = math.exp %356 : vector<2x128xf32>
    %cst_168 = arith.constant 1.000000e+00 : f32
    %358 = vector.broadcast %cst_168 : f32 to vector<2x128xf32>
    %359 = arith.addf %358, %357 : vector<2x128xf32>
    %360 = arith.divf %358, %359 : vector<2x128xf32>
    %361 = arith.mulf %352, %340 : vector<2x128xf32>
    %362 = arith.mulf %346, %354 : vector<2x128xf32>
    %363 = arith.addf %361, %362 : vector<2x128xf32>
    %364 = math.tanh %363 : vector<2x128xf32>
    %365 = arith.mulf %360, %364 : vector<2x128xf32>
    %c0_169 = arith.constant 0 : index
    %c0_170 = arith.constant 0 : index
    %366 = vector.load %arg6[%c0_169, %c0_170] : memref<2x128xf32, #tpu.memory_space<vmem>>, vector<2x128xf32>
    tpu.vector_store %arg6[%c0_169, %c0_170], %365 {strides = array<i32>} : memref<2x128xf32, #tpu.memory_space<vmem>>, vector<2x128xf32>,
    %c0_171 = arith.constant 0 : index
    %c0_172 = arith.constant 0 : index
    %367 = vector.load %arg7[%c0_171, %c0_172] : memref<2x128xf32, #tpu.memory_space<vmem>>, vector<2x128xf32>
    tpu.vector_store %arg7[%c0_171, %c0_172], %363 {strides = array<i32>} : memref<2x128xf32, #tpu.memory_space<vmem>>, vector<2x128xf32>,
    %368 = arith.index_cast %c4_i32 : i32 to index
    %c0_173 = arith.constant 0 : index
    %c0_174 = arith.constant 0 : index
    %369 = vector.load %arg4[%368, %c0_173, %c0_174] : memref<7x2x128xf32, #tpu.memory_space<vmem>>, vector<1x2x128xf32>
    %370 = vector.shape_cast %369 : vector<1x2x128xf32> to vector<2x128xf32>
    %371 = vector.shape_cast %365 : vector<2x128xf32> to vector<1x2x128xf32>
    tpu.vector_store %arg4[%368, %c0_173, %c0_174], %371 {strides = array<i32>} : memref<7x2x128xf32, #tpu.memory_space<vmem>>, vector<1x2x128xf32>,
    %c6_i32_175 = arith.constant 6 : i32
    %372 = arith.subi %c6_i32_175, %c4_i32 : i32
    %373 = arith.index_cast %372 : i32 to index
    %c0_176 = arith.constant 0 : index
    %c0_177 = arith.constant 0 : index
    %374 = vector.load %arg1[%373, %c0_176, %c0_177] : memref<7x2x1024xf32, #tpu.memory_space<vmem>>, vector<1x2x1024xf32>
    %375 = vector.shape_cast %374 : vector<1x2x1024xf32> to vector<2x1024xf32>
    %376 = vector.extract_strided_slice %375 {offsets = [0, 512], sizes = [2, 512], strides = [1, 1]} : vector<2x1024xf32> to vector<2x512xf32>
    %c0_178 = arith.constant 0 : index
    %c0_179 = arith.constant 0 : index
    %377 = vector.load %arg8[%c0_178, %c0_179] : memref<2x128xf32, #tpu.memory_space<vmem>>, vector<2x128xf32>
    %c0_180 = arith.constant 0 : index
    %c0_181 = arith.constant 0 : index
    %378 = vector.load %arg3[%c0_180, %c0_181] : memref<128x512xf32, #tpu.memory_space<vmem>>, vector<128x512xf32>
    %cst_182 = arith.constant dense<0.000000e+00> : vector<2x512xf32>
    %379 = tpu.matmul %377, %378, %cst_182 {dimension_numbers = #tpu.dot_dimension_numbers<[1], [0], [0], [1], [0, 0, 1, 1], [], []>} : vector<2x128xf32>, vector<128x512xf32>, vector<2x512xf32> -> vector<2x512xf32>
    %380 = arith.addf %376, %379 : vector<2x512xf32>
    %c0_183 = arith.constant 0 : index
    %c0_184 = arith.constant 0 : index
    %381 = vector.load %arg9[%c0_183, %c0_184] : memref<2x128xf32, #tpu.memory_space<vmem>>, vector<2x128xf32>
    %382 = vector.extract_strided_slice %380 {offsets = [0, 0], sizes = [2, 128], strides = [1, 1]} : vector<2x512xf32> to vector<2x128xf32>
    %383 = arith.negf %382 : vector<2x128xf32>
    %384 = math.exp %383 : vector<2x128xf32>
    %cst_185 = arith.constant 1.000000e+00 : f32
    %385 = vector.broadcast %cst_185 : f32 to vector<2x128xf32>
    %386 = arith.addf %385, %384 : vector<2x128xf32>
    %387 = arith.divf %385, %386 : vector<2x128xf32>
    %388 = vector.extract_strided_slice %380 {offsets = [0, 128], sizes = [2, 128], strides = [1, 1]} : vector<2x512xf32> to vector<2x128xf32>
    %389 = arith.negf %388 : vector<2x128xf32>
    %390 = math.exp %389 : vector<2x128xf32>
    %cst_186 = arith.constant 1.000000e+00 : f32
    %391 = vector.broadcast %cst_186 : f32 to vector<2x128xf32>
    %392 = arith.addf %391, %390 : vector<2x128xf32>
    %393 = arith.divf %391, %392 : vector<2x128xf32>
    %394 = vector.extract_strided_slice %380 {offsets = [0, 256], sizes = [2, 128], strides = [1, 1]} : vector<2x512xf32> to vector<2x128xf32>
    %395 = math.tanh %394 : vector<2x128xf32>
    %396 = vector.extract_strided_slice %380 {offsets = [0, 384], sizes = [2, 128], strides = [1, 1]} : vector<2x512xf32> to vector<2x128xf32>
    %397 = arith.negf %396 : vector<2x128xf32>
    %398 = math.exp %397 : vector<2x128xf32>
    %cst_187 = arith.constant 1.000000e+00 : f32
    %399 = vector.broadcast %cst_187 : f32 to vector<2x128xf32>
    %400 = arith.addf %399, %398 : vector<2x128xf32>
    %401 = arith.divf %399, %400 : vector<2x128xf32>
    %402 = arith.mulf %393, %381 : vector<2x128xf32>
    %403 = arith.mulf %387, %395 : vector<2x128xf32>
    %404 = arith.addf %402, %403 : vector<2x128xf32>
    %405 = math.tanh %404 : vector<2x128xf32>
    %406 = arith.mulf %401, %405 : vector<2x128xf32>
    %c0_188 = arith.constant 0 : index
    %c0_189 = arith.constant 0 : index
    %407 = vector.load %arg8[%c0_188, %c0_189] : memref<2x128xf32, #tpu.memory_space<vmem>>, vector<2x128xf32>
    tpu.vector_store %arg8[%c0_188, %c0_189], %406 {strides = array<i32>} : memref<2x128xf32, #tpu.memory_space<vmem>>, vector<2x128xf32>,
    %c0_190 = arith.constant 0 : index
    %c0_191 = arith.constant 0 : index
    %408 = vector.load %arg9[%c0_190, %c0_191] : memref<2x128xf32, #tpu.memory_space<vmem>>, vector<2x128xf32>
    tpu.vector_store %arg9[%c0_190, %c0_191], %404 {strides = array<i32>} : memref<2x128xf32, #tpu.memory_space<vmem>>, vector<2x128xf32>,
    %409 = arith.index_cast %372 : i32 to index
    %c0_192 = arith.constant 0 : index
    %c0_193 = arith.constant 0 : index
    %410 = vector.load %arg5[%409, %c0_192, %c0_193] : memref<7x2x128xf32, #tpu.memory_space<vmem>>, vector<1x2x128xf32>
    %411 = vector.shape_cast %410 : vector<1x2x128xf32> to vector<2x128xf32>
    %412 = vector.shape_cast %406 : vector<2x128xf32> to vector<1x2x128xf32>
    tpu.vector_store %arg5[%409, %c0_192, %c0_193], %412 {strides = array<i32>} : memref<7x2x128xf32, #tpu.memory_space<vmem>>, vector<1x2x128xf32>,
    %c5_i32 = arith.constant 5 : i32
    %413 = arith.index_cast %c5_i32 : i32 to index
    %c0_194 = arith.constant 0 : index
    %c0_195 = arith.constant 0 : index
    %414 = vector.load %arg1[%413, %c0_194, %c0_195] : memref<7x2x1024xf32, #tpu.memory_space<vmem>>, vector<1x2x1024xf32>
    %415 = vector.shape_cast %414 : vector<1x2x1024xf32> to vector<2x1024xf32>
    %416 = vector.extract_strided_slice %415 {offsets = [0, 0], sizes = [2, 512], strides = [1, 1]} : vector<2x1024xf32> to vector<2x512xf32>
    %c0_196 = arith.constant 0 : index
    %c0_197 = arith.constant 0 : index
    %417 = vector.load %arg6[%c0_196, %c0_197] : memref<2x128xf32, #tpu.memory_space<vmem>>, vector<2x128xf32>
    %c0_198 = arith.constant 0 : index
    %c0_199 = arith.constant 0 : index
    %418 = vector.load %arg2[%c0_198, %c0_199] : memref<128x512xf32, #tpu.memory_space<vmem>>, vector<128x512xf32>
    %cst_200 = arith.constant dense<0.000000e+00> : vector<2x512xf32>
    %419 = tpu.matmul %417, %418, %cst_200 {dimension_numbers = #tpu.dot_dimension_numbers<[1], [0], [0], [1], [0, 0, 1, 1], [], []>} : vector<2x128xf32>, vector<128x512xf32>, vector<2x512xf32> -> vector<2x512xf32>
    %420 = arith.addf %416, %419 : vector<2x512xf32>
    %c0_201 = arith.constant 0 : index
    %c0_202 = arith.constant 0 : index
    %421 = vector.load %arg7[%c0_201, %c0_202] : memref<2x128xf32, #tpu.memory_space<vmem>>, vector<2x128xf32>
    %422 = vector.extract_strided_slice %420 {offsets = [0, 0], sizes = [2, 128], strides = [1, 1]} : vector<2x512xf32> to vector<2x128xf32>
    %423 = arith.negf %422 : vector<2x128xf32>
    %424 = math.exp %423 : vector<2x128xf32>
    %cst_203 = arith.constant 1.000000e+00 : f32
    %425 = vector.broadcast %cst_203 : f32 to vector<2x128xf32>
    %426 = arith.addf %425, %424 : vector<2x128xf32>
    %427 = arith.divf %425, %426 : vector<2x128xf32>
    %428 = vector.extract_strided_slice %420 {offsets = [0, 128], sizes = [2, 128], strides = [1, 1]} : vector<2x512xf32> to vector<2x128xf32>
    %429 = arith.negf %428 : vector<2x128xf32>
    %430 = math.exp %429 : vector<2x128xf32>
    %cst_204 = arith.constant 1.000000e+00 : f32
    %431 = vector.broadcast %cst_204 : f32 to vector<2x128xf32>
    %432 = arith.addf %431, %430 : vector<2x128xf32>
    %433 = arith.divf %431, %432 : vector<2x128xf32>
    %434 = vector.extract_strided_slice %420 {offsets = [0, 256], sizes = [2, 128], strides = [1, 1]} : vector<2x512xf32> to vector<2x128xf32>
    %435 = math.tanh %434 : vector<2x128xf32>
    %436 = vector.extract_strided_slice %420 {offsets = [0, 384], sizes = [2, 128], strides = [1, 1]} : vector<2x512xf32> to vector<2x128xf32>
    %437 = arith.negf %436 : vector<2x128xf32>
    %438 = math.exp %437 : vector<2x128xf32>
    %cst_205 = arith.constant 1.000000e+00 : f32
    %439 = vector.broadcast %cst_205 : f32 to vector<2x128xf32>
    %440 = arith.addf %439, %438 : vector<2x128xf32>
    %441 = arith.divf %439, %440 : vector<2x128xf32>
    %442 = arith.mulf %433, %421 : vector<2x128xf32>
    %443 = arith.mulf %427, %435 : vector<2x128xf32>
    %444 = arith.addf %442, %443 : vector<2x128xf32>
    %445 = math.tanh %444 : vector<2x128xf32>
    %446 = arith.mulf %441, %445 : vector<2x128xf32>
    %c0_206 = arith.constant 0 : index
    %c0_207 = arith.constant 0 : index
    %447 = vector.load %arg6[%c0_206, %c0_207] : memref<2x128xf32, #tpu.memory_space<vmem>>, vector<2x128xf32>
    tpu.vector_store %arg6[%c0_206, %c0_207], %446 {strides = array<i32>} : memref<2x128xf32, #tpu.memory_space<vmem>>, vector<2x128xf32>,
    %c0_208 = arith.constant 0 : index
    %c0_209 = arith.constant 0 : index
    %448 = vector.load %arg7[%c0_208, %c0_209] : memref<2x128xf32, #tpu.memory_space<vmem>>, vector<2x128xf32>
    tpu.vector_store %arg7[%c0_208, %c0_209], %444 {strides = array<i32>} : memref<2x128xf32, #tpu.memory_space<vmem>>, vector<2x128xf32>,
    %449 = arith.index_cast %c5_i32 : i32 to index
    %c0_210 = arith.constant 0 : index
    %c0_211 = arith.constant 0 : index
    %450 = vector.load %arg4[%449, %c0_210, %c0_211] : memref<7x2x128xf32, #tpu.memory_space<vmem>>, vector<1x2x128xf32>
    %451 = vector.shape_cast %450 : vector<1x2x128xf32> to vector<2x128xf32>
    %452 = vector.shape_cast %446 : vector<2x128xf32> to vector<1x2x128xf32>
    tpu.vector_store %arg4[%449, %c0_210, %c0_211], %452 {strides = array<i32>} : memref<7x2x128xf32, #tpu.memory_space<vmem>>, vector<1x2x128xf32>,
    %c6_i32_212 = arith.constant 6 : i32
    %453 = arith.subi %c6_i32_212, %c5_i32 : i32
    %454 = arith.index_cast %453 : i32 to index
    %c0_213 = arith.constant 0 : index
    %c0_214 = arith.constant 0 : index
    %455 = vector.load %arg1[%454, %c0_213, %c0_214] : memref<7x2x1024xf32, #tpu.memory_space<vmem>>, vector<1x2x1024xf32>
    %456 = vector.shape_cast %455 : vector<1x2x1024xf32> to vector<2x1024xf32>
    %457 = vector.extract_strided_slice %456 {offsets = [0, 512], sizes = [2, 512], strides = [1, 1]} : vector<2x1024xf32> to vector<2x512xf32>
    %c0_215 = arith.constant 0 : index
    %c0_216 = arith.constant 0 : index
    %458 = vector.load %arg8[%c0_215, %c0_216] : memref<2x128xf32, #tpu.memory_space<vmem>>, vector<2x128xf32>
    %c0_217 = arith.constant 0 : index
    %c0_218 = arith.constant 0 : index
    %459 = vector.load %arg3[%c0_217, %c0_218] : memref<128x512xf32, #tpu.memory_space<vmem>>, vector<128x512xf32>
    %cst_219 = arith.constant dense<0.000000e+00> : vector<2x512xf32>
    %460 = tpu.matmul %458, %459, %cst_219 {dimension_numbers = #tpu.dot_dimension_numbers<[1], [0], [0], [1], [0, 0, 1, 1], [], []>} : vector<2x128xf32>, vector<128x512xf32>, vector<2x512xf32> -> vector<2x512xf32>
    %461 = arith.addf %457, %460 : vector<2x512xf32>
    %c0_220 = arith.constant 0 : index
    %c0_221 = arith.constant 0 : index
    %462 = vector.load %arg9[%c0_220, %c0_221] : memref<2x128xf32, #tpu.memory_space<vmem>>, vector<2x128xf32>
    %463 = vector.extract_strided_slice %461 {offsets = [0, 0], sizes = [2, 128], strides = [1, 1]} : vector<2x512xf32> to vector<2x128xf32>
    %464 = arith.negf %463 : vector<2x128xf32>
    %465 = math.exp %464 : vector<2x128xf32>
    %cst_222 = arith.constant 1.000000e+00 : f32
    %466 = vector.broadcast %cst_222 : f32 to vector<2x128xf32>
    %467 = arith.addf %466, %465 : vector<2x128xf32>
    %468 = arith.divf %466, %467 : vector<2x128xf32>
    %469 = vector.extract_strided_slice %461 {offsets = [0, 128], sizes = [2, 128], strides = [1, 1]} : vector<2x512xf32> to vector<2x128xf32>
    %470 = arith.negf %469 : vector<2x128xf32>
    %471 = math.exp %470 : vector<2x128xf32>
    %cst_223 = arith.constant 1.000000e+00 : f32
    %472 = vector.broadcast %cst_223 : f32 to vector<2x128xf32>
    %473 = arith.addf %472, %471 : vector<2x128xf32>
    %474 = arith.divf %472, %473 : vector<2x128xf32>
    %475 = vector.extract_strided_slice %461 {offsets = [0, 256], sizes = [2, 128], strides = [1, 1]} : vector<2x512xf32> to vector<2x128xf32>
    %476 = math.tanh %475 : vector<2x128xf32>
    %477 = vector.extract_strided_slice %461 {offsets = [0, 384], sizes = [2, 128], strides = [1, 1]} : vector<2x512xf32> to vector<2x128xf32>
    %478 = arith.negf %477 : vector<2x128xf32>
    %479 = math.exp %478 : vector<2x128xf32>
    %cst_224 = arith.constant 1.000000e+00 : f32
    %480 = vector.broadcast %cst_224 : f32 to vector<2x128xf32>
    %481 = arith.addf %480, %479 : vector<2x128xf32>
    %482 = arith.divf %480, %481 : vector<2x128xf32>
    %483 = arith.mulf %474, %462 : vector<2x128xf32>
    %484 = arith.mulf %468, %476 : vector<2x128xf32>
    %485 = arith.addf %483, %484 : vector<2x128xf32>
    %486 = math.tanh %485 : vector<2x128xf32>
    %487 = arith.mulf %482, %486 : vector<2x128xf32>
    %c0_225 = arith.constant 0 : index
    %c0_226 = arith.constant 0 : index
    %488 = vector.load %arg8[%c0_225, %c0_226] : memref<2x128xf32, #tpu.memory_space<vmem>>, vector<2x128xf32>
    tpu.vector_store %arg8[%c0_225, %c0_226], %487 {strides = array<i32>} : memref<2x128xf32, #tpu.memory_space<vmem>>, vector<2x128xf32>,
    %c0_227 = arith.constant 0 : index
    %c0_228 = arith.constant 0 : index
    %489 = vector.load %arg9[%c0_227, %c0_228] : memref<2x128xf32, #tpu.memory_space<vmem>>, vector<2x128xf32>
    tpu.vector_store %arg9[%c0_227, %c0_228], %485 {strides = array<i32>} : memref<2x128xf32, #tpu.memory_space<vmem>>, vector<2x128xf32>,
    %490 = arith.index_cast %453 : i32 to index
    %c0_229 = arith.constant 0 : index
    %c0_230 = arith.constant 0 : index
    %491 = vector.load %arg5[%490, %c0_229, %c0_230] : memref<7x2x128xf32, #tpu.memory_space<vmem>>, vector<1x2x128xf32>
    %492 = vector.shape_cast %491 : vector<1x2x128xf32> to vector<2x128xf32>
    %493 = vector.shape_cast %487 : vector<2x128xf32> to vector<1x2x128xf32>
    tpu.vector_store %arg5[%490, %c0_229, %c0_230], %493 {strides = array<i32>} : memref<7x2x128xf32, #tpu.memory_space<vmem>>, vector<1x2x128xf32>,
    %c6_i32_231 = arith.constant 6 : i32
    %494 = arith.index_cast %c6_i32_231 : i32 to index
    %c0_232 = arith.constant 0 : index
    %c0_233 = arith.constant 0 : index
    %495 = vector.load %arg1[%494, %c0_232, %c0_233] : memref<7x2x1024xf32, #tpu.memory_space<vmem>>, vector<1x2x1024xf32>
    %496 = vector.shape_cast %495 : vector<1x2x1024xf32> to vector<2x1024xf32>
    %497 = vector.extract_strided_slice %496 {offsets = [0, 0], sizes = [2, 512], strides = [1, 1]} : vector<2x1024xf32> to vector<2x512xf32>
    %c0_234 = arith.constant 0 : index
    %c0_235 = arith.constant 0 : index
    %498 = vector.load %arg6[%c0_234, %c0_235] : memref<2x128xf32, #tpu.memory_space<vmem>>, vector<2x128xf32>
    %c0_236 = arith.constant 0 : index
    %c0_237 = arith.constant 0 : index
    %499 = vector.load %arg2[%c0_236, %c0_237] : memref<128x512xf32, #tpu.memory_space<vmem>>, vector<128x512xf32>
    %cst_238 = arith.constant dense<0.000000e+00> : vector<2x512xf32>
    %500 = tpu.matmul %498, %499, %cst_238 {dimension_numbers = #tpu.dot_dimension_numbers<[1], [0], [0], [1], [0, 0, 1, 1], [], []>} : vector<2x128xf32>, vector<128x512xf32>, vector<2x512xf32> -> vector<2x512xf32>
    %501 = arith.addf %497, %500 : vector<2x512xf32>
    %c0_239 = arith.constant 0 : index
    %c0_240 = arith.constant 0 : index
    %502 = vector.load %arg7[%c0_239, %c0_240] : memref<2x128xf32, #tpu.memory_space<vmem>>, vector<2x128xf32>
    %503 = vector.extract_strided_slice %501 {offsets = [0, 0], sizes = [2, 128], strides = [1, 1]} : vector<2x512xf32> to vector<2x128xf32>
    %504 = arith.negf %503 : vector<2x128xf32>
    %505 = math.exp %504 : vector<2x128xf32>
    %cst_241 = arith.constant 1.000000e+00 : f32
    %506 = vector.broadcast %cst_241 : f32 to vector<2x128xf32>
    %507 = arith.addf %506, %505 : vector<2x128xf32>
    %508 = arith.divf %506, %507 : vector<2x128xf32>
    %509 = vector.extract_strided_slice %501 {offsets = [0, 128], sizes = [2, 128], strides = [1, 1]} : vector<2x512xf32> to vector<2x128xf32>
    %510 = arith.negf %509 : vector<2x128xf32>
    %511 = math.exp %510 : vector<2x128xf32>
    %cst_242 = arith.constant 1.000000e+00 : f32
    %512 = vector.broadcast %cst_242 : f32 to vector<2x128xf32>
    %513 = arith.addf %512, %511 : vector<2x128xf32>
    %514 = arith.divf %512, %513 : vector<2x128xf32>
    %515 = vector.extract_strided_slice %501 {offsets = [0, 256], sizes = [2, 128], strides = [1, 1]} : vector<2x512xf32> to vector<2x128xf32>
    %516 = math.tanh %515 : vector<2x128xf32>
    %517 = vector.extract_strided_slice %501 {offsets = [0, 384], sizes = [2, 128], strides = [1, 1]} : vector<2x512xf32> to vector<2x128xf32>
    %518 = arith.negf %517 : vector<2x128xf32>
    %519 = math.exp %518 : vector<2x128xf32>
    %cst_243 = arith.constant 1.000000e+00 : f32
    %520 = vector.broadcast %cst_243 : f32 to vector<2x128xf32>
    %521 = arith.addf %520, %519 : vector<2x128xf32>
    %522 = arith.divf %520, %521 : vector<2x128xf32>
    %523 = arith.mulf %514, %502 : vector<2x128xf32>
    %524 = arith.mulf %508, %516 : vector<2x128xf32>
    %525 = arith.addf %523, %524 : vector<2x128xf32>
    %526 = math.tanh %525 : vector<2x128xf32>
    %527 = arith.mulf %522, %526 : vector<2x128xf32>
    %c0_244 = arith.constant 0 : index
    %c0_245 = arith.constant 0 : index
    %528 = vector.load %arg6[%c0_244, %c0_245] : memref<2x128xf32, #tpu.memory_space<vmem>>, vector<2x128xf32>
    tpu.vector_store %arg6[%c0_244, %c0_245], %527 {strides = array<i32>} : memref<2x128xf32, #tpu.memory_space<vmem>>, vector<2x128xf32>,
    %c0_246 = arith.constant 0 : index
    %c0_247 = arith.constant 0 : index
    %529 = vector.load %arg7[%c0_246, %c0_247] : memref<2x128xf32, #tpu.memory_space<vmem>>, vector<2x128xf32>
    tpu.vector_store %arg7[%c0_246, %c0_247], %525 {strides = array<i32>} : memref<2x128xf32, #tpu.memory_space<vmem>>, vector<2x128xf32>,
    %530 = arith.index_cast %c6_i32_231 : i32 to index
    %c0_248 = arith.constant 0 : index
    %c0_249 = arith.constant 0 : index
    %531 = vector.load %arg4[%530, %c0_248, %c0_249] : memref<7x2x128xf32, #tpu.memory_space<vmem>>, vector<1x2x128xf32>
    %532 = vector.shape_cast %531 : vector<1x2x128xf32> to vector<2x128xf32>
    %533 = vector.shape_cast %527 : vector<2x128xf32> to vector<1x2x128xf32>
    tpu.vector_store %arg4[%530, %c0_248, %c0_249], %533 {strides = array<i32>} : memref<7x2x128xf32, #tpu.memory_space<vmem>>, vector<1x2x128xf32>,
    %c6_i32_250 = arith.constant 6 : i32
    %534 = arith.subi %c6_i32_250, %c6_i32_231 : i32
    %535 = arith.index_cast %534 : i32 to index
    %c0_251 = arith.constant 0 : index
    %c0_252 = arith.constant 0 : index
    %536 = vector.load %arg1[%535, %c0_251, %c0_252] : memref<7x2x1024xf32, #tpu.memory_space<vmem>>, vector<1x2x1024xf32>
    %537 = vector.shape_cast %536 : vector<1x2x1024xf32> to vector<2x1024xf32>
    %538 = vector.extract_strided_slice %537 {offsets = [0, 512], sizes = [2, 512], strides = [1, 1]} : vector<2x1024xf32> to vector<2x512xf32>
    %c0_253 = arith.constant 0 : index
    %c0_254 = arith.constant 0 : index
    %539 = vector.load %arg8[%c0_253, %c0_254] : memref<2x128xf32, #tpu.memory_space<vmem>>, vector<2x128xf32>
    %c0_255 = arith.constant 0 : index
    %c0_256 = arith.constant 0 : index
    %540 = vector.load %arg3[%c0_255, %c0_256] : memref<128x512xf32, #tpu.memory_space<vmem>>, vector<128x512xf32>
    %cst_257 = arith.constant dense<0.000000e+00> : vector<2x512xf32>
    %541 = tpu.matmul %539, %540, %cst_257 {dimension_numbers = #tpu.dot_dimension_numbers<[1], [0], [0], [1], [0, 0, 1, 1], [], []>} : vector<2x128xf32>, vector<128x512xf32>, vector<2x512xf32> -> vector<2x512xf32>
    %542 = arith.addf %538, %541 : vector<2x512xf32>
    %c0_258 = arith.constant 0 : index
    %c0_259 = arith.constant 0 : index
    %543 = vector.load %arg9[%c0_258, %c0_259] : memref<2x128xf32, #tpu.memory_space<vmem>>, vector<2x128xf32>
    %544 = vector.extract_strided_slice %542 {offsets = [0, 0], sizes = [2, 128], strides = [1, 1]} : vector<2x512xf32> to vector<2x128xf32>
    %545 = arith.negf %544 : vector<2x128xf32>
    %546 = math.exp %545 : vector<2x128xf32>
    %cst_260 = arith.constant 1.000000e+00 : f32
    %547 = vector.broadcast %cst_260 : f32 to vector<2x128xf32>
    %548 = arith.addf %547, %546 : vector<2x128xf32>
    %549 = arith.divf %547, %548 : vector<2x128xf32>
    %550 = vector.extract_strided_slice %542 {offsets = [0, 128], sizes = [2, 128], strides = [1, 1]} : vector<2x512xf32> to vector<2x128xf32>
    %551 = arith.negf %550 : vector<2x128xf32>
    %552 = math.exp %551 : vector<2x128xf32>
    %cst_261 = arith.constant 1.000000e+00 : f32
    %553 = vector.broadcast %cst_261 : f32 to vector<2x128xf32>
    %554 = arith.addf %553, %552 : vector<2x128xf32>
    %555 = arith.divf %553, %554 : vector<2x128xf32>
    %556 = vector.extract_strided_slice %542 {offsets = [0, 256], sizes = [2, 128], strides = [1, 1]} : vector<2x512xf32> to vector<2x128xf32>
    %557 = math.tanh %556 : vector<2x128xf32>
    %558 = vector.extract_strided_slice %542 {offsets = [0, 384], sizes = [2, 128], strides = [1, 1]} : vector<2x512xf32> to vector<2x128xf32>
    %559 = arith.negf %558 : vector<2x128xf32>
    %560 = math.exp %559 : vector<2x128xf32>
    %cst_262 = arith.constant 1.000000e+00 : f32
    %561 = vector.broadcast %cst_262 : f32 to vector<2x128xf32>
    %562 = arith.addf %561, %560 : vector<2x128xf32>
    %563 = arith.divf %561, %562 : vector<2x128xf32>
    %564 = arith.mulf %555, %543 : vector<2x128xf32>
    %565 = arith.mulf %549, %557 : vector<2x128xf32>
    %566 = arith.addf %564, %565 : vector<2x128xf32>
    %567 = math.tanh %566 : vector<2x128xf32>
    %568 = arith.mulf %563, %567 : vector<2x128xf32>
    %c0_263 = arith.constant 0 : index
    %c0_264 = arith.constant 0 : index
    %569 = vector.load %arg8[%c0_263, %c0_264] : memref<2x128xf32, #tpu.memory_space<vmem>>, vector<2x128xf32>
    tpu.vector_store %arg8[%c0_263, %c0_264], %568 {strides = array<i32>} : memref<2x128xf32, #tpu.memory_space<vmem>>, vector<2x128xf32>,
    %c0_265 = arith.constant 0 : index
    %c0_266 = arith.constant 0 : index
    %570 = vector.load %arg9[%c0_265, %c0_266] : memref<2x128xf32, #tpu.memory_space<vmem>>, vector<2x128xf32>
    tpu.vector_store %arg9[%c0_265, %c0_266], %566 {strides = array<i32>} : memref<2x128xf32, #tpu.memory_space<vmem>>, vector<2x128xf32>,
    %571 = arith.index_cast %534 : i32 to index
    %c0_267 = arith.constant 0 : index
    %c0_268 = arith.constant 0 : index
    %572 = vector.load %arg5[%571, %c0_267, %c0_268] : memref<7x2x128xf32, #tpu.memory_space<vmem>>, vector<1x2x128xf32>
    %573 = vector.shape_cast %572 : vector<1x2x128xf32> to vector<2x128xf32>
    %574 = vector.shape_cast %568 : vector<2x128xf32> to vector<1x2x128xf32>
    tpu.vector_store %arg5[%571, %c0_267, %c0_268], %574 {strides = array<i32>} : memref<7x2x128xf32, #tpu.memory_space<vmem>>, vector<1x2x128xf32>,
    %c7_i32 = arith.constant 7 : i32
    return
  }
  func.func @transform_0(%arg0: i32) -> (i32, i32, i32) {
    %c0_i32 = arith.constant 0 : i32
    %c0_i32_0 = arith.constant 0 : i32
    %c0_i32_1 = arith.constant 0 : i32
    %c0_i32_2 = arith.constant 0 : i32
    return %c0_i32, %c0_i32_0, %c0_i32_1 : i32, i32, i32
  }
  func.func @transform_1(%arg0: i32) -> (i32, i32) {
    %c0_i32 = arith.constant 0 : i32
    %c0_i32_0 = arith.constant 0 : i32
    %c0_i32_1 = arith.constant 0 : i32
    return %c0_i32, %c0_i32_0 : i32, i32
  }
  func.func @transform_2(%arg0: i32) -> (i32, i32) {
    %c0_i32 = arith.constant 0 : i32
    %c0_i32_0 = arith.constant 0 : i32
    %c0_i32_1 = arith.constant 0 : i32
    return %c0_i32, %c0_i32_0 : i32, i32
  }
  func.func @transform_3(%arg0: i32) -> (i32, i32, i32) {
    %c0_i32 = arith.constant 0 : i32
    %c0_i32_0 = arith.constant 0 : i32
    %c0_i32_1 = arith.constant 0 : i32
    %c0_i32_2 = arith.constant 0 : i32
    return %c0_i32, %c0_i32_0, %c0_i32_1 : i32, i32, i32
  }
  func.func @transform_4(%arg0: i32) -> (i32, i32, i32) {
    %c0_i32 = arith.constant 0 : i32
    %c0_i32_0 = arith.constant 0 : i32
    %c0_i32_1 = arith.constant 0 : i32
    %c0_i32_2 = arith.constant 0 : i32
    return %c0_i32, %c0_i32_0, %c0_i32_1 : i32, i32, i32
  }
}

module attributes {stable_mosaic.version = 11 : i64} {
  func.func @_matmul_bias_kernel(%arg0: i32, %arg1: i32, %arg2: i32, %arg3: memref<16x256xbf16, #tpu.memory_space<vmem>>, %arg4: memref<256x128xbf16, #tpu.memory_space<vmem>>, %arg5: memref<1x128xf32, #tpu.memory_space<vmem>>, %arg6: memref<16x128xf32, #tpu.memory_space<vmem>>, %arg7: memref<16x128xf32, #tpu.memory_space<vmem>>) attributes {dimension_semantics = [#tpu.dimension_semantics<parallel>, #tpu.dimension_semantics<parallel>, #tpu.dimension_semantics<arbitrary>], iteration_bounds = array<i64: 1, 1, 1>, scalar_prefetch = 0 : i64, scratch_operands = 1 : i64, tpu.core_type = #tpu.core_type<tc>, window_params = [{transform_indices = @transform_0, window_bounds = array<i64: 16, 256>}, {transform_indices = @transform_1, window_bounds = array<i64: 256, 128>}, {transform_indices = @transform_2, window_bounds = array<i64: 1, 128>}, {transform_indices = @transform_3, window_bounds = array<i64: 16, 128>}]} {
    %c0_i32 = arith.constant 0 : i32
    %0 = arith.cmpi eq, %arg2, %c0_i32 : i32
    %1 = arith.extui %0 : i1 to i32
    %c0_i32_0 = arith.constant 0 : i32
    %2 = arith.cmpi ne, %1, %c0_i32_0 : i32
    scf.if %2 {
      %cst_10 = arith.constant 0.000000e+00 : f32
      %12 = vector.broadcast %cst_10 : f32 to vector<16x128xf32>
      %c0_11 = arith.constant 0 : index
      %c0_12 = arith.constant 0 : index
      %13 = vector.load %arg7[%c0_11, %c0_12] : memref<16x128xf32, #tpu.memory_space<vmem>>, vector<16x128xf32>
      tpu.vector_store %arg7[%c0_11, %c0_12], %12 {strides = array<i32>} : memref<16x128xf32, #tpu.memory_space<vmem>>, vector<16x128xf32>,
    } else {
    }
    %c0 = arith.constant 0 : index
    %c0_1 = arith.constant 0 : index
    %3 = vector.load %arg7[%c0, %c0_1] : memref<16x128xf32, #tpu.memory_space<vmem>>, vector<16x128xf32>
    %c0_2 = arith.constant 0 : index
    %c0_3 = arith.constant 0 : index
    %4 = vector.load %arg3[%c0_2, %c0_3] : memref<16x256xbf16, #tpu.memory_space<vmem>>, vector<16x256xbf16>
    %c0_4 = arith.constant 0 : index
    %c0_5 = arith.constant 0 : index
    %5 = vector.load %arg4[%c0_4, %c0_5] : memref<256x128xbf16, #tpu.memory_space<vmem>>, vector<256x128xbf16>
    %cst = arith.constant dense<0.000000e+00> : vector<16x128xf32>
    %6 = tpu.matmul %4, %5, %cst {dimension_numbers = #tpu.dot_dimension_numbers<[1], [0], [0], [1], [0, 0, 1, 1], [], []>} : vector<16x256xbf16>, vector<256x128xbf16>, vector<16x128xf32> -> vector<16x128xf32>
    %7 = arith.addf %3, %6 : vector<16x128xf32>
    %c0_6 = arith.constant 0 : index
    %c0_7 = arith.constant 0 : index
    %8 = vector.load %arg7[%c0_6, %c0_7] : memref<16x128xf32, #tpu.memory_space<vmem>>, vector<16x128xf32>
    tpu.vector_store %arg7[%c0_6, %c0_7], %7 {strides = array<i32>} : memref<16x128xf32, #tpu.memory_space<vmem>>, vector<16x128xf32>,
    %c0_i32_8 = arith.constant 0 : i32
    %9 = arith.cmpi eq, %arg2, %c0_i32_8 : i32
    %10 = arith.extui %9 : i1 to i32
    %c0_i32_9 = arith.constant 0 : i32
    %11 = arith.cmpi ne, %10, %c0_i32_9 : i32
    scf.if %11 {
      %c0_10 = arith.constant 0 : index
      %c0_11 = arith.constant 0 : index
      %12 = vector.load %arg7[%c0_10, %c0_11] : memref<16x128xf32, #tpu.memory_space<vmem>>, vector<16x128xf32>
      %c0_12 = arith.constant 0 : index
      %c0_13 = arith.constant 0 : index
      %13 = vector.load %arg5[%c0_12, %c0_13] : memref<1x128xf32, #tpu.memory_space<vmem>>, vector<1x128xf32>
      %14 = vector.broadcast %13 : vector<1x128xf32> to vector<16x128xf32>
      %15 = arith.addf %12, %14 : vector<16x128xf32>
      %c0_14 = arith.constant 0 : index
      %c0_15 = arith.constant 0 : index
      %16 = vector.load %arg6[%c0_14, %c0_15] : memref<16x128xf32, #tpu.memory_space<vmem>>, vector<16x128xf32>
      tpu.vector_store %arg6[%c0_14, %c0_15], %15 {strides = array<i32>} : memref<16x128xf32, #tpu.memory_space<vmem>>, vector<16x128xf32>,
    } else {
    }
    return
  }
  func.func @transform_0(%arg0: i32, %arg1: i32, %arg2: i32) -> (i32, i32) {
    %c0_i32 = arith.constant 0 : i32
    return %arg0, %arg2 : i32, i32
  }
  func.func @transform_1(%arg0: i32, %arg1: i32, %arg2: i32) -> (i32, i32) {
    %c0_i32 = arith.constant 0 : i32
    return %arg2, %arg1 : i32, i32
  }
  func.func @transform_2(%arg0: i32, %arg1: i32, %arg2: i32) -> (i32, i32) {
    %c0_i32 = arith.constant 0 : i32
    %c0_i32_0 = arith.constant 0 : i32
    return %c0_i32, %arg1 : i32, i32
  }
  func.func @transform_3(%arg0: i32, %arg1: i32, %arg2: i32) -> (i32, i32) {
    %c0_i32 = arith.constant 0 : i32
    return %arg0, %arg1 : i32, i32
  }
}

module attributes {stable_mosaic.version = 11 : i64} {
  func.func @_matmul_bias_kernel(%arg0: i32, %arg1: i32, %arg2: i32, %arg3: memref<16x128xbf16, #tpu.memory_space<vmem>>, %arg4: memref<128x128xbf16, #tpu.memory_space<vmem>>, %arg5: memref<1x128xf32, #tpu.memory_space<vmem>>, %arg6: memref<16x128xf32, #tpu.memory_space<vmem>>, %arg7: memref<16x128xf32, #tpu.memory_space<vmem>>) attributes {dimension_semantics = [#tpu.dimension_semantics<parallel>, #tpu.dimension_semantics<parallel>, #tpu.dimension_semantics<arbitrary>], iteration_bounds = array<i64: 1, 1, 1>, scalar_prefetch = 0 : i64, scratch_operands = 1 : i64, tpu.core_type = #tpu.core_type<tc>, window_params = [{transform_indices = @transform_0, window_bounds = array<i64: 16, 128>}, {transform_indices = @transform_1, window_bounds = array<i64: 128, 128>}, {transform_indices = @transform_2, window_bounds = array<i64: 1, 128>}, {transform_indices = @transform_3, window_bounds = array<i64: 16, 128>}]} {
    %c0_i32 = arith.constant 0 : i32
    %0 = arith.cmpi eq, %arg2, %c0_i32 : i32
    %1 = arith.extui %0 : i1 to i32
    %c0_i32_0 = arith.constant 0 : i32
    %2 = arith.cmpi ne, %1, %c0_i32_0 : i32
    scf.if %2 {
      %cst_10 = arith.constant 0.000000e+00 : f32
      %12 = vector.broadcast %cst_10 : f32 to vector<16x128xf32>
      %c0_11 = arith.constant 0 : index
      %c0_12 = arith.constant 0 : index
      %13 = vector.load %arg7[%c0_11, %c0_12] : memref<16x128xf32, #tpu.memory_space<vmem>>, vector<16x128xf32>
      tpu.vector_store %arg7[%c0_11, %c0_12], %12 {strides = array<i32>} : memref<16x128xf32, #tpu.memory_space<vmem>>, vector<16x128xf32>,
    } else {
    }
    %c0 = arith.constant 0 : index
    %c0_1 = arith.constant 0 : index
    %3 = vector.load %arg7[%c0, %c0_1] : memref<16x128xf32, #tpu.memory_space<vmem>>, vector<16x128xf32>
    %c0_2 = arith.constant 0 : index
    %c0_3 = arith.constant 0 : index
    %4 = vector.load %arg3[%c0_2, %c0_3] : memref<16x128xbf16, #tpu.memory_space<vmem>>, vector<16x128xbf16>
    %c0_4 = arith.constant 0 : index
    %c0_5 = arith.constant 0 : index
    %5 = vector.load %arg4[%c0_4, %c0_5] : memref<128x128xbf16, #tpu.memory_space<vmem>>, vector<128x128xbf16>
    %cst = arith.constant dense<0.000000e+00> : vector<16x128xf32>
    %6 = tpu.matmul %4, %5, %cst {dimension_numbers = #tpu.dot_dimension_numbers<[1], [0], [0], [1], [0, 0, 1, 1], [], []>} : vector<16x128xbf16>, vector<128x128xbf16>, vector<16x128xf32> -> vector<16x128xf32>
    %7 = arith.addf %3, %6 : vector<16x128xf32>
    %c0_6 = arith.constant 0 : index
    %c0_7 = arith.constant 0 : index
    %8 = vector.load %arg7[%c0_6, %c0_7] : memref<16x128xf32, #tpu.memory_space<vmem>>, vector<16x128xf32>
    tpu.vector_store %arg7[%c0_6, %c0_7], %7 {strides = array<i32>} : memref<16x128xf32, #tpu.memory_space<vmem>>, vector<16x128xf32>,
    %c0_i32_8 = arith.constant 0 : i32
    %9 = arith.cmpi eq, %arg2, %c0_i32_8 : i32
    %10 = arith.extui %9 : i1 to i32
    %c0_i32_9 = arith.constant 0 : i32
    %11 = arith.cmpi ne, %10, %c0_i32_9 : i32
    scf.if %11 {
      %c0_10 = arith.constant 0 : index
      %c0_11 = arith.constant 0 : index
      %12 = vector.load %arg7[%c0_10, %c0_11] : memref<16x128xf32, #tpu.memory_space<vmem>>, vector<16x128xf32>
      %c0_12 = arith.constant 0 : index
      %c0_13 = arith.constant 0 : index
      %13 = vector.load %arg5[%c0_12, %c0_13] : memref<1x128xf32, #tpu.memory_space<vmem>>, vector<1x128xf32>
      %14 = vector.broadcast %13 : vector<1x128xf32> to vector<16x128xf32>
      %15 = arith.addf %12, %14 : vector<16x128xf32>
      %c0_14 = arith.constant 0 : index
      %c0_15 = arith.constant 0 : index
      %16 = vector.load %arg6[%c0_14, %c0_15] : memref<16x128xf32, #tpu.memory_space<vmem>>, vector<16x128xf32>
      tpu.vector_store %arg6[%c0_14, %c0_15], %15 {strides = array<i32>} : memref<16x128xf32, #tpu.memory_space<vmem>>, vector<16x128xf32>,
    } else {
    }
    return
  }
  func.func @transform_0(%arg0: i32, %arg1: i32, %arg2: i32) -> (i32, i32) {
    %c0_i32 = arith.constant 0 : i32
    return %arg0, %arg2 : i32, i32
  }
  func.func @transform_1(%arg0: i32, %arg1: i32, %arg2: i32) -> (i32, i32) {
    %c0_i32 = arith.constant 0 : i32
    return %arg2, %arg1 : i32, i32
  }
  func.func @transform_2(%arg0: i32, %arg1: i32, %arg2: i32) -> (i32, i32) {
    %c0_i32 = arith.constant 0 : i32
    %c0_i32_0 = arith.constant 0 : i32
    return %c0_i32, %arg1 : i32, i32
  }
  func.func @transform_3(%arg0: i32, %arg1: i32, %arg2: i32) -> (i32, i32) {
    %c0_i32 = arith.constant 0 : i32
    return %arg0, %arg1 : i32, i32
  }
}

</mosaic_0001>

<llo_original>
// kernel: _lambda_.14
$region0: #{_lambda_.14}
  #allocation0 [shape = 'u32[]', space=smem, size = 0x4, offset = 0x4, fixed_abs, tag = 'smem constant byte address 0x4 - core index']
  #allocation1 [shape = 'u32[144,128]{1,0:T(1,128)}', space=vmem, size = 0x12000, scoped, tag = 'internal scratch']
  #allocation2 [shape = 'f32[256,128]{1,0:T(8,128)}', space=vmem, size = 0x20000, scoped, tag = 'scratch operand']
  %s0 = inlined_call_operand.vmem [shape: bf16[2048,128], index: 0, kind: input, shape index: {}]
  %s1 = inlined_call_operand.vmem [shape: bf16[128,128], index: 1, kind: input, shape index: {}]
  %s2 = inlined_call_operand.vmem [shape: f32[1,128], index: 2, kind: input, shape index: {}]
  %s3 = inlined_call_operand.vmem [shape: f32[2048,128], index: 3, kind: output, shape index: {}]
  %s4 = sld [smem:[#allocation0]]
  $region53: #{_lambda_.14} parent=0
    _
  %s6 = ssub.s32 1, %s4
  %s7 = scalar_select 0, %s6, %s4
  loop: start=0, step=1, limit=10
  $region2: #{_lambda_.14} parent=0 // loop_pre_header
    _
  $region3: #{_lambda_.14} parent=0 // loop_header
    %s9 = sphi 0, %s13
    %p10 = scmp.ge.s32.totalorder %s9, 10
    %s16 = sphi 0, %s35
    %s17 = sphi 0, %s31
    %s18 = sphi 0, %s27
    %s19 = sphi 0, %s16
    %s20 = sphi 0, %s17
    %s21 = sphi 0, %s18
    %s22 = sphi 0, %s19
    %s23 = sphi 0, %s20
    %s24 = sphi 0, %s21
    %s40 = sphi 0, %s42
    %s43 = sphi 0, %s40
    %s44 = sphi 0, %s43
    %s60 = sphi 0, %s44
    %s68 = sphi 0, %s70
    %s71 = sphi 0, %s68
    %s72 = sphi 0, %s71
    %s88 = sphi 0, %s72
    %s94 = sphi 0, %s96
    %s97 = sphi 0, %s94
    %s98 = sphi 0, %s97
    %s114 = sphi 0, %s98
    %s122 = sphi 0, %s124
    %s125 = sphi 0, %s122
    %s126 = sphi 0, %s125
    %s142 = sphi 0, %s126
  $region4: #{_lambda_.14} parent=0 // loop_header_branch
    %12 = sbr.rel (%p10) target = $region8
  $region5: #{_lambda_.14} parent=0 // loop_body
    %s14 = ssub.s32 %s9, 1
    %s15 = ssub.s32 %s9, 2
    %s25 = sadd.s32 1, %s18
    %p26 = scmp.ge.s32.totalorder %s25, 1
    %s27 = scalar_select %p26, 0, %s25
    %s28 = sadd.s32 1, %s17
    %s29 = scalar_select %p26, %s28, %s17
    %p30 = scmp.ge.s32.totalorder %s29, 1
    %s31 = scalar_select %p30, 0, %s29
    %s32 = sadd.s32 1, %s16
    %s33 = scalar_select %p30, %s32, %s16
    %p34 = scmp.ge.s32.totalorder %s33, 8
    %s35 = scalar_select %p34, 0, %s33
    %s36 = ssub.s32 %s16, %s35
    %s37 = ssub.s32 %s18, %s27
    %s38 = sor.u32 %s36, %s37
    %p39 = scmp.eq.s32.totalorder %s38, 0
    %s41 = sadd.s32 %s40, 1
    %s42 = scalar_select %p39, %s40, %s41
    %p45 = pneg %p39
    %p46 = scmp.eq.s32.totalorder %s9, 7
    %p47 = por %p45, %p46
    %p48 = scmp.ne.s32.totalorder %s40, %s43
    %p49 = scmp.eq.s32.totalorder %s9, 0
    %p50 = por %p48, %p49
    %p51 = scmp.ne.s32.totalorder %s40, %s43
    %p52 = scmp.eq.s32.totalorder %s14, 7
    %p53 = por %p51, %p52
    %p54 = scmp.ne.s32.totalorder %s43, %s44
    %p55 = scmp.eq.s32.totalorder %s14, 0
    %p56 = por %p54, %p55
    %p57 = scmp.ne.s32.totalorder %s43, %s44
    %p58 = scmp.eq.s32.totalorder %s15, 7
    %p59 = por %p57, %p58
    %p61 = scmp.ne.s32.totalorder %s44, %s60
    %p62 = scmp.eq.s32.totalorder %s15, 0
    %p63 = por %p61, %p62
    %s64 = ssub.s32 %s18, %s27
    %s65 = ssub.s32 %s17, %s31
    %s66 = sor.u32 %s64, %s65
    %p67 = scmp.eq.s32.totalorder %s66, 0
    %s69 = sadd.s32 %s68, 1
    %s70 = scalar_select %p67, %s68, %s69
    %p73 = pneg %p67
    %p74 = scmp.eq.s32.totalorder %s9, 7
    %p75 = por %p73, %p74
    %p76 = scmp.ne.s32.totalorder %s68, %s71
    %p77 = scmp.eq.s32.totalorder %s9, 0
    %p78 = por %p76, %p77
    %p79 = scmp.ne.s32.totalorder %s68, %s71
    %p80 = scmp.eq.s32.totalorder %s14, 7
    %p81 = por %p79, %p80
    %p82 = scmp.ne.s32.totalorder %s71, %s72
    %p83 = scmp.eq.s32.totalorder %s14, 0
    %p84 = por %p82, %p83
    %p85 = scmp.ne.s32.totalorder %s71, %s72
    %p86 = scmp.eq.s32.totalorder %s15, 7
    %p87 = por %p85, %p86
    %p89 = scmp.ne.s32.totalorder %s72, %s88
    %p90 = scmp.eq.s32.totalorder %s15, 0
    %p91 = por %p89, %p90
    %s92 = ssub.s32 %s17, %s31
    %p93 = scmp.eq.s32.totalorder %s92, 0
    %s95 = sadd.s32 %s94, 1
    %s96 = scalar_select %p93, %s94, %s95
    %p99 = pneg %p93
    %p100 = scmp.eq.s32.totalorder %s9, 7
    %p101 = por %p99, %p100
    %p102 = scmp.ne.s32.totalorder %s94, %s97
    %p103 = scmp.eq.s32.totalorder %s9, 0
    %p104 = por %p102, %p103
    %p105 = scmp.ne.s32.totalorder %s94, %s97
    %p106 = scmp.eq.s32.totalorder %s14, 7
    %p107 = por %p105, %p106
    %p108 = scmp.ne.s32.totalorder %s97, %s98
    %p109 = scmp.eq.s32.totalorder %s14, 0
    %p110 = por %p108, %p109
    %p111 = scmp.ne.s32.totalorder %s97, %s98
    %p112 = scmp.eq.s32.totalorder %s15, 7
    %p113 = por %p111, %p112
    %p115 = scmp.ne.s32.totalorder %s98, %s114
    %p116 = scmp.eq.s32.totalorder %s15, 0
    %p117 = por %p115, %p116
    %s118 = ssub.s32 %s16, %s35
    %s119 = ssub.s32 %s17, %s31
    %s120 = sor.u32 %s118, %s119
    %p121 = scmp.eq.s32.totalorder %s120, 0
    %s123 = sadd.s32 %s122, 1
    %s124 = scalar_select %p121, %s122, %s123
    %p127 = pneg %p121
    %p128 = scmp.eq.s32.totalorder %s9, 7
    %p129 = por %p127, %p128
    %p130 = scmp.ne.s32.totalorder %s122, %s125
    %p131 = scmp.eq.s32.totalorder %s9, 0
    %p132 = por %p130, %p131
    %p133 = scmp.ne.s32.totalorder %s122, %s125
    %p134 = scmp.eq.s32.totalorder %s14, 7
    %p135 = por %p133, %p134
    %p136 = scmp.ne.s32.totalorder %s125, %s126
    %p137 = scmp.eq.s32.totalorder %s14, 0
    %p138 = por %p136, %p137
    %p139 = scmp.ne.s32.totalorder %s125, %s126
    %p140 = scmp.eq.s32.totalorder %s15, 7
    %p141 = por %p139, %p140
    %p143 = scmp.ne.s32.totalorder %s126, %s142
    %p144 = scmp.eq.s32.totalorder %s15, 0
    %p145 = por %p143, %p144
    %p146 = scmp.le.s32.totalorder 1, %s9
    %p147 = scmp.lt.s32.totalorder %s9, 9
    %p148 = pnand %p146, %p147
    %p149 = pneg %p148
    // Predicated region
    $region9: #{_lambda_.14} parent=5 // pred_check
      _
    $region10: #{_lambda_.14} parent=5 // pred_check_branch
      %151 = sbr.rel (%p148) target = $region12
    $region11: #{_lambda_.14} parent=5 // pred_region
      %s152 = ssub.s32 %s9, 1
      // Predicated region
      $region13: #{_lambda_.14} parent=11 // pred_check
        %p153 = pneg %p84
      $region14: #{_lambda_.14} parent=11 // pred_check_branch
        %155 = sbr.rel (%p153) target = $region16
      $region15: #{_lambda_.14} parent=11 // pred_region
        %s156 = smul.u32 16, %s21
        %p157 = scmp.lt.s32.totalorder %s156, 15
        %s158 = scalar_select %p157, %s156, 15
        %p159 = scmp.lt.s32.totalorder %s20, 0
        %s160 = scalar_select %p159, %s20, 0
        %s161 = sadd.s32 %s160, %s158
        %s162 = smul.addr %s161, 4
        %s163 = scalar_lea.vmem %s1, %s162
        %s164 = smul.u32 16, %s21
      $region16: #{_lambda_.14} parent=11 // pred_fallthru
        _
      // Predicated region
      $region17: #{_lambda_.14} parent=11 // pred_check
        %p165 = pneg %p110
      $region18: #{_lambda_.14} parent=11 // pred_check_branch
        %167 = sbr.rel (%p165) target = $region20
      $region19: #{_lambda_.14} parent=11 // pred_region
        %p168 = scmp.lt.s32.totalorder %s20, 0
        %s169 = scalar_select %p168, %s20, 0
        %s170 = scalar_lea.vmem %s2, %s169
      $region20: #{_lambda_.14} parent=11 // pred_fallthru
        _
    $region12: #{_lambda_.14} parent=5 // pred_fallthru
      _
    %p171 = scmp.lt.s32.totalorder %s9, 8
    // Predicated region
    $region21: #{_lambda_.14} parent=5 // pred_check
      %p172 = pneg %p171
    $region22: #{_lambda_.14} parent=5 // pred_check_branch
      %174 = sbr.rel (%p172) target = $region24
    $region23: #{_lambda_.14} parent=5 // pred_region
      // Predicated region
      $region25: #{_lambda_.14} parent=23 // pred_check
        %p175 = pneg %p50
      $region26: #{_lambda_.14} parent=23 // pred_check_branch
        %177 = sbr.rel (%p175) target = $region28
      $region27: #{_lambda_.14} parent=23 // pred_region
        %s178 = smul.u32 32, %s16
        %p179 = scmp.lt.s32.totalorder %s178, 255
        %s180 = scalar_select %p179, %s178, 255
        %p181 = scmp.lt.s32.totalorder %s18, 0
        %s182 = scalar_select %p181, %s18, 0
        %s183 = sadd.s32 %s182, %s180
        %s184 = smul.addr %s183, 4
        %s185 = scalar_lea.vmem %s0, %s184
        %s186 = smul.u32 32, %s16
      $region28: #{_lambda_.14} parent=23 // pred_fallthru
        _
    $region24: #{_lambda_.14} parent=5 // pred_fallthru
      _
    %p187 = scmp.le.s32.totalorder 1, %s9
    %p188 = scmp.lt.s32.totalorder %s9, 9
    %p189 = pnand %p187, %p188
    %p190 = pneg %p189
    // Predicated region
    $region29: #{_lambda_.14} parent=5 // pred_check
      _
    $region30: #{_lambda_.14} parent=5 // pred_check_branch
      %192 = sbr.rel (%p189) target = $region32
    $region31: #{_lambda_.14} parent=5 // pred_region
      %s193 = ssub.s32 %s9, 1
      %s194 = smul.u32 32, %s19
      %p195 = scmp.lt.s32.totalorder %s194, 255
      %s196 = scalar_select %p195, %s194, 255
      %p197 = scmp.lt.s32.totalorder %s21, 0
      %s198 = scalar_select %p197, %s21, 0
      %s199 = sadd.s32 %s198, %s196
      %s200 = smul.addr %s199, 4
      %s201 = scalar_lea.vmem %s0, %s200
      %p202 = pneg %p56
      %p203 = pneg %p53
      %s204 = smul.u32 16, %s21
      %p205 = scmp.lt.s32.totalorder %s204, 15
      %s206 = scalar_select %p205, %s204, 15
      %p207 = scmp.lt.s32.totalorder %s20, 0
      %s208 = scalar_select %p207, %s20, 0
      %s209 = sadd.s32 %s208, %s206
      %s210 = smul.addr %s209, 4
      %s211 = scalar_lea.vmem %s1, %s210
      %p212 = pneg %p84
      %p213 = pneg %p81
      %p214 = scmp.lt.s32.totalorder %s20, 0
      %s215 = scalar_select %p214, %s20, 0
      %s216 = scalar_lea.vmem %s2, %s215
      %p217 = pneg %p110
      %p218 = pneg %p107
      %p219 = pneg %p138
      %p220 = pneg %p135
      %s221 = smul.u32 32, %s19
      %p222 = scmp.lt.s32.totalorder %s221, 255
      %s223 = scalar_select %p222, %s221, 255
      %p224 = scmp.lt.s32.totalorder %s20, 0
      %s225 = scalar_select %p224, %s20, 0
      %s226 = sadd.s32 %s225, %s223
      %s227 = smul.addr %s226, 8
      %s228 = scalar_lea.vmem %s3, %s227
      %s229 = smul.u32 32, %s19
      %p230 = scmp.lt.s32.totalorder %s229, 255
      %s231 = scalar_select %p230, %s229, 255
      %p232 = scmp.lt.s32.totalorder %s21, 0
      %s233 = scalar_select %p232, %s21, 0
      %s234 = sadd.s32 %s233, %s231
      %s235 = smul.addr %s234, 4
      %s236 = scalar_lea.vmem %s0, %s235
      %s237 = smul.u32 32, %s19
      %s238 = smul.u32 16, %s21
      %p239 = scmp.lt.s32.totalorder %s238, 15
      %s240 = scalar_select %p239, %s238, 15
      %p241 = scmp.lt.s32.totalorder %s20, 0
      %s242 = scalar_select %p241, %s20, 0
      %s243 = sadd.s32 %s242, %s240
      %s244 = smul.addr %s243, 4
      %s245 = scalar_lea.vmem %s1, %s244
      %s246 = smul.u32 16, %s21
      %p247 = scmp.lt.s32.totalorder %s20, 0
      %s248 = scalar_select %p247, %s20, 0
      %s249 = scalar_lea.vmem %s2, %s248
      %s250 = smul.u32 32, %s19
      %p251 = scmp.lt.s32.totalorder %s250, 255
      %s252 = scalar_select %p251, %s250, 255
      %p253 = scmp.lt.s32.totalorder %s20, 0
      %s254 = scalar_select %p253, %s20, 0
      %s255 = sadd.s32 %s254, %s252
      %s256 = smul.addr %s255, 8
      %s257 = scalar_lea.vmem %s3, %s256
      %s258 = smul.u32 32, %s19
      %p260 = scmp.eq.s32.totalorder %s21, 0
      // Predicated region
      $region33: #{_lambda_.14} parent=31 // pred_check
        %p261 = pneg %p260
      $region34: #{_lambda_.14} parent=31 // pred_check_branch
        %263 = sbr.rel (%p261) target = $region36
      $region35: #{_lambda_.14} parent=31 // pred_region
        %264 = vst [vmem:[#allocation2] sm:$0xff] 0.0
        %265 = vst [vmem:[#allocation2 + $0x8] sm:$0xff] 0.0
        %266 = vst [vmem:[#allocation2 + $0x10] sm:$0xff] 0.0
        %267 = vst [vmem:[#allocation2 + $0x18] sm:$0xff] 0.0
        %268 = vst [vmem:[#allocation2 + $0x20] sm:$0xff] 0.0
        %269 = vst [vmem:[#allocation2 + $0x28] sm:$0xff] 0.0
        %270 = vst [vmem:[#allocation2 + $0x30] sm:$0xff] 0.0
        %271 = vst [vmem:[#allocation2 + $0x38] sm:$0xff] 0.0
        %272 = vst [vmem:[#allocation2 + $0x40] sm:$0xff] 0.0
        %273 = vst [vmem:[#allocation2 + $0x48] sm:$0xff] 0.0
        %274 = vst [vmem:[#allocation2 + $0x50] sm:$0xff] 0.0
        %275 = vst [vmem:[#allocation2 + $0x58] sm:$0xff] 0.0
        %276 = vst [vmem:[#allocation2 + $0x60] sm:$0xff] 0.0
        %277 = vst [vmem:[#allocation2 + $0x68] sm:$0xff] 0.0
        %278 = vst [vmem:[#allocation2 + $0x70] sm:$0xff] 0.0
        %279 = vst [vmem:[#allocation2 + $0x78] sm:$0xff] 0.0
        %280 = vst [vmem:[#allocation2 + $0x80] sm:$0xff] 0.0
        %281 = vst [vmem:[#allocation2 + $0x88] sm:$0xff] 0.0
        %282 = vst [vmem:[#allocation2 + $0x90] sm:$0xff] 0.0
        %283 = vst [vmem:[#allocation2 + $0x98] sm:$0xff] 0.0
        %284 = vst [vmem:[#allocation2 + $0xa0] sm:$0xff] 0.0
        %285 = vst [vmem:[#allocation2 + $0xa8] sm:$0xff] 0.0
        %286 = vst [vmem:[#allocation2 + $0xb0] sm:$0xff] 0.0
        %287 = vst [vmem:[#allocation2 + $0xb8] sm:$0xff] 0.0
        %288 = vst [vmem:[#allocation2 + $0xc0] sm:$0xff] 0.0
        %289 = vst [vmem:[#allocation2 + $0xc8] sm:$0xff] 0.0
        %290 = vst [vmem:[#allocation2 + $0xd0] sm:$0xff] 0.0
        %291 = vst [vmem:[#allocation2 + $0xd8] sm:$0xff] 0.0
        %292 = vst [vmem:[#allocation2 + $0xe0] sm:$0xff] 0.0
        %293 = vst [vmem:[#allocation2 + $0xe8] sm:$0xff] 0.0
        %294 = vst [vmem:[#allocation2 + $0xf0] sm:$0xff] 0.0
        %295 = vst [vmem:[#allocation2 + $0xf8] sm:$0xff] 0.0
      $region36: #{_lambda_.14} parent=31 // pred_fallthru
        _
      %v296 = vld [vmem:[#allocation2] sm:$0xff]
      %v297 = vld [vmem:[#allocation2 + $0x8] sm:$0xff]
      %v298 = vld [vmem:[#allocation2 + $0x10] sm:$0xff]
      %v299 = vld [vmem:[#allocation2 + $0x18] sm:$0xff]
      %v300 = vld [vmem:[#allocation2 + $0x20] sm:$0xff]
      %v301 = vld [vmem:[#allocation2 + $0x28] sm:$0xff]
      %v302 = vld [vmem:[#allocation2 + $0x30] sm:$0xff]
      %v303 = vld [vmem:[#allocation2 + $0x38] sm:$0xff]
      %v304 = vld [vmem:[#allocation2 + $0x40] sm:$0xff]
      %v305 = vld [vmem:[#allocation2 + $0x48] sm:$0xff]
      %v306 = vld [vmem:[#allocation2 + $0x50] sm:$0xff]
      %v307 = vld [vmem:[#allocation2 + $0x58] sm:$0xff]
      %v308 = vld [vmem:[#allocation2 + $0x60] sm:$0xff]
      %v309 = vld [vmem:[#allocation2 + $0x68] sm:$0xff]
      %v310 = vld [vmem:[#allocation2 + $0x70] sm:$0xff]
      %v311 = vld [vmem:[#allocation2 + $0x78] sm:$0xff]
      %v312 = vld [vmem:[#allocation2 + $0x80] sm:$0xff]
      %v313 = vld [vmem:[#allocation2 + $0x88] sm:$0xff]
      %v314 = vld [vmem:[#allocation2 + $0x90] sm:$0xff]
      %v315 = vld [vmem:[#allocation2 + $0x98] sm:$0xff]
      %v316 = vld [vmem:[#allocation2 + $0xa0] sm:$0xff]
      %v317 = vld [vmem:[#allocation2 + $0xa8] sm:$0xff]
      %v318 = vld [vmem:[#allocation2 + $0xb0] sm:$0xff]
      %v319 = vld [vmem:[#allocation2 + $0xb8] sm:$0xff]
      %v320 = vld [vmem:[#allocation2 + $0xc0] sm:$0xff]
      %v321 = vld [vmem:[#allocation2 + $0xc8] sm:$0xff]
      %v322 = vld [vmem:[#allocation2 + $0xd0] sm:$0xff]
      %v323 = vld [vmem:[#allocation2 + $0xd8] sm:$0xff]
      %v324 = vld [vmem:[#allocation2 + $0xe0] sm:$0xff]
      %v325 = vld [vmem:[#allocation2 + $0xe8] sm:$0xff]
      %v326 = vld [vmem:[#allocation2 + $0xf0] sm:$0xff]
      %v327 = vld [vmem:[#allocation2 + $0xf8] sm:$0xff]
      %v328 = vld [vmem:[%s236] sm:$0xf]
      %v329 = vld [vmem:[%s236 + $0x4] sm:$0xf]
      %v330 = vld [vmem:[%s236 + $0x8] sm:$0xf]
      %v331 = vld [vmem:[%s236 + $0xc] sm:$0xf]
      %v332 = vld [vmem:[%s236 + $0x10] sm:$0xf]
      %v333 = vld [vmem:[%s236 + $0x14] sm:$0xf]
      %v334 = vld [vmem:[%s236 + $0x18] sm:$0xf]
      %v335 = vld [vmem:[%s236 + $0x1c] sm:$0xf]
      %v336 = vld [vmem:[%s236 + $0x20] sm:$0xf]
      %v337 = vld [vmem:[%s236 + $0x24] sm:$0xf]
      %v338 = vld [vmem:[%s236 + $0x28] sm:$0xf]
      %v339 = vld [vmem:[%s236 + $0x2c] sm:$0xf]
      %v340 = vld [vmem:[%s236 + $0x30] sm:$0xf]
      %v341 = vld [vmem:[%s236 + $0x34] sm:$0xf]
      %v342 = vld [vmem:[%s236 + $0x38] sm:$0xf]
      %v343 = vld [vmem:[%s236 + $0x3c] sm:$0xf]
      %v344 = vld [vmem:[%s236 + $0x40] sm:$0xf]
      %v345 = vld [vmem:[%s236 + $0x44] sm:$0xf]
      %v346 = vld [vmem:[%s236 + $0x48] sm:$0xf]
      %v347 = vld [vmem:[%s236 + $0x4c] sm:$0xf]
      %v348 = vld [vmem:[%s236 + $0x50] sm:$0xf]
      %v349 = vld [vmem:[%s236 + $0x54] sm:$0xf]
      %v350 = vld [vmem:[%s236 + $0x58] sm:$0xf]
      %v351 = vld [vmem:[%s236 + $0x5c] sm:$0xf]
      %v352 = vld [vmem:[%s236 + $0x60] sm:$0xf]
      %v353 = vld [vmem:[%s236 + $0x64] sm:$0xf]
      %v354 = vld [vmem:[%s236 + $0x68] sm:$0xf]
      %v355 = vld [vmem:[%s236 + $0x6c] sm:$0xf]
      %v356 = vld [vmem:[%s236 + $0x70] sm:$0xf]
      %v357 = vld [vmem:[%s236 + $0x74] sm:$0xf]
      %v358 = vld [vmem:[%s236 + $0x78] sm:$0xf]
      %v359 = vld [vmem:[%s236 + $0x7c] sm:$0xf]
      %v360 = vld [vmem:[%s245] sm:$0xf]
      %v361 = vld [vmem:[%s245 + $0x4] sm:$0xf]
      %v362 = vld [vmem:[%s245 + $0x8] sm:$0xf]
      %v363 = vld [vmem:[%s245 + $0xc] sm:$0xf]
      %v364 = vld [vmem:[%s245 + $0x10] sm:$0xf]
      %v365 = vld [vmem:[%s245 + $0x14] sm:$0xf]
      %v366 = vld [vmem:[%s245 + $0x18] sm:$0xf]
      %v367 = vld [vmem:[%s245 + $0x1c] sm:$0xf]
      %v368 = vld [vmem:[%s245 + $0x20] sm:$0xf]
      %v369 = vld [vmem:[%s245 + $0x24] sm:$0xf]
      %v370 = vld [vmem:[%s245 + $0x28] sm:$0xf]
      %v371 = vld [vmem:[%s245 + $0x2c] sm:$0xf]
      %v372 = vld [vmem:[%s245 + $0x30] sm:$0xf]
      %v373 = vld [vmem:[%s245 + $0x34] sm:$0xf]
      %v374 = vld [vmem:[%s245 + $0x38] sm:$0xf]
      %v375 = vld [vmem:[%s245 + $0x3c] sm:$0xf]
      %v408 = vunpack.c.l.b16 %v328
      %v409 = vunpack.c.l.b16 %v329
      %v410 = vunpack.c.l.b16 %v330
      %v411 = vunpack.c.l.b16 %v331
      %v412 = vunpack.c.l.b16 %v332
      %v413 = vunpack.c.l.b16 %v333
      %v414 = vunpack.c.l.b16 %v334
      %v415 = vunpack.c.l.b16 %v335
      %v416 = vunpack.c.l.b16 %v336
      %v417 = vunpack.c.l.b16 %v337
      %v418 = vunpack.c.l.b16 %v338
      %v419 = vunpack.c.l.b16 %v339
      %v420 = vunpack.c.l.b16 %v340
      %v421 = vunpack.c.l.b16 %v341
      %v422 = vunpack.c.l.b16 %v342
      %v423 = vunpack.c.l.b16 %v343
      %v424 = vunpack.c.l.b16 %v344
      %v425 = vunpack.c.l.b16 %v345
      %v426 = vunpack.c.l.b16 %v346
      %v427 = vunpack.c.l.b16 %v347
      %v428 = vunpack.c.l.b16 %v348
      %v429 = vunpack.c.l.b16 %v349
      %v430 = vunpack.c.l.b16 %v350
      %v431 = vunpack.c.l.b16 %v351
      %v432 = vunpack.c.l.b16 %v352
      %v433 = vunpack.c.l.b16 %v353
      %v434 = vunpack.c.l.b16 %v354
      %v435 = vunpack.c.l.b16 %v355
      %v436 = vunpack.c.l.b16 %v356
      %v437 = vunpack.c.l.b16 %v357
      %v438 = vunpack.c.l.b16 %v358
      %v439 = vunpack.c.l.b16 %v359
      %v440 = vpack.c.b16 %v409, %v408
      %v441 = vpack.c.b16 %v411, %v410
      %v442 = vpack.c.b16 %v413, %v412
      %v443 = vpack.c.b16 %v415, %v414
      %v444 = vpack.c.b16 %v417, %v416
      %v445 = vpack.c.b16 %v419, %v418
      %v446 = vpack.c.b16 %v421, %v420
      %v447 = vpack.c.b16 %v423, %v422
      %v448 = vpack.c.b16 %v425, %v424
      %v449 = vpack.c.b16 %v427, %v426
      %v450 = vpack.c.b16 %v429, %v428
      %v451 = vpack.c.b16 %v431, %v430
      %v452 = vpack.c.b16 %v433, %v432
      %v453 = vpack.c.b16 %v435, %v434
      %v454 = vpack.c.b16 %v437, %v436
      %v455 = vpack.c.b16 %v439, %v438
      %v488 = vunpack.c.l.b16 %v360
      %v489 = vunpack.c.l.b16 %v361
      %v490 = vunpack.c.l.b16 %v362
      %v491 = vunpack.c.l.b16 %v363
      %v492 = vunpack.c.l.b16 %v364
      %v493 = vunpack.c.l.b16 %v365
      %v494 = vunpack.c.l.b16 %v366
      %v495 = vunpack.c.l.b16 %v367
      %v496 = vunpack.c.l.b16 %v368
      %v497 = vunpack.c.l.b16 %v369
      %v498 = vunpack.c.l.b16 %v370
      %v499 = vunpack.c.l.b16 %v371
      %v500 = vunpack.c.l.b16 %v372
      %v501 = vunpack.c.l.b16 %v373
      %v502 = vunpack.c.l.b16 %v374
      %v503 = vunpack.c.l.b16 %v375
      %v504 = vpack.c.b16 %v489, %v488
      %v505 = vpack.c.b16 %v491, %v490
      %v506 = vpack.c.b16 %v493, %v492
      %v507 = vpack.c.b16 %v495, %v494
      %v508 = vpack.c.b16 %v497, %v496
      %v509 = vpack.c.b16 %v499, %v498
      %v510 = vpack.c.b16 %v501, %v500
      %v511 = vpack.c.b16 %v503, %v502
      %520 = vmatprep.subr.bf16.mxu0 0
      %521 = vmatpush1.bf16.msra.mxu0 %v511
      %522 = vmatprep.subr.bf16.mxu0 0
      %523 = vmatpush1.bf16.msra.mxu0 %v510
      %524 = vmatprep.subr.bf16.mxu0 0
      %525 = vmatpush1.bf16.msra.mxu0 %v509
      %526 = vmatprep.subr.bf16.mxu0 0
      %527 = vmatpush1.bf16.msra.mxu0 %v508
      %528 = vmatprep.subr.bf16.mxu0 0
      %529 = vmatpush1.bf16.msra.mxu0 %v507
      %530 = vmatprep.subr.bf16.mxu0 0
      %531 = vmatpush1.bf16.msra.mxu0 %v506
      %532 = vmatprep.subr.bf16.mxu0 0
      %533 = vmatpush1.bf16.msra.mxu0 %v505
      %534 = vmatprep.subr.bf16.mxu0 0
      %535 = vmatpush1.bf16.msra.mxu0 %v504
      %536 = vmatprep.subr.bf16.mxu0 0
      %537 = vmatpush2.bf16.msra.mxu0 0
      %538 = vmatprep.subr.bf16.mxu0 0
      %539 = vmatpush2.bf16.msra.mxu0 0
      %540 = vmatprep.subr.bf16.mxu0 0
      %541 = vmatpush2.bf16.msra.mxu0 0
      %542 = vmatprep.subr.bf16.mxu0 0
      %543 = vmatpush2.bf16.msra.mxu0 0
      %544 = vmatprep.subr.bf16.mxu0 0
      %545 = vmatpush2.bf16.msra.mxu0 0
      %546 = vmatprep.subr.bf16.mxu0 0
      %547 = vmatpush2.bf16.msra.mxu0 0
      %548 = vmatprep.subr.bf16.mxu0 0
      %549 = vmatpush2.bf16.msra.mxu0 0
      %550 = vmatprep.subr.bf16.mxu0 0
      %551 = vmatpush2.bf16.msra.mxu0 0
      %552 = vmatprep.mubr.bf16.mxu0 0
      %553 = vmatmul.mubr.bf16.gmra.mxu0 %v440
      %v554 = vpop.f32.mrf.mxu0
      %v555 = vadd.f32 0.0, %v554
      %v556 = vpop.f32.mrf.mxu0
      %v557 = vpop.f32.mrf.mxu0
      %v558 = vadd.f32 0.0, %v557
      %v559 = vpop.f32.mrf.mxu0
      %560 = vmatprep.mubr.bf16.mxu0 0
      %561 = vmatmul.mubr.bf16.gmra.mxu0 %v441
      %v562 = vpop.f32.mrf.mxu0
      %v563 = vadd.f32 0.0, %v562
      %v564 = vpop.f32.mrf.mxu0
      %v565 = vpop.f32.mrf.mxu0
      %v566 = vadd.f32 0.0, %v565
      %v567 = vpop.f32.mrf.mxu0
      %568 = vmatprep.mubr.bf16.mxu0 0
      %569 = vmatmul.mubr.bf16.gmra.mxu0 %v442
      %v570 = vpop.f32.mrf.mxu0
      %v571 = vadd.f32 0.0, %v570
      %v572 = vpop.f32.mrf.mxu0
      %v573 = vpop.f32.mrf.mxu0
      %v574 = vadd.f32 0.0, %v573
      %v575 = vpop.f32.mrf.mxu0
      %576 = vmatprep.mubr.bf16.mxu0 0
      %577 = vmatmul.mubr.bf16.gmra.mxu0 %v443
      %v578 = vpop.f32.mrf.mxu0
      %v579 = vadd.f32 0.0, %v578
      %v580 = vpop.f32.mrf.mxu0
      %v581 = vpop.f32.mrf.mxu0
      %v582 = vadd.f32 0.0, %v581
      %v583 = vpop.f32.mrf.mxu0
      %584 = vmatprep.mubr.bf16.mxu0 0
      %585 = vmatmul.mubr.bf16.gmra.mxu0 %v444
      %v586 = vpop.f32.mrf.mxu0
      %v587 = vadd.f32 0.0, %v586
      %v588 = vpop.f32.mrf.mxu0
      %v589 = vpop.f32.mrf.mxu0
      %v590 = vadd.f32 0.0, %v589
      %v591 = vpop.f32.mrf.mxu0
      %592 = vmatprep.mubr.bf16.mxu0 0
      %593 = vmatmul.mubr.bf16.gmra.mxu0 %v445
      %v594 = vpop.f32.mrf.mxu0
      %v595 = vadd.f32 0.0, %v594
      %v596 = vpop.f32.mrf.mxu0
      %v597 = vpop.f32.mrf.mxu0
      %v598 = vadd.f32 0.0, %v597
      %v599 = vpop.f32.mrf.mxu0
      %600 = vmatprep.mubr.bf16.mxu0 0
      %601 = vmatmul.mubr.bf16.gmra.mxu0 %v446
      %v602 = vpop.f32.mrf.mxu0
      %v603 = vadd.f32 0.0, %v602
      %v604 = vpop.f32.mrf.mxu0
      %v605 = vpop.f32.mrf.mxu0
      %v606 = vadd.f32 0.0, %v605
      %v607 = vpop.f32.mrf.mxu0
      %608 = vmatprep.mubr.bf16.mxu0 0
      %609 = vmatmul.mubr.bf16.gmra.mxu0 %v447
      %v610 = vpop.f32.mrf.mxu0
      %v611 = vadd.f32 0.0, %v610
      %v612 = vpop.f32.mrf.mxu0
      %v613 = vpop.f32.mrf.mxu0
      %v614 = vadd.f32 0.0, %v613
      %v615 = vpop.f32.mrf.mxu0
      %616 = vmatprep.mubr.bf16.mxu0 0
      %617 = vmatmul.mubr.bf16.gmra.mxu0 %v448
      %v618 = vpop.f32.mrf.mxu0
      %v619 = vadd.f32 0.0, %v618
      %v620 = vpop.f32.mrf.mxu0
      %v621 = vpop.f32.mrf.mxu0
      %v622 = vadd.f32 0.0, %v621
      %v623 = vpop.f32.mrf.mxu0
      %624 = vmatprep.mubr.bf16.mxu0 0
      %625 = vmatmul.mubr.bf16.gmra.mxu0 %v449
      %v626 = vpop.f32.mrf.mxu0
      %v627 = vadd.f32 0.0, %v626
      %v628 = vpop.f32.mrf.mxu0
      %v629 = vpop.f32.mrf.mxu0
      %v630 = vadd.f32 0.0, %v629
      %v631 = vpop.f32.mrf.mxu0
      %632 = vmatprep.mubr.bf16.mxu0 0
      %633 = vmatmul.mubr.bf16.gmra.mxu0 %v450
      %v634 = vpop.f32.mrf.mxu0
      %v635 = vadd.f32 0.0, %v634
      %v636 = vpop.f32.mrf.mxu0
      %v637 = vpop.f32.mrf.mxu0
      %v638 = vadd.f32 0.0, %v637
      %v639 = vpop.f32.mrf.mxu0
      %640 = vmatprep.mubr.bf16.mxu0 0
      %641 = vmatmul.mubr.bf16.gmra.mxu0 %v451
      %v642 = vpop.f32.mrf.mxu0
      %v643 = vadd.f32 0.0, %v642
      %v644 = vpop.f32.mrf.mxu0
      %v645 = vpop.f32.mrf.mxu0
      %v646 = vadd.f32 0.0, %v645
      %v647 = vpop.f32.mrf.mxu0
      %648 = vmatprep.mubr.bf16.mxu0 0
      %649 = vmatmul.mubr.bf16.gmra.mxu0 %v452
      %v650 = vpop.f32.mrf.mxu0
      %v651 = vadd.f32 0.0, %v650
      %v652 = vpop.f32.mrf.mxu0
      %v653 = vpop.f32.mrf.mxu0
      %v654 = vadd.f32 0.0, %v653
      %v655 = vpop.f32.mrf.mxu0
      %656 = vmatprep.mubr.bf16.mxu0 0
      %657 = vmatmul.mubr.bf16.gmra.mxu0 %v453
      %v658 = vpop.f32.mrf.mxu0
      %v659 = vadd.f32 0.0, %v658
      %v660 = vpop.f32.mrf.mxu0
      %v661 = vpop.f32.mrf.mxu0
      %v662 = vadd.f32 0.0, %v661
      %v663 = vpop.f32.mrf.mxu0
      %664 = vmatprep.mubr.bf16.mxu0 0
      %665 = vmatmul.mubr.bf16.gmra.mxu0 %v454
      %v666 = vpop.f32.mrf.mxu0
      %v667 = vadd.f32 0.0, %v666
      %v668 = vpop.f32.mrf.mxu0
      %v669 = vpop.f32.mrf.mxu0
      %v670 = vadd.f32 0.0, %v669
      %v671 = vpop.f32.mrf.mxu0
      %672 = vmatprep.mubr.bf16.mxu0 0
      %673 = vmatmul.mubr.bf16.gmra.mxu0 %v455
      %v674 = vpop.f32.mrf.mxu0
      %v675 = vadd.f32 0.0, %v674
      %v676 = vpop.f32.mrf.mxu0
      %v677 = vpop.f32.mrf.mxu0
      %v678 = vadd.f32 0.0, %v677
      %v679 = vpop.f32.mrf.mxu0
      %680 = vdwg.mxu0
      %v681 = vadd.f32 %v296, %v555
      %v682 = vadd.f32 %v297, %v558
      %v683 = vadd.f32 %v298, %v563
      %v684 = vadd.f32 %v299, %v566
      %v685 = vadd.f32 %v300, %v571
      %v686 = vadd.f32 %v301, %v574
      %v687 = vadd.f32 %v302, %v579
      %v688 = vadd.f32 %v303, %v582
      %v689 = vadd.f32 %v304, %v587
      %v690 = vadd.f32 %v305, %v590
      %v691 = vadd.f32 %v306, %v595
      %v692 = vadd.f32 %v307, %v598
      %v693 = vadd.f32 %v308, %v603
      %v694 = vadd.f32 %v309, %v606
      %v695 = vadd.f32 %v310, %v611
      %v696 = vadd.f32 %v311, %v614
      %v697 = vadd.f32 %v312, %v619
      %v698 = vadd.f32 %v313, %v622
      %v699 = vadd.f32 %v314, %v627
      %v700 = vadd.f32 %v315, %v630
      %v701 = vadd.f32 %v316, %v635
      %v702 = vadd.f32 %v317, %v638
      %v703 = vadd.f32 %v318, %v643
      %v704 = vadd.f32 %v319, %v646
      %v705 = vadd.f32 %v320, %v651
      %v706 = vadd.f32 %v321, %v654
      %v707 = vadd.f32 %v322, %v659
      %v708 = vadd.f32 %v323, %v662
      %v709 = vadd.f32 %v324, %v667
      %v710 = vadd.f32 %v325, %v670
      %v711 = vadd.f32 %v326, %v675
      %v712 = vadd.f32 %v327, %v678
      %713 = vst [vmem:[#allocation2] sm:$0xff] %v681
      %714 = vst [vmem:[#allocation2 + $0x8] sm:$0xff] %v682
      %715 = vst [vmem:[#allocation2 + $0x10] sm:$0xff] %v683
      %716 = vst [vmem:[#allocation2 + $0x18] sm:$0xff] %v684
      %717 = vst [vmem:[#allocation2 + $0x20] sm:$0xff] %v685
      %718 = vst [vmem:[#allocation2 + $0x28] sm:$0xff] %v686
      %719 = vst [vmem:[#allocation2 + $0x30] sm:$0xff] %v687
      %720 = vst [vmem:[#allocation2 + $0x38] sm:$0xff] %v688
      %721 = vst [vmem:[#allocation2 + $0x40] sm:$0xff] %v689
      %722 = vst [vmem:[#allocation2 + $0x48] sm:$0xff] %v690
      %723 = vst [vmem:[#allocation2 + $0x50] sm:$0xff] %v691
      %724 = vst [vmem:[#allocation2 + $0x58] sm:$0xff] %v692
      %725 = vst [vmem:[#allocation2 + $0x60] sm:$0xff] %v693
      %726 = vst [vmem:[#allocation2 + $0x68] sm:$0xff] %v694
      %727 = vst [vmem:[#allocation2 + $0x70] sm:$0xff] %v695
      %728 = vst [vmem:[#allocation2 + $0x78] sm:$0xff] %v696
      %729 = vst [vmem:[#allocation2 + $0x80] sm:$0xff] %v697
      %730 = vst [vmem:[#allocation2 + $0x88] sm:$0xff] %v698
      %731 = vst [vmem:[#allocation2 + $0x90] sm:$0xff] %v699
      %732 = vst [vmem:[#allocation2 + $0x98] sm:$0xff] %v700
      %733 = vst [vmem:[#allocation2 + $0xa0] sm:$0xff] %v701
      %734 = vst [vmem:[#allocation2 + $0xa8] sm:$0xff] %v702
      %735 = vst [vmem:[#allocation2 + $0xb0] sm:$0xff] %v703
      %736 = vst [vmem:[#allocation2 + $0xb8] sm:$0xff] %v704
      %737 = vst [vmem:[#allocation2 + $0xc0] sm:$0xff] %v705
      %738 = vst [vmem:[#allocation2 + $0xc8] sm:$0xff] %v706
      %739 = vst [vmem:[#allocation2 + $0xd0] sm:$0xff] %v707
      %740 = vst [vmem:[#allocation2 + $0xd8] sm:$0xff] %v708
      %741 = vst [vmem:[#allocation2 + $0xe0] sm:$0xff] %v709
      %742 = vst [vmem:[#allocation2 + $0xe8] sm:$0xff] %v710
      %743 = vst [vmem:[#allocation2 + $0xf0] sm:$0xff] %v711
      %744 = vst [vmem:[#allocation2 + $0xf8] sm:$0xff] %v712
      // Predicated region
      $region37: #{_lambda_.14} parent=31 // pred_check
        %p745 = pneg %p260
      $region38: #{_lambda_.14} parent=31 // pred_check_branch
        %747 = sbr.rel (%p745) target = $region40
      $region39: #{_lambda_.14} parent=31 // pred_region
        %v748 = vld [vmem:[#allocation2] sm:$0xff]
        %v749 = vld [vmem:[#allocation2 + $0x8] sm:$0xff]
        %v750 = vld [vmem:[#allocation2 + $0x10] sm:$0xff]
        %v751 = vld [vmem:[#allocation2 + $0x18] sm:$0xff]
        %v752 = vld [vmem:[#allocation2 + $0x20] sm:$0xff]
        %v753 = vld [vmem:[#allocation2 + $0x28] sm:$0xff]
        %v754 = vld [vmem:[#allocation2 + $0x30] sm:$0xff]
        %v755 = vld [vmem:[#allocation2 + $0x38] sm:$0xff]
        %v756 = vld [vmem:[#allocation2 + $0x40] sm:$0xff]
        %v757 = vld [vmem:[#allocation2 + $0x48] sm:$0xff]
        %v758 = vld [vmem:[#allocation2 + $0x50] sm:$0xff]
        %v759 = vld [vmem:[#allocation2 + $0x58] sm:$0xff]
        %v760 = vld [vmem:[#allocation2 + $0x60] sm:$0xff]
        %v761 = vld [vmem:[#allocation2 + $0x68] sm:$0xff]
        %v762 = vld [vmem:[#allocation2 + $0x70] sm:$0xff]
        %v763 = vld [vmem:[#allocation2 + $0x78] sm:$0xff]
        %v764 = vld [vmem:[#allocation2 + $0x80] sm:$0xff]
        %v765 = vld [vmem:[#allocation2 + $0x88] sm:$0xff]
        %v766 = vld [vmem:[#allocation2 + $0x90] sm:$0xff]
        %v767 = vld [vmem:[#allocation2 + $0x98] sm:$0xff]
        %v768 = vld [vmem:[#allocation2 + $0xa0] sm:$0xff]
        %v769 = vld [vmem:[#allocation2 + $0xa8] sm:$0xff]
        %v770 = vld [vmem:[#allocation2 + $0xb0] sm:$0xff]
        %v771 = vld [vmem:[#allocation2 + $0xb8] sm:$0xff]
        %v772 = vld [vmem:[#allocation2 + $0xc0] sm:$0xff]
        %v773 = vld [vmem:[#allocation2 + $0xc8] sm:$0xff]
        %v774 = vld [vmem:[#allocation2 + $0xd0] sm:$0xff]
        %v775 = vld [vmem:[#allocation2 + $0xd8] sm:$0xff]
        %v776 = vld [vmem:[#allocation2 + $0xe0] sm:$0xff]
        %v777 = vld [vmem:[#allocation2 + $0xe8] sm:$0xff]
        %v778 = vld [vmem:[#allocation2 + $0xf0] sm:$0xff]
        %v779 = vld [vmem:[#allocation2 + $0xf8] sm:$0xff]
        %v780 = vld [vmem:[%s249] sm:$0x1]
        %v782 = vlaneseq
        %v783 = vshrl.u32 %v782, 7
        %v784 = vsub.s32 0, %v783
        %v785 = vrot.slane %v780, %v784
        %v787 = vadd.f32 %v748, %v785
        %v788 = vadd.f32 %v749, %v785
        %v789 = vadd.f32 %v750, %v785
        %v790 = vadd.f32 %v751, %v785
        %v791 = vadd.f32 %v752, %v785
        %v792 = vadd.f32 %v753, %v785
        %v793 = vadd.f32 %v754, %v785
        %v794 = vadd.f32 %v755, %v785
        %v795 = vadd.f32 %v756, %v785
        %v796 = vadd.f32 %v757, %v785
        %v797 = vadd.f32 %v758, %v785
        %v798 = vadd.f32 %v759, %v785
        %v799 = vadd.f32 %v760, %v785
        %v800 = vadd.f32 %v761, %v785
        %v801 = vadd.f32 %v762, %v785
        %v802 = vadd.f32 %v763, %v785
        %v803 = vadd.f32 %v764, %v785
        %v804 = vadd.f32 %v765, %v785
        %v805 = vadd.f32 %v766, %v785
        %v806 = vadd.f32 %v767, %v785
        %v807 = vadd.f32 %v768, %v785
        %v808 = vadd.f32 %v769, %v785
        %v809 = vadd.f32 %v770, %v785
        %v810 = vadd.f32 %v771, %v785
        %v811 = vadd.f32 %v772, %v785
        %v812 = vadd.f32 %v773, %v785
        %v813 = vadd.f32 %v774, %v785
        %v814 = vadd.f32 %v775, %v785
        %v815 = vadd.f32 %v776, %v785
        %v816 = vadd.f32 %v777, %v785
        %v817 = vadd.f32 %v778, %v785
        %v818 = vadd.f32 %v779, %v785
        %v819 = vmax.f32 %v787, 0.0
        %v820 = vmax.f32 %v788, 0.0
        %v821 = vmax.f32 %v789, 0.0
        %v822 = vmax.f32 %v790, 0.0
        %v823 = vmax.f32 %v791, 0.0
        %v824 = vmax.f32 %v792, 0.0
        %v825 = vmax.f32 %v793, 0.0
        %v826 = vmax.f32 %v794, 0.0
        %v827 = vmax.f32 %v795, 0.0
        %v828 = vmax.f32 %v796, 0.0
        %v829 = vmax.f32 %v797, 0.0
        %v830 = vmax.f32 %v798, 0.0
        %v831 = vmax.f32 %v799, 0.0
        %v832 = vmax.f32 %v800, 0.0
        %v833 = vmax.f32 %v801, 0.0
        %v834 = vmax.f32 %v802, 0.0
        %v835 = vmax.f32 %v803, 0.0
        %v836 = vmax.f32 %v804, 0.0
        %v837 = vmax.f32 %v805, 0.0
        %v838 = vmax.f32 %v806, 0.0
        %v839 = vmax.f32 %v807, 0.0
        %v840 = vmax.f32 %v808, 0.0
        %v841 = vmax.f32 %v809, 0.0
        %v842 = vmax.f32 %v810, 0.0
        %v843 = vmax.f32 %v811, 0.0
        %v844 = vmax.f32 %v812, 0.0
        %v845 = vmax.f32 %v813, 0.0
        %v846 = vmax.f32 %v814, 0.0
        %v847 = vmax.f32 %v815, 0.0
        %v848 = vmax.f32 %v816, 0.0
        %v849 = vmax.f32 %v817, 0.0
        %v850 = vmax.f32 %v818, 0.0
        %851 = vst [vmem:[%s257] sm:$0xff] %v819
        %852 = vst [vmem:[%s257 + $0x8] sm:$0xff] %v820
        %853 = vst [vmem:[%s257 + $0x10] sm:$0xff] %v821
        %854 = vst [vmem:[%s257 + $0x18] sm:$0xff] %v822
        %855 = vst [vmem:[%s257 + $0x20] sm:$0xff] %v823
        %856 = vst [vmem:[%s257 + $0x28] sm:$0xff] %v824
        %857 = vst [vmem:[%s257 + $0x30] sm:$0xff] %v825
        %858 = vst [vmem:[%s257 + $0x38] sm:$0xff] %v826
        %859 = vst [vmem:[%s257 + $0x40] sm:$0xff] %v827
        %860 = vst [vmem:[%s257 + $0x48] sm:$0xff] %v828
        %861 = vst [vmem:[%s257 + $0x50] sm:$0xff] %v829
        %862 = vst [vmem:[%s257 + $0x58] sm:$0xff] %v830
        %863 = vst [vmem:[%s257 + $0x60] sm:$0xff] %v831
        %864 = vst [vmem:[%s257 + $0x68] sm:$0xff] %v832
        %865 = vst [vmem:[%s257 + $0x70] sm:$0xff] %v833
        %866 = vst [vmem:[%s257 + $0x78] sm:$0xff] %v834
        %867 = vst [vmem:[%s257 + $0x80] sm:$0xff] %v835
        %868 = vst [vmem:[%s257 + $0x88] sm:$0xff] %v836
        %869 = vst [vmem:[%s257 + $0x90] sm:$0xff] %v837
        %870 = vst [vmem:[%s257 + $0x98] sm:$0xff] %v838
        %871 = vst [vmem:[%s257 + $0xa0] sm:$0xff] %v839
        %872 = vst [vmem:[%s257 + $0xa8] sm:$0xff] %v840
        %873 = vst [vmem:[%s257 + $0xb0] sm:$0xff] %v841
        %874 = vst [vmem:[%s257 + $0xb8] sm:$0xff] %v842
        %875 = vst [vmem:[%s257 + $0xc0] sm:$0xff] %v843
        %876 = vst [vmem:[%s257 + $0xc8] sm:$0xff] %v844
        %877 = vst [vmem:[%s257 + $0xd0] sm:$0xff] %v845
        %878 = vst [vmem:[%s257 + $0xd8] sm:$0xff] %v846
        %879 = vst [vmem:[%s257 + $0xe0] sm:$0xff] %v847
        %880 = vst [vmem:[%s257 + $0xe8] sm:$0xff] %v848
        %881 = vst [vmem:[%s257 + $0xf0] sm:$0xff] %v849
        %882 = vst [vmem:[%s257 + $0xf8] sm:$0xff] %v850
      $region40: #{_lambda_.14} parent=31 // pred_fallthru
        _
      %s883 = smul.u32 32, %s19
      %p884 = scmp.lt.s32.totalorder %s883, 255
      %s885 = scalar_select %p884, %s883, 255
      %p886 = scmp.lt.s32.totalorder %s20, 0
      %s887 = scalar_select %p886, %s20, 0
      %s888 = sadd.s32 %s887, %s885
      %s889 = smul.addr %s888, 8
      %s890 = scalar_lea.vmem %s3, %s889
      // Predicated region
      $region41: #{_lambda_.14} parent=31 // pred_check
        %p891 = pneg %p135
      $region42: #{_lambda_.14} parent=31 // pred_check_branch
        %893 = sbr.rel (%p891) target = $region44
      $region43: #{_lambda_.14} parent=31 // pred_region
        %s894 = smul.u32 32, %s19
      $region44: #{_lambda_.14} parent=31 // pred_fallthru
        _
    $region32: #{_lambda_.14} parent=5 // pred_fallthru
      _
    %p895 = scmp.le.s32.totalorder 2, %s9
    // Predicated region
    $region45: #{_lambda_.14} parent=5 // pred_check
      %p896 = pneg %p895
    $region46: #{_lambda_.14} parent=5 // pred_check_branch
      %898 = sbr.rel (%p896) target = $region48
    $region47: #{_lambda_.14} parent=5 // pred_region
      %s899 = ssub.s32 %s9, 2
      // Predicated region
      $region49: #{_lambda_.14} parent=47 // pred_check
        %p900 = pneg %p141
      $region50: #{_lambda_.14} parent=47 // pred_check_branch
        %902 = sbr.rel (%p900) target = $region52
      $region51: #{_lambda_.14} parent=47 // pred_region
        %s903 = smul.u32 32, %s22
        %p904 = scmp.lt.s32.totalorder %s903, 255
        %s905 = scalar_select %p904, %s903, 255
        %p906 = scmp.lt.s32.totalorder %s23, 0
        %s907 = scalar_select %p906, %s23, 0
        %s908 = sadd.s32 %s907, %s905
        %s909 = smul.addr %s908, 8
        %s910 = scalar_lea.vmem %s3, %s909
      $region52: #{_lambda_.14} parent=47 // pred_fallthru
        _
    $region48: #{_lambda_.14} parent=5 // pred_fallthru
      _
  $region6: #{_lambda_.14} parent=0 // loop_footer
    %s13 = sadd.s32 1, %s9
  $region7: #{_lambda_.14} parent=0 // loop_footer_branch
    %8 = sbr.rel target = $region3
  $region8: #{_lambda_.14} parent=0 // loop_exit
    _

// kernel: _lambda_.15
$region0: #{_lambda_.15}
  #allocation0 [shape = 'u32[]', space=smem, size = 0x4, offset = 0x4, fixed_abs, tag = 'smem constant byte address 0x4 - core index']
  #allocation1 [shape = 'u32[144,128]{1,0:T(1,128)}', space=vmem, size = 0x12000, scoped, tag = 'internal scratch']
  #allocation2 [shape = 'f32[256,128]{1,0:T(8,128)}', space=vmem, size = 0x20000, scoped, tag = 'scratch operand']
  %s0 = inlined_call_operand.vmem [shape: bf16[512,128], index: 0, kind: input, shape index: {}]
  %s1 = inlined_call_operand.vmem [shape: bf16[128,128], index: 1, kind: input, shape index: {}]
  %s2 = inlined_call_operand.vmem [shape: f32[1,128], index: 2, kind: input, shape index: {}]
  %s3 = inlined_call_operand.vmem [shape: f32[512,128], index: 3, kind: output, shape index: {}]
  %s4 = sld [smem:[#allocation0]]
  $region53: #{_lambda_.15} parent=0
    _
  %s6 = ssub.s32 1, %s4
  %s7 = scalar_select 0, %s6, %s4
  loop: start=0, step=1, limit=4
  $region2: #{_lambda_.15} parent=0 // loop_pre_header
    _
  $region3: #{_lambda_.15} parent=0 // loop_header
    %s9 = sphi 0, %s13
    %p10 = scmp.ge.s32.totalorder %s9, 4
    %s16 = sphi 0, %s35
    %s17 = sphi 0, %s31
    %s18 = sphi 0, %s27
    %s19 = sphi 0, %s16
    %s20 = sphi 0, %s17
    %s21 = sphi 0, %s18
    %s22 = sphi 0, %s19
    %s23 = sphi 0, %s20
    %s24 = sphi 0, %s21
    %s40 = sphi 0, %s42
    %s43 = sphi 0, %s40
    %s44 = sphi 0, %s43
    %s60 = sphi 0, %s44
    %s68 = sphi 0, %s70
    %s71 = sphi 0, %s68
    %s72 = sphi 0, %s71
    %s88 = sphi 0, %s72
    %s94 = sphi 0, %s96
    %s97 = sphi 0, %s94
    %s98 = sphi 0, %s97
    %s114 = sphi 0, %s98
    %s122 = sphi 0, %s124
    %s125 = sphi 0, %s122
    %s126 = sphi 0, %s125
    %s142 = sphi 0, %s126
  $region4: #{_lambda_.15} parent=0 // loop_header_branch
    %12 = sbr.rel (%p10) target = $region8
  $region5: #{_lambda_.15} parent=0 // loop_body
    %s14 = ssub.s32 %s9, 1
    %s15 = ssub.s32 %s9, 2
    %s25 = sadd.s32 1, %s18
    %p26 = scmp.ge.s32.totalorder %s25, 1
    %s27 = scalar_select %p26, 0, %s25
    %s28 = sadd.s32 1, %s17
    %s29 = scalar_select %p26, %s28, %s17
    %p30 = scmp.ge.s32.totalorder %s29, 1
    %s31 = scalar_select %p30, 0, %s29
    %s32 = sadd.s32 1, %s16
    %s33 = scalar_select %p30, %s32, %s16
    %p34 = scmp.ge.s32.totalorder %s33, 2
    %s35 = scalar_select %p34, 0, %s33
    %s36 = ssub.s32 %s16, %s35
    %s37 = ssub.s32 %s18, %s27
    %s38 = sor.u32 %s36, %s37
    %p39 = scmp.eq.s32.totalorder %s38, 0
    %s41 = sadd.s32 %s40, 1
    %s42 = scalar_select %p39, %s40, %s41
    %p45 = pneg %p39
    %p46 = scmp.eq.s32.totalorder %s9, 1
    %p47 = por %p45, %p46
    %p48 = scmp.ne.s32.totalorder %s40, %s43
    %p49 = scmp.eq.s32.totalorder %s9, 0
    %p50 = por %p48, %p49
    %p51 = scmp.ne.s32.totalorder %s40, %s43
    %p52 = scmp.eq.s32.totalorder %s14, 1
    %p53 = por %p51, %p52
    %p54 = scmp.ne.s32.totalorder %s43, %s44
    %p55 = scmp.eq.s32.totalorder %s14, 0
    %p56 = por %p54, %p55
    %p57 = scmp.ne.s32.totalorder %s43, %s44
    %p58 = scmp.eq.s32.totalorder %s15, 1
    %p59 = por %p57, %p58
    %p61 = scmp.ne.s32.totalorder %s44, %s60
    %p62 = scmp.eq.s32.totalorder %s15, 0
    %p63 = por %p61, %p62
    %s64 = ssub.s32 %s18, %s27
    %s65 = ssub.s32 %s17, %s31
    %s66 = sor.u32 %s64, %s65
    %p67 = scmp.eq.s32.totalorder %s66, 0
    %s69 = sadd.s32 %s68, 1
    %s70 = scalar_select %p67, %s68, %s69
    %p73 = pneg %p67
    %p74 = scmp.eq.s32.totalorder %s9, 1
    %p75 = por %p73, %p74
    %p76 = scmp.ne.s32.totalorder %s68, %s71
    %p77 = scmp.eq.s32.totalorder %s9, 0
    %p78 = por %p76, %p77
    %p79 = scmp.ne.s32.totalorder %s68, %s71
    %p80 = scmp.eq.s32.totalorder %s14, 1
    %p81 = por %p79, %p80
    %p82 = scmp.ne.s32.totalorder %s71, %s72
    %p83 = scmp.eq.s32.totalorder %s14, 0
    %p84 = por %p82, %p83
    %p85 = scmp.ne.s32.totalorder %s71, %s72
    %p86 = scmp.eq.s32.totalorder %s15, 1
    %p87 = por %p85, %p86
    %p89 = scmp.ne.s32.totalorder %s72, %s88
    %p90 = scmp.eq.s32.totalorder %s15, 0
    %p91 = por %p89, %p90
    %s92 = ssub.s32 %s17, %s31
    %p93 = scmp.eq.s32.totalorder %s92, 0
    %s95 = sadd.s32 %s94, 1
    %s96 = scalar_select %p93, %s94, %s95
    %p99 = pneg %p93
    %p100 = scmp.eq.s32.totalorder %s9, 1
    %p101 = por %p99, %p100
    %p102 = scmp.ne.s32.totalorder %s94, %s97
    %p103 = scmp.eq.s32.totalorder %s9, 0
    %p104 = por %p102, %p103
    %p105 = scmp.ne.s32.totalorder %s94, %s97
    %p106 = scmp.eq.s32.totalorder %s14, 1
    %p107 = por %p105, %p106
    %p108 = scmp.ne.s32.totalorder %s97, %s98
    %p109 = scmp.eq.s32.totalorder %s14, 0
    %p110 = por %p108, %p109
    %p111 = scmp.ne.s32.totalorder %s97, %s98
    %p112 = scmp.eq.s32.totalorder %s15, 1
    %p113 = por %p111, %p112
    %p115 = scmp.ne.s32.totalorder %s98, %s114
    %p116 = scmp.eq.s32.totalorder %s15, 0
    %p117 = por %p115, %p116
    %s118 = ssub.s32 %s16, %s35
    %s119 = ssub.s32 %s17, %s31
    %s120 = sor.u32 %s118, %s119
    %p121 = scmp.eq.s32.totalorder %s120, 0
    %s123 = sadd.s32 %s122, 1
    %s124 = scalar_select %p121, %s122, %s123
    %p127 = pneg %p121
    %p128 = scmp.eq.s32.totalorder %s9, 1
    %p129 = por %p127, %p128
    %p130 = scmp.ne.s32.totalorder %s122, %s125
    %p131 = scmp.eq.s32.totalorder %s9, 0
    %p132 = por %p130, %p131
    %p133 = scmp.ne.s32.totalorder %s122, %s125
    %p134 = scmp.eq.s32.totalorder %s14, 1
    %p135 = por %p133, %p134
    %p136 = scmp.ne.s32.totalorder %s125, %s126
    %p137 = scmp.eq.s32.totalorder %s14, 0
    %p138 = por %p136, %p137
    %p139 = scmp.ne.s32.totalorder %s125, %s126
    %p140 = scmp.eq.s32.totalorder %s15, 1
    %p141 = por %p139, %p140
    %p143 = scmp.ne.s32.totalorder %s126, %s142
    %p144 = scmp.eq.s32.totalorder %s15, 0
    %p145 = por %p143, %p144
    %p146 = scmp.le.s32.totalorder 1, %s9
    %p147 = scmp.lt.s32.totalorder %s9, 3
    %p148 = pnand %p146, %p147
    %p149 = pneg %p148
    // Predicated region
    $region9: #{_lambda_.15} parent=5 // pred_check
      _
    $region10: #{_lambda_.15} parent=5 // pred_check_branch
      %151 = sbr.rel (%p148) target = $region12
    $region11: #{_lambda_.15} parent=5 // pred_region
      %s152 = ssub.s32 %s9, 1
      // Predicated region
      $region13: #{_lambda_.15} parent=11 // pred_check
        %p153 = pneg %p84
      $region14: #{_lambda_.15} parent=11 // pred_check_branch
        %155 = sbr.rel (%p153) target = $region16
      $region15: #{_lambda_.15} parent=11 // pred_region
        %s156 = smul.u32 16, %s21
        %p157 = scmp.lt.s32.totalorder %s156, 15
        %s158 = scalar_select %p157, %s156, 15
        %p159 = scmp.lt.s32.totalorder %s20, 0
        %s160 = scalar_select %p159, %s20, 0
        %s161 = sadd.s32 %s160, %s158
        %s162 = smul.addr %s161, 4
        %s163 = scalar_lea.vmem %s1, %s162
        %s164 = smul.u32 16, %s21
      $region16: #{_lambda_.15} parent=11 // pred_fallthru
        _
      // Predicated region
      $region17: #{_lambda_.15} parent=11 // pred_check
        %p165 = pneg %p110
      $region18: #{_lambda_.15} parent=11 // pred_check_branch
        %167 = sbr.rel (%p165) target = $region20
      $region19: #{_lambda_.15} parent=11 // pred_region
        %p168 = scmp.lt.s32.totalorder %s20, 0
        %s169 = scalar_select %p168, %s20, 0
        %s170 = scalar_lea.vmem %s2, %s169
      $region20: #{_lambda_.15} parent=11 // pred_fallthru
        _
    $region12: #{_lambda_.15} parent=5 // pred_fallthru
      _
    %p171 = scmp.lt.s32.totalorder %s9, 2
    // Predicated region
    $region21: #{_lambda_.15} parent=5 // pred_check
      %p172 = pneg %p171
    $region22: #{_lambda_.15} parent=5 // pred_check_branch
      %174 = sbr.rel (%p172) target = $region24
    $region23: #{_lambda_.15} parent=5 // pred_region
      // Predicated region
      $region25: #{_lambda_.15} parent=23 // pred_check
        %p175 = pneg %p50
      $region26: #{_lambda_.15} parent=23 // pred_check_branch
        %177 = sbr.rel (%p175) target = $region28
      $region27: #{_lambda_.15} parent=23 // pred_region
        %s178 = smul.u32 32, %s16
        %p179 = scmp.lt.s32.totalorder %s178, 63
        %s180 = scalar_select %p179, %s178, 63
        %p181 = scmp.lt.s32.totalorder %s18, 0
        %s182 = scalar_select %p181, %s18, 0
        %s183 = sadd.s32 %s182, %s180
        %s184 = smul.addr %s183, 4
        %s185 = scalar_lea.vmem %s0, %s184
        %s186 = smul.u32 32, %s16
      $region28: #{_lambda_.15} parent=23 // pred_fallthru
        _
    $region24: #{_lambda_.15} parent=5 // pred_fallthru
      _
    %p187 = scmp.le.s32.totalorder 1, %s9
    %p188 = scmp.lt.s32.totalorder %s9, 3
    %p189 = pnand %p187, %p188
    %p190 = pneg %p189
    // Predicated region
    $region29: #{_lambda_.15} parent=5 // pred_check
      _
    $region30: #{_lambda_.15} parent=5 // pred_check_branch
      %192 = sbr.rel (%p189) target = $region32
    $region31: #{_lambda_.15} parent=5 // pred_region
      %s193 = ssub.s32 %s9, 1
      %s194 = smul.u32 32, %s19
      %p195 = scmp.lt.s32.totalorder %s194, 63
      %s196 = scalar_select %p195, %s194, 63
      %p197 = scmp.lt.s32.totalorder %s21, 0
      %s198 = scalar_select %p197, %s21, 0
      %s199 = sadd.s32 %s198, %s196
      %s200 = smul.addr %s199, 4
      %s201 = scalar_lea.vmem %s0, %s200
      %p202 = pneg %p56
      %p203 = pneg %p53
      %s204 = smul.u32 16, %s21
      %p205 = scmp.lt.s32.totalorder %s204, 15
      %s206 = scalar_select %p205, %s204, 15
      %p207 = scmp.lt.s32.totalorder %s20, 0
      %s208 = scalar_select %p207, %s20, 0
      %s209 = sadd.s32 %s208, %s206
      %s210 = smul.addr %s209, 4
      %s211 = scalar_lea.vmem %s1, %s210
      %p212 = pneg %p84
      %p213 = pneg %p81
      %p214 = scmp.lt.s32.totalorder %s20, 0
      %s215 = scalar_select %p214, %s20, 0
      %s216 = scalar_lea.vmem %s2, %s215
      %p217 = pneg %p110
      %p218 = pneg %p107
      %p219 = pneg %p138
      %p220 = pneg %p135
      %s221 = smul.u32 32, %s19
      %p222 = scmp.lt.s32.totalorder %s221, 63
      %s223 = scalar_select %p222, %s221, 63
      %p224 = scmp.lt.s32.totalorder %s20, 0
      %s225 = scalar_select %p224, %s20, 0
      %s226 = sadd.s32 %s225, %s223
      %s227 = smul.addr %s226, 8
      %s228 = scalar_lea.vmem %s3, %s227
      %s229 = smul.u32 32, %s19
      %p230 = scmp.lt.s32.totalorder %s229, 63
      %s231 = scalar_select %p230, %s229, 63
      %p232 = scmp.lt.s32.totalorder %s21, 0
      %s233 = scalar_select %p232, %s21, 0
      %s234 = sadd.s32 %s233, %s231
      %s235 = smul.addr %s234, 4
      %s236 = scalar_lea.vmem %s0, %s235
      %s237 = smul.u32 32, %s19
      %s238 = smul.u32 16, %s21
      %p239 = scmp.lt.s32.totalorder %s238, 15
      %s240 = scalar_select %p239, %s238, 15
      %p241 = scmp.lt.s32.totalorder %s20, 0
      %s242 = scalar_select %p241, %s20, 0
      %s243 = sadd.s32 %s242, %s240
      %s244 = smul.addr %s243, 4
      %s245 = scalar_lea.vmem %s1, %s244
      %s246 = smul.u32 16, %s21
      %p247 = scmp.lt.s32.totalorder %s20, 0
      %s248 = scalar_select %p247, %s20, 0
      %s249 = scalar_lea.vmem %s2, %s248
      %s250 = smul.u32 32, %s19
      %p251 = scmp.lt.s32.totalorder %s250, 63
      %s252 = scalar_select %p251, %s250, 63
      %p253 = scmp.lt.s32.totalorder %s20, 0
      %s254 = scalar_select %p253, %s20, 0
      %s255 = sadd.s32 %s254, %s252
      %s256 = smul.addr %s255, 8
      %s257 = scalar_lea.vmem %s3, %s256
      %s258 = smul.u32 32, %s19
      %p260 = scmp.eq.s32.totalorder %s21, 0
      // Predicated region
      $region33: #{_lambda_.15} parent=31 // pred_check
        %p261 = pneg %p260
      $region34: #{_lambda_.15} parent=31 // pred_check_branch
        %263 = sbr.rel (%p261) target = $region36
      $region35: #{_lambda_.15} parent=31 // pred_region
        %264 = vst [vmem:[#allocation2] sm:$0xff] 0.0
        %265 = vst [vmem:[#allocation2 + $0x8] sm:$0xff] 0.0
        %266 = vst [vmem:[#allocation2 + $0x10] sm:$0xff] 0.0
        %267 = vst [vmem:[#allocation2 + $0x18] sm:$0xff] 0.0
        %268 = vst [vmem:[#allocation2 + $0x20] sm:$0xff] 0.0
        %269 = vst [vmem:[#allocation2 + $0x28] sm:$0xff] 0.0
        %270 = vst [vmem:[#allocation2 + $0x30] sm:$0xff] 0.0
        %271 = vst [vmem:[#allocation2 + $0x38] sm:$0xff] 0.0
        %272 = vst [vmem:[#allocation2 + $0x40] sm:$0xff] 0.0
        %273 = vst [vmem:[#allocation2 + $0x48] sm:$0xff] 0.0
        %274 = vst [vmem:[#allocation2 + $0x50] sm:$0xff] 0.0
        %275 = vst [vmem:[#allocation2 + $0x58] sm:$0xff] 0.0
        %276 = vst [vmem:[#allocation2 + $0x60] sm:$0xff] 0.0
        %277 = vst [vmem:[#allocation2 + $0x68] sm:$0xff] 0.0
        %278 = vst [vmem:[#allocation2 + $0x70] sm:$0xff] 0.0
        %279 = vst [vmem:[#allocation2 + $0x78] sm:$0xff] 0.0
        %280 = vst [vmem:[#allocation2 + $0x80] sm:$0xff] 0.0
        %281 = vst [vmem:[#allocation2 + $0x88] sm:$0xff] 0.0
        %282 = vst [vmem:[#allocation2 + $0x90] sm:$0xff] 0.0
        %283 = vst [vmem:[#allocation2 + $0x98] sm:$0xff] 0.0
        %284 = vst [vmem:[#allocation2 + $0xa0] sm:$0xff] 0.0
        %285 = vst [vmem:[#allocation2 + $0xa8] sm:$0xff] 0.0
        %286 = vst [vmem:[#allocation2 + $0xb0] sm:$0xff] 0.0
        %287 = vst [vmem:[#allocation2 + $0xb8] sm:$0xff] 0.0
        %288 = vst [vmem:[#allocation2 + $0xc0] sm:$0xff] 0.0
        %289 = vst [vmem:[#allocation2 + $0xc8] sm:$0xff] 0.0
        %290 = vst [vmem:[#allocation2 + $0xd0] sm:$0xff] 0.0
        %291 = vst [vmem:[#allocation2 + $0xd8] sm:$0xff] 0.0
        %292 = vst [vmem:[#allocation2 + $0xe0] sm:$0xff] 0.0
        %293 = vst [vmem:[#allocation2 + $0xe8] sm:$0xff] 0.0
        %294 = vst [vmem:[#allocation2 + $0xf0] sm:$0xff] 0.0
        %295 = vst [vmem:[#allocation2 + $0xf8] sm:$0xff] 0.0
      $region36: #{_lambda_.15} parent=31 // pred_fallthru
        _
      %v296 = vld [vmem:[#allocation2] sm:$0xff]
      %v297 = vld [vmem:[#allocation2 + $0x8] sm:$0xff]
      %v298 = vld [vmem:[#allocation2 + $0x10] sm:$0xff]
      %v299 = vld [vmem:[#allocation2 + $0x18] sm:$0xff]
      %v300 = vld [vmem:[#allocation2 + $0x20] sm:$0xff]
      %v301 = vld [vmem:[#allocation2 + $0x28] sm:$0xff]
      %v302 = vld [vmem:[#allocation2 + $0x30] sm:$0xff]
      %v303 = vld [vmem:[#allocation2 + $0x38] sm:$0xff]
      %v304 = vld [vmem:[#allocation2 + $0x40] sm:$0xff]
      %v305 = vld [vmem:[#allocation2 + $0x48] sm:$0xff]
      %v306 = vld [vmem:[#allocation2 + $0x50] sm:$0xff]
      %v307 = vld [vmem:[#allocation2 + $0x58] sm:$0xff]
      %v308 = vld [vmem:[#allocation2 + $0x60] sm:$0xff]
      %v309 = vld [vmem:[#allocation2 + $0x68] sm:$0xff]
      %v310 = vld [vmem:[#allocation2 + $0x70] sm:$0xff]
      %v311 = vld [vmem:[#allocation2 + $0x78] sm:$0xff]
      %v312 = vld [vmem:[#allocation2 + $0x80] sm:$0xff]
      %v313 = vld [vmem:[#allocation2 + $0x88] sm:$0xff]
      %v314 = vld [vmem:[#allocation2 + $0x90] sm:$0xff]
      %v315 = vld [vmem:[#allocation2 + $0x98] sm:$0xff]
      %v316 = vld [vmem:[#allocation2 + $0xa0] sm:$0xff]
      %v317 = vld [vmem:[#allocation2 + $0xa8] sm:$0xff]
      %v318 = vld [vmem:[#allocation2 + $0xb0] sm:$0xff]
      %v319 = vld [vmem:[#allocation2 + $0xb8] sm:$0xff]
      %v320 = vld [vmem:[#allocation2 + $0xc0] sm:$0xff]
      %v321 = vld [vmem:[#allocation2 + $0xc8] sm:$0xff]
      %v322 = vld [vmem:[#allocation2 + $0xd0] sm:$0xff]
      %v323 = vld [vmem:[#allocation2 + $0xd8] sm:$0xff]
      %v324 = vld [vmem:[#allocation2 + $0xe0] sm:$0xff]
      %v325 = vld [vmem:[#allocation2 + $0xe8] sm:$0xff]
      %v326 = vld [vmem:[#allocation2 + $0xf0] sm:$0xff]
      %v327 = vld [vmem:[#allocation2 + $0xf8] sm:$0xff]
      %v328 = vld [vmem:[%s236] sm:$0xf]
      %v329 = vld [vmem:[%s236 + $0x4] sm:$0xf]
      %v330 = vld [vmem:[%s236 + $0x8] sm:$0xf]
      %v331 = vld [vmem:[%s236 + $0xc] sm:$0xf]
      %v332 = vld [vmem:[%s236 + $0x10] sm:$0xf]
      %v333 = vld [vmem:[%s236 + $0x14] sm:$0xf]
      %v334 = vld [vmem:[%s236 + $0x18] sm:$0xf]
      %v335 = vld [vmem:[%s236 + $0x1c] sm:$0xf]
      %v336 = vld [vmem:[%s236 + $0x20] sm:$0xf]
      %v337 = vld [vmem:[%s236 + $0x24] sm:$0xf]
      %v338 = vld [vmem:[%s236 + $0x28] sm:$0xf]
      %v339 = vld [vmem:[%s236 + $0x2c] sm:$0xf]
      %v340 = vld [vmem:[%s236 + $0x30] sm:$0xf]
      %v341 = vld [vmem:[%s236 + $0x34] sm:$0xf]
      %v342 = vld [vmem:[%s236 + $0x38] sm:$0xf]
      %v343 = vld [vmem:[%s236 + $0x3c] sm:$0xf]
      %v344 = vld [vmem:[%s236 + $0x40] sm:$0xf]
      %v345 = vld [vmem:[%s236 + $0x44] sm:$0xf]
      %v346 = vld [vmem:[%s236 + $0x48] sm:$0xf]
      %v347 = vld [vmem:[%s236 + $0x4c] sm:$0xf]
      %v348 = vld [vmem:[%s236 + $0x50] sm:$0xf]
      %v349 = vld [vmem:[%s236 + $0x54] sm:$0xf]
      %v350 = vld [vmem:[%s236 + $0x58] sm:$0xf]
      %v351 = vld [vmem:[%s236 + $0x5c] sm:$0xf]
      %v352 = vld [vmem:[%s236 + $0x60] sm:$0xf]
      %v353 = vld [vmem:[%s236 + $0x64] sm:$0xf]
      %v354 = vld [vmem:[%s236 + $0x68] sm:$0xf]
      %v355 = vld [vmem:[%s236 + $0x6c] sm:$0xf]
      %v356 = vld [vmem:[%s236 + $0x70] sm:$0xf]
      %v357 = vld [vmem:[%s236 + $0x74] sm:$0xf]
      %v358 = vld [vmem:[%s236 + $0x78] sm:$0xf]
      %v359 = vld [vmem:[%s236 + $0x7c] sm:$0xf]
      %v360 = vld [vmem:[%s245] sm:$0xf]
      %v361 = vld [vmem:[%s245 + $0x4] sm:$0xf]
      %v362 = vld [vmem:[%s245 + $0x8] sm:$0xf]
      %v363 = vld [vmem:[%s245 + $0xc] sm:$0xf]
      %v364 = vld [vmem:[%s245 + $0x10] sm:$0xf]
      %v365 = vld [vmem:[%s245 + $0x14] sm:$0xf]
      %v366 = vld [vmem:[%s245 + $0x18] sm:$0xf]
      %v367 = vld [vmem:[%s245 + $0x1c] sm:$0xf]
      %v368 = vld [vmem:[%s245 + $0x20] sm:$0xf]
      %v369 = vld [vmem:[%s245 + $0x24] sm:$0xf]
      %v370 = vld [vmem:[%s245 + $0x28] sm:$0xf]
      %v371 = vld [vmem:[%s245 + $0x2c] sm:$0xf]
      %v372 = vld [vmem:[%s245 + $0x30] sm:$0xf]
      %v373 = vld [vmem:[%s245 + $0x34] sm:$0xf]
      %v374 = vld [vmem:[%s245 + $0x38] sm:$0xf]
      %v375 = vld [vmem:[%s245 + $0x3c] sm:$0xf]
      %v408 = vunpack.c.l.b16 %v328
      %v409 = vunpack.c.l.b16 %v329
      %v410 = vunpack.c.l.b16 %v330
      %v411 = vunpack.c.l.b16 %v331
      %v412 = vunpack.c.l.b16 %v332
      %v413 = vunpack.c.l.b16 %v333
      %v414 = vunpack.c.l.b16 %v334
      %v415 = vunpack.c.l.b16 %v335
      %v416 = vunpack.c.l.b16 %v336
      %v417 = vunpack.c.l.b16 %v337
      %v418 = vunpack.c.l.b16 %v338
      %v419 = vunpack.c.l.b16 %v339
      %v420 = vunpack.c.l.b16 %v340
      %v421 = vunpack.c.l.b16 %v341
      %v422 = vunpack.c.l.b16 %v342
      %v423 = vunpack.c.l.b16 %v343
      %v424 = vunpack.c.l.b16 %v344
      %v425 = vunpack.c.l.b16 %v345
      %v426 = vunpack.c.l.b16 %v346
      %v427 = vunpack.c.l.b16 %v347
      %v428 = vunpack.c.l.b16 %v348
      %v429 = vunpack.c.l.b16 %v349
      %v430 = vunpack.c.l.b16 %v350
      %v431 = vunpack.c.l.b16 %v351
      %v432 = vunpack.c.l.b16 %v352
      %v433 = vunpack.c.l.b16 %v353
      %v434 = vunpack.c.l.b16 %v354
      %v435 = vunpack.c.l.b16 %v355
      %v436 = vunpack.c.l.b16 %v356
      %v437 = vunpack.c.l.b16 %v357
      %v438 = vunpack.c.l.b16 %v358
      %v439 = vunpack.c.l.b16 %v359
      %v440 = vpack.c.b16 %v409, %v408
      %v441 = vpack.c.b16 %v411, %v410
      %v442 = vpack.c.b16 %v413, %v412
      %v443 = vpack.c.b16 %v415, %v414
      %v444 = vpack.c.b16 %v417, %v416
      %v445 = vpack.c.b16 %v419, %v418
      %v446 = vpack.c.b16 %v421, %v420
      %v447 = vpack.c.b16 %v423, %v422
      %v448 = vpack.c.b16 %v425, %v424
      %v449 = vpack.c.b16 %v427, %v426
      %v450 = vpack.c.b16 %v429, %v428
      %v451 = vpack.c.b16 %v431, %v430
      %v452 = vpack.c.b16 %v433, %v432
      %v453 = vpack.c.b16 %v435, %v434
      %v454 = vpack.c.b16 %v437, %v436
      %v455 = vpack.c.b16 %v439, %v438
      %v488 = vunpack.c.l.b16 %v360
      %v489 = vunpack.c.l.b16 %v361
      %v490 = vunpack.c.l.b16 %v362
      %v491 = vunpack.c.l.b16 %v363
      %v492 = vunpack.c.l.b16 %v364
      %v493 = vunpack.c.l.b16 %v365
      %v494 = vunpack.c.l.b16 %v366
      %v495 = vunpack.c.l.b16 %v367
      %v496 = vunpack.c.l.b16 %v368
      %v497 = vunpack.c.l.b16 %v369
      %v498 = vunpack.c.l.b16 %v370
      %v499 = vunpack.c.l.b16 %v371
      %v500 = vunpack.c.l.b16 %v372
      %v501 = vunpack.c.l.b16 %v373
      %v502 = vunpack.c.l.b16 %v374
      %v503 = vunpack.c.l.b16 %v375
      %v504 = vpack.c.b16 %v489, %v488
      %v505 = vpack.c.b16 %v491, %v490
      %v506 = vpack.c.b16 %v493, %v492
      %v507 = vpack.c.b16 %v495, %v494
      %v508 = vpack.c.b16 %v497, %v496
      %v509 = vpack.c.b16 %v499, %v498
      %v510 = vpack.c.b16 %v501, %v500
      %v511 = vpack.c.b16 %v503, %v502
      %520 = vmatprep.subr.bf16.mxu0 0
      %521 = vmatpush1.bf16.msra.mxu0 %v511
      %522 = vmatprep.subr.bf16.mxu0 0
      %523 = vmatpush1.bf16.msra.mxu0 %v510
      %524 = vmatprep.subr.bf16.mxu0 0
      %525 = vmatpush1.bf16.msra.mxu0 %v509
      %526 = vmatprep.subr.bf16.mxu0 0
      %527 = vmatpush1.bf16.msra.mxu0 %v508
      %528 = vmatprep.subr.bf16.mxu0 0
      %529 = vmatpush1.bf16.msra.mxu0 %v507
      %530 = vmatprep.subr.bf16.mxu0 0
      %531 = vmatpush1.bf16.msra.mxu0 %v506
      %532 = vmatprep.subr.bf16.mxu0 0
      %533 = vmatpush1.bf16.msra.mxu0 %v505
      %534 = vmatprep.subr.bf16.mxu0 0
      %535 = vmatpush1.bf16.msra.mxu0 %v504
      %536 = vmatprep.subr.bf16.mxu0 0
      %537 = vmatpush2.bf16.msra.mxu0 0
      %538 = vmatprep.subr.bf16.mxu0 0
      %539 = vmatpush2.bf16.msra.mxu0 0
      %540 = vmatprep.subr.bf16.mxu0 0
      %541 = vmatpush2.bf16.msra.mxu0 0
      %542 = vmatprep.subr.bf16.mxu0 0
      %543 = vmatpush2.bf16.msra.mxu0 0
      %544 = vmatprep.subr.bf16.mxu0 0
      %545 = vmatpush2.bf16.msra.mxu0 0
      %546 = vmatprep.subr.bf16.mxu0 0
      %547 = vmatpush2.bf16.msra.mxu0 0
      %548 = vmatprep.subr.bf16.mxu0 0
      %549 = vmatpush2.bf16.msra.mxu0 0
      %550 = vmatprep.subr.bf16.mxu0 0
      %551 = vmatpush2.bf16.msra.mxu0 0
      %552 = vmatprep.mubr.bf16.mxu0 0
      %553 = vmatmul.mubr.bf16.gmra.mxu0 %v440
      %v554 = vpop.f32.mrf.mxu0
      %v555 = vadd.f32 0.0, %v554
      %v556 = vpop.f32.mrf.mxu0
      %v557 = vpop.f32.mrf.mxu0
      %v558 = vadd.f32 0.0, %v557
      %v559 = vpop.f32.mrf.mxu0
      %560 = vmatprep.mubr.bf16.mxu0 0
      %561 = vmatmul.mubr.bf16.gmra.mxu0 %v441
      %v562 = vpop.f32.mrf.mxu0
      %v563 = vadd.f32 0.0, %v562
      %v564 = vpop.f32.mrf.mxu0
      %v565 = vpop.f32.mrf.mxu0
      %v566 = vadd.f32 0.0, %v565
      %v567 = vpop.f32.mrf.mxu0
      %568 = vmatprep.mubr.bf16.mxu0 0
      %569 = vmatmul.mubr.bf16.gmra.mxu0 %v442
      %v570 = vpop.f32.mrf.mxu0
      %v571 = vadd.f32 0.0, %v570
      %v572 = vpop.f32.mrf.mxu0
      %v573 = vpop.f32.mrf.mxu0
      %v574 = vadd.f32 0.0, %v573
      %v575 = vpop.f32.mrf.mxu0
      %576 = vmatprep.mubr.bf16.mxu0 0
      %577 = vmatmul.mubr.bf16.gmra.mxu0 %v443
      %v578 = vpop.f32.mrf.mxu0
      %v579 = vadd.f32 0.0, %v578
      %v580 = vpop.f32.mrf.mxu0
      %v581 = vpop.f32.mrf.mxu0
      %v582 = vadd.f32 0.0, %v581
      %v583 = vpop.f32.mrf.mxu0
      %584 = vmatprep.mubr.bf16.mxu0 0
      %585 = vmatmul.mubr.bf16.gmra.mxu0 %v444
      %v586 = vpop.f32.mrf.mxu0
      %v587 = vadd.f32 0.0, %v586
      %v588 = vpop.f32.mrf.mxu0
      %v589 = vpop.f32.mrf.mxu0
      %v590 = vadd.f32 0.0, %v589
      %v591 = vpop.f32.mrf.mxu0
      %592 = vmatprep.mubr.bf16.mxu0 0
      %593 = vmatmul.mubr.bf16.gmra.mxu0 %v445
      %v594 = vpop.f32.mrf.mxu0
      %v595 = vadd.f32 0.0, %v594
      %v596 = vpop.f32.mrf.mxu0
      %v597 = vpop.f32.mrf.mxu0
      %v598 = vadd.f32 0.0, %v597
      %v599 = vpop.f32.mrf.mxu0
      %600 = vmatprep.mubr.bf16.mxu0 0
      %601 = vmatmul.mubr.bf16.gmra.mxu0 %v446
      %v602 = vpop.f32.mrf.mxu0
      %v603 = vadd.f32 0.0, %v602
      %v604 = vpop.f32.mrf.mxu0
      %v605 = vpop.f32.mrf.mxu0
      %v606 = vadd.f32 0.0, %v605
      %v607 = vpop.f32.mrf.mxu0
      %608 = vmatprep.mubr.bf16.mxu0 0
      %609 = vmatmul.mubr.bf16.gmra.mxu0 %v447
      %v610 = vpop.f32.mrf.mxu0
      %v611 = vadd.f32 0.0, %v610
      %v612 = vpop.f32.mrf.mxu0
      %v613 = vpop.f32.mrf.mxu0
      %v614 = vadd.f32 0.0, %v613
      %v615 = vpop.f32.mrf.mxu0
      %616 = vmatprep.mubr.bf16.mxu0 0
      %617 = vmatmul.mubr.bf16.gmra.mxu0 %v448
      %v618 = vpop.f32.mrf.mxu0
      %v619 = vadd.f32 0.0, %v618
      %v620 = vpop.f32.mrf.mxu0
      %v621 = vpop.f32.mrf.mxu0
      %v622 = vadd.f32 0.0, %v621
      %v623 = vpop.f32.mrf.mxu0
      %624 = vmatprep.mubr.bf16.mxu0 0
      %625 = vmatmul.mubr.bf16.gmra.mxu0 %v449
      %v626 = vpop.f32.mrf.mxu0
      %v627 = vadd.f32 0.0, %v626
      %v628 = vpop.f32.mrf.mxu0
      %v629 = vpop.f32.mrf.mxu0
      %v630 = vadd.f32 0.0, %v629
      %v631 = vpop.f32.mrf.mxu0
      %632 = vmatprep.mubr.bf16.mxu0 0
      %633 = vmatmul.mubr.bf16.gmra.mxu0 %v450
      %v634 = vpop.f32.mrf.mxu0
      %v635 = vadd.f32 0.0, %v634
      %v636 = vpop.f32.mrf.mxu0
      %v637 = vpop.f32.mrf.mxu0
      %v638 = vadd.f32 0.0, %v637
      %v639 = vpop.f32.mrf.mxu0
      %640 = vmatprep.mubr.bf16.mxu0 0
      %641 = vmatmul.mubr.bf16.gmra.mxu0 %v451
      %v642 = vpop.f32.mrf.mxu0
      %v643 = vadd.f32 0.0, %v642
      %v644 = vpop.f32.mrf.mxu0
      %v645 = vpop.f32.mrf.mxu0
      %v646 = vadd.f32 0.0, %v645
      %v647 = vpop.f32.mrf.mxu0
      %648 = vmatprep.mubr.bf16.mxu0 0
      %649 = vmatmul.mubr.bf16.gmra.mxu0 %v452
      %v650 = vpop.f32.mrf.mxu0
      %v651 = vadd.f32 0.0, %v650
      %v652 = vpop.f32.mrf.mxu0
      %v653 = vpop.f32.mrf.mxu0
      %v654 = vadd.f32 0.0, %v653
      %v655 = vpop.f32.mrf.mxu0
      %656 = vmatprep.mubr.bf16.mxu0 0
      %657 = vmatmul.mubr.bf16.gmra.mxu0 %v453
      %v658 = vpop.f32.mrf.mxu0
      %v659 = vadd.f32 0.0, %v658
      %v660 = vpop.f32.mrf.mxu0
      %v661 = vpop.f32.mrf.mxu0
      %v662 = vadd.f32 0.0, %v661
      %v663 = vpop.f32.mrf.mxu0
      %664 = vmatprep.mubr.bf16.mxu0 0
      %665 = vmatmul.mubr.bf16.gmra.mxu0 %v454
      %v666 = vpop.f32.mrf.mxu0
      %v667 = vadd.f32 0.0, %v666
      %v668 = vpop.f32.mrf.mxu0
      %v669 = vpop.f32.mrf.mxu0
      %v670 = vadd.f32 0.0, %v669
      %v671 = vpop.f32.mrf.mxu0
      %672 = vmatprep.mubr.bf16.mxu0 0
      %673 = vmatmul.mubr.bf16.gmra.mxu0 %v455
      %v674 = vpop.f32.mrf.mxu0
      %v675 = vadd.f32 0.0, %v674
      %v676 = vpop.f32.mrf.mxu0
      %v677 = vpop.f32.mrf.mxu0
      %v678 = vadd.f32 0.0, %v677
      %v679 = vpop.f32.mrf.mxu0
      %680 = vdwg.mxu0
      %v681 = vadd.f32 %v296, %v555
      %v682 = vadd.f32 %v297, %v558
      %v683 = vadd.f32 %v298, %v563
      %v684 = vadd.f32 %v299, %v566
      %v685 = vadd.f32 %v300, %v571
      %v686 = vadd.f32 %v301, %v574
      %v687 = vadd.f32 %v302, %v579
      %v688 = vadd.f32 %v303, %v582
      %v689 = vadd.f32 %v304, %v587
      %v690 = vadd.f32 %v305, %v590
      %v691 = vadd.f32 %v306, %v595
      %v692 = vadd.f32 %v307, %v598
      %v693 = vadd.f32 %v308, %v603
      %v694 = vadd.f32 %v309, %v606
      %v695 = vadd.f32 %v310, %v611
      %v696 = vadd.f32 %v311, %v614
      %v697 = vadd.f32 %v312, %v619
      %v698 = vadd.f32 %v313, %v622
      %v699 = vadd.f32 %v314, %v627
      %v700 = vadd.f32 %v315, %v630
      %v701 = vadd.f32 %v316, %v635
      %v702 = vadd.f32 %v317, %v638
      %v703 = vadd.f32 %v318, %v643
      %v704 = vadd.f32 %v319, %v646
      %v705 = vadd.f32 %v320, %v651
      %v706 = vadd.f32 %v321, %v654
      %v707 = vadd.f32 %v322, %v659
      %v708 = vadd.f32 %v323, %v662
      %v709 = vadd.f32 %v324, %v667
      %v710 = vadd.f32 %v325, %v670
      %v711 = vadd.f32 %v326, %v675
      %v712 = vadd.f32 %v327, %v678
      %713 = vst [vmem:[#allocation2] sm:$0xff] %v681
      %714 = vst [vmem:[#allocation2 + $0x8] sm:$0xff] %v682
      %715 = vst [vmem:[#allocation2 + $0x10] sm:$0xff] %v683
      %716 = vst [vmem:[#allocation2 + $0x18] sm:$0xff] %v684
      %717 = vst [vmem:[#allocation2 + $0x20] sm:$0xff] %v685
      %718 = vst [vmem:[#allocation2 + $0x28] sm:$0xff] %v686
      %719 = vst [vmem:[#allocation2 + $0x30] sm:$0xff] %v687
      %720 = vst [vmem:[#allocation2 + $0x38] sm:$0xff] %v688
      %721 = vst [vmem:[#allocation2 + $0x40] sm:$0xff] %v689
      %722 = vst [vmem:[#allocation2 + $0x48] sm:$0xff] %v690
      %723 = vst [vmem:[#allocation2 + $0x50] sm:$0xff] %v691
      %724 = vst [vmem:[#allocation2 + $0x58] sm:$0xff] %v692
      %725 = vst [vmem:[#allocation2 + $0x60] sm:$0xff] %v693
      %726 = vst [vmem:[#allocation2 + $0x68] sm:$0xff] %v694
      %727 = vst [vmem:[#allocation2 + $0x70] sm:$0xff] %v695
      %728 = vst [vmem:[#allocation2 + $0x78] sm:$0xff] %v696
      %729 = vst [vmem:[#allocation2 + $0x80] sm:$0xff] %v697
      %730 = vst [vmem:[#allocation2 + $0x88] sm:$0xff] %v698
      %731 = vst [vmem:[#allocation2 + $0x90] sm:$0xff] %v699
      %732 = vst [vmem:[#allocation2 + $0x98] sm:$0xff] %v700
      %733 = vst [vmem:[#allocation2 + $0xa0] sm:$0xff] %v701
      %734 = vst [vmem:[#allocation2 + $0xa8] sm:$0xff] %v702
      %735 = vst [vmem:[#allocation2 + $0xb0] sm:$0xff] %v703
      %736 = vst [vmem:[#allocation2 + $0xb8] sm:$0xff] %v704
      %737 = vst [vmem:[#allocation2 + $0xc0] sm:$0xff] %v705
      %738 = vst [vmem:[#allocation2 + $0xc8] sm:$0xff] %v706
      %739 = vst [vmem:[#allocation2 + $0xd0] sm:$0xff] %v707
      %740 = vst [vmem:[#allocation2 + $0xd8] sm:$0xff] %v708
      %741 = vst [vmem:[#allocation2 + $0xe0] sm:$0xff] %v709
      %742 = vst [vmem:[#allocation2 + $0xe8] sm:$0xff] %v710
      %743 = vst [vmem:[#allocation2 + $0xf0] sm:$0xff] %v711
      %744 = vst [vmem:[#allocation2 + $0xf8] sm:$0xff] %v712
      // Predicated region
      $region37: #{_lambda_.15} parent=31 // pred_check
        %p745 = pneg %p260
      $region38: #{_lambda_.15} parent=31 // pred_check_branch
        %747 = sbr.rel (%p745) target = $region40
      $region39: #{_lambda_.15} parent=31 // pred_region
        %v748 = vld [vmem:[#allocation2] sm:$0xff]
        %v749 = vld [vmem:[#allocation2 + $0x8] sm:$0xff]
        %v750 = vld [vmem:[#allocation2 + $0x10] sm:$0xff]
        %v751 = vld [vmem:[#allocation2 + $0x18] sm:$0xff]
        %v752 = vld [vmem:[#allocation2 + $0x20] sm:$0xff]
        %v753 = vld [vmem:[#allocation2 + $0x28] sm:$0xff]
        %v754 = vld [vmem:[#allocation2 + $0x30] sm:$0xff]
        %v755 = vld [vmem:[#allocation2 + $0x38] sm:$0xff]
        %v756 = vld [vmem:[#allocation2 + $0x40] sm:$0xff]
        %v757 = vld [vmem:[#allocation2 + $0x48] sm:$0xff]
        %v758 = vld [vmem:[#allocation2 + $0x50] sm:$0xff]
        %v759 = vld [vmem:[#allocation2 + $0x58] sm:$0xff]
        %v760 = vld [vmem:[#allocation2 + $0x60] sm:$0xff]
        %v761 = vld [vmem:[#allocation2 + $0x68] sm:$0xff]
        %v762 = vld [vmem:[#allocation2 + $0x70] sm:$0xff]
        %v763 = vld [vmem:[#allocation2 + $0x78] sm:$0xff]
        %v764 = vld [vmem:[#allocation2 + $0x80] sm:$0xff]
        %v765 = vld [vmem:[#allocation2 + $0x88] sm:$0xff]
        %v766 = vld [vmem:[#allocation2 + $0x90] sm:$0xff]
        %v767 = vld [vmem:[#allocation2 + $0x98] sm:$0xff]
        %v768 = vld [vmem:[#allocation2 + $0xa0] sm:$0xff]
        %v769 = vld [vmem:[#allocation2 + $0xa8] sm:$0xff]
        %v770 = vld [vmem:[#allocation2 + $0xb0] sm:$0xff]
        %v771 = vld [vmem:[#allocation2 + $0xb8] sm:$0xff]
        %v772 = vld [vmem:[#allocation2 + $0xc0] sm:$0xff]
        %v773 = vld [vmem:[#allocation2 + $0xc8] sm:$0xff]
        %v774 = vld [vmem:[#allocation2 + $0xd0] sm:$0xff]
        %v775 = vld [vmem:[#allocation2 + $0xd8] sm:$0xff]
        %v776 = vld [vmem:[#allocation2 + $0xe0] sm:$0xff]
        %v777 = vld [vmem:[#allocation2 + $0xe8] sm:$0xff]
        %v778 = vld [vmem:[#allocation2 + $0xf0] sm:$0xff]
        %v779 = vld [vmem:[#allocation2 + $0xf8] sm:$0xff]
        %v780 = vld [vmem:[%s249] sm:$0x1]
        %v782 = vlaneseq
        %v783 = vshrl.u32 %v782, 7
        %v784 = vsub.s32 0, %v783
        %v785 = vrot.slane %v780, %v784
        %v787 = vadd.f32 %v748, %v785
        %v788 = vadd.f32 %v749, %v785
        %v789 = vadd.f32 %v750, %v785
        %v790 = vadd.f32 %v751, %v785
        %v791 = vadd.f32 %v752, %v785
        %v792 = vadd.f32 %v753, %v785
        %v793 = vadd.f32 %v754, %v785
        %v794 = vadd.f32 %v755, %v785
        %v795 = vadd.f32 %v756, %v785
        %v796 = vadd.f32 %v757, %v785
        %v797 = vadd.f32 %v758, %v785
        %v798 = vadd.f32 %v759, %v785
        %v799 = vadd.f32 %v760, %v785
        %v800 = vadd.f32 %v761, %v785
        %v801 = vadd.f32 %v762, %v785
        %v802 = vadd.f32 %v763, %v785
        %v803 = vadd.f32 %v764, %v785
        %v804 = vadd.f32 %v765, %v785
        %v805 = vadd.f32 %v766, %v785
        %v806 = vadd.f32 %v767, %v785
        %v807 = vadd.f32 %v768, %v785
        %v808 = vadd.f32 %v769, %v785
        %v809 = vadd.f32 %v770, %v785
        %v810 = vadd.f32 %v771, %v785
        %v811 = vadd.f32 %v772, %v785
        %v812 = vadd.f32 %v773, %v785
        %v813 = vadd.f32 %v774, %v785
        %v814 = vadd.f32 %v775, %v785
        %v815 = vadd.f32 %v776, %v785
        %v816 = vadd.f32 %v777, %v785
        %v817 = vadd.f32 %v778, %v785
        %v818 = vadd.f32 %v779, %v785
        %v819 = vmax.f32 %v787, 0.0
        %v820 = vmax.f32 %v788, 0.0
        %v821 = vmax.f32 %v789, 0.0
        %v822 = vmax.f32 %v790, 0.0
        %v823 = vmax.f32 %v791, 0.0
        %v824 = vmax.f32 %v792, 0.0
        %v825 = vmax.f32 %v793, 0.0
        %v826 = vmax.f32 %v794, 0.0
        %v827 = vmax.f32 %v795, 0.0
        %v828 = vmax.f32 %v796, 0.0
        %v829 = vmax.f32 %v797, 0.0
        %v830 = vmax.f32 %v798, 0.0
        %v831 = vmax.f32 %v799, 0.0
        %v832 = vmax.f32 %v800, 0.0
        %v833 = vmax.f32 %v801, 0.0
        %v834 = vmax.f32 %v802, 0.0
        %v835 = vmax.f32 %v803, 0.0
        %v836 = vmax.f32 %v804, 0.0
        %v837 = vmax.f32 %v805, 0.0
        %v838 = vmax.f32 %v806, 0.0
        %v839 = vmax.f32 %v807, 0.0
        %v840 = vmax.f32 %v808, 0.0
        %v841 = vmax.f32 %v809, 0.0
        %v842 = vmax.f32 %v810, 0.0
        %v843 = vmax.f32 %v811, 0.0
        %v844 = vmax.f32 %v812, 0.0
        %v845 = vmax.f32 %v813, 0.0
        %v846 = vmax.f32 %v814, 0.0
        %v847 = vmax.f32 %v815, 0.0
        %v848 = vmax.f32 %v816, 0.0
        %v849 = vmax.f32 %v817, 0.0
        %v850 = vmax.f32 %v818, 0.0
        %851 = vst [vmem:[%s257] sm:$0xff] %v819
        %852 = vst [vmem:[%s257 + $0x8] sm:$0xff] %v820
        %853 = vst [vmem:[%s257 + $0x10] sm:$0xff] %v821
        %854 = vst [vmem:[%s257 + $0x18] sm:$0xff] %v822
        %855 = vst [vmem:[%s257 + $0x20] sm:$0xff] %v823
        %856 = vst [vmem:[%s257 + $0x28] sm:$0xff] %v824
        %857 = vst [vmem:[%s257 + $0x30] sm:$0xff] %v825
        %858 = vst [vmem:[%s257 + $0x38] sm:$0xff] %v826
        %859 = vst [vmem:[%s257 + $0x40] sm:$0xff] %v827
        %860 = vst [vmem:[%s257 + $0x48] sm:$0xff] %v828
        %861 = vst [vmem:[%s257 + $0x50] sm:$0xff] %v829
        %862 = vst [vmem:[%s257 + $0x58] sm:$0xff] %v830
        %863 = vst [vmem:[%s257 + $0x60] sm:$0xff] %v831
        %864 = vst [vmem:[%s257 + $0x68] sm:$0xff] %v832
        %865 = vst [vmem:[%s257 + $0x70] sm:$0xff] %v833
        %866 = vst [vmem:[%s257 + $0x78] sm:$0xff] %v834
        %867 = vst [vmem:[%s257 + $0x80] sm:$0xff] %v835
        %868 = vst [vmem:[%s257 + $0x88] sm:$0xff] %v836
        %869 = vst [vmem:[%s257 + $0x90] sm:$0xff] %v837
        %870 = vst [vmem:[%s257 + $0x98] sm:$0xff] %v838
        %871 = vst [vmem:[%s257 + $0xa0] sm:$0xff] %v839
        %872 = vst [vmem:[%s257 + $0xa8] sm:$0xff] %v840
        %873 = vst [vmem:[%s257 + $0xb0] sm:$0xff] %v841
        %874 = vst [vmem:[%s257 + $0xb8] sm:$0xff] %v842
        %875 = vst [vmem:[%s257 + $0xc0] sm:$0xff] %v843
        %876 = vst [vmem:[%s257 + $0xc8] sm:$0xff] %v844
        %877 = vst [vmem:[%s257 + $0xd0] sm:$0xff] %v845
        %878 = vst [vmem:[%s257 + $0xd8] sm:$0xff] %v846
        %879 = vst [vmem:[%s257 + $0xe0] sm:$0xff] %v847
        %880 = vst [vmem:[%s257 + $0xe8] sm:$0xff] %v848
        %881 = vst [vmem:[%s257 + $0xf0] sm:$0xff] %v849
        %882 = vst [vmem:[%s257 + $0xf8] sm:$0xff] %v850
      $region40: #{_lambda_.15} parent=31 // pred_fallthru
        _
      %s883 = smul.u32 32, %s19
      %p884 = scmp.lt.s32.totalorder %s883, 63
      %s885 = scalar_select %p884, %s883, 63
      %p886 = scmp.lt.s32.totalorder %s20, 0
      %s887 = scalar_select %p886, %s20, 0
      %s888 = sadd.s32 %s887, %s885
      %s889 = smul.addr %s888, 8
      %s890 = scalar_lea.vmem %s3, %s889
      // Predicated region
      $region41: #{_lambda_.15} parent=31 // pred_check
        %p891 = pneg %p135
      $region42: #{_lambda_.15} parent=31 // pred_check_branch
        %893 = sbr.rel (%p891) target = $region44
      $region43: #{_lambda_.15} parent=31 // pred_region
        %s894 = smul.u32 32, %s19
      $region44: #{_lambda_.15} parent=31 // pred_fallthru
        _
    $region32: #{_lambda_.15} parent=5 // pred_fallthru
      _
    %p895 = scmp.le.s32.totalorder 2, %s9
    // Predicated region
    $region45: #{_lambda_.15} parent=5 // pred_check
      %p896 = pneg %p895
    $region46: #{_lambda_.15} parent=5 // pred_check_branch
      %898 = sbr.rel (%p896) target = $region48
    $region47: #{_lambda_.15} parent=5 // pred_region
      %s899 = ssub.s32 %s9, 2
      // Predicated region
      $region49: #{_lambda_.15} parent=47 // pred_check
        %p900 = pneg %p141
      $region50: #{_lambda_.15} parent=47 // pred_check_branch
        %902 = sbr.rel (%p900) target = $region52
      $region51: #{_lambda_.15} parent=47 // pred_region
        %s903 = smul.u32 32, %s22
        %p904 = scmp.lt.s32.totalorder %s903, 63
        %s905 = scalar_select %p904, %s903, 63
        %p906 = scmp.lt.s32.totalorder %s23, 0
        %s907 = scalar_select %p906, %s23, 0
        %s908 = sadd.s32 %s907, %s905
        %s909 = smul.addr %s908, 8
        %s910 = scalar_lea.vmem %s3, %s909
      $region52: #{_lambda_.15} parent=47 // pred_fallthru
        _
    $region48: #{_lambda_.15} parent=5 // pred_fallthru
      _
  $region6: #{_lambda_.15} parent=0 // loop_footer
    %s13 = sadd.s32 1, %s9
  $region7: #{_lambda_.15} parent=0 // loop_footer_branch
    %8 = sbr.rel target = $region3
  $region8: #{_lambda_.15} parent=0 // loop_exit
    _

// kernel: _lambda_.16
$region0: #{_lambda_.16}
  #allocation0 [shape = 'u32[]', space=smem, size = 0x4, offset = 0x4, fixed_abs, tag = 'smem constant byte address 0x4 - core index']
  #allocation1 [shape = 'u32[144,128]{1,0:T(1,128)}', space=vmem, size = 0x12000, scoped, tag = 'internal scratch']
  #allocation2 [shape = 'f32[128,128]{1,0:T(8,128)}', space=vmem, size = 0x10000, scoped, tag = 'scratch operand']
  %s0 = inlined_call_operand.vmem [shape: bf16[128,256], index: 0, kind: input, shape index: {}]
  %s1 = inlined_call_operand.vmem [shape: bf16[256,128], index: 1, kind: input, shape index: {}]
  %s2 = inlined_call_operand.vmem [shape: f32[1,128], index: 2, kind: input, shape index: {}]
  %s3 = inlined_call_operand.vmem [shape: f32[128,128], index: 3, kind: output, shape index: {}]
  %s4 = sld [smem:[#allocation0]]
  $region30: #{_lambda_.16} parent=0
    _
  %s6 = ssub.s32 1, %s4
  %s7 = scalar_select 0, %s6, %s4
  // Predicated region
  $region2: #{_lambda_.16} parent=0 // pred_check
    _
  $region3: #{_lambda_.16} parent=0 // pred_check_branch
    %9 = sbr.rel (0) target = $region5
  $region4: #{_lambda_.16} parent=0 // pred_region
    _
  $region5: #{_lambda_.16} parent=0 // pred_fallthru
    _
  // Predicated region
  $region6: #{_lambda_.16} parent=0 // pred_check
    _
  $region7: #{_lambda_.16} parent=0 // pred_check_branch
    %11 = sbr.rel (0) target = $region9
  $region8: #{_lambda_.16} parent=0 // pred_region
    _
  $region9: #{_lambda_.16} parent=0 // pred_fallthru
    _
  // Predicated region
  $region10: #{_lambda_.16} parent=0 // pred_check
    _
  $region11: #{_lambda_.16} parent=0 // pred_check_branch
    %13 = sbr.rel (0) target = $region13
  $region12: #{_lambda_.16} parent=0 // pred_region
    _
  $region13: #{_lambda_.16} parent=0 // pred_fallthru
    _
  %p15 = scmp.eq.s32.totalorder 0, 0
  // Predicated region
  $region14: #{_lambda_.16} parent=0 // pred_check
    %p16 = pneg %p15
  $region15: #{_lambda_.16} parent=0 // pred_check_branch
    %18 = sbr.rel (%p16) target = $region17
  $region16: #{_lambda_.16} parent=0 // pred_region
    %19 = vst [vmem:[#allocation2] sm:$0xff] 0.0
    %20 = vst [vmem:[#allocation2 + $0x8] sm:$0xff] 0.0
    %21 = vst [vmem:[#allocation2 + $0x10] sm:$0xff] 0.0
    %22 = vst [vmem:[#allocation2 + $0x18] sm:$0xff] 0.0
    %23 = vst [vmem:[#allocation2 + $0x20] sm:$0xff] 0.0
    %24 = vst [vmem:[#allocation2 + $0x28] sm:$0xff] 0.0
    %25 = vst [vmem:[#allocation2 + $0x30] sm:$0xff] 0.0
    %26 = vst [vmem:[#allocation2 + $0x38] sm:$0xff] 0.0
    %27 = vst [vmem:[#allocation2 + $0x40] sm:$0xff] 0.0
    %28 = vst [vmem:[#allocation2 + $0x48] sm:$0xff] 0.0
    %29 = vst [vmem:[#allocation2 + $0x50] sm:$0xff] 0.0
    %30 = vst [vmem:[#allocation2 + $0x58] sm:$0xff] 0.0
    %31 = vst [vmem:[#allocation2 + $0x60] sm:$0xff] 0.0
    %32 = vst [vmem:[#allocation2 + $0x68] sm:$0xff] 0.0
    %33 = vst [vmem:[#allocation2 + $0x70] sm:$0xff] 0.0
    %34 = vst [vmem:[#allocation2 + $0x78] sm:$0xff] 0.0
  $region17: #{_lambda_.16} parent=0 // pred_fallthru
    _
  %v35 = vld [vmem:[#allocation2] sm:$0xff]
  %v36 = vld [vmem:[#allocation2 + $0x8] sm:$0xff]
  %v37 = vld [vmem:[#allocation2 + $0x10] sm:$0xff]
  %v38 = vld [vmem:[#allocation2 + $0x18] sm:$0xff]
  %v39 = vld [vmem:[#allocation2 + $0x20] sm:$0xff]
  %v40 = vld [vmem:[#allocation2 + $0x28] sm:$0xff]
  %v41 = vld [vmem:[#allocation2 + $0x30] sm:$0xff]
  %v42 = vld [vmem:[#allocation2 + $0x38] sm:$0xff]
  %v43 = vld [vmem:[#allocation2 + $0x40] sm:$0xff]
  %v44 = vld [vmem:[#allocation2 + $0x48] sm:$0xff]
  %v45 = vld [vmem:[#allocation2 + $0x50] sm:$0xff]
  %v46 = vld [vmem:[#allocation2 + $0x58] sm:$0xff]
  %v47 = vld [vmem:[#allocation2 + $0x60] sm:$0xff]
  %v48 = vld [vmem:[#allocation2 + $0x68] sm:$0xff]
  %v49 = vld [vmem:[#allocation2 + $0x70] sm:$0xff]
  %v50 = vld [vmem:[#allocation2 + $0x78] sm:$0xff]
  %v51 = vld [vmem:[%s0] sm:$0xff]
  %v52 = vld [vmem:[%s0 + $0x8] sm:$0xff]
  %v53 = vld [vmem:[%s0 + $0x10] sm:$0xff]
  %v54 = vld [vmem:[%s0 + $0x18] sm:$0xff]
  %v55 = vld [vmem:[%s0 + $0x20] sm:$0xff]
  %v56 = vld [vmem:[%s0 + $0x28] sm:$0xff]
  %v57 = vld [vmem:[%s0 + $0x30] sm:$0xff]
  %v58 = vld [vmem:[%s0 + $0x38] sm:$0xff]
  %v59 = vld [vmem:[%s0 + $0x40] sm:$0xff]
  %v60 = vld [vmem:[%s0 + $0x48] sm:$0xff]
  %v61 = vld [vmem:[%s0 + $0x50] sm:$0xff]
  %v62 = vld [vmem:[%s0 + $0x58] sm:$0xff]
  %v63 = vld [vmem:[%s0 + $0x60] sm:$0xff]
  %v64 = vld [vmem:[%s0 + $0x68] sm:$0xff]
  %v65 = vld [vmem:[%s0 + $0x70] sm:$0xff]
  %v66 = vld [vmem:[%s0 + $0x78] sm:$0xff]
  %v67 = vld [vmem:[%s1] sm:$0xf]
  %v68 = vld [vmem:[%s1 + $0x4] sm:$0xf]
  %v69 = vld [vmem:[%s1 + $0x8] sm:$0xf]
  %v70 = vld [vmem:[%s1 + $0xc] sm:$0xf]
  %v71 = vld [vmem:[%s1 + $0x10] sm:$0xf]
  %v72 = vld [vmem:[%s1 + $0x14] sm:$0xf]
  %v73 = vld [vmem:[%s1 + $0x18] sm:$0xf]
  %v74 = vld [vmem:[%s1 + $0x1c] sm:$0xf]
  %v75 = vld [vmem:[%s1 + $0x20] sm:$0xf]
  %v76 = vld [vmem:[%s1 + $0x24] sm:$0xf]
  %v77 = vld [vmem:[%s1 + $0x28] sm:$0xf]
  %v78 = vld [vmem:[%s1 + $0x2c] sm:$0xf]
  %v79 = vld [vmem:[%s1 + $0x30] sm:$0xf]
  %v80 = vld [vmem:[%s1 + $0x34] sm:$0xf]
  %v81 = vld [vmem:[%s1 + $0x38] sm:$0xf]
  %v82 = vld [vmem:[%s1 + $0x3c] sm:$0xf]
  %v83 = vld [vmem:[%s1 + $0x40] sm:$0xf]
  %v84 = vld [vmem:[%s1 + $0x44] sm:$0xf]
  %v85 = vld [vmem:[%s1 + $0x48] sm:$0xf]
  %v86 = vld [vmem:[%s1 + $0x4c] sm:$0xf]
  %v87 = vld [vmem:[%s1 + $0x50] sm:$0xf]
  %v88 = vld [vmem:[%s1 + $0x54] sm:$0xf]
  %v89 = vld [vmem:[%s1 + $0x58] sm:$0xf]
  %v90 = vld [vmem:[%s1 + $0x5c] sm:$0xf]
  %v91 = vld [vmem:[%s1 + $0x60] sm:$0xf]
  %v92 = vld [vmem:[%s1 + $0x64] sm:$0xf]
  %v93 = vld [vmem:[%s1 + $0x68] sm:$0xf]
  %v94 = vld [vmem:[%s1 + $0x6c] sm:$0xf]
  %v95 = vld [vmem:[%s1 + $0x70] sm:$0xf]
  %v96 = vld [vmem:[%s1 + $0x74] sm:$0xf]
  %v97 = vld [vmem:[%s1 + $0x78] sm:$0xf]
  %v98 = vld [vmem:[%s1 + $0x7c] sm:$0xf]
  %v115 = vunpack.c.l.b16 %v51
  %v116 = vunpack.c.h.b16 %v51
  %v117 = vunpack.c.l.b16 %v52
  %v118 = vunpack.c.h.b16 %v52
  %v119 = vunpack.c.l.b16 %v53
  %v120 = vunpack.c.h.b16 %v53
  %v121 = vunpack.c.l.b16 %v54
  %v122 = vunpack.c.h.b16 %v54
  %v123 = vunpack.c.l.b16 %v55
  %v124 = vunpack.c.h.b16 %v55
  %v125 = vunpack.c.l.b16 %v56
  %v126 = vunpack.c.h.b16 %v56
  %v127 = vunpack.c.l.b16 %v57
  %v128 = vunpack.c.h.b16 %v57
  %v129 = vunpack.c.l.b16 %v58
  %v130 = vunpack.c.h.b16 %v58
  %v131 = vunpack.c.l.b16 %v59
  %v132 = vunpack.c.h.b16 %v59
  %v133 = vunpack.c.l.b16 %v60
  %v134 = vunpack.c.h.b16 %v60
  %v135 = vunpack.c.l.b16 %v61
  %v136 = vunpack.c.h.b16 %v61
  %v137 = vunpack.c.l.b16 %v62
  %v138 = vunpack.c.h.b16 %v62
  %v139 = vunpack.c.l.b16 %v63
  %v140 = vunpack.c.h.b16 %v63
  %v141 = vunpack.c.l.b16 %v64
  %v142 = vunpack.c.h.b16 %v64
  %v143 = vunpack.c.l.b16 %v65
  %v144 = vunpack.c.h.b16 %v65
  %v145 = vunpack.c.l.b16 %v66
  %v146 = vunpack.c.h.b16 %v66
  %v147 = vpack.c.b16 %v117, %v115
  %v148 = vpack.c.b16 %v118, %v116
  %v149 = vpack.c.b16 %v121, %v119
  %v150 = vpack.c.b16 %v122, %v120
  %v151 = vpack.c.b16 %v125, %v123
  %v152 = vpack.c.b16 %v126, %v124
  %v153 = vpack.c.b16 %v129, %v127
  %v154 = vpack.c.b16 %v130, %v128
  %v155 = vpack.c.b16 %v133, %v131
  %v156 = vpack.c.b16 %v134, %v132
  %v157 = vpack.c.b16 %v137, %v135
  %v158 = vpack.c.b16 %v138, %v136
  %v159 = vpack.c.b16 %v141, %v139
  %v160 = vpack.c.b16 %v142, %v140
  %v161 = vpack.c.b16 %v145, %v143
  %v162 = vpack.c.b16 %v146, %v144
  %v211 = vunpack.c.l.b16 %v67
  %v212 = vunpack.c.l.b16 %v68
  %v213 = vunpack.c.l.b16 %v69
  %v214 = vunpack.c.l.b16 %v70
  %v215 = vunpack.c.l.b16 %v71
  %v216 = vunpack.c.l.b16 %v72
  %v217 = vunpack.c.l.b16 %v73
  %v218 = vunpack.c.l.b16 %v74
  %v219 = vunpack.c.l.b16 %v75
  %v220 = vunpack.c.l.b16 %v76
  %v221 = vunpack.c.l.b16 %v77
  %v222 = vunpack.c.l.b16 %v78
  %v223 = vunpack.c.l.b16 %v79
  %v224 = vunpack.c.l.b16 %v80
  %v225 = vunpack.c.l.b16 %v81
  %v226 = vunpack.c.l.b16 %v82
  %v227 = vunpack.c.l.b16 %v83
  %v228 = vunpack.c.l.b16 %v84
  %v229 = vunpack.c.l.b16 %v85
  %v230 = vunpack.c.l.b16 %v86
  %v231 = vunpack.c.l.b16 %v87
  %v232 = vunpack.c.l.b16 %v88
  %v233 = vunpack.c.l.b16 %v89
  %v234 = vunpack.c.l.b16 %v90
  %v235 = vunpack.c.l.b16 %v91
  %v236 = vunpack.c.l.b16 %v92
  %v237 = vunpack.c.l.b16 %v93
  %v238 = vunpack.c.l.b16 %v94
  %v239 = vunpack.c.l.b16 %v95
  %v240 = vunpack.c.l.b16 %v96
  %v241 = vunpack.c.l.b16 %v97
  %v242 = vunpack.c.l.b16 %v98
  %v243 = vpack.c.b16 %v212, %v211
  %v244 = vpack.c.b16 %v214, %v213
  %v245 = vpack.c.b16 %v216, %v215
  %v246 = vpack.c.b16 %v218, %v217
  %v247 = vpack.c.b16 %v220, %v219
  %v248 = vpack.c.b16 %v222, %v221
  %v249 = vpack.c.b16 %v224, %v223
  %v250 = vpack.c.b16 %v226, %v225
  %v251 = vpack.c.b16 %v228, %v227
  %v252 = vpack.c.b16 %v230, %v229
  %v253 = vpack.c.b16 %v232, %v231
  %v254 = vpack.c.b16 %v234, %v233
  %v255 = vpack.c.b16 %v236, %v235
  %v256 = vpack.c.b16 %v238, %v237
  %v257 = vpack.c.b16 %v240, %v239
  %v258 = vpack.c.b16 %v242, %v241
  %275 = vmatprep.subr.bf16.mxu0 0
  %276 = vmatpush1.bf16.msra.mxu0 %v250
  %277 = vmatprep.subr.bf16.mxu0 0
  %278 = vmatpush1.bf16.msra.mxu0 %v249
  %279 = vmatprep.subr.bf16.mxu0 0
  %280 = vmatpush1.bf16.msra.mxu0 %v248
  %281 = vmatprep.subr.bf16.mxu0 0
  %282 = vmatpush1.bf16.msra.mxu0 %v247
  %283 = vmatprep.subr.bf16.mxu0 0
  %284 = vmatpush1.bf16.msra.mxu0 %v246
  %285 = vmatprep.subr.bf16.mxu0 0
  %286 = vmatpush1.bf16.msra.mxu0 %v245
  %287 = vmatprep.subr.bf16.mxu0 0
  %288 = vmatpush1.bf16.msra.mxu0 %v244
  %289 = vmatprep.subr.bf16.mxu0 0
  %290 = vmatpush1.bf16.msra.mxu0 %v243
  %291 = vmatprep.subr.bf16.mxu0 0
  %292 = vmatpush2.bf16.msra.mxu0 %v258
  %293 = vmatprep.subr.bf16.mxu0 0
  %294 = vmatpush2.bf16.msra.mxu0 %v257
  %295 = vmatprep.subr.bf16.mxu0 0
  %296 = vmatpush2.bf16.msra.mxu0 %v256
  %297 = vmatprep.subr.bf16.mxu0 0
  %298 = vmatpush2.bf16.msra.mxu0 %v255
  %299 = vmatprep.subr.bf16.mxu0 0
  %300 = vmatpush2.bf16.msra.mxu0 %v254
  %301 = vmatprep.subr.bf16.mxu0 0
  %302 = vmatpush2.bf16.msra.mxu0 %v253
  %303 = vmatprep.subr.bf16.mxu0 0
  %304 = vmatpush2.bf16.msra.mxu0 %v252
  %305 = vmatprep.subr.bf16.mxu0 0
  %306 = vmatpush2.bf16.msra.mxu0 %v251
  %307 = vmatprep.mubr.bf16.mxu0 %v148
  %308 = vmatmul.mubr.bf16.gmra.mxu0 %v147
  %v309 = vpop.f32.mrf.mxu0
  %v310 = vadd.f32 0.0, %v309
  %v311 = vpop.f32.mrf.mxu0
  %v312 = vpop.f32.mrf.mxu0
  %v313 = vadd.f32 0.0, %v312
  %v314 = vpop.f32.mrf.mxu0
  %315 = vmatprep.mubr.bf16.mxu0 %v150
  %316 = vmatmul.mubr.bf16.gmra.mxu0 %v149
  %v317 = vpop.f32.mrf.mxu0
  %v318 = vadd.f32 0.0, %v317
  %v319 = vpop.f32.mrf.mxu0
  %v320 = vpop.f32.mrf.mxu0
  %v321 = vadd.f32 0.0, %v320
  %v322 = vpop.f32.mrf.mxu0
  %323 = vmatprep.mubr.bf16.mxu0 %v152
  %324 = vmatmul.mubr.bf16.gmra.mxu0 %v151
  %v325 = vpop.f32.mrf.mxu0
  %v326 = vadd.f32 0.0, %v325
  %v327 = vpop.f32.mrf.mxu0
  %v328 = vpop.f32.mrf.mxu0
  %v329 = vadd.f32 0.0, %v328
  %v330 = vpop.f32.mrf.mxu0
  %331 = vmatprep.mubr.bf16.mxu0 %v154
  %332 = vmatmul.mubr.bf16.gmra.mxu0 %v153
  %v333 = vpop.f32.mrf.mxu0
  %v334 = vadd.f32 0.0, %v333
  %v335 = vpop.f32.mrf.mxu0
  %v336 = vpop.f32.mrf.mxu0
  %v337 = vadd.f32 0.0, %v336
  %v338 = vpop.f32.mrf.mxu0
  %339 = vmatprep.mubr.bf16.mxu0 %v156
  %340 = vmatmul.mubr.bf16.gmra.mxu0 %v155
  %v341 = vpop.f32.mrf.mxu0
  %v342 = vadd.f32 0.0, %v341
  %v343 = vpop.f32.mrf.mxu0
  %v344 = vpop.f32.mrf.mxu0
  %v345 = vadd.f32 0.0, %v344
  %v346 = vpop.f32.mrf.mxu0
  %347 = vmatprep.mubr.bf16.mxu0 %v158
  %348 = vmatmul.mubr.bf16.gmra.mxu0 %v157
  %v349 = vpop.f32.mrf.mxu0
  %v350 = vadd.f32 0.0, %v349
  %v351 = vpop.f32.mrf.mxu0
  %v352 = vpop.f32.mrf.mxu0
  %v353 = vadd.f32 0.0, %v352
  %v354 = vpop.f32.mrf.mxu0
  %355 = vmatprep.mubr.bf16.mxu0 %v160
  %356 = vmatmul.mubr.bf16.gmra.mxu0 %v159
  %v357 = vpop.f32.mrf.mxu0
  %v358 = vadd.f32 0.0, %v357
  %v359 = vpop.f32.mrf.mxu0
  %v360 = vpop.f32.mrf.mxu0
  %v361 = vadd.f32 0.0, %v360
  %v362 = vpop.f32.mrf.mxu0
  %363 = vmatprep.mubr.bf16.mxu0 %v162
  %364 = vmatmul.mubr.bf16.gmra.mxu0 %v161
  %v365 = vpop.f32.mrf.mxu0
  %v366 = vadd.f32 0.0, %v365
  %v367 = vpop.f32.mrf.mxu0
  %v368 = vpop.f32.mrf.mxu0
  %v369 = vadd.f32 0.0, %v368
  %v370 = vpop.f32.mrf.mxu0
  %371 = vdwg.mxu0
  %v372 = vadd.f32 %v35, %v310
  %v373 = vadd.f32 %v36, %v313
  %v374 = vadd.f32 %v37, %v318
  %v375 = vadd.f32 %v38, %v321
  %v376 = vadd.f32 %v39, %v326
  %v377 = vadd.f32 %v40, %v329
  %v378 = vadd.f32 %v41, %v334
  %v379 = vadd.f32 %v42, %v337
  %v380 = vadd.f32 %v43, %v342
  %v381 = vadd.f32 %v44, %v345
  %v382 = vadd.f32 %v45, %v350
  %v383 = vadd.f32 %v46, %v353
  %v384 = vadd.f32 %v47, %v358
  %v385 = vadd.f32 %v48, %v361
  %v386 = vadd.f32 %v49, %v366
  %v387 = vadd.f32 %v50, %v369
  %388 = vst [vmem:[#allocation2] sm:$0xff] %v372
  %389 = vst [vmem:[#allocation2 + $0x8] sm:$0xff] %v373
  %390 = vst [vmem:[#allocation2 + $0x10] sm:$0xff] %v374
  %391 = vst [vmem:[#allocation2 + $0x18] sm:$0xff] %v375
  %392 = vst [vmem:[#allocation2 + $0x20] sm:$0xff] %v376
  %393 = vst [vmem:[#allocation2 + $0x28] sm:$0xff] %v377
  %394 = vst [vmem:[#allocation2 + $0x30] sm:$0xff] %v378
  %395 = vst [vmem:[#allocation2 + $0x38] sm:$0xff] %v379
  %396 = vst [vmem:[#allocation2 + $0x40] sm:$0xff] %v380
  %397 = vst [vmem:[#allocation2 + $0x48] sm:$0xff] %v381
  %398 = vst [vmem:[#allocation2 + $0x50] sm:$0xff] %v382
  %399 = vst [vmem:[#allocation2 + $0x58] sm:$0xff] %v383
  %400 = vst [vmem:[#allocation2 + $0x60] sm:$0xff] %v384
  %401 = vst [vmem:[#allocation2 + $0x68] sm:$0xff] %v385
  %402 = vst [vmem:[#allocation2 + $0x70] sm:$0xff] %v386
  %403 = vst [vmem:[#allocation2 + $0x78] sm:$0xff] %v387
  // Predicated region
  $region18: #{_lambda_.16} parent=0 // pred_check
    %p404 = pneg %p15
  $region19: #{_lambda_.16} parent=0 // pred_check_branch
    %406 = sbr.rel (%p404) target = $region21
  $region20: #{_lambda_.16} parent=0 // pred_region
    %v407 = vld [vmem:[#allocation2] sm:$0xff]
    %v408 = vld [vmem:[#allocation2 + $0x8] sm:$0xff]
    %v409 = vld [vmem:[#allocation2 + $0x10] sm:$0xff]
    %v410 = vld [vmem:[#allocation2 + $0x18] sm:$0xff]
    %v411 = vld [vmem:[#allocation2 + $0x20] sm:$0xff]
    %v412 = vld [vmem:[#allocation2 + $0x28] sm:$0xff]
    %v413 = vld [vmem:[#allocation2 + $0x30] sm:$0xff]
    %v414 = vld [vmem:[#allocation2 + $0x38] sm:$0xff]
    %v415 = vld [vmem:[#allocation2 + $0x40] sm:$0xff]
    %v416 = vld [vmem:[#allocation2 + $0x48] sm:$0xff]
    %v417 = vld [vmem:[#allocation2 + $0x50] sm:$0xff]
    %v418 = vld [vmem:[#allocation2 + $0x58] sm:$0xff]
    %v419 = vld [vmem:[#allocation2 + $0x60] sm:$0xff]
    %v420 = vld [vmem:[#allocation2 + $0x68] sm:$0xff]
    %v421 = vld [vmem:[#allocation2 + $0x70] sm:$0xff]
    %v422 = vld [vmem:[#allocation2 + $0x78] sm:$0xff]
    %v423 = vld [vmem:[%s2] sm:$0x1]
    %v425 = vlaneseq
    %v426 = vshrl.u32 %v425, 7
    %v427 = vsub.s32 0, %v426
    %v428 = vrot.slane %v423, %v427
    %v430 = vadd.f32 %v407, %v428
    %v431 = vadd.f32 %v408, %v428
    %v432 = vadd.f32 %v409, %v428
    %v433 = vadd.f32 %v410, %v428
    %v434 = vadd.f32 %v411, %v428
    %v435 = vadd.f32 %v412, %v428
    %v436 = vadd.f32 %v413, %v428
    %v437 = vadd.f32 %v414, %v428
    %v438 = vadd.f32 %v415, %v428
    %v439 = vadd.f32 %v416, %v428
    %v440 = vadd.f32 %v417, %v428
    %v441 = vadd.f32 %v418, %v428
    %v442 = vadd.f32 %v419, %v428
    %v443 = vadd.f32 %v420, %v428
    %v444 = vadd.f32 %v421, %v428
    %v445 = vadd.f32 %v422, %v428
    %v446 = vmax.f32 %v430, 0.0
    %v447 = vmax.f32 %v431, 0.0
    %v448 = vmax.f32 %v432, 0.0
    %v449 = vmax.f32 %v433, 0.0
    %v450 = vmax.f32 %v434, 0.0
    %v451 = vmax.f32 %v435, 0.0
    %v452 = vmax.f32 %v436, 0.0
    %v453 = vmax.f32 %v437, 0.0
    %v454 = vmax.f32 %v438, 0.0
    %v455 = vmax.f32 %v439, 0.0
    %v456 = vmax.f32 %v440, 0.0
    %v457 = vmax.f32 %v441, 0.0
    %v458 = vmax.f32 %v442, 0.0
    %v459 = vmax.f32 %v443, 0.0
    %v460 = vmax.f32 %v444, 0.0
    %v461 = vmax.f32 %v445, 0.0
    %462 = vst [vmem:[%s3] sm:$0xff] %v446
    %463 = vst [vmem:[%s3 + $0x8] sm:$0xff] %v447
    %464 = vst [vmem:[%s3 + $0x10] sm:$0xff] %v448
    %465 = vst [vmem:[%s3 + $0x18] sm:$0xff] %v449
    %466 = vst [vmem:[%s3 + $0x20] sm:$0xff] %v450
    %467 = vst [vmem:[%s3 + $0x28] sm:$0xff] %v451
    %468 = vst [vmem:[%s3 + $0x30] sm:$0xff] %v452
    %469 = vst [vmem:[%s3 + $0x38] sm:$0xff] %v453
    %470 = vst [vmem:[%s3 + $0x40] sm:$0xff] %v454
    %471 = vst [vmem:[%s3 + $0x48] sm:$0xff] %v455
    %472 = vst [vmem:[%s3 + $0x50] sm:$0xff] %v456
    %473 = vst [vmem:[%s3 + $0x58] sm:$0xff] %v457
    %474 = vst [vmem:[%s3 + $0x60] sm:$0xff] %v458
    %475 = vst [vmem:[%s3 + $0x68] sm:$0xff] %v459
    %476 = vst [vmem:[%s3 + $0x70] sm:$0xff] %v460
    %477 = vst [vmem:[%s3 + $0x78] sm:$0xff] %v461
  $region21: #{_lambda_.16} parent=0 // pred_fallthru
    _
  // Predicated region
  $region22: #{_lambda_.16} parent=0 // pred_check
    _
  $region23: #{_lambda_.16} parent=0 // pred_check_branch
    %479 = sbr.rel (0) target = $region25
  $region24: #{_lambda_.16} parent=0 // pred_region
    _
  $region25: #{_lambda_.16} parent=0 // pred_fallthru
    _
  // Predicated region
  $region26: #{_lambda_.16} parent=0 // pred_check
    _
  $region27: #{_lambda_.16} parent=0 // pred_check_branch
    %481 = sbr.rel (0) target = $region29
  $region28: #{_lambda_.16} parent=0 // pred_region
    _
  $region29: #{_lambda_.16} parent=0 // pred_fallthru
    _

// kernel: _lambda_.17
$region0: #{_lambda_.17}
  #allocation0 [shape = 'u32[]', space=smem, size = 0x4, offset = 0x4, fixed_abs, tag = 'smem constant byte address 0x4 - core index']
  #allocation1 [shape = 'u32[144,128]{1,0:T(1,128)}', space=vmem, size = 0x12000, scoped, tag = 'internal scratch']
  #allocation2 [shape = 'f32[128,128]{1,0:T(8,128)}', space=vmem, size = 0x10000, scoped, tag = 'scratch operand']
  %s0 = inlined_call_operand.vmem [shape: bf16[128,384], index: 0, kind: input, shape index: {}]
  %s1 = inlined_call_operand.vmem [shape: bf16[384,128], index: 1, kind: input, shape index: {}]
  %s2 = inlined_call_operand.vmem [shape: f32[1,128], index: 2, kind: input, shape index: {}]
  %s3 = inlined_call_operand.vmem [shape: f32[128,128], index: 3, kind: output, shape index: {}]
  %s4 = sld [smem:[#allocation0]]
  $region30: #{_lambda_.17} parent=0
    _
  %s6 = ssub.s32 1, %s4
  %s7 = scalar_select 0, %s6, %s4
  // Predicated region
  $region2: #{_lambda_.17} parent=0 // pred_check
    _
  $region3: #{_lambda_.17} parent=0 // pred_check_branch
    %9 = sbr.rel (0) target = $region5
  $region4: #{_lambda_.17} parent=0 // pred_region
    _
  $region5: #{_lambda_.17} parent=0 // pred_fallthru
    _
  // Predicated region
  $region6: #{_lambda_.17} parent=0 // pred_check
    _
  $region7: #{_lambda_.17} parent=0 // pred_check_branch
    %11 = sbr.rel (0) target = $region9
  $region8: #{_lambda_.17} parent=0 // pred_region
    _
  $region9: #{_lambda_.17} parent=0 // pred_fallthru
    _
  // Predicated region
  $region10: #{_lambda_.17} parent=0 // pred_check
    _
  $region11: #{_lambda_.17} parent=0 // pred_check_branch
    %13 = sbr.rel (0) target = $region13
  $region12: #{_lambda_.17} parent=0 // pred_region
    _
  $region13: #{_lambda_.17} parent=0 // pred_fallthru
    _
  %p15 = scmp.eq.s32.totalorder 0, 0
  // Predicated region
  $region14: #{_lambda_.17} parent=0 // pred_check
    %p16 = pneg %p15
  $region15: #{_lambda_.17} parent=0 // pred_check_branch
    %18 = sbr.rel (%p16) target = $region17
  $region16: #{_lambda_.17} parent=0 // pred_region
    %19 = vst [vmem:[#allocation2] sm:$0xff] 0.0
    %20 = vst [vmem:[#allocation2 + $0x8] sm:$0xff] 0.0
    %21 = vst [vmem:[#allocation2 + $0x10] sm:$0xff] 0.0
    %22 = vst [vmem:[#allocation2 + $0x18] sm:$0xff] 0.0
    %23 = vst [vmem:[#allocation2 + $0x20] sm:$0xff] 0.0
    %24 = vst [vmem:[#allocation2 + $0x28] sm:$0xff] 0.0
    %25 = vst [vmem:[#allocation2 + $0x30] sm:$0xff] 0.0
    %26 = vst [vmem:[#allocation2 + $0x38] sm:$0xff] 0.0
    %27 = vst [vmem:[#allocation2 + $0x40] sm:$0xff] 0.0
    %28 = vst [vmem:[#allocation2 + $0x48] sm:$0xff] 0.0
    %29 = vst [vmem:[#allocation2 + $0x50] sm:$0xff] 0.0
    %30 = vst [vmem:[#allocation2 + $0x58] sm:$0xff] 0.0
    %31 = vst [vmem:[#allocation2 + $0x60] sm:$0xff] 0.0
    %32 = vst [vmem:[#allocation2 + $0x68] sm:$0xff] 0.0
    %33 = vst [vmem:[#allocation2 + $0x70] sm:$0xff] 0.0
    %34 = vst [vmem:[#allocation2 + $0x78] sm:$0xff] 0.0
  $region17: #{_lambda_.17} parent=0 // pred_fallthru
    _
  %v35 = vld [vmem:[#allocation2] sm:$0xff]
  %v36 = vld [vmem:[#allocation2 + $0x8] sm:$0xff]
  %v37 = vld [vmem:[#allocation2 + $0x10] sm:$0xff]
  %v38 = vld [vmem:[#allocation2 + $0x18] sm:$0xff]
  %v39 = vld [vmem:[#allocation2 + $0x20] sm:$0xff]
  %v40 = vld [vmem:[#allocation2 + $0x28] sm:$0xff]
  %v41 = vld [vmem:[#allocation2 + $0x30] sm:$0xff]
  %v42 = vld [vmem:[#allocation2 + $0x38] sm:$0xff]
  %v43 = vld [vmem:[#allocation2 + $0x40] sm:$0xff]
  %v44 = vld [vmem:[#allocation2 + $0x48] sm:$0xff]
  %v45 = vld [vmem:[#allocation2 + $0x50] sm:$0xff]
  %v46 = vld [vmem:[#allocation2 + $0x58] sm:$0xff]
  %v47 = vld [vmem:[#allocation2 + $0x60] sm:$0xff]
  %v48 = vld [vmem:[#allocation2 + $0x68] sm:$0xff]
  %v49 = vld [vmem:[#allocation2 + $0x70] sm:$0xff]
  %v50 = vld [vmem:[#allocation2 + $0x78] sm:$0xff]
  %v51 = vld [vmem:[%s0] sm:$0xff]
  %v52 = vld [vmem:[%s0 + $0x8] sm:$0xf]
  %v53 = vld [vmem:[%s0 + $0xc] sm:$0xff]
  %v54 = vld [vmem:[%s0 + $0x14] sm:$0xf]
  %v55 = vld [vmem:[%s0 + $0x18] sm:$0xff]
  %v56 = vld [vmem:[%s0 + $0x20] sm:$0xf]
  %v57 = vld [vmem:[%s0 + $0x24] sm:$0xff]
  %v58 = vld [vmem:[%s0 + $0x2c] sm:$0xf]
  %v59 = vld [vmem:[%s0 + $0x30] sm:$0xff]
  %v60 = vld [vmem:[%s0 + $0x38] sm:$0xf]
  %v61 = vld [vmem:[%s0 + $0x3c] sm:$0xff]
  %v62 = vld [vmem:[%s0 + $0x44] sm:$0xf]
  %v63 = vld [vmem:[%s0 + $0x48] sm:$0xff]
  %v64 = vld [vmem:[%s0 + $0x50] sm:$0xf]
  %v65 = vld [vmem:[%s0 + $0x54] sm:$0xff]
  %v66 = vld [vmem:[%s0 + $0x5c] sm:$0xf]
  %v67 = vld [vmem:[%s0 + $0x60] sm:$0xff]
  %v68 = vld [vmem:[%s0 + $0x68] sm:$0xf]
  %v69 = vld [vmem:[%s0 + $0x6c] sm:$0xff]
  %v70 = vld [vmem:[%s0 + $0x74] sm:$0xf]
  %v71 = vld [vmem:[%s0 + $0x78] sm:$0xff]
  %v72 = vld [vmem:[%s0 + $0x80] sm:$0xf]
  %v73 = vld [vmem:[%s0 + $0x84] sm:$0xff]
  %v74 = vld [vmem:[%s0 + $0x8c] sm:$0xf]
  %v75 = vld [vmem:[%s0 + $0x90] sm:$0xff]
  %v76 = vld [vmem:[%s0 + $0x98] sm:$0xf]
  %v77 = vld [vmem:[%s0 + $0x9c] sm:$0xff]
  %v78 = vld [vmem:[%s0 + $0xa4] sm:$0xf]
  %v79 = vld [vmem:[%s0 + $0xa8] sm:$0xff]
  %v80 = vld [vmem:[%s0 + $0xb0] sm:$0xf]
  %v81 = vld [vmem:[%s0 + $0xb4] sm:$0xff]
  %v82 = vld [vmem:[%s0 + $0xbc] sm:$0xf]
  %v83 = vld [vmem:[%s1] sm:$0xf]
  %v84 = vld [vmem:[%s1 + $0x4] sm:$0xf]
  %v85 = vld [vmem:[%s1 + $0x8] sm:$0xf]
  %v86 = vld [vmem:[%s1 + $0xc] sm:$0xf]
  %v87 = vld [vmem:[%s1 + $0x10] sm:$0xf]
  %v88 = vld [vmem:[%s1 + $0x14] sm:$0xf]
  %v89 = vld [vmem:[%s1 + $0x18] sm:$0xf]
  %v90 = vld [vmem:[%s1 + $0x1c] sm:$0xf]
  %v91 = vld [vmem:[%s1 + $0x20] sm:$0xf]
  %v92 = vld [vmem:[%s1 + $0x24] sm:$0xf]
  %v93 = vld [vmem:[%s1 + $0x28] sm:$0xf]
  %v94 = vld [vmem:[%s1 + $0x2c] sm:$0xf]
  %v95 = vld [vmem:[%s1 + $0x30] sm:$0xf]
  %v96 = vld [vmem:[%s1 + $0x34] sm:$0xf]
  %v97 = vld [vmem:[%s1 + $0x38] sm:$0xf]
  %v98 = vld [vmem:[%s1 + $0x3c] sm:$0xf]
  %v99 = vld [vmem:[%s1 + $0x40] sm:$0xf]
  %v100 = vld [vmem:[%s1 + $0x44] sm:$0xf]
  %v101 = vld [vmem:[%s1 + $0x48] sm:$0xf]
  %v102 = vld [vmem:[%s1 + $0x4c] sm:$0xf]
  %v103 = vld [vmem:[%s1 + $0x50] sm:$0xf]
  %v104 = vld [vmem:[%s1 + $0x54] sm:$0xf]
  %v105 = vld [vmem:[%s1 + $0x58] sm:$0xf]
  %v106 = vld [vmem:[%s1 + $0x5c] sm:$0xf]
  %v107 = vld [vmem:[%s1 + $0x60] sm:$0xf]
  %v108 = vld [vmem:[%s1 + $0x64] sm:$0xf]
  %v109 = vld [vmem:[%s1 + $0x68] sm:$0xf]
  %v110 = vld [vmem:[%s1 + $0x6c] sm:$0xf]
  %v111 = vld [vmem:[%s1 + $0x70] sm:$0xf]
  %v112 = vld [vmem:[%s1 + $0x74] sm:$0xf]
  %v113 = vld [vmem:[%s1 + $0x78] sm:$0xf]
  %v114 = vld [vmem:[%s1 + $0x7c] sm:$0xf]
  %v115 = vld [vmem:[%s1 + $0x80] sm:$0xf]
  %v116 = vld [vmem:[%s1 + $0x84] sm:$0xf]
  %v117 = vld [vmem:[%s1 + $0x88] sm:$0xf]
  %v118 = vld [vmem:[%s1 + $0x8c] sm:$0xf]
  %v119 = vld [vmem:[%s1 + $0x90] sm:$0xf]
  %v120 = vld [vmem:[%s1 + $0x94] sm:$0xf]
  %v121 = vld [vmem:[%s1 + $0x98] sm:$0xf]
  %v122 = vld [vmem:[%s1 + $0x9c] sm:$0xf]
  %v123 = vld [vmem:[%s1 + $0xa0] sm:$0xf]
  %v124 = vld [vmem:[%s1 + $0xa4] sm:$0xf]
  %v125 = vld [vmem:[%s1 + $0xa8] sm:$0xf]
  %v126 = vld [vmem:[%s1 + $0xac] sm:$0xf]
  %v127 = vld [vmem:[%s1 + $0xb0] sm:$0xf]
  %v128 = vld [vmem:[%s1 + $0xb4] sm:$0xf]
  %v129 = vld [vmem:[%s1 + $0xb8] sm:$0xf]
  %v130 = vld [vmem:[%s1 + $0xbc] sm:$0xf]
  %v163 = vunpack.c.l.b16 %v51
  %v164 = vunpack.c.h.b16 %v51
  %v165 = vunpack.c.l.b16 %v52
  %v166 = vunpack.c.l.b16 %v53
  %v167 = vunpack.c.h.b16 %v53
  %v168 = vunpack.c.l.b16 %v54
  %v169 = vunpack.c.l.b16 %v55
  %v170 = vunpack.c.h.b16 %v55
  %v171 = vunpack.c.l.b16 %v56
  %v172 = vunpack.c.l.b16 %v57
  %v173 = vunpack.c.h.b16 %v57
  %v174 = vunpack.c.l.b16 %v58
  %v175 = vunpack.c.l.b16 %v59
  %v176 = vunpack.c.h.b16 %v59
  %v177 = vunpack.c.l.b16 %v60
  %v178 = vunpack.c.l.b16 %v61
  %v179 = vunpack.c.h.b16 %v61
  %v180 = vunpack.c.l.b16 %v62
  %v181 = vunpack.c.l.b16 %v63
  %v182 = vunpack.c.h.b16 %v63
  %v183 = vunpack.c.l.b16 %v64
  %v184 = vunpack.c.l.b16 %v65
  %v185 = vunpack.c.h.b16 %v65
  %v186 = vunpack.c.l.b16 %v66
  %v187 = vunpack.c.l.b16 %v67
  %v188 = vunpack.c.h.b16 %v67
  %v189 = vunpack.c.l.b16 %v68
  %v190 = vunpack.c.l.b16 %v69
  %v191 = vunpack.c.h.b16 %v69
  %v192 = vunpack.c.l.b16 %v70
  %v193 = vunpack.c.l.b16 %v71
  %v194 = vunpack.c.h.b16 %v71
  %v195 = vunpack.c.l.b16 %v72
  %v196 = vunpack.c.l.b16 %v73
  %v197 = vunpack.c.h.b16 %v73
  %v198 = vunpack.c.l.b16 %v74
  %v199 = vunpack.c.l.b16 %v75
  %v200 = vunpack.c.h.b16 %v75
  %v201 = vunpack.c.l.b16 %v76
  %v202 = vunpack.c.l.b16 %v77
  %v203 = vunpack.c.h.b16 %v77
  %v204 = vunpack.c.l.b16 %v78
  %v205 = vunpack.c.l.b16 %v79
  %v206 = vunpack.c.h.b16 %v79
  %v207 = vunpack.c.l.b16 %v80
  %v208 = vunpack.c.l.b16 %v81
  %v209 = vunpack.c.h.b16 %v81
  %v210 = vunpack.c.l.b16 %v82
  %v211 = vpack.c.b16 %v166, %v163
  %v212 = vpack.c.b16 %v167, %v164
  %v213 = vpack.c.b16 %v168, %v165
  %v214 = vpack.c.b16 %v172, %v169
  %v215 = vpack.c.b16 %v173, %v170
  %v216 = vpack.c.b16 %v174, %v171
  %v217 = vpack.c.b16 %v178, %v175
  %v218 = vpack.c.b16 %v179, %v176
  %v219 = vpack.c.b16 %v180, %v177
  %v220 = vpack.c.b16 %v184, %v181
  %v221 = vpack.c.b16 %v185, %v182
  %v222 = vpack.c.b16 %v186, %v183
  %v223 = vpack.c.b16 %v190, %v187
  %v224 = vpack.c.b16 %v191, %v188
  %v225 = vpack.c.b16 %v192, %v189
  %v226 = vpack.c.b16 %v196, %v193
  %v227 = vpack.c.b16 %v197, %v194
  %v228 = vpack.c.b16 %v198, %v195
  %v229 = vpack.c.b16 %v202, %v199
  %v230 = vpack.c.b16 %v203, %v200
  %v231 = vpack.c.b16 %v204, %v201
  %v232 = vpack.c.b16 %v208, %v205
  %v233 = vpack.c.b16 %v209, %v206
  %v234 = vpack.c.b16 %v210, %v207
  %v307 = vunpack.c.l.b16 %v83
  %v308 = vunpack.c.l.b16 %v84
  %v309 = vunpack.c.l.b16 %v85
  %v310 = vunpack.c.l.b16 %v86
  %v311 = vunpack.c.l.b16 %v87
  %v312 = vunpack.c.l.b16 %v88
  %v313 = vunpack.c.l.b16 %v89
  %v314 = vunpack.c.l.b16 %v90
  %v315 = vunpack.c.l.b16 %v91
  %v316 = vunpack.c.l.b16 %v92
  %v317 = vunpack.c.l.b16 %v93
  %v318 = vunpack.c.l.b16 %v94
  %v319 = vunpack.c.l.b16 %v95
  %v320 = vunpack.c.l.b16 %v96
  %v321 = vunpack.c.l.b16 %v97
  %v322 = vunpack.c.l.b16 %v98
  %v323 = vunpack.c.l.b16 %v99
  %v324 = vunpack.c.l.b16 %v100
  %v325 = vunpack.c.l.b16 %v101
  %v326 = vunpack.c.l.b16 %v102
  %v327 = vunpack.c.l.b16 %v103
  %v328 = vunpack.c.l.b16 %v104
  %v329 = vunpack.c.l.b16 %v105
  %v330 = vunpack.c.l.b16 %v106
  %v331 = vunpack.c.l.b16 %v107
  %v332 = vunpack.c.l.b16 %v108
  %v333 = vunpack.c.l.b16 %v109
  %v334 = vunpack.c.l.b16 %v110
  %v335 = vunpack.c.l.b16 %v111
  %v336 = vunpack.c.l.b16 %v112
  %v337 = vunpack.c.l.b16 %v113
  %v338 = vunpack.c.l.b16 %v114
  %v339 = vunpack.c.l.b16 %v115
  %v340 = vunpack.c.l.b16 %v116
  %v341 = vunpack.c.l.b16 %v117
  %v342 = vunpack.c.l.b16 %v118
  %v343 = vunpack.c.l.b16 %v119
  %v344 = vunpack.c.l.b16 %v120
  %v345 = vunpack.c.l.b16 %v121
  %v346 = vunpack.c.l.b16 %v122
  %v347 = vunpack.c.l.b16 %v123
  %v348 = vunpack.c.l.b16 %v124
  %v349 = vunpack.c.l.b16 %v125
  %v350 = vunpack.c.l.b16 %v126
  %v351 = vunpack.c.l.b16 %v127
  %v352 = vunpack.c.l.b16 %v128
  %v353 = vunpack.c.l.b16 %v129
  %v354 = vunpack.c.l.b16 %v130
  %v355 = vpack.c.b16 %v308, %v307
  %v356 = vpack.c.b16 %v310, %v309
  %v357 = vpack.c.b16 %v312, %v311
  %v358 = vpack.c.b16 %v314, %v313
  %v359 = vpack.c.b16 %v316, %v315
  %v360 = vpack.c.b16 %v318, %v317
  %v361 = vpack.c.b16 %v320, %v319
  %v362 = vpack.c.b16 %v322, %v321
  %v363 = vpack.c.b16 %v324, %v323
  %v364 = vpack.c.b16 %v326, %v325
  %v365 = vpack.c.b16 %v328, %v327
  %v366 = vpack.c.b16 %v330, %v329
  %v367 = vpack.c.b16 %v332, %v331
  %v368 = vpack.c.b16 %v334, %v333
  %v369 = vpack.c.b16 %v336, %v335
  %v370 = vpack.c.b16 %v338, %v337
  %v371 = vpack.c.b16 %v340, %v339
  %v372 = vpack.c.b16 %v342, %v341
  %v373 = vpack.c.b16 %v344, %v343
  %v374 = vpack.c.b16 %v346, %v345
  %v375 = vpack.c.b16 %v348, %v347
  %v376 = vpack.c.b16 %v350, %v349
  %v377 = vpack.c.b16 %v352, %v351
  %v378 = vpack.c.b16 %v354, %v353
  %403 = vmatprep.subr.bf16.mxu0 0
  %404 = vmatpush1.bf16.msra.mxu0 %v362
  %405 = vmatprep.subr.bf16.mxu0 0
  %406 = vmatpush1.bf16.msra.mxu0 %v361
  %407 = vmatprep.subr.bf16.mxu0 0
  %408 = vmatpush1.bf16.msra.mxu0 %v360
  %409 = vmatprep.subr.bf16.mxu0 0
  %410 = vmatpush1.bf16.msra.mxu0 %v359
  %411 = vmatprep.subr.bf16.mxu0 0
  %412 = vmatpush1.bf16.msra.mxu0 %v358
  %413 = vmatprep.subr.bf16.mxu0 0
  %414 = vmatpush1.bf16.msra.mxu0 %v357
  %415 = vmatprep.subr.bf16.mxu0 0
  %416 = vmatpush1.bf16.msra.mxu0 %v356
  %417 = vmatprep.subr.bf16.mxu0 0
  %418 = vmatpush1.bf16.msra.mxu0 %v355
  %419 = vmatprep.subr.bf16.mxu0 0
  %420 = vmatpush2.bf16.msra.mxu0 %v370
  %421 = vmatprep.subr.bf16.mxu0 0
  %422 = vmatpush2.bf16.msra.mxu0 %v369
  %423 = vmatprep.subr.bf16.mxu0 0
  %424 = vmatpush2.bf16.msra.mxu0 %v368
  %425 = vmatprep.subr.bf16.mxu0 0
  %426 = vmatpush2.bf16.msra.mxu0 %v367
  %427 = vmatprep.subr.bf16.mxu0 0
  %428 = vmatpush2.bf16.msra.mxu0 %v366
  %429 = vmatprep.subr.bf16.mxu0 0
  %430 = vmatpush2.bf16.msra.mxu0 %v365
  %431 = vmatprep.subr.bf16.mxu0 0
  %432 = vmatpush2.bf16.msra.mxu0 %v364
  %433 = vmatprep.subr.bf16.mxu0 0
  %434 = vmatpush2.bf16.msra.mxu0 %v363
  %435 = vmatprep.mubr.bf16.mxu0 %v212
  %436 = vmatmul.mubr.bf16.gmra.mxu0 %v211
  %v437 = vpop.f32.mrf.mxu0
  %v438 = vadd.f32 0.0, %v437
  %v439 = vpop.f32.mrf.mxu0
  %v440 = vpop.f32.mrf.mxu0
  %v441 = vadd.f32 0.0, %v440
  %v442 = vpop.f32.mrf.mxu0
  %443 = vmatprep.mubr.bf16.mxu0 %v215
  %444 = vmatmul.mubr.bf16.gmra.mxu0 %v214
  %v445 = vpop.f32.mrf.mxu0
  %v446 = vadd.f32 0.0, %v445
  %v447 = vpop.f32.mrf.mxu0
  %v448 = vpop.f32.mrf.mxu0
  %v449 = vadd.f32 0.0, %v448
  %v450 = vpop.f32.mrf.mxu0
  %451 = vmatprep.mubr.bf16.mxu0 %v218
  %452 = vmatmul.mubr.bf16.gmra.mxu0 %v217
  %v453 = vpop.f32.mrf.mxu0
  %v454 = vadd.f32 0.0, %v453
  %v455 = vpop.f32.mrf.mxu0
  %v456 = vpop.f32.mrf.mxu0
  %v457 = vadd.f32 0.0, %v456
  %v458 = vpop.f32.mrf.mxu0
  %459 = vmatprep.mubr.bf16.mxu0 %v221
  %460 = vmatmul.mubr.bf16.gmra.mxu0 %v220
  %v461 = vpop.f32.mrf.mxu0
  %v462 = vadd.f32 0.0, %v461
  %v463 = vpop.f32.mrf.mxu0
  %v464 = vpop.f32.mrf.mxu0
  %v465 = vadd.f32 0.0, %v464
  %v466 = vpop.f32.mrf.mxu0
  %467 = vmatprep.mubr.bf16.mxu0 %v224
  %468 = vmatmul.mubr.bf16.gmra.mxu0 %v223
  %v469 = vpop.f32.mrf.mxu0
  %v470 = vadd.f32 0.0, %v469
  %v471 = vpop.f32.mrf.mxu0
  %v472 = vpop.f32.mrf.mxu0
  %v473 = vadd.f32 0.0, %v472
  %v474 = vpop.f32.mrf.mxu0
  %475 = vmatprep.mubr.bf16.mxu0 %v227
  %476 = vmatmul.mubr.bf16.gmra.mxu0 %v226
  %v477 = vpop.f32.mrf.mxu0
  %v478 = vadd.f32 0.0, %v477
  %v479 = vpop.f32.mrf.mxu0
  %v480 = vpop.f32.mrf.mxu0
  %v481 = vadd.f32 0.0, %v480
  %v482 = vpop.f32.mrf.mxu0
  %483 = vmatprep.mubr.bf16.mxu0 %v230
  %484 = vmatmul.mubr.bf16.gmra.mxu0 %v229
  %v485 = vpop.f32.mrf.mxu0
  %v486 = vadd.f32 0.0, %v485
  %v487 = vpop.f32.mrf.mxu0
  %v488 = vpop.f32.mrf.mxu0
  %v489 = vadd.f32 0.0, %v488
  %v490 = vpop.f32.mrf.mxu0
  %491 = vmatprep.mubr.bf16.mxu0 %v233
  %492 = vmatmul.mubr.bf16.gmra.mxu0 %v232
  %v493 = vpop.f32.mrf.mxu0
  %v494 = vadd.f32 0.0, %v493
  %v495 = vpop.f32.mrf.mxu0
  %v496 = vpop.f32.mrf.mxu0
  %v497 = vadd.f32 0.0, %v496
  %v498 = vpop.f32.mrf.mxu0
  %499 = vdwg.mxu0
  %500 = vmatprep.subr.bf16.mxu0 0
  %501 = vmatpush1.bf16.msra.mxu0 %v378
  %502 = vmatprep.subr.bf16.mxu0 0
  %503 = vmatpush1.bf16.msra.mxu0 %v377
  %504 = vmatprep.subr.bf16.mxu0 0
  %505 = vmatpush1.bf16.msra.mxu0 %v376
  %506 = vmatprep.subr.bf16.mxu0 0
  %507 = vmatpush1.bf16.msra.mxu0 %v375
  %508 = vmatprep.subr.bf16.mxu0 0
  %509 = vmatpush1.bf16.msra.mxu0 %v374
  %510 = vmatprep.subr.bf16.mxu0 0
  %511 = vmatpush1.bf16.msra.mxu0 %v373
  %512 = vmatprep.subr.bf16.mxu0 0
  %513 = vmatpush1.bf16.msra.mxu0 %v372
  %514 = vmatprep.subr.bf16.mxu0 0
  %515 = vmatpush1.bf16.msra.mxu0 %v371
  %516 = vmatprep.subr.bf16.mxu0 0
  %517 = vmatpush2.bf16.msra.mxu0 0
  %518 = vmatprep.subr.bf16.mxu0 0
  %519 = vmatpush2.bf16.msra.mxu0 0
  %520 = vmatprep.subr.bf16.mxu0 0
  %521 = vmatpush2.bf16.msra.mxu0 0
  %522 = vmatprep.subr.bf16.mxu0 0
  %523 = vmatpush2.bf16.msra.mxu0 0
  %524 = vmatprep.subr.bf16.mxu0 0
  %525 = vmatpush2.bf16.msra.mxu0 0
  %526 = vmatprep.subr.bf16.mxu0 0
  %527 = vmatpush2.bf16.msra.mxu0 0
  %528 = vmatprep.subr.bf16.mxu0 0
  %529 = vmatpush2.bf16.msra.mxu0 0
  %530 = vmatprep.subr.bf16.mxu0 0
  %531 = vmatpush2.bf16.msra.mxu0 0
  %532 = vmatprep.mubr.bf16.mxu0 0
  %533 = vmatmul.mubr.bf16.gmra.mxu0 %v213
  %v534 = vpop.f32.mrf.mxu0
  %v535 = vadd.f32 %v438, %v534
  %v536 = vpop.f32.mrf.mxu0
  %v537 = vpop.f32.mrf.mxu0
  %v538 = vadd.f32 %v441, %v537
  %v539 = vpop.f32.mrf.mxu0
  %540 = vmatprep.mubr.bf16.mxu0 0
  %541 = vmatmul.mubr.bf16.gmra.mxu0 %v216
  %v542 = vpop.f32.mrf.mxu0
  %v543 = vadd.f32 %v446, %v542
  %v544 = vpop.f32.mrf.mxu0
  %v545 = vpop.f32.mrf.mxu0
  %v546 = vadd.f32 %v449, %v545
  %v547 = vpop.f32.mrf.mxu0
  %548 = vmatprep.mubr.bf16.mxu0 0
  %549 = vmatmul.mubr.bf16.gmra.mxu0 %v219
  %v550 = vpop.f32.mrf.mxu0
  %v551 = vadd.f32 %v454, %v550
  %v552 = vpop.f32.mrf.mxu0
  %v553 = vpop.f32.mrf.mxu0
  %v554 = vadd.f32 %v457, %v553
  %v555 = vpop.f32.mrf.mxu0
  %556 = vmatprep.mubr.bf16.mxu0 0
  %557 = vmatmul.mubr.bf16.gmra.mxu0 %v222
  %v558 = vpop.f32.mrf.mxu0
  %v559 = vadd.f32 %v462, %v558
  %v560 = vpop.f32.mrf.mxu0
  %v561 = vpop.f32.mrf.mxu0
  %v562 = vadd.f32 %v465, %v561
  %v563 = vpop.f32.mrf.mxu0
  %564 = vmatprep.mubr.bf16.mxu0 0
  %565 = vmatmul.mubr.bf16.gmra.mxu0 %v225
  %v566 = vpop.f32.mrf.mxu0
  %v567 = vadd.f32 %v470, %v566
  %v568 = vpop.f32.mrf.mxu0
  %v569 = vpop.f32.mrf.mxu0
  %v570 = vadd.f32 %v473, %v569
  %v571 = vpop.f32.mrf.mxu0
  %572 = vmatprep.mubr.bf16.mxu0 0
  %573 = vmatmul.mubr.bf16.gmra.mxu0 %v228
  %v574 = vpop.f32.mrf.mxu0
  %v575 = vadd.f32 %v478, %v574
  %v576 = vpop.f32.mrf.mxu0
  %v577 = vpop.f32.mrf.mxu0
  %v578 = vadd.f32 %v481, %v577
  %v579 = vpop.f32.mrf.mxu0
  %580 = vmatprep.mubr.bf16.mxu0 0
  %581 = vmatmul.mubr.bf16.gmra.mxu0 %v231
  %v582 = vpop.f32.mrf.mxu0
  %v583 = vadd.f32 %v486, %v582
  %v584 = vpop.f32.mrf.mxu0
  %v585 = vpop.f32.mrf.mxu0
  %v586 = vadd.f32 %v489, %v585
  %v587 = vpop.f32.mrf.mxu0
  %588 = vmatprep.mubr.bf16.mxu0 0
  %589 = vmatmul.mubr.bf16.gmra.mxu0 %v234
  %v590 = vpop.f32.mrf.mxu0
  %v591 = vadd.f32 %v494, %v590
  %v592 = vpop.f32.mrf.mxu0
  %v593 = vpop.f32.mrf.mxu0
  %v594 = vadd.f32 %v497, %v593
  %v595 = vpop.f32.mrf.mxu0
  %596 = vdwg.mxu0
  %v597 = vadd.f32 %v35, %v535
  %v598 = vadd.f32 %v36, %v538
  %v599 = vadd.f32 %v37, %v543
  %v600 = vadd.f32 %v38, %v546
  %v601 = vadd.f32 %v39, %v551
  %v602 = vadd.f32 %v40, %v554
  %v603 = vadd.f32 %v41, %v559
  %v604 = vadd.f32 %v42, %v562
  %v605 = vadd.f32 %v43, %v567
  %v606 = vadd.f32 %v44, %v570
  %v607 = vadd.f32 %v45, %v575
  %v608 = vadd.f32 %v46, %v578
  %v609 = vadd.f32 %v47, %v583
  %v610 = vadd.f32 %v48, %v586
  %v611 = vadd.f32 %v49, %v591
  %v612 = vadd.f32 %v50, %v594
  %613 = vst [vmem:[#allocation2] sm:$0xff] %v597
  %614 = vst [vmem:[#allocation2 + $0x8] sm:$0xff] %v598
  %615 = vst [vmem:[#allocation2 + $0x10] sm:$0xff] %v599
  %616 = vst [vmem:[#allocation2 + $0x18] sm:$0xff] %v600
  %617 = vst [vmem:[#allocation2 + $0x20] sm:$0xff] %v601
  %618 = vst [vmem:[#allocation2 + $0x28] sm:$0xff] %v602
  %619 = vst [vmem:[#allocation2 + $0x30] sm:$0xff] %v603
  %620 = vst [vmem:[#allocation2 + $0x38] sm:$0xff] %v604
  %621 = vst [vmem:[#allocation2 + $0x40] sm:$0xff] %v605
  %622 = vst [vmem:[#allocation2 + $0x48] sm:$0xff] %v606
  %623 = vst [vmem:[#allocation2 + $0x50] sm:$0xff] %v607
  %624 = vst [vmem:[#allocation2 + $0x58] sm:$0xff] %v608
  %625 = vst [vmem:[#allocation2 + $0x60] sm:$0xff] %v609
  %626 = vst [vmem:[#allocation2 + $0x68] sm:$0xff] %v610
  %627 = vst [vmem:[#allocation2 + $0x70] sm:$0xff] %v611
  %628 = vst [vmem:[#allocation2 + $0x78] sm:$0xff] %v612
  // Predicated region
  $region18: #{_lambda_.17} parent=0 // pred_check
    %p629 = pneg %p15
  $region19: #{_lambda_.17} parent=0 // pred_check_branch
    %631 = sbr.rel (%p629) target = $region21
  $region20: #{_lambda_.17} parent=0 // pred_region
    %v632 = vld [vmem:[#allocation2] sm:$0xff]
    %v633 = vld [vmem:[#allocation2 + $0x8] sm:$0xff]
    %v634 = vld [vmem:[#allocation2 + $0x10] sm:$0xff]
    %v635 = vld [vmem:[#allocation2 + $0x18] sm:$0xff]
    %v636 = vld [vmem:[#allocation2 + $0x20] sm:$0xff]
    %v637 = vld [vmem:[#allocation2 + $0x28] sm:$0xff]
    %v638 = vld [vmem:[#allocation2 + $0x30] sm:$0xff]
    %v639 = vld [vmem:[#allocation2 + $0x38] sm:$0xff]
    %v640 = vld [vmem:[#allocation2 + $0x40] sm:$0xff]
    %v641 = vld [vmem:[#allocation2 + $0x48] sm:$0xff]
    %v642 = vld [vmem:[#allocation2 + $0x50] sm:$0xff]
    %v643 = vld [vmem:[#allocation2 + $0x58] sm:$0xff]
    %v644 = vld [vmem:[#allocation2 + $0x60] sm:$0xff]
    %v645 = vld [vmem:[#allocation2 + $0x68] sm:$0xff]
    %v646 = vld [vmem:[#allocation2 + $0x70] sm:$0xff]
    %v647 = vld [vmem:[#allocation2 + $0x78] sm:$0xff]
    %v648 = vld [vmem:[%s2] sm:$0x1]
    %v650 = vlaneseq
    %v651 = vshrl.u32 %v650, 7
    %v652 = vsub.s32 0, %v651
    %v653 = vrot.slane %v648, %v652
    %v655 = vadd.f32 %v632, %v653
    %v656 = vadd.f32 %v633, %v653
    %v657 = vadd.f32 %v634, %v653
    %v658 = vadd.f32 %v635, %v653
    %v659 = vadd.f32 %v636, %v653
    %v660 = vadd.f32 %v637, %v653
    %v661 = vadd.f32 %v638, %v653
    %v662 = vadd.f32 %v639, %v653
    %v663 = vadd.f32 %v640, %v653
    %v664 = vadd.f32 %v641, %v653
    %v665 = vadd.f32 %v642, %v653
    %v666 = vadd.f32 %v643, %v653
    %v667 = vadd.f32 %v644, %v653
    %v668 = vadd.f32 %v645, %v653
    %v669 = vadd.f32 %v646, %v653
    %v670 = vadd.f32 %v647, %v653
    %v671 = vmax.f32 %v655, 0.0
    %v672 = vmax.f32 %v656, 0.0
    %v673 = vmax.f32 %v657, 0.0
    %v674 = vmax.f32 %v658, 0.0
    %v675 = vmax.f32 %v659, 0.0
    %v676 = vmax.f32 %v660, 0.0
    %v677 = vmax.f32 %v661, 0.0
    %v678 = vmax.f32 %v662, 0.0
    %v679 = vmax.f32 %v663, 0.0
    %v680 = vmax.f32 %v664, 0.0
    %v681 = vmax.f32 %v665, 0.0
    %v682 = vmax.f32 %v666, 0.0
    %v683 = vmax.f32 %v667, 0.0
    %v684 = vmax.f32 %v668, 0.0
    %v685 = vmax.f32 %v669, 0.0
    %v686 = vmax.f32 %v670, 0.0
    %687 = vst [vmem:[%s3] sm:$0xff] %v671
    %688 = vst [vmem:[%s3 + $0x8] sm:$0xff] %v672
    %689 = vst [vmem:[%s3 + $0x10] sm:$0xff] %v673
    %690 = vst [vmem:[%s3 + $0x18] sm:$0xff] %v674
    %691 = vst [vmem:[%s3 + $0x20] sm:$0xff] %v675
    %692 = vst [vmem:[%s3 + $0x28] sm:$0xff] %v676
    %693 = vst [vmem:[%s3 + $0x30] sm:$0xff] %v677
    %694 = vst [vmem:[%s3 + $0x38] sm:$0xff] %v678
    %695 = vst [vmem:[%s3 + $0x40] sm:$0xff] %v679
    %696 = vst [vmem:[%s3 + $0x48] sm:$0xff] %v680
    %697 = vst [vmem:[%s3 + $0x50] sm:$0xff] %v681
    %698 = vst [vmem:[%s3 + $0x58] sm:$0xff] %v682
    %699 = vst [vmem:[%s3 + $0x60] sm:$0xff] %v683
    %700 = vst [vmem:[%s3 + $0x68] sm:$0xff] %v684
    %701 = vst [vmem:[%s3 + $0x70] sm:$0xff] %v685
    %702 = vst [vmem:[%s3 + $0x78] sm:$0xff] %v686
  $region21: #{_lambda_.17} parent=0 // pred_fallthru
    _
  // Predicated region
  $region22: #{_lambda_.17} parent=0 // pred_check
    _
  $region23: #{_lambda_.17} parent=0 // pred_check_branch
    %704 = sbr.rel (0) target = $region25
  $region24: #{_lambda_.17} parent=0 // pred_region
    _
  $region25: #{_lambda_.17} parent=0 // pred_fallthru
    _
  // Predicated region
  $region26: #{_lambda_.17} parent=0 // pred_check
    _
  $region27: #{_lambda_.17} parent=0 // pred_check_branch
    %706 = sbr.rel (0) target = $region29
  $region28: #{_lambda_.17} parent=0 // pred_region
    _
  $region29: #{_lambda_.17} parent=0 // pred_fallthru
    _

// kernel: _lambda_.18
$region0: #{_lambda_.18}
  #allocation0 [shape = 'u32[]', space=smem, size = 0x4, offset = 0x4, fixed_abs, tag = 'smem constant byte address 0x4 - core index']
  #allocation1 [shape = 'u32[144,128]{1,0:T(1,128)}', space=vmem, size = 0x12000, scoped, tag = 'internal scratch']
  #allocation2 [shape = 'f32[64,128]{1,0:T(8,128)}', space=vmem, size = 0x8000, scoped, tag = 'scratch operand']
  %s0 = inlined_call_operand.vmem [shape: bf16[64,384], index: 0, kind: input, shape index: {}]
  %s1 = inlined_call_operand.vmem [shape: bf16[384,128], index: 1, kind: input, shape index: {}]
  %s2 = inlined_call_operand.vmem [shape: f32[1,128], index: 2, kind: input, shape index: {}]
  %s3 = inlined_call_operand.vmem [shape: f32[64,128], index: 3, kind: output, shape index: {}]
  %s4 = sld [smem:[#allocation0]]
  $region30: #{_lambda_.18} parent=0
    _
  %s6 = ssub.s32 1, %s4
  %s7 = scalar_select 0, %s6, %s4
  // Predicated region
  $region2: #{_lambda_.18} parent=0 // pred_check
    _
  $region3: #{_lambda_.18} parent=0 // pred_check_branch
    %9 = sbr.rel (0) target = $region5
  $region4: #{_lambda_.18} parent=0 // pred_region
    _
  $region5: #{_lambda_.18} parent=0 // pred_fallthru
    _
  // Predicated region
  $region6: #{_lambda_.18} parent=0 // pred_check
    _
  $region7: #{_lambda_.18} parent=0 // pred_check_branch
    %11 = sbr.rel (0) target = $region9
  $region8: #{_lambda_.18} parent=0 // pred_region
    _
  $region9: #{_lambda_.18} parent=0 // pred_fallthru
    _
  // Predicated region
  $region10: #{_lambda_.18} parent=0 // pred_check
    _
  $region11: #{_lambda_.18} parent=0 // pred_check_branch
    %13 = sbr.rel (0) target = $region13
  $region12: #{_lambda_.18} parent=0 // pred_region
    _
  $region13: #{_lambda_.18} parent=0 // pred_fallthru
    _
  %p15 = scmp.eq.s32.totalorder 0, 0
  // Predicated region
  $region14: #{_lambda_.18} parent=0 // pred_check
    %p16 = pneg %p15
  $region15: #{_lambda_.18} parent=0 // pred_check_branch
    %18 = sbr.rel (%p16) target = $region17
  $region16: #{_lambda_.18} parent=0 // pred_region
    %19 = vst [vmem:[#allocation2] sm:$0xff] 0.0
    %20 = vst [vmem:[#allocation2 + $0x8] sm:$0xff] 0.0
    %21 = vst [vmem:[#allocation2 + $0x10] sm:$0xff] 0.0
    %22 = vst [vmem:[#allocation2 + $0x18] sm:$0xff] 0.0
    %23 = vst [vmem:[#allocation2 + $0x20] sm:$0xff] 0.0
    %24 = vst [vmem:[#allocation2 + $0x28] sm:$0xff] 0.0
    %25 = vst [vmem:[#allocation2 + $0x30] sm:$0xff] 0.0
    %26 = vst [vmem:[#allocation2 + $0x38] sm:$0xff] 0.0
  $region17: #{_lambda_.18} parent=0 // pred_fallthru
    _
  %v27 = vld [vmem:[#allocation2] sm:$0xff]
  %v28 = vld [vmem:[#allocation2 + $0x8] sm:$0xff]
  %v29 = vld [vmem:[#allocation2 + $0x10] sm:$0xff]
  %v30 = vld [vmem:[#allocation2 + $0x18] sm:$0xff]
  %v31 = vld [vmem:[#allocation2 + $0x20] sm:$0xff]
  %v32 = vld [vmem:[#allocation2 + $0x28] sm:$0xff]
  %v33 = vld [vmem:[#allocation2 + $0x30] sm:$0xff]
  %v34 = vld [vmem:[#allocation2 + $0x38] sm:$0xff]
  %v35 = vld [vmem:[%s0] sm:$0xff]
  %v36 = vld [vmem:[%s0 + $0x8] sm:$0xf]
  %v37 = vld [vmem:[%s0 + $0xc] sm:$0xff]
  %v38 = vld [vmem:[%s0 + $0x14] sm:$0xf]
  %v39 = vld [vmem:[%s0 + $0x18] sm:$0xff]
  %v40 = vld [vmem:[%s0 + $0x20] sm:$0xf]
  %v41 = vld [vmem:[%s0 + $0x24] sm:$0xff]
  %v42 = vld [vmem:[%s0 + $0x2c] sm:$0xf]
  %v43 = vld [vmem:[%s0 + $0x30] sm:$0xff]
  %v44 = vld [vmem:[%s0 + $0x38] sm:$0xf]
  %v45 = vld [vmem:[%s0 + $0x3c] sm:$0xff]
  %v46 = vld [vmem:[%s0 + $0x44] sm:$0xf]
  %v47 = vld [vmem:[%s0 + $0x48] sm:$0xff]
  %v48 = vld [vmem:[%s0 + $0x50] sm:$0xf]
  %v49 = vld [vmem:[%s0 + $0x54] sm:$0xff]
  %v50 = vld [vmem:[%s0 + $0x5c] sm:$0xf]
  %v51 = vld [vmem:[%s1] sm:$0xf]
  %v52 = vld [vmem:[%s1 + $0x4] sm:$0xf]
  %v53 = vld [vmem:[%s1 + $0x8] sm:$0xf]
  %v54 = vld [vmem:[%s1 + $0xc] sm:$0xf]
  %v55 = vld [vmem:[%s1 + $0x10] sm:$0xf]
  %v56 = vld [vmem:[%s1 + $0x14] sm:$0xf]
  %v57 = vld [vmem:[%s1 + $0x18] sm:$0xf]
  %v58 = vld [vmem:[%s1 + $0x1c] sm:$0xf]
  %v59 = vld [vmem:[%s1 + $0x20] sm:$0xf]
  %v60 = vld [vmem:[%s1 + $0x24] sm:$0xf]
  %v61 = vld [vmem:[%s1 + $0x28] sm:$0xf]
  %v62 = vld [vmem:[%s1 + $0x2c] sm:$0xf]
  %v63 = vld [vmem:[%s1 + $0x30] sm:$0xf]
  %v64 = vld [vmem:[%s1 + $0x34] sm:$0xf]
  %v65 = vld [vmem:[%s1 + $0x38] sm:$0xf]
  %v66 = vld [vmem:[%s1 + $0x3c] sm:$0xf]
  %v67 = vld [vmem:[%s1 + $0x40] sm:$0xf]
  %v68 = vld [vmem:[%s1 + $0x44] sm:$0xf]
  %v69 = vld [vmem:[%s1 + $0x48] sm:$0xf]
  %v70 = vld [vmem:[%s1 + $0x4c] sm:$0xf]
  %v71 = vld [vmem:[%s1 + $0x50] sm:$0xf]
  %v72 = vld [vmem:[%s1 + $0x54] sm:$0xf]
  %v73 = vld [vmem:[%s1 + $0x58] sm:$0xf]
  %v74 = vld [vmem:[%s1 + $0x5c] sm:$0xf]
  %v75 = vld [vmem:[%s1 + $0x60] sm:$0xf]
  %v76 = vld [vmem:[%s1 + $0x64] sm:$0xf]
  %v77 = vld [vmem:[%s1 + $0x68] sm:$0xf]
  %v78 = vld [vmem:[%s1 + $0x6c] sm:$0xf]
  %v79 = vld [vmem:[%s1 + $0x70] sm:$0xf]
  %v80 = vld [vmem:[%s1 + $0x74] sm:$0xf]
  %v81 = vld [vmem:[%s1 + $0x78] sm:$0xf]
  %v82 = vld [vmem:[%s1 + $0x7c] sm:$0xf]
  %v83 = vld [vmem:[%s1 + $0x80] sm:$0xf]
  %v84 = vld [vmem:[%s1 + $0x84] sm:$0xf]
  %v85 = vld [vmem:[%s1 + $0x88] sm:$0xf]
  %v86 = vld [vmem:[%s1 + $0x8c] sm:$0xf]
  %v87 = vld [vmem:[%s1 + $0x90] sm:$0xf]
  %v88 = vld [vmem:[%s1 + $0x94] sm:$0xf]
  %v89 = vld [vmem:[%s1 + $0x98] sm:$0xf]
  %v90 = vld [vmem:[%s1 + $0x9c] sm:$0xf]
  %v91 = vld [vmem:[%s1 + $0xa0] sm:$0xf]
  %v92 = vld [vmem:[%s1 + $0xa4] sm:$0xf]
  %v93 = vld [vmem:[%s1 + $0xa8] sm:$0xf]
  %v94 = vld [vmem:[%s1 + $0xac] sm:$0xf]
  %v95 = vld [vmem:[%s1 + $0xb0] sm:$0xf]
  %v96 = vld [vmem:[%s1 + $0xb4] sm:$0xf]
  %v97 = vld [vmem:[%s1 + $0xb8] sm:$0xf]
  %v98 = vld [vmem:[%s1 + $0xbc] sm:$0xf]
  %v115 = vunpack.c.l.b16 %v35
  %v116 = vunpack.c.h.b16 %v35
  %v117 = vunpack.c.l.b16 %v36
  %v118 = vunpack.c.l.b16 %v37
  %v119 = vunpack.c.h.b16 %v37
  %v120 = vunpack.c.l.b16 %v38
  %v121 = vunpack.c.l.b16 %v39
  %v122 = vunpack.c.h.b16 %v39
  %v123 = vunpack.c.l.b16 %v40
  %v124 = vunpack.c.l.b16 %v41
  %v125 = vunpack.c.h.b16 %v41
  %v126 = vunpack.c.l.b16 %v42
  %v127 = vunpack.c.l.b16 %v43
  %v128 = vunpack.c.h.b16 %v43
  %v129 = vunpack.c.l.b16 %v44
  %v130 = vunpack.c.l.b16 %v45
  %v131 = vunpack.c.h.b16 %v45
  %v132 = vunpack.c.l.b16 %v46
  %v133 = vunpack.c.l.b16 %v47
  %v134 = vunpack.c.h.b16 %v47
  %v135 = vunpack.c.l.b16 %v48
  %v136 = vunpack.c.l.b16 %v49
  %v137 = vunpack.c.h.b16 %v49
  %v138 = vunpack.c.l.b16 %v50
  %v139 = vpack.c.b16 %v118, %v115
  %v140 = vpack.c.b16 %v119, %v116
  %v141 = vpack.c.b16 %v120, %v117
  %v142 = vpack.c.b16 %v124, %v121
  %v143 = vpack.c.b16 %v125, %v122
  %v144 = vpack.c.b16 %v126, %v123
  %v145 = vpack.c.b16 %v130, %v127
  %v146 = vpack.c.b16 %v131, %v128
  %v147 = vpack.c.b16 %v132, %v129
  %v148 = vpack.c.b16 %v136, %v133
  %v149 = vpack.c.b16 %v137, %v134
  %v150 = vpack.c.b16 %v138, %v135
  %v211 = vunpack.c.l.b16 %v51
  %v212 = vunpack.c.l.b16 %v52
  %v213 = vunpack.c.l.b16 %v53
  %v214 = vunpack.c.l.b16 %v54
  %v215 = vunpack.c.l.b16 %v55
  %v216 = vunpack.c.l.b16 %v56
  %v217 = vunpack.c.l.b16 %v57
  %v218 = vunpack.c.l.b16 %v58
  %v219 = vunpack.c.l.b16 %v59
  %v220 = vunpack.c.l.b16 %v60
  %v221 = vunpack.c.l.b16 %v61
  %v222 = vunpack.c.l.b16 %v62
  %v223 = vunpack.c.l.b16 %v63
  %v224 = vunpack.c.l.b16 %v64
  %v225 = vunpack.c.l.b16 %v65
  %v226 = vunpack.c.l.b16 %v66
  %v227 = vunpack.c.l.b16 %v67
  %v228 = vunpack.c.l.b16 %v68
  %v229 = vunpack.c.l.b16 %v69
  %v230 = vunpack.c.l.b16 %v70
  %v231 = vunpack.c.l.b16 %v71
  %v232 = vunpack.c.l.b16 %v72
  %v233 = vunpack.c.l.b16 %v73
  %v234 = vunpack.c.l.b16 %v74
  %v235 = vunpack.c.l.b16 %v75
  %v236 = vunpack.c.l.b16 %v76
  %v237 = vunpack.c.l.b16 %v77
  %v238 = vunpack.c.l.b16 %v78
  %v239 = vunpack.c.l.b16 %v79
  %v240 = vunpack.c.l.b16 %v80
  %v241 = vunpack.c.l.b16 %v81
  %v242 = vunpack.c.l.b16 %v82
  %v243 = vunpack.c.l.b16 %v83
  %v244 = vunpack.c.l.b16 %v84
  %v245 = vunpack.c.l.b16 %v85
  %v246 = vunpack.c.l.b16 %v86
  %v247 = vunpack.c.l.b16 %v87
  %v248 = vunpack.c.l.b16 %v88
  %v249 = vunpack.c.l.b16 %v89
  %v250 = vunpack.c.l.b16 %v90
  %v251 = vunpack.c.l.b16 %v91
  %v252 = vunpack.c.l.b16 %v92
  %v253 = vunpack.c.l.b16 %v93
  %v254 = vunpack.c.l.b16 %v94
  %v255 = vunpack.c.l.b16 %v95
  %v256 = vunpack.c.l.b16 %v96
  %v257 = vunpack.c.l.b16 %v97
  %v258 = vunpack.c.l.b16 %v98
  %v259 = vpack.c.b16 %v212, %v211
  %v260 = vpack.c.b16 %v214, %v213
  %v261 = vpack.c.b16 %v216, %v215
  %v262 = vpack.c.b16 %v218, %v217
  %v263 = vpack.c.b16 %v220, %v219
  %v264 = vpack.c.b16 %v222, %v221
  %v265 = vpack.c.b16 %v224, %v223
  %v266 = vpack.c.b16 %v226, %v225
  %v267 = vpack.c.b16 %v228, %v227
  %v268 = vpack.c.b16 %v230, %v229
  %v269 = vpack.c.b16 %v232, %v231
  %v270 = vpack.c.b16 %v234, %v233
  %v271 = vpack.c.b16 %v236, %v235
  %v272 = vpack.c.b16 %v238, %v237
  %v273 = vpack.c.b16 %v240, %v239
  %v274 = vpack.c.b16 %v242, %v241
  %v275 = vpack.c.b16 %v244, %v243
  %v276 = vpack.c.b16 %v246, %v245
  %v277 = vpack.c.b16 %v248, %v247
  %v278 = vpack.c.b16 %v250, %v249
  %v279 = vpack.c.b16 %v252, %v251
  %v280 = vpack.c.b16 %v254, %v253
  %v281 = vpack.c.b16 %v256, %v255
  %v282 = vpack.c.b16 %v258, %v257
  %307 = vmatprep.subr.bf16.mxu0 0
  %308 = vmatpush1.bf16.msra.mxu0 %v266
  %309 = vmatprep.subr.bf16.mxu0 0
  %310 = vmatpush1.bf16.msra.mxu0 %v265
  %311 = vmatprep.subr.bf16.mxu0 0
  %312 = vmatpush1.bf16.msra.mxu0 %v264
  %313 = vmatprep.subr.bf16.mxu0 0
  %314 = vmatpush1.bf16.msra.mxu0 %v263
  %315 = vmatprep.subr.bf16.mxu0 0
  %316 = vmatpush1.bf16.msra.mxu0 %v262
  %317 = vmatprep.subr.bf16.mxu0 0
  %318 = vmatpush1.bf16.msra.mxu0 %v261
  %319 = vmatprep.subr.bf16.mxu0 0
  %320 = vmatpush1.bf16.msra.mxu0 %v260
  %321 = vmatprep.subr.bf16.mxu0 0
  %322 = vmatpush1.bf16.msra.mxu0 %v259
  %323 = vmatprep.subr.bf16.mxu0 0
  %324 = vmatpush2.bf16.msra.mxu0 %v274
  %325 = vmatprep.subr.bf16.mxu0 0
  %326 = vmatpush2.bf16.msra.mxu0 %v273
  %327 = vmatprep.subr.bf16.mxu0 0
  %328 = vmatpush2.bf16.msra.mxu0 %v272
  %329 = vmatprep.subr.bf16.mxu0 0
  %330 = vmatpush2.bf16.msra.mxu0 %v271
  %331 = vmatprep.subr.bf16.mxu0 0
  %332 = vmatpush2.bf16.msra.mxu0 %v270
  %333 = vmatprep.subr.bf16.mxu0 0
  %334 = vmatpush2.bf16.msra.mxu0 %v269
  %335 = vmatprep.subr.bf16.mxu0 0
  %336 = vmatpush2.bf16.msra.mxu0 %v268
  %337 = vmatprep.subr.bf16.mxu0 0
  %338 = vmatpush2.bf16.msra.mxu0 %v267
  %339 = vmatprep.mubr.bf16.mxu0 %v140
  %340 = vmatmul.mubr.bf16.gmra.mxu0 %v139
  %v341 = vpop.f32.mrf.mxu0
  %v342 = vadd.f32 0.0, %v341
  %v343 = vpop.f32.mrf.mxu0
  %v344 = vpop.f32.mrf.mxu0
  %v345 = vadd.f32 0.0, %v344
  %v346 = vpop.f32.mrf.mxu0
  %347 = vmatprep.mubr.bf16.mxu0 %v143
  %348 = vmatmul.mubr.bf16.gmra.mxu0 %v142
  %v349 = vpop.f32.mrf.mxu0
  %v350 = vadd.f32 0.0, %v349
  %v351 = vpop.f32.mrf.mxu0
  %v352 = vpop.f32.mrf.mxu0
  %v353 = vadd.f32 0.0, %v352
  %v354 = vpop.f32.mrf.mxu0
  %355 = vmatprep.mubr.bf16.mxu0 %v146
  %356 = vmatmul.mubr.bf16.gmra.mxu0 %v145
  %v357 = vpop.f32.mrf.mxu0
  %v358 = vadd.f32 0.0, %v357
  %v359 = vpop.f32.mrf.mxu0
  %v360 = vpop.f32.mrf.mxu0
  %v361 = vadd.f32 0.0, %v360
  %v362 = vpop.f32.mrf.mxu0
  %363 = vmatprep.mubr.bf16.mxu0 %v149
  %364 = vmatmul.mubr.bf16.gmra.mxu0 %v148
  %v365 = vpop.f32.mrf.mxu0
  %v366 = vadd.f32 0.0, %v365
  %v367 = vpop.f32.mrf.mxu0
  %v368 = vpop.f32.mrf.mxu0
  %v369 = vadd.f32 0.0, %v368
  %v370 = vpop.f32.mrf.mxu0
  %371 = vdwg.mxu0
  %372 = vmatprep.subr.bf16.mxu0 0
  %373 = vmatpush1.bf16.msra.mxu0 %v282
  %374 = vmatprep.subr.bf16.mxu0 0
  %375 = vmatpush1.bf16.msra.mxu0 %v281
  %376 = vmatprep.subr.bf16.mxu0 0
  %377 = vmatpush1.bf16.msra.mxu0 %v280
  %378 = vmatprep.subr.bf16.mxu0 0
  %379 = vmatpush1.bf16.msra.mxu0 %v279
  %380 = vmatprep.subr.bf16.mxu0 0
  %381 = vmatpush1.bf16.msra.mxu0 %v278
  %382 = vmatprep.subr.bf16.mxu0 0
  %383 = vmatpush1.bf16.msra.mxu0 %v277
  %384 = vmatprep.subr.bf16.mxu0 0
  %385 = vmatpush1.bf16.msra.mxu0 %v276
  %386 = vmatprep.subr.bf16.mxu0 0
  %387 = vmatpush1.bf16.msra.mxu0 %v275
  %388 = vmatprep.subr.bf16.mxu0 0
  %389 = vmatpush2.bf16.msra.mxu0 0
  %390 = vmatprep.subr.bf16.mxu0 0
  %391 = vmatpush2.bf16.msra.mxu0 0
  %392 = vmatprep.subr.bf16.mxu0 0
  %393 = vmatpush2.bf16.msra.mxu0 0
  %394 = vmatprep.subr.bf16.mxu0 0
  %395 = vmatpush2.bf16.msra.mxu0 0
  %396 = vmatprep.subr.bf16.mxu0 0
  %397 = vmatpush2.bf16.msra.mxu0 0
  %398 = vmatprep.subr.bf16.mxu0 0
  %399 = vmatpush2.bf16.msra.mxu0 0
  %400 = vmatprep.subr.bf16.mxu0 0
  %401 = vmatpush2.bf16.msra.mxu0 0
  %402 = vmatprep.subr.bf16.mxu0 0
  %403 = vmatpush2.bf16.msra.mxu0 0
  %404 = vmatprep.mubr.bf16.mxu0 0
  %405 = vmatmul.mubr.bf16.gmra.mxu0 %v141
  %v406 = vpop.f32.mrf.mxu0
  %v407 = vadd.f32 %v342, %v406
  %v408 = vpop.f32.mrf.mxu0
  %v409 = vpop.f32.mrf.mxu0
  %v410 = vadd.f32 %v345, %v409
  %v411 = vpop.f32.mrf.mxu0
  %412 = vmatprep.mubr.bf16.mxu0 0
  %413 = vmatmul.mubr.bf16.gmra.mxu0 %v144
  %v414 = vpop.f32.mrf.mxu0
  %v415 = vadd.f32 %v350, %v414
  %v416 = vpop.f32.mrf.mxu0
  %v417 = vpop.f32.mrf.mxu0
  %v418 = vadd.f32 %v353, %v417
  %v419 = vpop.f32.mrf.mxu0
  %420 = vmatprep.mubr.bf16.mxu0 0
  %421 = vmatmul.mubr.bf16.gmra.mxu0 %v147
  %v422 = vpop.f32.mrf.mxu0
  %v423 = vadd.f32 %v358, %v422
  %v424 = vpop.f32.mrf.mxu0
  %v425 = vpop.f32.mrf.mxu0
  %v426 = vadd.f32 %v361, %v425
  %v427 = vpop.f32.mrf.mxu0
  %428 = vmatprep.mubr.bf16.mxu0 0
  %429 = vmatmul.mubr.bf16.gmra.mxu0 %v150
  %v430 = vpop.f32.mrf.mxu0
  %v431 = vadd.f32 %v366, %v430
  %v432 = vpop.f32.mrf.mxu0
  %v433 = vpop.f32.mrf.mxu0
  %v434 = vadd.f32 %v369, %v433
  %v435 = vpop.f32.mrf.mxu0
  %436 = vdwg.mxu0
  %v437 = vadd.f32 %v27, %v407
  %v438 = vadd.f32 %v28, %v410
  %v439 = vadd.f32 %v29, %v415
  %v440 = vadd.f32 %v30, %v418
  %v441 = vadd.f32 %v31, %v423
  %v442 = vadd.f32 %v32, %v426
  %v443 = vadd.f32 %v33, %v431
  %v444 = vadd.f32 %v34, %v434
  %445 = vst [vmem:[#allocation2] sm:$0xff] %v437
  %446 = vst [vmem:[#allocation2 + $0x8] sm:$0xff] %v438
  %447 = vst [vmem:[#allocation2 + $0x10] sm:$0xff] %v439
  %448 = vst [vmem:[#allocation2 + $0x18] sm:$0xff] %v440
  %449 = vst [vmem:[#allocation2 + $0x20] sm:$0xff] %v441
  %450 = vst [vmem:[#allocation2 + $0x28] sm:$0xff] %v442
  %451 = vst [vmem:[#allocation2 + $0x30] sm:$0xff] %v443
  %452 = vst [vmem:[#allocation2 + $0x38] sm:$0xff] %v444
  // Predicated region
  $region18: #{_lambda_.18} parent=0 // pred_check
    %p453 = pneg %p15
  $region19: #{_lambda_.18} parent=0 // pred_check_branch
    %455 = sbr.rel (%p453) target = $region21
  $region20: #{_lambda_.18} parent=0 // pred_region
    %v456 = vld [vmem:[#allocation2] sm:$0xff]
    %v457 = vld [vmem:[#allocation2 + $0x8] sm:$0xff]
    %v458 = vld [vmem:[#allocation2 + $0x10] sm:$0xff]
    %v459 = vld [vmem:[#allocation2 + $0x18] sm:$0xff]
    %v460 = vld [vmem:[#allocation2 + $0x20] sm:$0xff]
    %v461 = vld [vmem:[#allocation2 + $0x28] sm:$0xff]
    %v462 = vld [vmem:[#allocation2 + $0x30] sm:$0xff]
    %v463 = vld [vmem:[#allocation2 + $0x38] sm:$0xff]
    %v464 = vld [vmem:[%s2] sm:$0x1]
    %v466 = vlaneseq
    %v467 = vshrl.u32 %v466, 7
    %v468 = vsub.s32 0, %v467
    %v469 = vrot.slane %v464, %v468
    %v471 = vadd.f32 %v456, %v469
    %v472 = vadd.f32 %v457, %v469
    %v473 = vadd.f32 %v458, %v469
    %v474 = vadd.f32 %v459, %v469
    %v475 = vadd.f32 %v460, %v469
    %v476 = vadd.f32 %v461, %v469
    %v477 = vadd.f32 %v462, %v469
    %v478 = vadd.f32 %v463, %v469
    %v479 = vmax.f32 %v471, 0.0
    %v480 = vmax.f32 %v472, 0.0
    %v481 = vmax.f32 %v473, 0.0
    %v482 = vmax.f32 %v474, 0.0
    %v483 = vmax.f32 %v475, 0.0
    %v484 = vmax.f32 %v476, 0.0
    %v485 = vmax.f32 %v477, 0.0
    %v486 = vmax.f32 %v478, 0.0
    %487 = vst [vmem:[%s3] sm:$0xff] %v479
    %488 = vst [vmem:[%s3 + $0x8] sm:$0xff] %v480
    %489 = vst [vmem:[%s3 + $0x10] sm:$0xff] %v481
    %490 = vst [vmem:[%s3 + $0x18] sm:$0xff] %v482
    %491 = vst [vmem:[%s3 + $0x20] sm:$0xff] %v483
    %492 = vst [vmem:[%s3 + $0x28] sm:$0xff] %v484
    %493 = vst [vmem:[%s3 + $0x30] sm:$0xff] %v485
    %494 = vst [vmem:[%s3 + $0x38] sm:$0xff] %v486
  $region21: #{_lambda_.18} parent=0 // pred_fallthru
    _
  // Predicated region
  $region22: #{_lambda_.18} parent=0 // pred_check
    _
  $region23: #{_lambda_.18} parent=0 // pred_check_branch
    %496 = sbr.rel (0) target = $region25
  $region24: #{_lambda_.18} parent=0 // pred_region
    _
  $region25: #{_lambda_.18} parent=0 // pred_fallthru
    _
  // Predicated region
  $region26: #{_lambda_.18} parent=0 // pred_check
    _
  $region27: #{_lambda_.18} parent=0 // pred_check_branch
    %498 = sbr.rel (0) target = $region29
  $region28: #{_lambda_.18} parent=0 // pred_region
    _
  $region29: #{_lambda_.18} parent=0 // pred_fallthru
    _

// kernel: _lambda_.20
$region0: #{_lambda_.20}
  #allocation0 [shape = 'u32[]', space=smem, size = 0x4, offset = 0x4, fixed_abs, tag = 'smem constant byte address 0x4 - core index']
  #allocation1 [shape = 'u32[144,128]{1,0:T(1,128)}', space=vmem, size = 0x12000, scoped, tag = 'internal scratch']
  #allocation2 [shape = 'f32[16,128]{1,0:T(8,128)}', space=vmem, size = 0x2000, scoped, tag = 'scratch operand']
  %s0 = inlined_call_operand.vmem [shape: bf16[16,256], index: 0, kind: input, shape index: {}]
  %s1 = inlined_call_operand.vmem [shape: bf16[256,128], index: 1, kind: input, shape index: {}]
  %s2 = inlined_call_operand.vmem [shape: f32[1,128], index: 2, kind: input, shape index: {}]
  %s3 = inlined_call_operand.vmem [shape: f32[16,128], index: 3, kind: output, shape index: {}]
  %s4 = sld [smem:[#allocation0]]
  $region30: #{_lambda_.20} parent=0
    _
  %s6 = ssub.s32 1, %s4
  %s7 = scalar_select 0, %s6, %s4
  // Predicated region
  $region2: #{_lambda_.20} parent=0 // pred_check
    _
  $region3: #{_lambda_.20} parent=0 // pred_check_branch
    %9 = sbr.rel (0) target = $region5
  $region4: #{_lambda_.20} parent=0 // pred_region
    _
  $region5: #{_lambda_.20} parent=0 // pred_fallthru
    _
  // Predicated region
  $region6: #{_lambda_.20} parent=0 // pred_check
    _
  $region7: #{_lambda_.20} parent=0 // pred_check_branch
    %11 = sbr.rel (0) target = $region9
  $region8: #{_lambda_.20} parent=0 // pred_region
    _
  $region9: #{_lambda_.20} parent=0 // pred_fallthru
    _
  // Predicated region
  $region10: #{_lambda_.20} parent=0 // pred_check
    _
  $region11: #{_lambda_.20} parent=0 // pred_check_branch
    %13 = sbr.rel (0) target = $region13
  $region12: #{_lambda_.20} parent=0 // pred_region
    _
  $region13: #{_lambda_.20} parent=0 // pred_fallthru
    _
  %p15 = scmp.eq.s32.totalorder 0, 0
  // Predicated region
  $region14: #{_lambda_.20} parent=0 // pred_check
    %p16 = pneg %p15
  $region15: #{_lambda_.20} parent=0 // pred_check_branch
    %18 = sbr.rel (%p16) target = $region17
  $region16: #{_lambda_.20} parent=0 // pred_region
    %19 = vst [vmem:[#allocation2] sm:$0xff] 0.0
    %20 = vst [vmem:[#allocation2 + $0x8] sm:$0xff] 0.0
  $region17: #{_lambda_.20} parent=0 // pred_fallthru
    _
  %v21 = vld [vmem:[#allocation2] sm:$0xff]
  %v22 = vld [vmem:[#allocation2 + $0x8] sm:$0xff]
  %v23 = vld [vmem:[%s0] sm:$0xff]
  %v24 = vld [vmem:[%s0 + $0x8] sm:$0xff]
  %v25 = vld [vmem:[%s1] sm:$0xf]
  %v26 = vld [vmem:[%s1 + $0x4] sm:$0xf]
  %v27 = vld [vmem:[%s1 + $0x8] sm:$0xf]
  %v28 = vld [vmem:[%s1 + $0xc] sm:$0xf]
  %v29 = vld [vmem:[%s1 + $0x10] sm:$0xf]
  %v30 = vld [vmem:[%s1 + $0x14] sm:$0xf]
  %v31 = vld [vmem:[%s1 + $0x18] sm:$0xf]
  %v32 = vld [vmem:[%s1 + $0x1c] sm:$0xf]
  %v33 = vld [vmem:[%s1 + $0x20] sm:$0xf]
  %v34 = vld [vmem:[%s1 + $0x24] sm:$0xf]
  %v35 = vld [vmem:[%s1 + $0x28] sm:$0xf]
  %v36 = vld [vmem:[%s1 + $0x2c] sm:$0xf]
  %v37 = vld [vmem:[%s1 + $0x30] sm:$0xf]
  %v38 = vld [vmem:[%s1 + $0x34] sm:$0xf]
  %v39 = vld [vmem:[%s1 + $0x38] sm:$0xf]
  %v40 = vld [vmem:[%s1 + $0x3c] sm:$0xf]
  %v41 = vld [vmem:[%s1 + $0x40] sm:$0xf]
  %v42 = vld [vmem:[%s1 + $0x44] sm:$0xf]
  %v43 = vld [vmem:[%s1 + $0x48] sm:$0xf]
  %v44 = vld [vmem:[%s1 + $0x4c] sm:$0xf]
  %v45 = vld [vmem:[%s1 + $0x50] sm:$0xf]
  %v46 = vld [vmem:[%s1 + $0x54] sm:$0xf]
  %v47 = vld [vmem:[%s1 + $0x58] sm:$0xf]
  %v48 = vld [vmem:[%s1 + $0x5c] sm:$0xf]
  %v49 = vld [vmem:[%s1 + $0x60] sm:$0xf]
  %v50 = vld [vmem:[%s1 + $0x64] sm:$0xf]
  %v51 = vld [vmem:[%s1 + $0x68] sm:$0xf]
  %v52 = vld [vmem:[%s1 + $0x6c] sm:$0xf]
  %v53 = vld [vmem:[%s1 + $0x70] sm:$0xf]
  %v54 = vld [vmem:[%s1 + $0x74] sm:$0xf]
  %v55 = vld [vmem:[%s1 + $0x78] sm:$0xf]
  %v56 = vld [vmem:[%s1 + $0x7c] sm:$0xf]
  %v59 = vunpack.c.l.b16 %v23
  %v60 = vunpack.c.h.b16 %v23
  %v61 = vunpack.c.l.b16 %v24
  %v62 = vunpack.c.h.b16 %v24
  %v63 = vpack.c.b16 %v61, %v59
  %v64 = vpack.c.b16 %v62, %v60
  %v99 = vunpack.c.l.b16 %v25
  %v100 = vunpack.c.l.b16 %v26
  %v101 = vunpack.c.l.b16 %v27
  %v102 = vunpack.c.l.b16 %v28
  %v103 = vunpack.c.l.b16 %v29
  %v104 = vunpack.c.l.b16 %v30
  %v105 = vunpack.c.l.b16 %v31
  %v106 = vunpack.c.l.b16 %v32
  %v107 = vunpack.c.l.b16 %v33
  %v108 = vunpack.c.l.b16 %v34
  %v109 = vunpack.c.l.b16 %v35
  %v110 = vunpack.c.l.b16 %v36
  %v111 = vunpack.c.l.b16 %v37
  %v112 = vunpack.c.l.b16 %v38
  %v113 = vunpack.c.l.b16 %v39
  %v114 = vunpack.c.l.b16 %v40
  %v115 = vunpack.c.l.b16 %v41
  %v116 = vunpack.c.l.b16 %v42
  %v117 = vunpack.c.l.b16 %v43
  %v118 = vunpack.c.l.b16 %v44
  %v119 = vunpack.c.l.b16 %v45
  %v120 = vunpack.c.l.b16 %v46
  %v121 = vunpack.c.l.b16 %v47
  %v122 = vunpack.c.l.b16 %v48
  %v123 = vunpack.c.l.b16 %v49
  %v124 = vunpack.c.l.b16 %v50
  %v125 = vunpack.c.l.b16 %v51
  %v126 = vunpack.c.l.b16 %v52
  %v127 = vunpack.c.l.b16 %v53
  %v128 = vunpack.c.l.b16 %v54
  %v129 = vunpack.c.l.b16 %v55
  %v130 = vunpack.c.l.b16 %v56
  %v131 = vpack.c.b16 %v100, %v99
  %v132 = vpack.c.b16 %v102, %v101
  %v133 = vpack.c.b16 %v104, %v103
  %v134 = vpack.c.b16 %v106, %v105
  %v135 = vpack.c.b16 %v108, %v107
  %v136 = vpack.c.b16 %v110, %v109
  %v137 = vpack.c.b16 %v112, %v111
  %v138 = vpack.c.b16 %v114, %v113
  %v139 = vpack.c.b16 %v116, %v115
  %v140 = vpack.c.b16 %v118, %v117
  %v141 = vpack.c.b16 %v120, %v119
  %v142 = vpack.c.b16 %v122, %v121
  %v143 = vpack.c.b16 %v124, %v123
  %v144 = vpack.c.b16 %v126, %v125
  %v145 = vpack.c.b16 %v128, %v127
  %v146 = vpack.c.b16 %v130, %v129
  %163 = vmatprep.subr.bf16.mxu0 0
  %164 = vmatpush1.bf16.msra.mxu0 %v138
  %165 = vmatprep.subr.bf16.mxu0 0
  %166 = vmatpush1.bf16.msra.mxu0 %v137
  %167 = vmatprep.subr.bf16.mxu0 0
  %168 = vmatpush1.bf16.msra.mxu0 %v136
  %169 = vmatprep.subr.bf16.mxu0 0
  %170 = vmatpush1.bf16.msra.mxu0 %v135
  %171 = vmatprep.subr.bf16.mxu0 0
  %172 = vmatpush1.bf16.msra.mxu0 %v134
  %173 = vmatprep.subr.bf16.mxu0 0
  %174 = vmatpush1.bf16.msra.mxu0 %v133
  %175 = vmatprep.subr.bf16.mxu0 0
  %176 = vmatpush1.bf16.msra.mxu0 %v132
  %177 = vmatprep.subr.bf16.mxu0 0
  %178 = vmatpush1.bf16.msra.mxu0 %v131
  %179 = vmatprep.subr.bf16.mxu0 0
  %180 = vmatpush2.bf16.msra.mxu0 %v146
  %181 = vmatprep.subr.bf16.mxu0 0
  %182 = vmatpush2.bf16.msra.mxu0 %v145
  %183 = vmatprep.subr.bf16.mxu0 0
  %184 = vmatpush2.bf16.msra.mxu0 %v144
  %185 = vmatprep.subr.bf16.mxu0 0
  %186 = vmatpush2.bf16.msra.mxu0 %v143
  %187 = vmatprep.subr.bf16.mxu0 0
  %188 = vmatpush2.bf16.msra.mxu0 %v142
  %189 = vmatprep.subr.bf16.mxu0 0
  %190 = vmatpush2.bf16.msra.mxu0 %v141
  %191 = vmatprep.subr.bf16.mxu0 0
  %192 = vmatpush2.bf16.msra.mxu0 %v140
  %193 = vmatprep.subr.bf16.mxu0 0
  %194 = vmatpush2.bf16.msra.mxu0 %v139
  %195 = vmatprep.mubr.bf16.mxu0 %v64
  %196 = vmatmul.mubr.bf16.gmra.mxu0 %v63
  %v197 = vpop.f32.mrf.mxu0
  %v198 = vadd.f32 0.0, %v197
  %v199 = vpop.f32.mrf.mxu0
  %v200 = vpop.f32.mrf.mxu0
  %v201 = vadd.f32 0.0, %v200
  %v202 = vpop.f32.mrf.mxu0
  %203 = vdwg.mxu0
  %v204 = vadd.f32 %v21, %v198
  %v205 = vadd.f32 %v22, %v201
  %206 = vst [vmem:[#allocation2] sm:$0xff] %v204
  %207 = vst [vmem:[#allocation2 + $0x8] sm:$0xff] %v205
  // Predicated region
  $region18: #{_lambda_.20} parent=0 // pred_check
    %p208 = pneg %p15
  $region19: #{_lambda_.20} parent=0 // pred_check_branch
    %210 = sbr.rel (%p208) target = $region21
  $region20: #{_lambda_.20} parent=0 // pred_region
    %v211 = vld [vmem:[#allocation2] sm:$0xff]
    %v212 = vld [vmem:[#allocation2 + $0x8] sm:$0xff]
    %v213 = vld [vmem:[%s2] sm:$0x1]
    %v215 = vlaneseq
    %v216 = vshrl.u32 %v215, 7
    %v217 = vsub.s32 0, %v216
    %v218 = vrot.slane %v213, %v217
    %v220 = vadd.f32 %v211, %v218
    %v221 = vadd.f32 %v212, %v218
    %v222 = vmax.f32 %v220, 0.0
    %v223 = vmax.f32 %v221, 0.0
    %224 = vst [vmem:[%s3] sm:$0xff] %v222
    %225 = vst [vmem:[%s3 + $0x8] sm:$0xff] %v223
  $region21: #{_lambda_.20} parent=0 // pred_fallthru
    _
  // Predicated region
  $region22: #{_lambda_.20} parent=0 // pred_check
    _
  $region23: #{_lambda_.20} parent=0 // pred_check_branch
    %227 = sbr.rel (0) target = $region25
  $region24: #{_lambda_.20} parent=0 // pred_region
    _
  $region25: #{_lambda_.20} parent=0 // pred_fallthru
    _
  // Predicated region
  $region26: #{_lambda_.20} parent=0 // pred_check
    _
  $region27: #{_lambda_.20} parent=0 // pred_check_branch
    %229 = sbr.rel (0) target = $region29
  $region28: #{_lambda_.20} parent=0 // pred_region
    _
  $region29: #{_lambda_.20} parent=0 // pred_fallthru
    _

// kernel: _lambda_.19
$region0: #{_lambda_.19}
  #allocation0 [shape = 'u32[]', space=smem, size = 0x4, offset = 0x4, fixed_abs, tag = 'smem constant byte address 0x4 - core index']
  #allocation1 [shape = 'u32[144,128]{1,0:T(1,128)}', space=vmem, size = 0x12000, scoped, tag = 'internal scratch']
  #allocation2 [shape = 'f32[64,128]{1,0:T(8,128)}', space=vmem, size = 0x8000, scoped, tag = 'scratch operand']
  %s0 = inlined_call_operand.vmem [shape: bf16[64,640], index: 0, kind: input, shape index: {}]
  %s1 = inlined_call_operand.vmem [shape: bf16[640,128], index: 1, kind: input, shape index: {}]
  %s2 = inlined_call_operand.vmem [shape: f32[1,128], index: 2, kind: input, shape index: {}]
  %s3 = inlined_call_operand.vmem [shape: f32[64,128], index: 3, kind: output, shape index: {}]
  %s4 = sld [smem:[#allocation0]]
  $region30: #{_lambda_.19} parent=0
    _
  %s6 = ssub.s32 1, %s4
  %s7 = scalar_select 0, %s6, %s4
  // Predicated region
  $region2: #{_lambda_.19} parent=0 // pred_check
    _
  $region3: #{_lambda_.19} parent=0 // pred_check_branch
    %9 = sbr.rel (0) target = $region5
  $region4: #{_lambda_.19} parent=0 // pred_region
    _
  $region5: #{_lambda_.19} parent=0 // pred_fallthru
    _
  // Predicated region
  $region6: #{_lambda_.19} parent=0 // pred_check
    _
  $region7: #{_lambda_.19} parent=0 // pred_check_branch
    %11 = sbr.rel (0) target = $region9
  $region8: #{_lambda_.19} parent=0 // pred_region
    _
  $region9: #{_lambda_.19} parent=0 // pred_fallthru
    _
  // Predicated region
  $region10: #{_lambda_.19} parent=0 // pred_check
    _
  $region11: #{_lambda_.19} parent=0 // pred_check_branch
    %13 = sbr.rel (0) target = $region13
  $region12: #{_lambda_.19} parent=0 // pred_region
    _
  $region13: #{_lambda_.19} parent=0 // pred_fallthru
    _
  %p15 = scmp.eq.s32.totalorder 0, 0
  // Predicated region
  $region14: #{_lambda_.19} parent=0 // pred_check
    %p16 = pneg %p15
  $region15: #{_lambda_.19} parent=0 // pred_check_branch
    %18 = sbr.rel (%p16) target = $region17
  $region16: #{_lambda_.19} parent=0 // pred_region
    %19 = vst [vmem:[#allocation2] sm:$0xff] 0.0
    %20 = vst [vmem:[#allocation2 + $0x8] sm:$0xff] 0.0
    %21 = vst [vmem:[#allocation2 + $0x10] sm:$0xff] 0.0
    %22 = vst [vmem:[#allocation2 + $0x18] sm:$0xff] 0.0
    %23 = vst [vmem:[#allocation2 + $0x20] sm:$0xff] 0.0
    %24 = vst [vmem:[#allocation2 + $0x28] sm:$0xff] 0.0
    %25 = vst [vmem:[#allocation2 + $0x30] sm:$0xff] 0.0
    %26 = vst [vmem:[#allocation2 + $0x38] sm:$0xff] 0.0
  $region17: #{_lambda_.19} parent=0 // pred_fallthru
    _
  %v27 = vld [vmem:[#allocation2] sm:$0xff]
  %v28 = vld [vmem:[#allocation2 + $0x8] sm:$0xff]
  %v29 = vld [vmem:[#allocation2 + $0x10] sm:$0xff]
  %v30 = vld [vmem:[#allocation2 + $0x18] sm:$0xff]
  %v31 = vld [vmem:[#allocation2 + $0x20] sm:$0xff]
  %v32 = vld [vmem:[#allocation2 + $0x28] sm:$0xff]
  %v33 = vld [vmem:[#allocation2 + $0x30] sm:$0xff]
  %v34 = vld [vmem:[#allocation2 + $0x38] sm:$0xff]
  %v35 = vld [vmem:[%s0] sm:$0xff]
  %v36 = vld [vmem:[%s0 + $0x8] sm:$0xff]
  %v37 = vld [vmem:[%s0 + $0x10] sm:$0xf]
  %v38 = vld [vmem:[%s0 + $0x14] sm:$0xff]
  %v39 = vld [vmem:[%s0 + $0x1c] sm:$0xff]
  %v40 = vld [vmem:[%s0 + $0x24] sm:$0xf]
  %v41 = vld [vmem:[%s0 + $0x28] sm:$0xff]
  %v42 = vld [vmem:[%s0 + $0x30] sm:$0xff]
  %v43 = vld [vmem:[%s0 + $0x38] sm:$0xf]
  %v44 = vld [vmem:[%s0 + $0x3c] sm:$0xff]
  %v45 = vld [vmem:[%s0 + $0x44] sm:$0xff]
  %v46 = vld [vmem:[%s0 + $0x4c] sm:$0xf]
  %v47 = vld [vmem:[%s0 + $0x50] sm:$0xff]
  %v48 = vld [vmem:[%s0 + $0x58] sm:$0xff]
  %v49 = vld [vmem:[%s0 + $0x60] sm:$0xf]
  %v50 = vld [vmem:[%s0 + $0x64] sm:$0xff]
  %v51 = vld [vmem:[%s0 + $0x6c] sm:$0xff]
  %v52 = vld [vmem:[%s0 + $0x74] sm:$0xf]
  %v53 = vld [vmem:[%s0 + $0x78] sm:$0xff]
  %v54 = vld [vmem:[%s0 + $0x80] sm:$0xff]
  %v55 = vld [vmem:[%s0 + $0x88] sm:$0xf]
  %v56 = vld [vmem:[%s0 + $0x8c] sm:$0xff]
  %v57 = vld [vmem:[%s0 + $0x94] sm:$0xff]
  %v58 = vld [vmem:[%s0 + $0x9c] sm:$0xf]
  %v59 = vld [vmem:[%s1] sm:$0xf]
  %v60 = vld [vmem:[%s1 + $0x4] sm:$0xf]
  %v61 = vld [vmem:[%s1 + $0x8] sm:$0xf]
  %v62 = vld [vmem:[%s1 + $0xc] sm:$0xf]
  %v63 = vld [vmem:[%s1 + $0x10] sm:$0xf]
  %v64 = vld [vmem:[%s1 + $0x14] sm:$0xf]
  %v65 = vld [vmem:[%s1 + $0x18] sm:$0xf]
  %v66 = vld [vmem:[%s1 + $0x1c] sm:$0xf]
  %v67 = vld [vmem:[%s1 + $0x20] sm:$0xf]
  %v68 = vld [vmem:[%s1 + $0x24] sm:$0xf]
  %v69 = vld [vmem:[%s1 + $0x28] sm:$0xf]
  %v70 = vld [vmem:[%s1 + $0x2c] sm:$0xf]
  %v71 = vld [vmem:[%s1 + $0x30] sm:$0xf]
  %v72 = vld [vmem:[%s1 + $0x34] sm:$0xf]
  %v73 = vld [vmem:[%s1 + $0x38] sm:$0xf]
  %v74 = vld [vmem:[%s1 + $0x3c] sm:$0xf]
  %v75 = vld [vmem:[%s1 + $0x40] sm:$0xf]
  %v76 = vld [vmem:[%s1 + $0x44] sm:$0xf]
  %v77 = vld [vmem:[%s1 + $0x48] sm:$0xf]
  %v78 = vld [vmem:[%s1 + $0x4c] sm:$0xf]
  %v79 = vld [vmem:[%s1 + $0x50] sm:$0xf]
  %v80 = vld [vmem:[%s1 + $0x54] sm:$0xf]
  %v81 = vld [vmem:[%s1 + $0x58] sm:$0xf]
  %v82 = vld [vmem:[%s1 + $0x5c] sm:$0xf]
  %v83 = vld [vmem:[%s1 + $0x60] sm:$0xf]
  %v84 = vld [vmem:[%s1 + $0x64] sm:$0xf]
  %v85 = vld [vmem:[%s1 + $0x68] sm:$0xf]
  %v86 = vld [vmem:[%s1 + $0x6c] sm:$0xf]
  %v87 = vld [vmem:[%s1 + $0x70] sm:$0xf]
  %v88 = vld [vmem:[%s1 + $0x74] sm:$0xf]
  %v89 = vld [vmem:[%s1 + $0x78] sm:$0xf]
  %v90 = vld [vmem:[%s1 + $0x7c] sm:$0xf]
  %v91 = vld [vmem:[%s1 + $0x80] sm:$0xf]
  %v92 = vld [vmem:[%s1 + $0x84] sm:$0xf]
  %v93 = vld [vmem:[%s1 + $0x88] sm:$0xf]
  %v94 = vld [vmem:[%s1 + $0x8c] sm:$0xf]
  %v95 = vld [vmem:[%s1 + $0x90] sm:$0xf]
  %v96 = vld [vmem:[%s1 + $0x94] sm:$0xf]
  %v97 = vld [vmem:[%s1 + $0x98] sm:$0xf]
  %v98 = vld [vmem:[%s1 + $0x9c] sm:$0xf]
  %v99 = vld [vmem:[%s1 + $0xa0] sm:$0xf]
  %v100 = vld [vmem:[%s1 + $0xa4] sm:$0xf]
  %v101 = vld [vmem:[%s1 + $0xa8] sm:$0xf]
  %v102 = vld [vmem:[%s1 + $0xac] sm:$0xf]
  %v103 = vld [vmem:[%s1 + $0xb0] sm:$0xf]
  %v104 = vld [vmem:[%s1 + $0xb4] sm:$0xf]
  %v105 = vld [vmem:[%s1 + $0xb8] sm:$0xf]
  %v106 = vld [vmem:[%s1 + $0xbc] sm:$0xf]
  %v107 = vld [vmem:[%s1 + $0xc0] sm:$0xf]
  %v108 = vld [vmem:[%s1 + $0xc4] sm:$0xf]
  %v109 = vld [vmem:[%s1 + $0xc8] sm:$0xf]
  %v110 = vld [vmem:[%s1 + $0xcc] sm:$0xf]
  %v111 = vld [vmem:[%s1 + $0xd0] sm:$0xf]
  %v112 = vld [vmem:[%s1 + $0xd4] sm:$0xf]
  %v113 = vld [vmem:[%s1 + $0xd8] sm:$0xf]
  %v114 = vld [vmem:[%s1 + $0xdc] sm:$0xf]
  %v115 = vld [vmem:[%s1 + $0xe0] sm:$0xf]
  %v116 = vld [vmem:[%s1 + $0xe4] sm:$0xf]
  %v117 = vld [vmem:[%s1 + $0xe8] sm:$0xf]
  %v118 = vld [vmem:[%s1 + $0xec] sm:$0xf]
  %v119 = vld [vmem:[%s1 + $0xf0] sm:$0xf]
  %v120 = vld [vmem:[%s1 + $0xf4] sm:$0xf]
  %v121 = vld [vmem:[%s1 + $0xf8] sm:$0xf]
  %v122 = vld [vmem:[%s1 + $0xfc] sm:$0xf]
  %v123 = vld [vmem:[%s1 + $0x100] sm:$0xf]
  %v124 = vld [vmem:[%s1 + $0x104] sm:$0xf]
  %v125 = vld [vmem:[%s1 + $0x108] sm:$0xf]
  %v126 = vld [vmem:[%s1 + $0x10c] sm:$0xf]
  %v127 = vld [vmem:[%s1 + $0x110] sm:$0xf]
  %v128 = vld [vmem:[%s1 + $0x114] sm:$0xf]
  %v129 = vld [vmem:[%s1 + $0x118] sm:$0xf]
  %v130 = vld [vmem:[%s1 + $0x11c] sm:$0xf]
  %v131 = vld [vmem:[%s1 + $0x120] sm:$0xf]
  %v132 = vld [vmem:[%s1 + $0x124] sm:$0xf]
  %v133 = vld [vmem:[%s1 + $0x128] sm:$0xf]
  %v134 = vld [vmem:[%s1 + $0x12c] sm:$0xf]
  %v135 = vld [vmem:[%s1 + $0x130] sm:$0xf]
  %v136 = vld [vmem:[%s1 + $0x134] sm:$0xf]
  %v137 = vld [vmem:[%s1 + $0x138] sm:$0xf]
  %v138 = vld [vmem:[%s1 + $0x13c] sm:$0xf]
  %v163 = vunpack.c.l.b16 %v35
  %v164 = vunpack.c.h.b16 %v35
  %v165 = vunpack.c.l.b16 %v36
  %v166 = vunpack.c.h.b16 %v36
  %v167 = vunpack.c.l.b16 %v37
  %v168 = vunpack.c.l.b16 %v38
  %v169 = vunpack.c.h.b16 %v38
  %v170 = vunpack.c.l.b16 %v39
  %v171 = vunpack.c.h.b16 %v39
  %v172 = vunpack.c.l.b16 %v40
  %v173 = vunpack.c.l.b16 %v41
  %v174 = vunpack.c.h.b16 %v41
  %v175 = vunpack.c.l.b16 %v42
  %v176 = vunpack.c.h.b16 %v42
  %v177 = vunpack.c.l.b16 %v43
  %v178 = vunpack.c.l.b16 %v44
  %v179 = vunpack.c.h.b16 %v44
  %v180 = vunpack.c.l.b16 %v45
  %v181 = vunpack.c.h.b16 %v45
  %v182 = vunpack.c.l.b16 %v46
  %v183 = vunpack.c.l.b16 %v47
  %v184 = vunpack.c.h.b16 %v47
  %v185 = vunpack.c.l.b16 %v48
  %v186 = vunpack.c.h.b16 %v48
  %v187 = vunpack.c.l.b16 %v49
  %v188 = vunpack.c.l.b16 %v50
  %v189 = vunpack.c.h.b16 %v50
  %v190 = vunpack.c.l.b16 %v51
  %v191 = vunpack.c.h.b16 %v51
  %v192 = vunpack.c.l.b16 %v52
  %v193 = vunpack.c.l.b16 %v53
  %v194 = vunpack.c.h.b16 %v53
  %v195 = vunpack.c.l.b16 %v54
  %v196 = vunpack.c.h.b16 %v54
  %v197 = vunpack.c.l.b16 %v55
  %v198 = vunpack.c.l.b16 %v56
  %v199 = vunpack.c.h.b16 %v56
  %v200 = vunpack.c.l.b16 %v57
  %v201 = vunpack.c.h.b16 %v57
  %v202 = vunpack.c.l.b16 %v58
  %v203 = vpack.c.b16 %v168, %v163
  %v204 = vpack.c.b16 %v169, %v164
  %v205 = vpack.c.b16 %v170, %v165
  %v206 = vpack.c.b16 %v171, %v166
  %v207 = vpack.c.b16 %v172, %v167
  %v208 = vpack.c.b16 %v178, %v173
  %v209 = vpack.c.b16 %v179, %v174
  %v210 = vpack.c.b16 %v180, %v175
  %v211 = vpack.c.b16 %v181, %v176
  %v212 = vpack.c.b16 %v182, %v177
  %v213 = vpack.c.b16 %v188, %v183
  %v214 = vpack.c.b16 %v189, %v184
  %v215 = vpack.c.b16 %v190, %v185
  %v216 = vpack.c.b16 %v191, %v186
  %v217 = vpack.c.b16 %v192, %v187
  %v218 = vpack.c.b16 %v198, %v193
  %v219 = vpack.c.b16 %v199, %v194
  %v220 = vpack.c.b16 %v200, %v195
  %v221 = vpack.c.b16 %v201, %v196
  %v222 = vpack.c.b16 %v202, %v197
  %v323 = vunpack.c.l.b16 %v59
  %v324 = vunpack.c.l.b16 %v60
  %v325 = vunpack.c.l.b16 %v61
  %v326 = vunpack.c.l.b16 %v62
  %v327 = vunpack.c.l.b16 %v63
  %v328 = vunpack.c.l.b16 %v64
  %v329 = vunpack.c.l.b16 %v65
  %v330 = vunpack.c.l.b16 %v66
  %v331 = vunpack.c.l.b16 %v67
  %v332 = vunpack.c.l.b16 %v68
  %v333 = vunpack.c.l.b16 %v69
  %v334 = vunpack.c.l.b16 %v70
  %v335 = vunpack.c.l.b16 %v71
  %v336 = vunpack.c.l.b16 %v72
  %v337 = vunpack.c.l.b16 %v73
  %v338 = vunpack.c.l.b16 %v74
  %v339 = vunpack.c.l.b16 %v75
  %v340 = vunpack.c.l.b16 %v76
  %v341 = vunpack.c.l.b16 %v77
  %v342 = vunpack.c.l.b16 %v78
  %v343 = vunpack.c.l.b16 %v79
  %v344 = vunpack.c.l.b16 %v80
  %v345 = vunpack.c.l.b16 %v81
  %v346 = vunpack.c.l.b16 %v82
  %v347 = vunpack.c.l.b16 %v83
  %v348 = vunpack.c.l.b16 %v84
  %v349 = vunpack.c.l.b16 %v85
  %v350 = vunpack.c.l.b16 %v86
  %v351 = vunpack.c.l.b16 %v87
  %v352 = vunpack.c.l.b16 %v88
  %v353 = vunpack.c.l.b16 %v89
  %v354 = vunpack.c.l.b16 %v90
  %v355 = vunpack.c.l.b16 %v91
  %v356 = vunpack.c.l.b16 %v92
  %v357 = vunpack.c.l.b16 %v93
  %v358 = vunpack.c.l.b16 %v94
  %v359 = vunpack.c.l.b16 %v95
  %v360 = vunpack.c.l.b16 %v96
  %v361 = vunpack.c.l.b16 %v97
  %v362 = vunpack.c.l.b16 %v98
  %v363 = vunpack.c.l.b16 %v99
  %v364 = vunpack.c.l.b16 %v100
  %v365 = vunpack.c.l.b16 %v101
  %v366 = vunpack.c.l.b16 %v102
  %v367 = vunpack.c.l.b16 %v103
  %v368 = vunpack.c.l.b16 %v104
  %v369 = vunpack.c.l.b16 %v105
  %v370 = vunpack.c.l.b16 %v106
  %v371 = vunpack.c.l.b16 %v107
  %v372 = vunpack.c.l.b16 %v108
  %v373 = vunpack.c.l.b16 %v109
  %v374 = vunpack.c.l.b16 %v110
  %v375 = vunpack.c.l.b16 %v111
  %v376 = vunpack.c.l.b16 %v112
  %v377 = vunpack.c.l.b16 %v113
  %v378 = vunpack.c.l.b16 %v114
  %v379 = vunpack.c.l.b16 %v115
  %v380 = vunpack.c.l.b16 %v116
  %v381 = vunpack.c.l.b16 %v117
  %v382 = vunpack.c.l.b16 %v118
  %v383 = vunpack.c.l.b16 %v119
  %v384 = vunpack.c.l.b16 %v120
  %v385 = vunpack.c.l.b16 %v121
  %v386 = vunpack.c.l.b16 %v122
  %v387 = vunpack.c.l.b16 %v123
  %v388 = vunpack.c.l.b16 %v124
  %v389 = vunpack.c.l.b16 %v125
  %v390 = vunpack.c.l.b16 %v126
  %v391 = vunpack.c.l.b16 %v127
  %v392 = vunpack.c.l.b16 %v128
  %v393 = vunpack.c.l.b16 %v129
  %v394 = vunpack.c.l.b16 %v130
  %v395 = vunpack.c.l.b16 %v131
  %v396 = vunpack.c.l.b16 %v132
  %v397 = vunpack.c.l.b16 %v133
  %v398 = vunpack.c.l.b16 %v134
  %v399 = vunpack.c.l.b16 %v135
  %v400 = vunpack.c.l.b16 %v136
  %v401 = vunpack.c.l.b16 %v137
  %v402 = vunpack.c.l.b16 %v138
  %v403 = vpack.c.b16 %v324, %v323
  %v404 = vpack.c.b16 %v326, %v325
  %v405 = vpack.c.b16 %v328, %v327
  %v406 = vpack.c.b16 %v330, %v329
  %v407 = vpack.c.b16 %v332, %v331
  %v408 = vpack.c.b16 %v334, %v333
  %v409 = vpack.c.b16 %v336, %v335
  %v410 = vpack.c.b16 %v338, %v337
  %v411 = vpack.c.b16 %v340, %v339
  %v412 = vpack.c.b16 %v342, %v341
  %v413 = vpack.c.b16 %v344, %v343
  %v414 = vpack.c.b16 %v346, %v345
  %v415 = vpack.c.b16 %v348, %v347
  %v416 = vpack.c.b16 %v350, %v349
  %v417 = vpack.c.b16 %v352, %v351
  %v418 = vpack.c.b16 %v354, %v353
  %v419 = vpack.c.b16 %v356, %v355
  %v420 = vpack.c.b16 %v358, %v357
  %v421 = vpack.c.b16 %v360, %v359
  %v422 = vpack.c.b16 %v362, %v361
  %v423 = vpack.c.b16 %v364, %v363
  %v424 = vpack.c.b16 %v366, %v365
  %v425 = vpack.c.b16 %v368, %v367
  %v426 = vpack.c.b16 %v370, %v369
  %v427 = vpack.c.b16 %v372, %v371
  %v428 = vpack.c.b16 %v374, %v373
  %v429 = vpack.c.b16 %v376, %v375
  %v430 = vpack.c.b16 %v378, %v377
  %v431 = vpack.c.b16 %v380, %v379
  %v432 = vpack.c.b16 %v382, %v381
  %v433 = vpack.c.b16 %v384, %v383
  %v434 = vpack.c.b16 %v386, %v385
  %v435 = vpack.c.b16 %v388, %v387
  %v436 = vpack.c.b16 %v390, %v389
  %v437 = vpack.c.b16 %v392, %v391
  %v438 = vpack.c.b16 %v394, %v393
  %v439 = vpack.c.b16 %v396, %v395
  %v440 = vpack.c.b16 %v398, %v397
  %v441 = vpack.c.b16 %v400, %v399
  %v442 = vpack.c.b16 %v402, %v401
  %483 = vmatprep.subr.bf16.mxu0 0
  %484 = vmatpush1.bf16.msra.mxu0 %v410
  %485 = vmatprep.subr.bf16.mxu0 0
  %486 = vmatpush1.bf16.msra.mxu0 %v409
  %487 = vmatprep.subr.bf16.mxu0 0
  %488 = vmatpush1.bf16.msra.mxu0 %v408
  %489 = vmatprep.subr.bf16.mxu0 0
  %490 = vmatpush1.bf16.msra.mxu0 %v407
  %491 = vmatprep.subr.bf16.mxu0 0
  %492 = vmatpush1.bf16.msra.mxu0 %v406
  %493 = vmatprep.subr.bf16.mxu0 0
  %494 = vmatpush1.bf16.msra.mxu0 %v405
  %495 = vmatprep.subr.bf16.mxu0 0
  %496 = vmatpush1.bf16.msra.mxu0 %v404
  %497 = vmatprep.subr.bf16.mxu0 0
  %498 = vmatpush1.bf16.msra.mxu0 %v403
  %499 = vmatprep.subr.bf16.mxu0 0
  %500 = vmatpush2.bf16.msra.mxu0 %v418
  %501 = vmatprep.subr.bf16.mxu0 0
  %502 = vmatpush2.bf16.msra.mxu0 %v417
  %503 = vmatprep.subr.bf16.mxu0 0
  %504 = vmatpush2.bf16.msra.mxu0 %v416
  %505 = vmatprep.subr.bf16.mxu0 0
  %506 = vmatpush2.bf16.msra.mxu0 %v415
  %507 = vmatprep.subr.bf16.mxu0 0
  %508 = vmatpush2.bf16.msra.mxu0 %v414
  %509 = vmatprep.subr.bf16.mxu0 0
  %510 = vmatpush2.bf16.msra.mxu0 %v413
  %511 = vmatprep.subr.bf16.mxu0 0
  %512 = vmatpush2.bf16.msra.mxu0 %v412
  %513 = vmatprep.subr.bf16.mxu0 0
  %514 = vmatpush2.bf16.msra.mxu0 %v411
  %515 = vmatprep.mubr.bf16.mxu0 %v204
  %516 = vmatmul.mubr.bf16.gmra.mxu0 %v203
  %v517 = vpop.f32.mrf.mxu0
  %v518 = vadd.f32 0.0, %v517
  %v519 = vpop.f32.mrf.mxu0
  %v520 = vpop.f32.mrf.mxu0
  %v521 = vadd.f32 0.0, %v520
  %v522 = vpop.f32.mrf.mxu0
  %523 = vmatprep.mubr.bf16.mxu0 %v209
  %524 = vmatmul.mubr.bf16.gmra.mxu0 %v208
  %v525 = vpop.f32.mrf.mxu0
  %v526 = vadd.f32 0.0, %v525
  %v527 = vpop.f32.mrf.mxu0
  %v528 = vpop.f32.mrf.mxu0
  %v529 = vadd.f32 0.0, %v528
  %v530 = vpop.f32.mrf.mxu0
  %531 = vmatprep.mubr.bf16.mxu0 %v214
  %532 = vmatmul.mubr.bf16.gmra.mxu0 %v213
  %v533 = vpop.f32.mrf.mxu0
  %v534 = vadd.f32 0.0, %v533
  %v535 = vpop.f32.mrf.mxu0
  %v536 = vpop.f32.mrf.mxu0
  %v537 = vadd.f32 0.0, %v536
  %v538 = vpop.f32.mrf.mxu0
  %539 = vmatprep.mubr.bf16.mxu0 %v219
  %540 = vmatmul.mubr.bf16.gmra.mxu0 %v218
  %v541 = vpop.f32.mrf.mxu0
  %v542 = vadd.f32 0.0, %v541
  %v543 = vpop.f32.mrf.mxu0
  %v544 = vpop.f32.mrf.mxu0
  %v545 = vadd.f32 0.0, %v544
  %v546 = vpop.f32.mrf.mxu0
  %547 = vdwg.mxu0
  %548 = vmatprep.subr.bf16.mxu0 0
  %549 = vmatpush1.bf16.msra.mxu0 %v426
  %550 = vmatprep.subr.bf16.mxu0 0
  %551 = vmatpush1.bf16.msra.mxu0 %v425
  %552 = vmatprep.subr.bf16.mxu0 0
  %553 = vmatpush1.bf16.msra.mxu0 %v424
  %554 = vmatprep.subr.bf16.mxu0 0
  %555 = vmatpush1.bf16.msra.mxu0 %v423
  %556 = vmatprep.subr.bf16.mxu0 0
  %557 = vmatpush1.bf16.msra.mxu0 %v422
  %558 = vmatprep.subr.bf16.mxu0 0
  %559 = vmatpush1.bf16.msra.mxu0 %v421
  %560 = vmatprep.subr.bf16.mxu0 0
  %561 = vmatpush1.bf16.msra.mxu0 %v420
  %562 = vmatprep.subr.bf16.mxu0 0
  %563 = vmatpush1.bf16.msra.mxu0 %v419
  %564 = vmatprep.subr.bf16.mxu0 0
  %565 = vmatpush2.bf16.msra.mxu0 %v434
  %566 = vmatprep.subr.bf16.mxu0 0
  %567 = vmatpush2.bf16.msra.mxu0 %v433
  %568 = vmatprep.subr.bf16.mxu0 0
  %569 = vmatpush2.bf16.msra.mxu0 %v432
  %570 = vmatprep.subr.bf16.mxu0 0
  %571 = vmatpush2.bf16.msra.mxu0 %v431
  %572 = vmatprep.subr.bf16.mxu0 0
  %573 = vmatpush2.bf16.msra.mxu0 %v430
  %574 = vmatprep.subr.bf16.mxu0 0
  %575 = vmatpush2.bf16.msra.mxu0 %v429
  %576 = vmatprep.subr.bf16.mxu0 0
  %577 = vmatpush2.bf16.msra.mxu0 %v428
  %578 = vmatprep.subr.bf16.mxu0 0
  %579 = vmatpush2.bf16.msra.mxu0 %v427
  %580 = vmatprep.mubr.bf16.mxu0 %v206
  %581 = vmatmul.mubr.bf16.gmra.mxu0 %v205
  %v582 = vpop.f32.mrf.mxu0
  %v583 = vadd.f32 %v518, %v582
  %v584 = vpop.f32.mrf.mxu0
  %v585 = vpop.f32.mrf.mxu0
  %v586 = vadd.f32 %v521, %v585
  %v587 = vpop.f32.mrf.mxu0
  %588 = vmatprep.mubr.bf16.mxu0 %v211
  %589 = vmatmul.mubr.bf16.gmra.mxu0 %v210
  %v590 = vpop.f32.mrf.mxu0
  %v591 = vadd.f32 %v526, %v590
  %v592 = vpop.f32.mrf.mxu0
  %v593 = vpop.f32.mrf.mxu0
  %v594 = vadd.f32 %v529, %v593
  %v595 = vpop.f32.mrf.mxu0
  %596 = vmatprep.mubr.bf16.mxu0 %v216
  %597 = vmatmul.mubr.bf16.gmra.mxu0 %v215
  %v598 = vpop.f32.mrf.mxu0
  %v599 = vadd.f32 %v534, %v598
  %v600 = vpop.f32.mrf.mxu0
  %v601 = vpop.f32.mrf.mxu0
  %v602 = vadd.f32 %v537, %v601
  %v603 = vpop.f32.mrf.mxu0
  %604 = vmatprep.mubr.bf16.mxu0 %v221
  %605 = vmatmul.mubr.bf16.gmra.mxu0 %v220
  %v606 = vpop.f32.mrf.mxu0
  %v607 = vadd.f32 %v542, %v606
  %v608 = vpop.f32.mrf.mxu0
  %v609 = vpop.f32.mrf.mxu0
  %v610 = vadd.f32 %v545, %v609
  %v611 = vpop.f32.mrf.mxu0
  %612 = vdwg.mxu0
  %613 = vmatprep.subr.bf16.mxu0 0
  %614 = vmatpush1.bf16.msra.mxu0 %v442
  %615 = vmatprep.subr.bf16.mxu0 0
  %616 = vmatpush1.bf16.msra.mxu0 %v441
  %617 = vmatprep.subr.bf16.mxu0 0
  %618 = vmatpush1.bf16.msra.mxu0 %v440
  %619 = vmatprep.subr.bf16.mxu0 0
  %620 = vmatpush1.bf16.msra.mxu0 %v439
  %621 = vmatprep.subr.bf16.mxu0 0
  %622 = vmatpush1.bf16.msra.mxu0 %v438
  %623 = vmatprep.subr.bf16.mxu0 0
  %624 = vmatpush1.bf16.msra.mxu0 %v437
  %625 = vmatprep.subr.bf16.mxu0 0
  %626 = vmatpush1.bf16.msra.mxu0 %v436
  %627 = vmatprep.subr.bf16.mxu0 0
  %628 = vmatpush1.bf16.msra.mxu0 %v435
  %629 = vmatprep.subr.bf16.mxu0 0
  %630 = vmatpush2.bf16.msra.mxu0 0
  %631 = vmatprep.subr.bf16.mxu0 0
  %632 = vmatpush2.bf16.msra.mxu0 0
  %633 = vmatprep.subr.bf16.mxu0 0
  %634 = vmatpush2.bf16.msra.mxu0 0
  %635 = vmatprep.subr.bf16.mxu0 0
  %636 = vmatpush2.bf16.msra.mxu0 0
  %637 = vmatprep.subr.bf16.mxu0 0
  %638 = vmatpush2.bf16.msra.mxu0 0
  %639 = vmatprep.subr.bf16.mxu0 0
  %640 = vmatpush2.bf16.msra.mxu0 0
  %641 = vmatprep.subr.bf16.mxu0 0
  %642 = vmatpush2.bf16.msra.mxu0 0
  %643 = vmatprep.subr.bf16.mxu0 0
  %644 = vmatpush2.bf16.msra.mxu0 0
  %645 = vmatprep.mubr.bf16.mxu0 0
  %646 = vmatmul.mubr.bf16.gmra.mxu0 %v207
  %v647 = vpop.f32.mrf.mxu0
  %v648 = vadd.f32 %v583, %v647
  %v649 = vpop.f32.mrf.mxu0
  %v650 = vpop.f32.mrf.mxu0
  %v651 = vadd.f32 %v586, %v650
  %v652 = vpop.f32.mrf.mxu0
  %653 = vmatprep.mubr.bf16.mxu0 0
  %654 = vmatmul.mubr.bf16.gmra.mxu0 %v212
  %v655 = vpop.f32.mrf.mxu0
  %v656 = vadd.f32 %v591, %v655
  %v657 = vpop.f32.mrf.mxu0
  %v658 = vpop.f32.mrf.mxu0
  %v659 = vadd.f32 %v594, %v658
  %v660 = vpop.f32.mrf.mxu0
  %661 = vmatprep.mubr.bf16.mxu0 0
  %662 = vmatmul.mubr.bf16.gmra.mxu0 %v217
  %v663 = vpop.f32.mrf.mxu0
  %v664 = vadd.f32 %v599, %v663
  %v665 = vpop.f32.mrf.mxu0
  %v666 = vpop.f32.mrf.mxu0
  %v667 = vadd.f32 %v602, %v666
  %v668 = vpop.f32.mrf.mxu0
  %669 = vmatprep.mubr.bf16.mxu0 0
  %670 = vmatmul.mubr.bf16.gmra.mxu0 %v222
  %v671 = vpop.f32.mrf.mxu0
  %v672 = vadd.f32 %v607, %v671
  %v673 = vpop.f32.mrf.mxu0
  %v674 = vpop.f32.mrf.mxu0
  %v675 = vadd.f32 %v610, %v674
  %v676 = vpop.f32.mrf.mxu0
  %677 = vdwg.mxu0
  %v678 = vadd.f32 %v27, %v648
  %v679 = vadd.f32 %v28, %v651
  %v680 = vadd.f32 %v29, %v656
  %v681 = vadd.f32 %v30, %v659
  %v682 = vadd.f32 %v31, %v664
  %v683 = vadd.f32 %v32, %v667
  %v684 = vadd.f32 %v33, %v672
  %v685 = vadd.f32 %v34, %v675
  %686 = vst [vmem:[#allocation2] sm:$0xff] %v678
  %687 = vst [vmem:[#allocation2 + $0x8] sm:$0xff] %v679
  %688 = vst [vmem:[#allocation2 + $0x10] sm:$0xff] %v680
  %689 = vst [vmem:[#allocation2 + $0x18] sm:$0xff] %v681
  %690 = vst [vmem:[#allocation2 + $0x20] sm:$0xff] %v682
  %691 = vst [vmem:[#allocation2 + $0x28] sm:$0xff] %v683
  %692 = vst [vmem:[#allocation2 + $0x30] sm:$0xff] %v684
  %693 = vst [vmem:[#allocation2 + $0x38] sm:$0xff] %v685
  // Predicated region
  $region18: #{_lambda_.19} parent=0 // pred_check
    %p694 = pneg %p15
  $region19: #{_lambda_.19} parent=0 // pred_check_branch
    %696 = sbr.rel (%p694) target = $region21
  $region20: #{_lambda_.19} parent=0 // pred_region
    %v697 = vld [vmem:[#allocation2] sm:$0xff]
    %v698 = vld [vmem:[#allocation2 + $0x8] sm:$0xff]
    %v699 = vld [vmem:[#allocation2 + $0x10] sm:$0xff]
    %v700 = vld [vmem:[#allocation2 + $0x18] sm:$0xff]
    %v701 = vld [vmem:[#allocation2 + $0x20] sm:$0xff]
    %v702 = vld [vmem:[#allocation2 + $0x28] sm:$0xff]
    %v703 = vld [vmem:[#allocation2 + $0x30] sm:$0xff]
    %v704 = vld [vmem:[#allocation2 + $0x38] sm:$0xff]
    %v705 = vld [vmem:[%s2] sm:$0x1]
    %v707 = vlaneseq
    %v708 = vshrl.u32 %v707, 7
    %v709 = vsub.s32 0, %v708
    %v710 = vrot.slane %v705, %v709
    %v712 = vadd.f32 %v697, %v710
    %v713 = vadd.f32 %v698, %v710
    %v714 = vadd.f32 %v699, %v710
    %v715 = vadd.f32 %v700, %v710
    %v716 = vadd.f32 %v701, %v710
    %v717 = vadd.f32 %v702, %v710
    %v718 = vadd.f32 %v703, %v710
    %v719 = vadd.f32 %v704, %v710
    %v720 = vmax.f32 %v712, 0.0
    %v721 = vmax.f32 %v713, 0.0
    %v722 = vmax.f32 %v714, 0.0
    %v723 = vmax.f32 %v715, 0.0
    %v724 = vmax.f32 %v716, 0.0
    %v725 = vmax.f32 %v717, 0.0
    %v726 = vmax.f32 %v718, 0.0
    %v727 = vmax.f32 %v719, 0.0
    %728 = vst [vmem:[%s3] sm:$0xff] %v720
    %729 = vst [vmem:[%s3 + $0x8] sm:$0xff] %v721
    %730 = vst [vmem:[%s3 + $0x10] sm:$0xff] %v722
    %731 = vst [vmem:[%s3 + $0x18] sm:$0xff] %v723
    %732 = vst [vmem:[%s3 + $0x20] sm:$0xff] %v724
    %733 = vst [vmem:[%s3 + $0x28] sm:$0xff] %v725
    %734 = vst [vmem:[%s3 + $0x30] sm:$0xff] %v726
    %735 = vst [vmem:[%s3 + $0x38] sm:$0xff] %v727
  $region21: #{_lambda_.19} parent=0 // pred_fallthru
    _
  // Predicated region
  $region22: #{_lambda_.19} parent=0 // pred_check
    _
  $region23: #{_lambda_.19} parent=0 // pred_check_branch
    %737 = sbr.rel (0) target = $region25
  $region24: #{_lambda_.19} parent=0 // pred_region
    _
  $region25: #{_lambda_.19} parent=0 // pred_fallthru
    _
  // Predicated region
  $region26: #{_lambda_.19} parent=0 // pred_check
    _
  $region27: #{_lambda_.19} parent=0 // pred_check_branch
    %739 = sbr.rel (0) target = $region29
  $region28: #{_lambda_.19} parent=0 // pred_region
    _
  $region29: #{_lambda_.19} parent=0 // pred_fallthru
    _

// kernel: _lambda_.21
$region0: #{_lambda_.21}
  #allocation0 [shape = 'u32[]', space=smem, size = 0x4, offset = 0x4, fixed_abs, tag = 'smem constant byte address 0x4 - core index']
  #allocation1 [shape = 'u32[144,128]{1,0:T(1,128)}', space=vmem, size = 0x12000, scoped, tag = 'internal scratch']
  #allocation2 [shape = 'f32[16,256]{1,0:T(8,128)}', space=vmem, size = 0x4000, scoped, tag = 'scratch operand']
  %s0 = inlined_call_operand.vmem [shape: bf16[16,128], index: 0, kind: input, shape index: {}]
  %s1 = inlined_call_operand.vmem [shape: bf16[128,1024], index: 1, kind: input, shape index: {}]
  %s2 = inlined_call_operand.vmem [shape: f32[1,1024], index: 2, kind: input, shape index: {}]
  %s3 = inlined_call_operand.vmem [shape: f32[16,1024], index: 3, kind: output, shape index: {}]
  %s4 = sld [smem:[#allocation0]]
  $region110: #{_lambda_.21} parent=0
    _
  %s6 = ssub.s32 1, %s4
  %s7 = scalar_select 0, %s6, %s4
  $region1: #{_lambda_.21} parent=0
    #allocation3 [shape = 'u8[131072]{0}', space=vmem, size = 0x20000, scoped, tag = 'input window, operand 1']
    #allocation4 [shape = 'u8[32768]{0}', space=vmem, size = 0x8000, scoped, tag = 'output window, operand 0']
    loop: start=0, step=1, limit=6
    $region2: #{_lambda_.21} parent=1 // loop_pre_header
      _
    $region3: #{_lambda_.21} parent=1 // loop_header
      %s9 = sphi 0, %s13
      %p10 = scmp.ge.s32.totalorder %s9, 6
      %s16 = sphi 0, %s35
      %s17 = sphi 0, %s31
      %s18 = sphi 0, %s27
      %s19 = sphi 0, %s16
      %s20 = sphi 0, %s17
      %s21 = sphi 0, %s18
      %s22 = sphi 0, %s19
      %s23 = sphi 0, %s20
      %s24 = sphi 0, %s21
      %s40 = sphi 0, %s42
      %s43 = sphi 0, %s40
      %s44 = sphi 0, %s43
      %s60 = sphi 0, %s44
      %s68 = sphi 0, %s70
      %s71 = sphi 0, %s68
      %s72 = sphi 0, %s71
      %s88 = sphi 0, %s72
      %s94 = sphi 0, %s96
      %s97 = sphi 0, %s94
      %s98 = sphi 0, %s97
      %s114 = sphi 0, %s98
      %s122 = sphi 0, %s124
      %s125 = sphi 0, %s122
      %s126 = sphi 0, %s125
      %s142 = sphi 0, %s126
    $region4: #{_lambda_.21} parent=1 // loop_header_branch
      %12 = sbr.rel (%p10) target = $region8
    $region5: #{_lambda_.21} parent=1 // loop_body
      %s14 = ssub.s32 %s9, 1
      %s15 = ssub.s32 %s9, 2
      %s25 = sadd.s32 1, %s18
      %p26 = scmp.ge.s32.totalorder %s25, 1
      %s27 = scalar_select %p26, 0, %s25
      %s28 = sadd.s32 1, %s17
      %s29 = scalar_select %p26, %s28, %s17
      %p30 = scmp.ge.s32.totalorder %s29, 4
      %s31 = scalar_select %p30, 0, %s29
      %s32 = sadd.s32 1, %s16
      %s33 = scalar_select %p30, %s32, %s16
      %p34 = scmp.ge.s32.totalorder %s33, 1
      %s35 = scalar_select %p34, 0, %s33
      %s36 = ssub.s32 %s16, %s35
      %s37 = ssub.s32 %s18, %s27
      %s38 = sor.u32 %s36, %s37
      %p39 = scmp.eq.s32.totalorder %s38, 0
      %s41 = sadd.s32 %s40, 1
      %s42 = scalar_select %p39, %s40, %s41
      %p45 = pneg %p39
      %p46 = scmp.eq.s32.totalorder %s9, 3
      %p47 = por %p45, %p46
      %p48 = scmp.ne.s32.totalorder %s40, %s43
      %p49 = scmp.eq.s32.totalorder %s9, 0
      %p50 = por %p48, %p49
      %p51 = scmp.ne.s32.totalorder %s40, %s43
      %p52 = scmp.eq.s32.totalorder %s14, 3
      %p53 = por %p51, %p52
      %p54 = scmp.ne.s32.totalorder %s43, %s44
      %p55 = scmp.eq.s32.totalorder %s14, 0
      %p56 = por %p54, %p55
      %p57 = scmp.ne.s32.totalorder %s43, %s44
      %p58 = scmp.eq.s32.totalorder %s15, 3
      %p59 = por %p57, %p58
      %p61 = scmp.ne.s32.totalorder %s44, %s60
      %p62 = scmp.eq.s32.totalorder %s15, 0
      %p63 = por %p61, %p62
      %s64 = ssub.s32 %s18, %s27
      %s65 = ssub.s32 %s17, %s31
      %s66 = sor.u32 %s64, %s65
      %p67 = scmp.eq.s32.totalorder %s66, 0
      %s69 = sadd.s32 %s68, 1
      %s70 = scalar_select %p67, %s68, %s69
      %p73 = pneg %p67
      %p74 = scmp.eq.s32.totalorder %s9, 3
      %p75 = por %p73, %p74
      %p76 = scmp.ne.s32.totalorder %s68, %s71
      %p77 = scmp.eq.s32.totalorder %s9, 0
      %p78 = por %p76, %p77
      %p79 = scmp.ne.s32.totalorder %s68, %s71
      %p80 = scmp.eq.s32.totalorder %s14, 3
      %p81 = por %p79, %p80
      %p82 = scmp.ne.s32.totalorder %s71, %s72
      %p83 = scmp.eq.s32.totalorder %s14, 0
      %p84 = por %p82, %p83
      %p85 = scmp.ne.s32.totalorder %s71, %s72
      %p86 = scmp.eq.s32.totalorder %s15, 3
      %p87 = por %p85, %p86
      %p89 = scmp.ne.s32.totalorder %s72, %s88
      %p90 = scmp.eq.s32.totalorder %s15, 0
      %p91 = por %p89, %p90
      %s92 = ssub.s32 %s17, %s31
      %p93 = scmp.eq.s32.totalorder %s92, 0
      %s95 = sadd.s32 %s94, 1
      %s96 = scalar_select %p93, %s94, %s95
      %p99 = pneg %p93
      %p100 = scmp.eq.s32.totalorder %s9, 3
      %p101 = por %p99, %p100
      %p102 = scmp.ne.s32.totalorder %s94, %s97
      %p103 = scmp.eq.s32.totalorder %s9, 0
      %p104 = por %p102, %p103
      %p105 = scmp.ne.s32.totalorder %s94, %s97
      %p106 = scmp.eq.s32.totalorder %s14, 3
      %p107 = por %p105, %p106
      %p108 = scmp.ne.s32.totalorder %s97, %s98
      %p109 = scmp.eq.s32.totalorder %s14, 0
      %p110 = por %p108, %p109
      %p111 = scmp.ne.s32.totalorder %s97, %s98
      %p112 = scmp.eq.s32.totalorder %s15, 3
      %p113 = por %p111, %p112
      %p115 = scmp.ne.s32.totalorder %s98, %s114
      %p116 = scmp.eq.s32.totalorder %s15, 0
      %p117 = por %p115, %p116
      %s118 = ssub.s32 %s16, %s35
      %s119 = ssub.s32 %s17, %s31
      %s120 = sor.u32 %s118, %s119
      %p121 = scmp.eq.s32.totalorder %s120, 0
      %s123 = sadd.s32 %s122, 1
      %s124 = scalar_select %p121, %s122, %s123
      %p127 = pneg %p121
      %p128 = scmp.eq.s32.totalorder %s9, 3
      %p129 = por %p127, %p128
      %p130 = scmp.ne.s32.totalorder %s122, %s125
      %p131 = scmp.eq.s32.totalorder %s9, 0
      %p132 = por %p130, %p131
      %p133 = scmp.ne.s32.totalorder %s122, %s125
      %p134 = scmp.eq.s32.totalorder %s14, 3
      %p135 = por %p133, %p134
      %p136 = scmp.ne.s32.totalorder %s125, %s126
      %p137 = scmp.eq.s32.totalorder %s14, 0
      %p138 = por %p136, %p137
      %p139 = scmp.ne.s32.totalorder %s125, %s126
      %p140 = scmp.eq.s32.totalorder %s15, 3
      %p141 = por %p139, %p140
      %p143 = scmp.ne.s32.totalorder %s126, %s142
      %p144 = scmp.eq.s32.totalorder %s15, 0
      %p145 = por %p143, %p144
      %p146 = scmp.le.s32.totalorder 1, %s9
      %p147 = scmp.lt.s32.totalorder %s9, 5
      %p148 = pnand %p146, %p147
      %p149 = pneg %p148
      // Predicated region
      $region9: #{_lambda_.21} parent=5 // pred_check
        _
      $region10: #{_lambda_.21} parent=5 // pred_check_branch
        %151 = sbr.rel (%p148) target = $region12
      $region11: #{_lambda_.21} parent=5 // pred_region
        %s152 = ssub.s32 %s9, 1
        // Predicated region
        $region13: #{_lambda_.21} parent=11 // pred_check
          %p153 = pneg %p56
        $region14: #{_lambda_.21} parent=11 // pred_check_branch
          %155 = sbr.rel (%p153) target = $region16
        $region15: #{_lambda_.21} parent=11 // pred_region
          %s156 = smul.u32 2, %s19
          %p157 = scmp.lt.s32.totalorder %s156, 1
          %s158 = scalar_select %p157, %s156, 1
          %p159 = scmp.lt.s32.totalorder %s21, 0
          %s160 = scalar_select %p159, %s21, 0
          %s161 = sadd.s32 %s160, %s158
          %s162 = smul.addr %s161, 4
          %s163 = scalar_lea.vmem %s0, %s162
          %s164 = smul.u32 2, %s19
        $region16: #{_lambda_.21} parent=11 // pred_fallthru
          _
      $region12: #{_lambda_.21} parent=5 // pred_fallthru
        _
      %p165 = scmp.lt.s32.totalorder %s9, 4
      // Predicated region
      $region17: #{_lambda_.21} parent=5 // pred_check
        %p166 = pneg %p165
      $region18: #{_lambda_.21} parent=5 // pred_check_branch
        %168 = sbr.rel (%p166) target = $region20
      $region19: #{_lambda_.21} parent=5 // pred_region
        // Predicated region
        $region21: #{_lambda_.21} parent=19 // pred_check
          %p169 = pneg %p78
        $region22: #{_lambda_.21} parent=19 // pred_check_branch
          %171 = sbr.rel (%p169) target = $region24
        $region23: #{_lambda_.21} parent=19 // pred_region
          %s172 = sand.u32 %s68, 1
          %s173 = sand.u32 %s68, 1
          %s174 = smul.addr %s173, 128
          %s175 = scalar_lea.vmem [#allocation3], %s174
          %s176 = smul.u32 16, %s18
          %s177 = smul.u32 2, %s17
          %s178 = smul.addr %s176, 8
          %s179 = sadd.s32 %s177, %s178
          %s180 = smul.addr %s179, 4
          %s181 = scalar_lea.vmem %s1, %s180
          // Predicated region
          $region25: #{_lambda_.21} parent=23 // pred_check
            _
          $region26: #{_lambda_.21} parent=23 // pred_check_branch
            %183 = sbr.rel (0) target = $region28
          $region27: #{_lambda_.21} parent=23 // pred_region
            // Predicated region
            $region29: #{_lambda_.21} parent=27 // pred_check
              _
            $region30: #{_lambda_.21} parent=27 // pred_check_branch
              %185 = sbr.rel (0) target = $region32
            $region31: #{_lambda_.21} parent=27 // pred_region
              // Predicated region
              $region44: #{_lambda_.21} parent=31 // pred_check
                _
              $region45: #{_lambda_.21} parent=31 // pred_check_branch
                %231 = sbr.rel (0) target = $region47
              $region46: #{_lambda_.21} parent=31 // pred_region
                loop: start=0, step=1, limit=1
                $region48: #{_lambda_.21} parent=46 // loop_pre_header
                  _
                $region49: #{_lambda_.21} parent=46 // loop_header
                  %s233 = sphi 0, %s237
                  %p234 = scmp.ge.s32.totalorder %s233, 1
                  %s238 = sphi %s181, %s181
                  %s239 = sphi %s175, %s175
                $region50: #{_lambda_.21} parent=46 // loop_header_branch
                  %236 = sbr.rel (%p234) target = $region54
                $region51: #{_lambda_.21} parent=46 // loop_body
                  %v240 = vld [vmem:[%s238] sm:$0xff]
                  %241 = vst [vmem:[%s239] sm:$0xff] %v240
                  %v242 = vld [vmem:[%s238 + $0x20] sm:$0xff]
                  %243 = vst [vmem:[%s239 + $0x8] sm:$0xff] %v242
                  %v244 = vld [vmem:[%s238 + $0x40] sm:$0xff]
                  %245 = vst [vmem:[%s239 + $0x10] sm:$0xff] %v244
                  %v246 = vld [vmem:[%s238 + $0x60] sm:$0xff]
                  %247 = vst [vmem:[%s239 + $0x18] sm:$0xff] %v246
                  %v248 = vld [vmem:[%s238 + $0x80] sm:$0xff]
                  %249 = vst [vmem:[%s239 + $0x20] sm:$0xff] %v248
                  %v250 = vld [vmem:[%s238 + $0xa0] sm:$0xff]
                  %251 = vst [vmem:[%s239 + $0x28] sm:$0xff] %v250
                  %v252 = vld [vmem:[%s238 + $0xc0] sm:$0xff]
                  %253 = vst [vmem:[%s239 + $0x30] sm:$0xff] %v252
                  %v254 = vld [vmem:[%s238 + $0xe0] sm:$0xff]
                  %255 = vst [vmem:[%s239 + $0x38] sm:$0xff] %v254
                  %v256 = vld [vmem:[%s238 + $0x100] sm:$0xff]
                  %257 = vst [vmem:[%s239 + $0x40] sm:$0xff] %v256
                  %v258 = vld [vmem:[%s238 + $0x120] sm:$0xff]
                  %259 = vst [vmem:[%s239 + $0x48] sm:$0xff] %v258
                  %v260 = vld [vmem:[%s238 + $0x140] sm:$0xff]
                  %261 = vst [vmem:[%s239 + $0x50] sm:$0xff] %v260
                  %v262 = vld [vmem:[%s238 + $0x160] sm:$0xff]
                  %263 = vst [vmem:[%s239 + $0x58] sm:$0xff] %v262
                  %v264 = vld [vmem:[%s238 + $0x180] sm:$0xff]
                  %265 = vst [vmem:[%s239 + $0x60] sm:$0xff] %v264
                  %v266 = vld [vmem:[%s238 + $0x1a0] sm:$0xff]
                  %267 = vst [vmem:[%s239 + $0x68] sm:$0xff] %v266
                  %v268 = vld [vmem:[%s238 + $0x1c0] sm:$0xff]
                  %269 = vst [vmem:[%s239 + $0x70] sm:$0xff] %v268
                  %v270 = vld [vmem:[%s238 + $0x1e0] sm:$0xff]
                  %271 = vst [vmem:[%s239 + $0x78] sm:$0xff] %v270
                $region52: #{_lambda_.21} parent=46 // loop_footer
                  %s237 = sadd.s32 1, %s233
                $region53: #{_lambda_.21} parent=46 // loop_footer_branch
                  %232 = sbr.rel target = $region49
                $region54: #{_lambda_.21} parent=46 // loop_exit
                  _
              $region47: #{_lambda_.21} parent=31 // pred_fallthru
                _
              // Predicated region
              $region55: #{_lambda_.21} parent=31 // pred_check
                _
              $region56: #{_lambda_.21} parent=31 // pred_check_branch
                %273 = sbr.rel target = $region58
              $region57: #{_lambda_.21} parent=31 // pred_region
                _
              $region58: #{_lambda_.21} parent=31 // pred_fallthru
                _
            $region32: #{_lambda_.21} parent=27 // pred_fallthru
              _
            // Predicated region
            $region33: #{_lambda_.21} parent=27 // pred_check
              _
            $region34: #{_lambda_.21} parent=27 // pred_check_branch
              %187 = sbr.rel target = $region36
            $region35: #{_lambda_.21} parent=27 // pred_region
              %s189 = ssub.s32 256, 1
              loop: start=0, step=1, limit=1
              $region37: #{_lambda_.21} parent=35 // loop_pre_header
                _
              $region38: #{_lambda_.21} parent=35 // loop_header
                %s191 = sphi 0, %s195
                %p192 = scmp.ge.s32.totalorder %s191, 1
                %s196 = sphi %s181, %s181
                %s197 = sphi %s175, %s175
              $region39: #{_lambda_.21} parent=35 // loop_header_branch
                %194 = sbr.rel (%p192) target = $region43
              $region40: #{_lambda_.21} parent=35 // loop_body
                %v198 = vld [vmem:[%s196] sm:%s189]
                %199 = vst [vmem:[%s197] sm:%s189] %v198
                %v200 = vld [vmem:[%s196 + $0x20] sm:%s189]
                %201 = vst [vmem:[%s197 + $0x8] sm:%s189] %v200
                %v202 = vld [vmem:[%s196 + $0x40] sm:%s189]
                %203 = vst [vmem:[%s197 + $0x10] sm:%s189] %v202
                %v204 = vld [vmem:[%s196 + $0x60] sm:%s189]
                %205 = vst [vmem:[%s197 + $0x18] sm:%s189] %v204
                %v206 = vld [vmem:[%s196 + $0x80] sm:%s189]
                %207 = vst [vmem:[%s197 + $0x20] sm:%s189] %v206
                %v208 = vld [vmem:[%s196 + $0xa0] sm:%s189]
                %209 = vst [vmem:[%s197 + $0x28] sm:%s189] %v208
                %v210 = vld [vmem:[%s196 + $0xc0] sm:%s189]
                %211 = vst [vmem:[%s197 + $0x30] sm:%s189] %v210
                %v212 = vld [vmem:[%s196 + $0xe0] sm:%s189]
                %213 = vst [vmem:[%s197 + $0x38] sm:%s189] %v212
                %v214 = vld [vmem:[%s196 + $0x100] sm:%s189]
                %215 = vst [vmem:[%s197 + $0x40] sm:%s189] %v214
                %v216 = vld [vmem:[%s196 + $0x120] sm:%s189]
                %217 = vst [vmem:[%s197 + $0x48] sm:%s189] %v216
                %v218 = vld [vmem:[%s196 + $0x140] sm:%s189]
                %219 = vst [vmem:[%s197 + $0x50] sm:%s189] %v218
                %v220 = vld [vmem:[%s196 + $0x160] sm:%s189]
                %221 = vst [vmem:[%s197 + $0x58] sm:%s189] %v220
                %v222 = vld [vmem:[%s196 + $0x180] sm:%s189]
                %223 = vst [vmem:[%s197 + $0x60] sm:%s189] %v222
                %v224 = vld [vmem:[%s196 + $0x1a0] sm:%s189]
                %225 = vst [vmem:[%s197 + $0x68] sm:%s189] %v224
                %v226 = vld [vmem:[%s196 + $0x1c0] sm:%s189]
                %227 = vst [vmem:[%s197 + $0x70] sm:%s189] %v226
                %v228 = vld [vmem:[%s196 + $0x1e0] sm:%s189]
                %229 = vst [vmem:[%s197 + $0x78] sm:%s189] %v228
              $region41: #{_lambda_.21} parent=35 // loop_footer
                %s195 = sadd.s32 1, %s191
              $region42: #{_lambda_.21} parent=35 // loop_footer_branch
                %190 = sbr.rel target = $region38
              $region43: #{_lambda_.21} parent=35 // loop_exit
                _
            $region36: #{_lambda_.21} parent=27 // pred_fallthru
              _
          $region28: #{_lambda_.21} parent=23 // pred_fallthru
            _
          %274 = vnop
        $region24: #{_lambda_.21} parent=19 // pred_fallthru
          _
        // Predicated region
        $region59: #{_lambda_.21} parent=19 // pred_check
          %p275 = pneg %p104
        $region60: #{_lambda_.21} parent=19 // pred_check_branch
          %277 = sbr.rel (%p275) target = $region62
        $region61: #{_lambda_.21} parent=19 // pred_region
          %s278 = smul.u32 2, %s17
          %p279 = scmp.lt.s32.totalorder %s278, 7
          %s280 = scalar_select %p279, %s278, 7
          %s281 = scalar_lea.vmem %s2, %s280
          %s282 = smul.u32 2, %s17
        $region62: #{_lambda_.21} parent=19 // pred_fallthru
          _
      $region20: #{_lambda_.21} parent=5 // pred_fallthru
        _
      %p283 = scmp.le.s32.totalorder 1, %s9
      %p284 = scmp.lt.s32.totalorder %s9, 5
      %p285 = pnand %p283, %p284
      %p286 = pneg %p285
      // Predicated region
      $region63: #{_lambda_.21} parent=5 // pred_check
        _
      $region64: #{_lambda_.21} parent=5 // pred_check_branch
        %288 = sbr.rel (%p285) target = $region66
      $region65: #{_lambda_.21} parent=5 // pred_region
        %s289 = ssub.s32 %s9, 1
        %s290 = sand.u32 %s71, 1
        %s291 = sand.u32 %s71, 1
        %s292 = smul.addr %s291, 128
        %s293 = scalar_lea.vmem [#allocation3], %s292
        // Predicated region
        $region67: #{_lambda_.21} parent=65 // pred_check
          %p294 = pneg %p84
        $region68: #{_lambda_.21} parent=65 // pred_check_branch
          %296 = sbr.rel (%p294) target = $region70
        $region69: #{_lambda_.21} parent=65 // pred_region
          _
        $region70: #{_lambda_.21} parent=65 // pred_fallthru
          _
        %s297 = smul.u32 2, %s19
        %p298 = scmp.lt.s32.totalorder %s297, 1
        %s299 = scalar_select %p298, %s297, 1
        %p300 = scmp.lt.s32.totalorder %s21, 0
        %s301 = scalar_select %p300, %s21, 0
        %s302 = sadd.s32 %s301, %s299
        %s303 = smul.addr %s302, 4
        %s304 = scalar_lea.vmem %s0, %s303
        %p305 = pneg %p56
        %p306 = pneg %p53
        %s307 = sand.u32 %s71, 1
        %s308 = sand.u32 %s71, 1
        %s309 = smul.addr %s308, 128
        %s310 = scalar_lea.vmem [#allocation3], %s309
        %p311 = pneg %p84
        %p312 = pneg %p81
        %s313 = smul.u32 2, %s20
        %p314 = scmp.lt.s32.totalorder %s313, 7
        %s315 = scalar_select %p314, %s313, 7
        %s316 = scalar_lea.vmem %s2, %s315
        %p317 = pneg %p110
        %p318 = pneg %p107
        %p319 = pneg %p138
        %p320 = pneg %p135
        %s321 = sand.u32 %s125, 1
        %s322 = sand.u32 %s125, 1
        %s323 = smul.addr %s322, 32
        %s324 = scalar_lea.vmem [#allocation4], %s323
        %s325 = smul.u32 2, %s19
        %p326 = scmp.lt.s32.totalorder %s325, 1
        %s327 = scalar_select %p326, %s325, 1
        %p328 = scmp.lt.s32.totalorder %s21, 0
        %s329 = scalar_select %p328, %s21, 0
        %s330 = sadd.s32 %s329, %s327
        %s331 = smul.addr %s330, 4
        %s332 = scalar_lea.vmem %s0, %s331
        %s333 = smul.u32 2, %s19
        %s334 = smul.u32 16, %s21
        %s335 = smul.u32 2, %s20
        %s336 = smul.u32 2, %s20
        %p337 = scmp.lt.s32.totalorder %s336, 7
        %s338 = scalar_select %p337, %s336, 7
        %s339 = scalar_lea.vmem %s2, %s338
        %s340 = smul.u32 2, %s20
        %s341 = smul.u32 2, %s19
        %s342 = smul.u32 2, %s20
        %p344 = scmp.eq.s32.totalorder %s21, 0
        // Predicated region
        $region71: #{_lambda_.21} parent=65 // pred_check
          %p345 = pneg %p344
        $region72: #{_lambda_.21} parent=65 // pred_check_branch
          %347 = sbr.rel (%p345) target = $region74
        $region73: #{_lambda_.21} parent=65 // pred_region
          %348 = vst [vmem:[#allocation2] sm:$0xff] 0.0
          %349 = vst [vmem:[#allocation2 + $0x8] sm:$0xff] 0.0
          %350 = vst [vmem:[#allocation2 + $0x10] sm:$0xff] 0.0
          %351 = vst [vmem:[#allocation2 + $0x18] sm:$0xff] 0.0
        $region74: #{_lambda_.21} parent=65 // pred_fallthru
          _
        %v352 = vld [vmem:[#allocation2] sm:$0xff]
        %v353 = vld [vmem:[#allocation2 + $0x8] sm:$0xff]
        %v354 = vld [vmem:[#allocation2 + $0x10] sm:$0xff]
        %v355 = vld [vmem:[#allocation2 + $0x18] sm:$0xff]
        %v356 = vld [vmem:[%s332] sm:$0xf]
        %v357 = vld [vmem:[%s332 + $0x4] sm:$0xf]
        %v358 = vld [vmem:[%s293] sm:$0xff]
        %v359 = vld [vmem:[%s293 + $0x8] sm:$0xff]
        %v360 = vld [vmem:[%s293 + $0x10] sm:$0xff]
        %v361 = vld [vmem:[%s293 + $0x18] sm:$0xff]
        %v362 = vld [vmem:[%s293 + $0x20] sm:$0xff]
        %v363 = vld [vmem:[%s293 + $0x28] sm:$0xff]
        %v364 = vld [vmem:[%s293 + $0x30] sm:$0xff]
        %v365 = vld [vmem:[%s293 + $0x38] sm:$0xff]
        %v366 = vld [vmem:[%s293 + $0x40] sm:$0xff]
        %v367 = vld [vmem:[%s293 + $0x48] sm:$0xff]
        %v368 = vld [vmem:[%s293 + $0x50] sm:$0xff]
        %v369 = vld [vmem:[%s293 + $0x58] sm:$0xff]
        %v370 = vld [vmem:[%s293 + $0x60] sm:$0xff]
        %v371 = vld [vmem:[%s293 + $0x68] sm:$0xff]
        %v372 = vld [vmem:[%s293 + $0x70] sm:$0xff]
        %v373 = vld [vmem:[%s293 + $0x78] sm:$0xff]
        %v376 = vunpack.c.l.b16 %v356
        %v377 = vunpack.c.l.b16 %v357
        %v378 = vpack.c.b16 %v377, %v376
        %v396 = vunpack.c.l.b16 %v358
        %v397 = vunpack.c.h.b16 %v358
        %v398 = vunpack.c.l.b16 %v359
        %v399 = vunpack.c.h.b16 %v359
        %v400 = vunpack.c.l.b16 %v360
        %v401 = vunpack.c.h.b16 %v360
        %v402 = vunpack.c.l.b16 %v361
        %v403 = vunpack.c.h.b16 %v361
        %v404 = vunpack.c.l.b16 %v362
        %v405 = vunpack.c.h.b16 %v362
        %v406 = vunpack.c.l.b16 %v363
        %v407 = vunpack.c.h.b16 %v363
        %v408 = vunpack.c.l.b16 %v364
        %v409 = vunpack.c.h.b16 %v364
        %v410 = vunpack.c.l.b16 %v365
        %v411 = vunpack.c.h.b16 %v365
        %v412 = vunpack.c.l.b16 %v366
        %v413 = vunpack.c.h.b16 %v366
        %v414 = vunpack.c.l.b16 %v367
        %v415 = vunpack.c.h.b16 %v367
        %v416 = vunpack.c.l.b16 %v368
        %v417 = vunpack.c.h.b16 %v368
        %v418 = vunpack.c.l.b16 %v369
        %v419 = vunpack.c.h.b16 %v369
        %v420 = vunpack.c.l.b16 %v370
        %v421 = vunpack.c.h.b16 %v370
        %v422 = vunpack.c.l.b16 %v371
        %v423 = vunpack.c.h.b16 %v371
        %v424 = vunpack.c.l.b16 %v372
        %v425 = vunpack.c.h.b16 %v372
        %v426 = vunpack.c.l.b16 %v373
        %v427 = vunpack.c.h.b16 %v373
        %v428 = vpack.c.b16 %v398, %v396
        %v429 = vpack.c.b16 %v399, %v397
        %v430 = vpack.c.b16 %v402, %v400
        %v431 = vpack.c.b16 %v403, %v401
        %v432 = vpack.c.b16 %v406, %v404
        %v433 = vpack.c.b16 %v407, %v405
        %v434 = vpack.c.b16 %v410, %v408
        %v435 = vpack.c.b16 %v411, %v409
        %v436 = vpack.c.b16 %v414, %v412
        %v437 = vpack.c.b16 %v415, %v413
        %v438 = vpack.c.b16 %v418, %v416
        %v439 = vpack.c.b16 %v419, %v417
        %v440 = vpack.c.b16 %v422, %v420
        %v441 = vpack.c.b16 %v423, %v421
        %v442 = vpack.c.b16 %v426, %v424
        %v443 = vpack.c.b16 %v427, %v425
        %460 = vmatprep.subr.bf16.mxu0 %v443
        %461 = vmatpush1.bf16.msra.mxu0 %v442
        %462 = vmatprep.subr.bf16.mxu0 %v441
        %463 = vmatpush1.bf16.msra.mxu0 %v440
        %464 = vmatprep.subr.bf16.mxu0 %v439
        %465 = vmatpush1.bf16.msra.mxu0 %v438
        %466 = vmatprep.subr.bf16.mxu0 %v437
        %467 = vmatpush1.bf16.msra.mxu0 %v436
        %468 = vmatprep.subr.bf16.mxu0 %v435
        %469 = vmatpush1.bf16.msra.mxu0 %v434
        %470 = vmatprep.subr.bf16.mxu0 %v433
        %471 = vmatpush1.bf16.msra.mxu0 %v432
        %472 = vmatprep.subr.bf16.mxu0 %v431
        %473 = vmatpush1.bf16.msra.mxu0 %v430
        %474 = vmatprep.subr.bf16.mxu0 %v429
        %475 = vmatpush1.bf16.msra.mxu0 %v428
        %476 = vmatprep.subr.bf16.mxu0 0
        %477 = vmatpush2.bf16.msra.mxu0 0
        %478 = vmatprep.subr.bf16.mxu0 0
        %479 = vmatpush2.bf16.msra.mxu0 0
        %480 = vmatprep.subr.bf16.mxu0 0
        %481 = vmatpush2.bf16.msra.mxu0 0
        %482 = vmatprep.subr.bf16.mxu0 0
        %483 = vmatpush2.bf16.msra.mxu0 0
        %484 = vmatprep.subr.bf16.mxu0 0
        %485 = vmatpush2.bf16.msra.mxu0 0
        %486 = vmatprep.subr.bf16.mxu0 0
        %487 = vmatpush2.bf16.msra.mxu0 0
        %488 = vmatprep.subr.bf16.mxu0 0
        %489 = vmatpush2.bf16.msra.mxu0 0
        %490 = vmatprep.subr.bf16.mxu0 0
        %491 = vmatpush2.bf16.msra.mxu0 0
        %492 = vmatprep.mubr.bf16.mxu0 0
        %493 = vmatmul.mubr.bf16.gmra.mxu0 %v378
        %v494 = vpop.f32.mrf.mxu0
        %v495 = vadd.f32 0.0, %v494
        %v496 = vpop.f32.mrf.mxu0
        %v497 = vadd.f32 0.0, %v496
        %v498 = vpop.f32.mrf.mxu0
        %v499 = vadd.f32 0.0, %v498
        %v500 = vpop.f32.mrf.mxu0
        %v501 = vadd.f32 0.0, %v500
        %502 = vdwg.mxu0
        %v503 = vadd.f32 %v352, %v495
        %v504 = vadd.f32 %v353, %v497
        %v505 = vadd.f32 %v354, %v499
        %v506 = vadd.f32 %v355, %v501
        %507 = vst [vmem:[#allocation2] sm:$0xff] %v503
        %508 = vst [vmem:[#allocation2 + $0x8] sm:$0xff] %v504
        %509 = vst [vmem:[#allocation2 + $0x10] sm:$0xff] %v505
        %510 = vst [vmem:[#allocation2 + $0x18] sm:$0xff] %v506
        // Predicated region
        $region75: #{_lambda_.21} parent=65 // pred_check
          %p511 = pneg %p344
        $region76: #{_lambda_.21} parent=65 // pred_check_branch
          %513 = sbr.rel (%p511) target = $region78
        $region77: #{_lambda_.21} parent=65 // pred_region
          %v514 = vld [vmem:[#allocation2] sm:$0xff]
          %v515 = vld [vmem:[#allocation2 + $0x8] sm:$0xff]
          %v516 = vld [vmem:[#allocation2 + $0x10] sm:$0xff]
          %v517 = vld [vmem:[#allocation2 + $0x18] sm:$0xff]
          %v518 = vld [vmem:[%s339] sm:$0x3]
          %v520 = vlaneseq
          %v521 = vshrl.u32 %v520, 7
          %v522 = vsub.s32 0, %v521
          %v523 = vrot.slane %v518, %v522
          %v524 = vlaneseq
          %v525 = vshrl.u32 %v524, 7
          %v526 = vsub.s32 1, %v525
          %v527 = vrot.slane %v518, %v526
          %v530 = vadd.f32 %v514, %v523
          %v531 = vadd.f32 %v515, %v527
          %v532 = vadd.f32 %v516, %v523
          %v533 = vadd.f32 %v517, %v527
          %534 = vst [vmem:[%s324] sm:$0xff] %v530
          %535 = vst [vmem:[%s324 + $0x8] sm:$0xff] %v531
          %536 = vst [vmem:[%s324 + $0x10] sm:$0xff] %v532
          %537 = vst [vmem:[%s324 + $0x18] sm:$0xff] %v533
        $region78: #{_lambda_.21} parent=65 // pred_fallthru
          _
        %s538 = sand.u32 %s125, 1
        %s539 = sand.u32 %s125, 1
        %s540 = smul.addr %s539, 32
        %s541 = scalar_lea.vmem [#allocation4], %s540
        // Predicated region
        $region79: #{_lambda_.21} parent=65 // pred_check
          %p542 = pneg %p135
        $region80: #{_lambda_.21} parent=65 // pred_check_branch
          %544 = sbr.rel (%p542) target = $region82
        $region81: #{_lambda_.21} parent=65 // pred_region
          %s545 = smul.u32 2, %s19
          %s546 = smul.u32 2, %s20
          %s547 = smul.addr %s545, 8
          %s548 = sadd.s32 %s546, %s547
          %s549 = smul.addr %s548, 8
          %s550 = scalar_lea.vmem %s3, %s549
          // Predicated region
          $region83: #{_lambda_.21} parent=81 // pred_check
            _
          $region84: #{_lambda_.21} parent=81 // pred_check_branch
            %552 = sbr.rel (0) target = $region86
          $region85: #{_lambda_.21} parent=81 // pred_region
            // Predicated region
            $region87: #{_lambda_.21} parent=85 // pred_check
              _
            $region88: #{_lambda_.21} parent=85 // pred_check_branch
              %554 = sbr.rel (0) target = $region90
            $region89: #{_lambda_.21} parent=85 // pred_region
              loop: start=0, step=1, limit=1
              $region91: #{_lambda_.21} parent=89 // loop_pre_header
                _
              $region92: #{_lambda_.21} parent=89 // loop_header
                %s556 = sphi 0, %s560
                %p557 = scmp.ge.s32.totalorder %s556, 1
                %s561 = sphi %s541, %s541
                %s562 = sphi %s550, %s550
              $region93: #{_lambda_.21} parent=89 // loop_header_branch
                %559 = sbr.rel (%p557) target = $region97
              $region94: #{_lambda_.21} parent=89 // loop_body
                %v563 = vld [vmem:[%s561] sm:$0xff]
                %564 = vst [vmem:[%s562] sm:$0xff] %v563
                %v565 = vld [vmem:[%s561 + $0x8] sm:$0xff]
                %566 = vst [vmem:[%s562 + $0x8] sm:$0xff] %v565
                %v567 = vld [vmem:[%s561 + $0x10] sm:$0xff]
                %568 = vst [vmem:[%s562 + $0x40] sm:$0xff] %v567
                %v569 = vld [vmem:[%s561 + $0x18] sm:$0xff]
                %570 = vst [vmem:[%s562 + $0x48] sm:$0xff] %v569
              $region95: #{_lambda_.21} parent=89 // loop_footer
                %s560 = sadd.s32 1, %s556
              $region96: #{_lambda_.21} parent=89 // loop_footer_branch
                %555 = sbr.rel target = $region92
              $region97: #{_lambda_.21} parent=89 // loop_exit
                _
            $region90: #{_lambda_.21} parent=85 // pred_fallthru
              _
            // Predicated region
            $region98: #{_lambda_.21} parent=85 // pred_check
              _
            $region99: #{_lambda_.21} parent=85 // pred_check_branch
              %572 = sbr.rel target = $region101
            $region100: #{_lambda_.21} parent=85 // pred_region
              _
            $region101: #{_lambda_.21} parent=85 // pred_fallthru
              _
          $region86: #{_lambda_.21} parent=81 // pred_fallthru
            _
          %573 = vnop
        $region82: #{_lambda_.21} parent=65 // pred_fallthru
          _
      $region66: #{_lambda_.21} parent=5 // pred_fallthru
        _
      %p574 = scmp.le.s32.totalorder 2, %s9
      // Predicated region
      $region102: #{_lambda_.21} parent=5 // pred_check
        %p575 = pneg %p574
      $region103: #{_lambda_.21} parent=5 // pred_check_branch
        %577 = sbr.rel (%p575) target = $region105
      $region104: #{_lambda_.21} parent=5 // pred_region
        %s578 = ssub.s32 %s9, 2
        // Predicated region
        $region106: #{_lambda_.21} parent=104 // pred_check
          %p579 = pneg %p141
        $region107: #{_lambda_.21} parent=104 // pred_check_branch
          %581 = sbr.rel (%p579) target = $region109
        $region108: #{_lambda_.21} parent=104 // pred_region
          %s582 = sand.u32 %s126, 1
          %s583 = sand.u32 %s126, 1
          %s584 = smul.addr %s583, 32
          %s585 = scalar_lea.vmem [#allocation4], %s584
        $region109: #{_lambda_.21} parent=104 // pred_fallthru
          _
      $region105: #{_lambda_.21} parent=5 // pred_fallthru
        _
    $region6: #{_lambda_.21} parent=1 // loop_footer
      %s13 = sadd.s32 1, %s9
    $region7: #{_lambda_.21} parent=1 // loop_footer_branch
      %8 = sbr.rel target = $region3
    $region8: #{_lambda_.21} parent=1 // loop_exit
      _

// kernel: _lambda_.23
$region0: #{_lambda_.23}
  #allocation0 [shape = 'u32[]', space=smem, size = 0x4, offset = 0x4, fixed_abs, tag = 'smem constant byte address 0x4 - core index']
  #allocation1 [shape = 'u32[144,128]{1,0:T(1,128)}', space=vmem, size = 0x12000, scoped, tag = 'internal scratch']
  #allocation2 [shape = 'f32[16,128]{1,0:T(8,128)}', space=vmem, size = 0x2000, scoped, tag = 'scratch operand']
  %s0 = inlined_call_operand.vmem [shape: bf16[16,256], index: 0, kind: input, shape index: {}]
  %s1 = inlined_call_operand.vmem [shape: bf16[256,128], index: 1, kind: input, shape index: {}]
  %s2 = inlined_call_operand.vmem [shape: f32[1,128], index: 2, kind: input, shape index: {}]
  %s3 = inlined_call_operand.vmem [shape: f32[16,128], index: 3, kind: output, shape index: {}]
  %s4 = sld [smem:[#allocation0]]
  $region30: #{_lambda_.23} parent=0
    _
  %s6 = ssub.s32 1, %s4
  %s7 = scalar_select 0, %s6, %s4
  // Predicated region
  $region2: #{_lambda_.23} parent=0 // pred_check
    _
  $region3: #{_lambda_.23} parent=0 // pred_check_branch
    %9 = sbr.rel (0) target = $region5
  $region4: #{_lambda_.23} parent=0 // pred_region
    _
  $region5: #{_lambda_.23} parent=0 // pred_fallthru
    _
  // Predicated region
  $region6: #{_lambda_.23} parent=0 // pred_check
    _
  $region7: #{_lambda_.23} parent=0 // pred_check_branch
    %11 = sbr.rel (0) target = $region9
  $region8: #{_lambda_.23} parent=0 // pred_region
    _
  $region9: #{_lambda_.23} parent=0 // pred_fallthru
    _
  // Predicated region
  $region10: #{_lambda_.23} parent=0 // pred_check
    _
  $region11: #{_lambda_.23} parent=0 // pred_check_branch
    %13 = sbr.rel (0) target = $region13
  $region12: #{_lambda_.23} parent=0 // pred_region
    _
  $region13: #{_lambda_.23} parent=0 // pred_fallthru
    _
  %p15 = scmp.eq.s32.totalorder 0, 0
  // Predicated region
  $region14: #{_lambda_.23} parent=0 // pred_check
    %p16 = pneg %p15
  $region15: #{_lambda_.23} parent=0 // pred_check_branch
    %18 = sbr.rel (%p16) target = $region17
  $region16: #{_lambda_.23} parent=0 // pred_region
    %19 = vst [vmem:[#allocation2] sm:$0xff] 0.0
    %20 = vst [vmem:[#allocation2 + $0x8] sm:$0xff] 0.0
  $region17: #{_lambda_.23} parent=0 // pred_fallthru
    _
  %v21 = vld [vmem:[#allocation2] sm:$0xff]
  %v22 = vld [vmem:[#allocation2 + $0x8] sm:$0xff]
  %v23 = vld [vmem:[%s0] sm:$0xff]
  %v24 = vld [vmem:[%s0 + $0x8] sm:$0xff]
  %v25 = vld [vmem:[%s1] sm:$0xf]
  %v26 = vld [vmem:[%s1 + $0x4] sm:$0xf]
  %v27 = vld [vmem:[%s1 + $0x8] sm:$0xf]
  %v28 = vld [vmem:[%s1 + $0xc] sm:$0xf]
  %v29 = vld [vmem:[%s1 + $0x10] sm:$0xf]
  %v30 = vld [vmem:[%s1 + $0x14] sm:$0xf]
  %v31 = vld [vmem:[%s1 + $0x18] sm:$0xf]
  %v32 = vld [vmem:[%s1 + $0x1c] sm:$0xf]
  %v33 = vld [vmem:[%s1 + $0x20] sm:$0xf]
  %v34 = vld [vmem:[%s1 + $0x24] sm:$0xf]
  %v35 = vld [vmem:[%s1 + $0x28] sm:$0xf]
  %v36 = vld [vmem:[%s1 + $0x2c] sm:$0xf]
  %v37 = vld [vmem:[%s1 + $0x30] sm:$0xf]
  %v38 = vld [vmem:[%s1 + $0x34] sm:$0xf]
  %v39 = vld [vmem:[%s1 + $0x38] sm:$0xf]
  %v40 = vld [vmem:[%s1 + $0x3c] sm:$0xf]
  %v41 = vld [vmem:[%s1 + $0x40] sm:$0xf]
  %v42 = vld [vmem:[%s1 + $0x44] sm:$0xf]
  %v43 = vld [vmem:[%s1 + $0x48] sm:$0xf]
  %v44 = vld [vmem:[%s1 + $0x4c] sm:$0xf]
  %v45 = vld [vmem:[%s1 + $0x50] sm:$0xf]
  %v46 = vld [vmem:[%s1 + $0x54] sm:$0xf]
  %v47 = vld [vmem:[%s1 + $0x58] sm:$0xf]
  %v48 = vld [vmem:[%s1 + $0x5c] sm:$0xf]
  %v49 = vld [vmem:[%s1 + $0x60] sm:$0xf]
  %v50 = vld [vmem:[%s1 + $0x64] sm:$0xf]
  %v51 = vld [vmem:[%s1 + $0x68] sm:$0xf]
  %v52 = vld [vmem:[%s1 + $0x6c] sm:$0xf]
  %v53 = vld [vmem:[%s1 + $0x70] sm:$0xf]
  %v54 = vld [vmem:[%s1 + $0x74] sm:$0xf]
  %v55 = vld [vmem:[%s1 + $0x78] sm:$0xf]
  %v56 = vld [vmem:[%s1 + $0x7c] sm:$0xf]
  %v59 = vunpack.c.l.b16 %v23
  %v60 = vunpack.c.h.b16 %v23
  %v61 = vunpack.c.l.b16 %v24
  %v62 = vunpack.c.h.b16 %v24
  %v63 = vpack.c.b16 %v61, %v59
  %v64 = vpack.c.b16 %v62, %v60
  %v99 = vunpack.c.l.b16 %v25
  %v100 = vunpack.c.l.b16 %v26
  %v101 = vunpack.c.l.b16 %v27
  %v102 = vunpack.c.l.b16 %v28
  %v103 = vunpack.c.l.b16 %v29
  %v104 = vunpack.c.l.b16 %v30
  %v105 = vunpack.c.l.b16 %v31
  %v106 = vunpack.c.l.b16 %v32
  %v107 = vunpack.c.l.b16 %v33
  %v108 = vunpack.c.l.b16 %v34
  %v109 = vunpack.c.l.b16 %v35
  %v110 = vunpack.c.l.b16 %v36
  %v111 = vunpack.c.l.b16 %v37
  %v112 = vunpack.c.l.b16 %v38
  %v113 = vunpack.c.l.b16 %v39
  %v114 = vunpack.c.l.b16 %v40
  %v115 = vunpack.c.l.b16 %v41
  %v116 = vunpack.c.l.b16 %v42
  %v117 = vunpack.c.l.b16 %v43
  %v118 = vunpack.c.l.b16 %v44
  %v119 = vunpack.c.l.b16 %v45
  %v120 = vunpack.c.l.b16 %v46
  %v121 = vunpack.c.l.b16 %v47
  %v122 = vunpack.c.l.b16 %v48
  %v123 = vunpack.c.l.b16 %v49
  %v124 = vunpack.c.l.b16 %v50
  %v125 = vunpack.c.l.b16 %v51
  %v126 = vunpack.c.l.b16 %v52
  %v127 = vunpack.c.l.b16 %v53
  %v128 = vunpack.c.l.b16 %v54
  %v129 = vunpack.c.l.b16 %v55
  %v130 = vunpack.c.l.b16 %v56
  %v131 = vpack.c.b16 %v100, %v99
  %v132 = vpack.c.b16 %v102, %v101
  %v133 = vpack.c.b16 %v104, %v103
  %v134 = vpack.c.b16 %v106, %v105
  %v135 = vpack.c.b16 %v108, %v107
  %v136 = vpack.c.b16 %v110, %v109
  %v137 = vpack.c.b16 %v112, %v111
  %v138 = vpack.c.b16 %v114, %v113
  %v139 = vpack.c.b16 %v116, %v115
  %v140 = vpack.c.b16 %v118, %v117
  %v141 = vpack.c.b16 %v120, %v119
  %v142 = vpack.c.b16 %v122, %v121
  %v143 = vpack.c.b16 %v124, %v123
  %v144 = vpack.c.b16 %v126, %v125
  %v145 = vpack.c.b16 %v128, %v127
  %v146 = vpack.c.b16 %v130, %v129
  %163 = vmatprep.subr.bf16.mxu0 0
  %164 = vmatpush1.bf16.msra.mxu0 %v138
  %165 = vmatprep.subr.bf16.mxu0 0
  %166 = vmatpush1.bf16.msra.mxu0 %v137
  %167 = vmatprep.subr.bf16.mxu0 0
  %168 = vmatpush1.bf16.msra.mxu0 %v136
  %169 = vmatprep.subr.bf16.mxu0 0
  %170 = vmatpush1.bf16.msra.mxu0 %v135
  %171 = vmatprep.subr.bf16.mxu0 0
  %172 = vmatpush1.bf16.msra.mxu0 %v134
  %173 = vmatprep.subr.bf16.mxu0 0
  %174 = vmatpush1.bf16.msra.mxu0 %v133
  %175 = vmatprep.subr.bf16.mxu0 0
  %176 = vmatpush1.bf16.msra.mxu0 %v132
  %177 = vmatprep.subr.bf16.mxu0 0
  %178 = vmatpush1.bf16.msra.mxu0 %v131
  %179 = vmatprep.subr.bf16.mxu0 0
  %180 = vmatpush2.bf16.msra.mxu0 %v146
  %181 = vmatprep.subr.bf16.mxu0 0
  %182 = vmatpush2.bf16.msra.mxu0 %v145
  %183 = vmatprep.subr.bf16.mxu0 0
  %184 = vmatpush2.bf16.msra.mxu0 %v144
  %185 = vmatprep.subr.bf16.mxu0 0
  %186 = vmatpush2.bf16.msra.mxu0 %v143
  %187 = vmatprep.subr.bf16.mxu0 0
  %188 = vmatpush2.bf16.msra.mxu0 %v142
  %189 = vmatprep.subr.bf16.mxu0 0
  %190 = vmatpush2.bf16.msra.mxu0 %v141
  %191 = vmatprep.subr.bf16.mxu0 0
  %192 = vmatpush2.bf16.msra.mxu0 %v140
  %193 = vmatprep.subr.bf16.mxu0 0
  %194 = vmatpush2.bf16.msra.mxu0 %v139
  %195 = vmatprep.mubr.bf16.mxu0 %v64
  %196 = vmatmul.mubr.bf16.gmra.mxu0 %v63
  %v197 = vpop.f32.mrf.mxu0
  %v198 = vadd.f32 0.0, %v197
  %v199 = vpop.f32.mrf.mxu0
  %v200 = vpop.f32.mrf.mxu0
  %v201 = vadd.f32 0.0, %v200
  %v202 = vpop.f32.mrf.mxu0
  %203 = vdwg.mxu0
  %v204 = vadd.f32 %v21, %v198
  %v205 = vadd.f32 %v22, %v201
  %206 = vst [vmem:[#allocation2] sm:$0xff] %v204
  %207 = vst [vmem:[#allocation2 + $0x8] sm:$0xff] %v205
  // Predicated region
  $region18: #{_lambda_.23} parent=0 // pred_check
    %p208 = pneg %p15
  $region19: #{_lambda_.23} parent=0 // pred_check_branch
    %210 = sbr.rel (%p208) target = $region21
  $region20: #{_lambda_.23} parent=0 // pred_region
    %v211 = vld [vmem:[#allocation2] sm:$0xff]
    %v212 = vld [vmem:[#allocation2 + $0x8] sm:$0xff]
    %v213 = vld [vmem:[%s2] sm:$0x1]
    %v215 = vlaneseq
    %v216 = vshrl.u32 %v215, 7
    %v217 = vsub.s32 0, %v216
    %v218 = vrot.slane %v213, %v217
    %v220 = vadd.f32 %v211, %v218
    %v221 = vadd.f32 %v212, %v218
    %222 = vst [vmem:[%s3] sm:$0xff] %v220
    %223 = vst [vmem:[%s3 + $0x8] sm:$0xff] %v221
  $region21: #{_lambda_.23} parent=0 // pred_fallthru
    _
  // Predicated region
  $region22: #{_lambda_.23} parent=0 // pred_check
    _
  $region23: #{_lambda_.23} parent=0 // pred_check_branch
    %225 = sbr.rel (0) target = $region25
  $region24: #{_lambda_.23} parent=0 // pred_region
    _
  $region25: #{_lambda_.23} parent=0 // pred_fallthru
    _
  // Predicated region
  $region26: #{_lambda_.23} parent=0 // pred_check
    _
  $region27: #{_lambda_.23} parent=0 // pred_check_branch
    %227 = sbr.rel (0) target = $region29
  $region28: #{_lambda_.23} parent=0 // pred_region
    _
  $region29: #{_lambda_.23} parent=0 // pred_fallthru
    _

// kernel: _lambda_.27
$region0: #{_lambda_.27}
  #allocation0 [shape = 'u32[]', space=smem, size = 0x4, offset = 0x4, fixed_abs, tag = 'smem constant byte address 0x4 - core index']
  #allocation1 [shape = 'u32[144,128]{1,0:T(1,128)}', space=vmem, size = 0x12000, scoped, tag = 'internal scratch']
  #allocation2 [shape = 'f32[16,128]{1,0:T(8,128)}', space=vmem, size = 0x2000, scoped, tag = 'scratch operand']
  %s0 = inlined_call_operand.vmem [shape: bf16[16,128], index: 0, kind: input, shape index: {}]
  %s1 = inlined_call_operand.vmem [shape: bf16[128,128], index: 1, kind: input, shape index: {}]
  %s2 = inlined_call_operand.vmem [shape: f32[1,128], index: 2, kind: input, shape index: {}]
  %s3 = inlined_call_operand.vmem [shape: f32[16,128], index: 3, kind: output, shape index: {}]
  %s4 = sld [smem:[#allocation0]]
  $region30: #{_lambda_.27} parent=0
    _
  %s6 = ssub.s32 1, %s4
  %s7 = scalar_select 0, %s6, %s4
  // Predicated region
  $region2: #{_lambda_.27} parent=0 // pred_check
    _
  $region3: #{_lambda_.27} parent=0 // pred_check_branch
    %9 = sbr.rel (0) target = $region5
  $region4: #{_lambda_.27} parent=0 // pred_region
    _
  $region5: #{_lambda_.27} parent=0 // pred_fallthru
    _
  // Predicated region
  $region6: #{_lambda_.27} parent=0 // pred_check
    _
  $region7: #{_lambda_.27} parent=0 // pred_check_branch
    %11 = sbr.rel (0) target = $region9
  $region8: #{_lambda_.27} parent=0 // pred_region
    _
  $region9: #{_lambda_.27} parent=0 // pred_fallthru
    _
  // Predicated region
  $region10: #{_lambda_.27} parent=0 // pred_check
    _
  $region11: #{_lambda_.27} parent=0 // pred_check_branch
    %13 = sbr.rel (0) target = $region13
  $region12: #{_lambda_.27} parent=0 // pred_region
    _
  $region13: #{_lambda_.27} parent=0 // pred_fallthru
    _
  %p15 = scmp.eq.s32.totalorder 0, 0
  // Predicated region
  $region14: #{_lambda_.27} parent=0 // pred_check
    %p16 = pneg %p15
  $region15: #{_lambda_.27} parent=0 // pred_check_branch
    %18 = sbr.rel (%p16) target = $region17
  $region16: #{_lambda_.27} parent=0 // pred_region
    %19 = vst [vmem:[#allocation2] sm:$0xff] 0.0
    %20 = vst [vmem:[#allocation2 + $0x8] sm:$0xff] 0.0
  $region17: #{_lambda_.27} parent=0 // pred_fallthru
    _
  %v21 = vld [vmem:[#allocation2] sm:$0xff]
  %v22 = vld [vmem:[#allocation2 + $0x8] sm:$0xff]
  %v23 = vld [vmem:[%s0] sm:$0xf]
  %v24 = vld [vmem:[%s0 + $0x4] sm:$0xf]
  %v25 = vld [vmem:[%s1] sm:$0xf]
  %v26 = vld [vmem:[%s1 + $0x4] sm:$0xf]
  %v27 = vld [vmem:[%s1 + $0x8] sm:$0xf]
  %v28 = vld [vmem:[%s1 + $0xc] sm:$0xf]
  %v29 = vld [vmem:[%s1 + $0x10] sm:$0xf]
  %v30 = vld [vmem:[%s1 + $0x14] sm:$0xf]
  %v31 = vld [vmem:[%s1 + $0x18] sm:$0xf]
  %v32 = vld [vmem:[%s1 + $0x1c] sm:$0xf]
  %v33 = vld [vmem:[%s1 + $0x20] sm:$0xf]
  %v34 = vld [vmem:[%s1 + $0x24] sm:$0xf]
  %v35 = vld [vmem:[%s1 + $0x28] sm:$0xf]
  %v36 = vld [vmem:[%s1 + $0x2c] sm:$0xf]
  %v37 = vld [vmem:[%s1 + $0x30] sm:$0xf]
  %v38 = vld [vmem:[%s1 + $0x34] sm:$0xf]
  %v39 = vld [vmem:[%s1 + $0x38] sm:$0xf]
  %v40 = vld [vmem:[%s1 + $0x3c] sm:$0xf]
  %v43 = vunpack.c.l.b16 %v23
  %v44 = vunpack.c.l.b16 %v24
  %v45 = vpack.c.b16 %v44, %v43
  %v63 = vunpack.c.l.b16 %v25
  %v64 = vunpack.c.l.b16 %v26
  %v65 = vunpack.c.l.b16 %v27
  %v66 = vunpack.c.l.b16 %v28
  %v67 = vunpack.c.l.b16 %v29
  %v68 = vunpack.c.l.b16 %v30
  %v69 = vunpack.c.l.b16 %v31
  %v70 = vunpack.c.l.b16 %v32
  %v71 = vunpack.c.l.b16 %v33
  %v72 = vunpack.c.l.b16 %v34
  %v73 = vunpack.c.l.b16 %v35
  %v74 = vunpack.c.l.b16 %v36
  %v75 = vunpack.c.l.b16 %v37
  %v76 = vunpack.c.l.b16 %v38
  %v77 = vunpack.c.l.b16 %v39
  %v78 = vunpack.c.l.b16 %v40
  %v79 = vpack.c.b16 %v64, %v63
  %v80 = vpack.c.b16 %v66, %v65
  %v81 = vpack.c.b16 %v68, %v67
  %v82 = vpack.c.b16 %v70, %v69
  %v83 = vpack.c.b16 %v72, %v71
  %v84 = vpack.c.b16 %v74, %v73
  %v85 = vpack.c.b16 %v76, %v75
  %v86 = vpack.c.b16 %v78, %v77
  %95 = vmatprep.subr.bf16.mxu0 0
  %96 = vmatpush1.bf16.msra.mxu0 %v86
  %97 = vmatprep.subr.bf16.mxu0 0
  %98 = vmatpush1.bf16.msra.mxu0 %v85
  %99 = vmatprep.subr.bf16.mxu0 0
  %100 = vmatpush1.bf16.msra.mxu0 %v84
  %101 = vmatprep.subr.bf16.mxu0 0
  %102 = vmatpush1.bf16.msra.mxu0 %v83
  %103 = vmatprep.subr.bf16.mxu0 0
  %104 = vmatpush1.bf16.msra.mxu0 %v82
  %105 = vmatprep.subr.bf16.mxu0 0
  %106 = vmatpush1.bf16.msra.mxu0 %v81
  %107 = vmatprep.subr.bf16.mxu0 0
  %108 = vmatpush1.bf16.msra.mxu0 %v80
  %109 = vmatprep.subr.bf16.mxu0 0
  %110 = vmatpush1.bf16.msra.mxu0 %v79
  %111 = vmatprep.subr.bf16.mxu0 0
  %112 = vmatpush2.bf16.msra.mxu0 0
  %113 = vmatprep.subr.bf16.mxu0 0
  %114 = vmatpush2.bf16.msra.mxu0 0
  %115 = vmatprep.subr.bf16.mxu0 0
  %116 = vmatpush2.bf16.msra.mxu0 0
  %117 = vmatprep.subr.bf16.mxu0 0
  %118 = vmatpush2.bf16.msra.mxu0 0
  %119 = vmatprep.subr.bf16.mxu0 0
  %120 = vmatpush2.bf16.msra.mxu0 0
  %121 = vmatprep.subr.bf16.mxu0 0
  %122 = vmatpush2.bf16.msra.mxu0 0
  %123 = vmatprep.subr.bf16.mxu0 0
  %124 = vmatpush2.bf16.msra.mxu0 0
  %125 = vmatprep.subr.bf16.mxu0 0
  %126 = vmatpush2.bf16.msra.mxu0 0
  %127 = vmatprep.mubr.bf16.mxu0 0
  %128 = vmatmul.mubr.bf16.gmra.mxu0 %v45
  %v129 = vpop.f32.mrf.mxu0
  %v130 = vadd.f32 0.0, %v129
  %v131 = vpop.f32.mrf.mxu0
  %v132 = vpop.f32.mrf.mxu0
  %v133 = vadd.f32 0.0, %v132
  %v134 = vpop.f32.mrf.mxu0
  %135 = vdwg.mxu0
  %v136 = vadd.f32 %v21, %v130
  %v137 = vadd.f32 %v22, %v133
  %138 = vst [vmem:[#allocation2] sm:$0xff] %v136
  %139 = vst [vmem:[#allocation2 + $0x8] sm:$0xff] %v137
  // Predicated region
  $region18: #{_lambda_.27} parent=0 // pred_check
    %p140 = pneg %p15
  $region19: #{_lambda_.27} parent=0 // pred_check_branch
    %142 = sbr.rel (%p140) target = $region21
  $region20: #{_lambda_.27} parent=0 // pred_region
    %v143 = vld [vmem:[#allocation2] sm:$0xff]
    %v144 = vld [vmem:[#allocation2 + $0x8] sm:$0xff]
    %v145 = vld [vmem:[%s2] sm:$0x1]
    %v147 = vlaneseq
    %v148 = vshrl.u32 %v147, 7
    %v149 = vsub.s32 0, %v148
    %v150 = vrot.slane %v145, %v149
    %v152 = vadd.f32 %v143, %v150
    %v153 = vadd.f32 %v144, %v150
    %154 = vst [vmem:[%s3] sm:$0xff] %v152
    %155 = vst [vmem:[%s3 + $0x8] sm:$0xff] %v153
  $region21: #{_lambda_.27} parent=0 // pred_fallthru
    _
  // Predicated region
  $region22: #{_lambda_.27} parent=0 // pred_check
    _
  $region23: #{_lambda_.27} parent=0 // pred_check_branch
    %157 = sbr.rel (0) target = $region25
  $region24: #{_lambda_.27} parent=0 // pred_region
    _
  $region25: #{_lambda_.27} parent=0 // pred_fallthru
    _
  // Predicated region
  $region26: #{_lambda_.27} parent=0 // pred_check
    _
  $region27: #{_lambda_.27} parent=0 // pred_check_branch
    %159 = sbr.rel (0) target = $region29
  $region28: #{_lambda_.27} parent=0 // pred_region
    _
  $region29: #{_lambda_.27} parent=0 // pred_fallthru
    _

// kernel: _lambda_.22
$region0: #{_lambda_.22}
  #allocation0 [shape = 'u32[]', space=smem, size = 0x4, offset = 0x4, fixed_abs, tag = 'smem constant byte address 0x4 - core index']
  #allocation1 [shape = 'u32[144,128]{1,0:T(1,128)}', space=vmem, size = 0x12000, scoped, tag = 'internal scratch']
  #allocation2 [shape = 'f32[2,128]{1,0:T(2,128)}', space=vmem, size = 0x400, scoped, tag = 'scratch operand']
  #allocation3 [shape = 'f32[2,128]{1,0:T(2,128)}', space=vmem, size = 0x400, scoped, tag = 'scratch operand']
  #allocation4 [shape = 'f32[2,128]{1,0:T(2,128)}', space=vmem, size = 0x400, scoped, tag = 'scratch operand']
  #allocation5 [shape = 'f32[2,128]{1,0:T(2,128)}', space=vmem, size = 0x400, scoped, tag = 'scratch operand']
  %s0 = inlined_call_operand.vmem [shape: f32[7,2,1024], index: 0, kind: input, shape index: {}]
  %s1 = inlined_call_operand.vmem [shape: f32[128,512], index: 1, kind: input, shape index: {}]
  %s2 = inlined_call_operand.vmem [shape: f32[128,512], index: 2, kind: input, shape index: {}]
  %s3 = inlined_call_operand.vmem [shape: f32[7,2,128], index: 3, kind: output, shape index: {0}]
  %s4 = inlined_call_operand.vmem [shape: f32[7,2,128], index: 4, kind: output, shape index: {1}]
  %5 = xla_tuple %s3, %s4
  %s6 = sld [smem:[#allocation0]]
  $region30: #{_lambda_.22} parent=0
    _
  %s8 = ssub.s32 1, %s6
  %s9 = scalar_select 0, %s8, %s6
  // Predicated region
  $region2: #{_lambda_.22} parent=0 // pred_check
    _
  $region3: #{_lambda_.22} parent=0 // pred_check_branch
    %11 = sbr.rel (0) target = $region5
  $region4: #{_lambda_.22} parent=0 // pred_region
    _
  $region5: #{_lambda_.22} parent=0 // pred_fallthru
    _
  // Predicated region
  $region6: #{_lambda_.22} parent=0 // pred_check
    _
  $region7: #{_lambda_.22} parent=0 // pred_check_branch
    %13 = sbr.rel (0) target = $region9
  $region8: #{_lambda_.22} parent=0 // pred_region
    _
  $region9: #{_lambda_.22} parent=0 // pred_fallthru
    _
  // Predicated region
  $region10: #{_lambda_.22} parent=0 // pred_check
    _
  $region11: #{_lambda_.22} parent=0 // pred_check_branch
    %15 = sbr.rel (0) target = $region13
  $region12: #{_lambda_.22} parent=0 // pred_region
    _
  $region13: #{_lambda_.22} parent=0 // pred_fallthru
    _
  %16 = vst [vmem:[#allocation2] sm:$0x3] 0.0
  %17 = vst [vmem:[#allocation3] sm:$0x3] 0.0
  %18 = vst [vmem:[#allocation4] sm:$0x3] 0.0
  %19 = vst [vmem:[#allocation5] sm:$0x3] 0.0
  %v20 = vld [vmem:[%s0] sm:$0xff]
  %v21 = vld [vmem:[#allocation2] sm:$0x3]
  %v22 = vld [vmem:[%s1] sm:$0xff]
  %v23 = vld [vmem:[%s1 + $0x8] sm:$0xff]
  %v24 = vld [vmem:[%s1 + $0x10] sm:$0xff]
  %v25 = vld [vmem:[%s1 + $0x18] sm:$0xff]
  %v26 = vld [vmem:[%s1 + $0x20] sm:$0xff]
  %v27 = vld [vmem:[%s1 + $0x28] sm:$0xff]
  %v28 = vld [vmem:[%s1 + $0x30] sm:$0xff]
  %v29 = vld [vmem:[%s1 + $0x38] sm:$0xff]
  %v30 = vld [vmem:[%s1 + $0x40] sm:$0xff]
  %v31 = vld [vmem:[%s1 + $0x48] sm:$0xff]
  %v32 = vld [vmem:[%s1 + $0x50] sm:$0xff]
  %v33 = vld [vmem:[%s1 + $0x58] sm:$0xff]
  %v34 = vld [vmem:[%s1 + $0x60] sm:$0xff]
  %v35 = vld [vmem:[%s1 + $0x68] sm:$0xff]
  %v36 = vld [vmem:[%s1 + $0x70] sm:$0xff]
  %v37 = vld [vmem:[%s1 + $0x78] sm:$0xff]
  %v38 = vld [vmem:[%s1 + $0x80] sm:$0xff]
  %v39 = vld [vmem:[%s1 + $0x88] sm:$0xff]
  %v40 = vld [vmem:[%s1 + $0x90] sm:$0xff]
  %v41 = vld [vmem:[%s1 + $0x98] sm:$0xff]
  %v42 = vld [vmem:[%s1 + $0xa0] sm:$0xff]
  %v43 = vld [vmem:[%s1 + $0xa8] sm:$0xff]
  %v44 = vld [vmem:[%s1 + $0xb0] sm:$0xff]
  %v45 = vld [vmem:[%s1 + $0xb8] sm:$0xff]
  %v46 = vld [vmem:[%s1 + $0xc0] sm:$0xff]
  %v47 = vld [vmem:[%s1 + $0xc8] sm:$0xff]
  %v48 = vld [vmem:[%s1 + $0xd0] sm:$0xff]
  %v49 = vld [vmem:[%s1 + $0xd8] sm:$0xff]
  %v50 = vld [vmem:[%s1 + $0xe0] sm:$0xff]
  %v51 = vld [vmem:[%s1 + $0xe8] sm:$0xff]
  %v52 = vld [vmem:[%s1 + $0xf0] sm:$0xff]
  %v53 = vld [vmem:[%s1 + $0xf8] sm:$0xff]
  %v54 = vld [vmem:[%s1 + $0x100] sm:$0xff]
  %v55 = vld [vmem:[%s1 + $0x108] sm:$0xff]
  %v56 = vld [vmem:[%s1 + $0x110] sm:$0xff]
  %v57 = vld [vmem:[%s1 + $0x118] sm:$0xff]
  %v58 = vld [vmem:[%s1 + $0x120] sm:$0xff]
  %v59 = vld [vmem:[%s1 + $0x128] sm:$0xff]
  %v60 = vld [vmem:[%s1 + $0x130] sm:$0xff]
  %v61 = vld [vmem:[%s1 + $0x138] sm:$0xff]
  %v62 = vld [vmem:[%s1 + $0x140] sm:$0xff]
  %v63 = vld [vmem:[%s1 + $0x148] sm:$0xff]
  %v64 = vld [vmem:[%s1 + $0x150] sm:$0xff]
  %v65 = vld [vmem:[%s1 + $0x158] sm:$0xff]
  %v66 = vld [vmem:[%s1 + $0x160] sm:$0xff]
  %v67 = vld [vmem:[%s1 + $0x168] sm:$0xff]
  %v68 = vld [vmem:[%s1 + $0x170] sm:$0xff]
  %v69 = vld [vmem:[%s1 + $0x178] sm:$0xff]
  %v70 = vld [vmem:[%s1 + $0x180] sm:$0xff]
  %v71 = vld [vmem:[%s1 + $0x188] sm:$0xff]
  %v72 = vld [vmem:[%s1 + $0x190] sm:$0xff]
  %v73 = vld [vmem:[%s1 + $0x198] sm:$0xff]
  %v74 = vld [vmem:[%s1 + $0x1a0] sm:$0xff]
  %v75 = vld [vmem:[%s1 + $0x1a8] sm:$0xff]
  %v76 = vld [vmem:[%s1 + $0x1b0] sm:$0xff]
  %v77 = vld [vmem:[%s1 + $0x1b8] sm:$0xff]
  %v78 = vld [vmem:[%s1 + $0x1c0] sm:$0xff]
  %v79 = vld [vmem:[%s1 + $0x1c8] sm:$0xff]
  %v80 = vld [vmem:[%s1 + $0x1d0] sm:$0xff]
  %v81 = vld [vmem:[%s1 + $0x1d8] sm:$0xff]
  %v82 = vld [vmem:[%s1 + $0x1e0] sm:$0xff]
  %v83 = vld [vmem:[%s1 + $0x1e8] sm:$0xff]
  %v84 = vld [vmem:[%s1 + $0x1f0] sm:$0xff]
  %v85 = vld [vmem:[%s1 + $0x1f8] sm:$0xff]
  %86 = vmatprep.subr.mxu0 %v83
  %87 = vmatpush1.msra.mxu0 %v82
  %88 = vmatprep.subr.mxu0 %v79
  %89 = vmatpush1.msra.mxu0 %v78
  %90 = vmatprep.subr.mxu0 %v75
  %91 = vmatpush1.msra.mxu0 %v74
  %92 = vmatprep.subr.mxu0 %v71
  %93 = vmatpush1.msra.mxu0 %v70
  %94 = vmatprep.subr.mxu0 %v67
  %95 = vmatpush1.msra.mxu0 %v66
  %96 = vmatprep.subr.mxu0 %v63
  %97 = vmatpush1.msra.mxu0 %v62
  %98 = vmatprep.subr.mxu0 %v59
  %99 = vmatpush1.msra.mxu0 %v58
  %100 = vmatprep.subr.mxu0 %v55
  %101 = vmatpush1.msra.mxu0 %v54
  %102 = vmatprep.subr.mxu0 %v51
  %103 = vmatpush1.msra.mxu0 %v50
  %104 = vmatprep.subr.mxu0 %v47
  %105 = vmatpush1.msra.mxu0 %v46
  %106 = vmatprep.subr.mxu0 %v43
  %107 = vmatpush1.msra.mxu0 %v42
  %108 = vmatprep.subr.mxu0 %v39
  %109 = vmatpush1.msra.mxu0 %v38
  %110 = vmatprep.subr.mxu0 %v35
  %111 = vmatpush1.msra.mxu0 %v34
  %112 = vmatprep.subr.mxu0 %v31
  %113 = vmatpush1.msra.mxu0 %v30
  %114 = vmatprep.subr.mxu0 %v27
  %115 = vmatpush1.msra.mxu0 %v26
  %116 = vmatprep.subr.mxu0 %v23
  %117 = vmatpush1.msra.mxu0 %v22
  %118 = vmatprep.subr.mxu0 0.0
  %119 = vmatpush2.msra.mxu0 0.0
  %120 = vmatprep.subr.mxu0 0.0
  %121 = vmatpush2.msra.mxu0 0.0
  %122 = vmatprep.subr.mxu0 0.0
  %123 = vmatpush2.msra.mxu0 0.0
  %124 = vmatprep.subr.mxu0 0.0
  %125 = vmatpush2.msra.mxu0 0.0
  %126 = vmatprep.subr.mxu0 0.0
  %127 = vmatpush2.msra.mxu0 0.0
  %128 = vmatprep.subr.mxu0 0.0
  %129 = vmatpush2.msra.mxu0 0.0
  %130 = vmatprep.subr.mxu0 0.0
  %131 = vmatpush2.msra.mxu0 0.0
  %132 = vmatprep.subr.mxu0 0.0
  %133 = vmatpush2.msra.mxu0 0.0
  %134 = vmatprep.subr.mxu0 0.0
  %135 = vmatpush2.msra.mxu0 0.0
  %136 = vmatprep.subr.mxu0 0.0
  %137 = vmatpush2.msra.mxu0 0.0
  %138 = vmatprep.subr.mxu0 0.0
  %139 = vmatpush2.msra.mxu0 0.0
  %140 = vmatprep.subr.mxu0 0.0
  %141 = vmatpush2.msra.mxu0 0.0
  %142 = vmatprep.subr.mxu0 0.0
  %143 = vmatpush2.msra.mxu0 0.0
  %144 = vmatprep.subr.mxu0 0.0
  %145 = vmatpush2.msra.mxu0 0.0
  %146 = vmatprep.subr.mxu0 0.0
  %147 = vmatpush2.msra.mxu0 0.0
  %148 = vmatprep.subr.mxu0 0.0
  %149 = vmatpush2.msra.mxu0 0.0
  %150 = vmatprep.mubr.f32.mxu0 0.0
  %151 = vmatmul.mubr.f32.gmra.mxu0 %v21
  %v152 = vpop.f32.mrf.mxu0
  %v153 = vadd.f32 0.0, %v152
  %v154 = vpop.f32.mrf.mxu0
  %v155 = vadd.f32 0.0, %v154
  %156 = vdwg.mxu0
  %157 = vmatprep.subr.mxu0 %v85
  %158 = vmatpush1.msra.mxu0 %v84
  %159 = vmatprep.subr.mxu0 %v81
  %160 = vmatpush1.msra.mxu0 %v80
  %161 = vmatprep.subr.mxu0 %v77
  %162 = vmatpush1.msra.mxu0 %v76
  %163 = vmatprep.subr.mxu0 %v73
  %164 = vmatpush1.msra.mxu0 %v72
  %165 = vmatprep.subr.mxu0 %v69
  %166 = vmatpush1.msra.mxu0 %v68
  %167 = vmatprep.subr.mxu0 %v65
  %168 = vmatpush1.msra.mxu0 %v64
  %169 = vmatprep.subr.mxu0 %v61
  %170 = vmatpush1.msra.mxu0 %v60
  %171 = vmatprep.subr.mxu0 %v57
  %172 = vmatpush1.msra.mxu0 %v56
  %173 = vmatprep.subr.mxu0 %v53
  %174 = vmatpush1.msra.mxu0 %v52
  %175 = vmatprep.subr.mxu0 %v49
  %176 = vmatpush1.msra.mxu0 %v48
  %177 = vmatprep.subr.mxu0 %v45
  %178 = vmatpush1.msra.mxu0 %v44
  %179 = vmatprep.subr.mxu0 %v41
  %180 = vmatpush1.msra.mxu0 %v40
  %181 = vmatprep.subr.mxu0 %v37
  %182 = vmatpush1.msra.mxu0 %v36
  %183 = vmatprep.subr.mxu0 %v33
  %184 = vmatpush1.msra.mxu0 %v32
  %185 = vmatprep.subr.mxu0 %v29
  %186 = vmatpush1.msra.mxu0 %v28
  %187 = vmatprep.subr.mxu0 %v25
  %188 = vmatpush1.msra.mxu0 %v24
  %189 = vmatprep.subr.mxu0 0.0
  %190 = vmatpush2.msra.mxu0 0.0
  %191 = vmatprep.subr.mxu0 0.0
  %192 = vmatpush2.msra.mxu0 0.0
  %193 = vmatprep.subr.mxu0 0.0
  %194 = vmatpush2.msra.mxu0 0.0
  %195 = vmatprep.subr.mxu0 0.0
  %196 = vmatpush2.msra.mxu0 0.0
  %197 = vmatprep.subr.mxu0 0.0
  %198 = vmatpush2.msra.mxu0 0.0
  %199 = vmatprep.subr.mxu0 0.0
  %200 = vmatpush2.msra.mxu0 0.0
  %201 = vmatprep.subr.mxu0 0.0
  %202 = vmatpush2.msra.mxu0 0.0
  %203 = vmatprep.subr.mxu0 0.0
  %204 = vmatpush2.msra.mxu0 0.0
  %205 = vmatprep.subr.mxu0 0.0
  %206 = vmatpush2.msra.mxu0 0.0
  %207 = vmatprep.subr.mxu0 0.0
  %208 = vmatpush2.msra.mxu0 0.0
  %209 = vmatprep.subr.mxu0 0.0
  %210 = vmatpush2.msra.mxu0 0.0
  %211 = vmatprep.subr.mxu0 0.0
  %212 = vmatpush2.msra.mxu0 0.0
  %213 = vmatprep.subr.mxu0 0.0
  %214 = vmatpush2.msra.mxu0 0.0
  %215 = vmatprep.subr.mxu0 0.0
  %216 = vmatpush2.msra.mxu0 0.0
  %217 = vmatprep.subr.mxu0 0.0
  %218 = vmatpush2.msra.mxu0 0.0
  %219 = vmatprep.subr.mxu0 0.0
  %220 = vmatpush2.msra.mxu0 0.0
  %221 = vmatprep.mubr.f32.mxu0 0.0
  %222 = vmatmul.mubr.f32.gmra.mxu0 %v21
  %v223 = vpop.f32.mrf.mxu0
  %v224 = vadd.f32 0.0, %v223
  %v225 = vpop.f32.mrf.mxu0
  %v226 = vadd.f32 0.0, %v225
  %227 = vdwg.mxu0
  %v232 = vcombine.low %v153, %v155
  %v233 = vcombine.low %v224, %v226
  %v235 = vunpack.c.l.s4 1983009808
  %v236 = vunpack.c.0.s8 %v235
  %v237 = vlaneseq
  %v238 = vshrl.u32 %v237, 7
  %v239 = vsub.s32 %v236, %v238
  %v240 = vrot.slane %v232, %v239
  %v242 = vunpack.c.l.s4 1983009808
  %v243 = vunpack.c.0.s8 %v242
  %v244 = vlaneseq
  %v245 = vshrl.u32 %v244, 7
  %v246 = vsub.s32 %v243, %v245
  %v247 = vrot.slane %v233, %v246
  %v248 = vcombine.low %v240, %v247
  %v250 = vadd.f32 %v20, %v248
  %v251 = vld [vmem:[#allocation3] sm:$0x3]
  %v252 = vxor.u32 %v250, 2147483648
  %v253 = vmul.f32 %v252, 1.442695
  %v254 = vpow.pop %v253
  %v255 = vadd.f32 %v254, 1.0
  %v256 = vrcp.pop %v255
  %v257 = vmul.f32 1.0, %v256
  %v259 = vrot.slane %v250, 2
  %v261 = vxor.u32 %v259, 2147483648
  %v262 = vmul.f32 %v261, 1.442695
  %v263 = vpow.pop %v262
  %v264 = vadd.f32 %v263, 1.0
  %v265 = vrcp.pop %v264
  %v266 = vmul.f32 1.0, %v265
  %v267 = vrot.slane %v250, 4
  %v269 = vtanh.pop %v267
  %v270 = vrot.slane %v250, 6
  %v272 = vxor.u32 %v270, 2147483648
  %v273 = vmul.f32 %v272, 1.442695
  %v274 = vpow.pop %v273
  %v275 = vadd.f32 %v274, 1.0
  %v276 = vrcp.pop %v275
  %v277 = vmul.f32 1.0, %v276
  %v278 = vmul.f32 %v266, %v251
  %v279 = vmul.f32 %v257, %v269
  %v280 = vadd.f32 %v278, %v279
  %v281 = vtanh.pop %v280
  %v282 = vmul.f32 %v277, %v281
  %283 = vst [vmem:[#allocation2] sm:$0x3] %v282
  %284 = vst [vmem:[#allocation3] sm:$0x3] %v280
  %285 = vst [vmem:[%s3] sm:$0x3] %v282
  %s286 = scalar_lea.vmem %s0, 96
  %v287 = vld [vmem:[%s286 + $0x8] sm:$0xff]
  %v288 = vld [vmem:[#allocation4] sm:$0x3]
  %v289 = vld [vmem:[%s2] sm:$0xff]
  %v290 = vld [vmem:[%s2 + $0x8] sm:$0xff]
  %v291 = vld [vmem:[%s2 + $0x10] sm:$0xff]
  %v292 = vld [vmem:[%s2 + $0x18] sm:$0xff]
  %v293 = vld [vmem:[%s2 + $0x20] sm:$0xff]
  %v294 = vld [vmem:[%s2 + $0x28] sm:$0xff]
  %v295 = vld [vmem:[%s2 + $0x30] sm:$0xff]
  %v296 = vld [vmem:[%s2 + $0x38] sm:$0xff]
  %v297 = vld [vmem:[%s2 + $0x40] sm:$0xff]
  %v298 = vld [vmem:[%s2 + $0x48] sm:$0xff]
  %v299 = vld [vmem:[%s2 + $0x50] sm:$0xff]
  %v300 = vld [vmem:[%s2 + $0x58] sm:$0xff]
  %v301 = vld [vmem:[%s2 + $0x60] sm:$0xff]
  %v302 = vld [vmem:[%s2 + $0x68] sm:$0xff]
  %v303 = vld [vmem:[%s2 + $0x70] sm:$0xff]
  %v304 = vld [vmem:[%s2 + $0x78] sm:$0xff]
  %v305 = vld [vmem:[%s2 + $0x80] sm:$0xff]
  %v306 = vld [vmem:[%s2 + $0x88] sm:$0xff]
  %v307 = vld [vmem:[%s2 + $0x90] sm:$0xff]
  %v308 = vld [vmem:[%s2 + $0x98] sm:$0xff]
  %v309 = vld [vmem:[%s2 + $0xa0] sm:$0xff]
  %v310 = vld [vmem:[%s2 + $0xa8] sm:$0xff]
  %v311 = vld [vmem:[%s2 + $0xb0] sm:$0xff]
  %v312 = vld [vmem:[%s2 + $0xb8] sm:$0xff]
  %v313 = vld [vmem:[%s2 + $0xc0] sm:$0xff]
  %v314 = vld [vmem:[%s2 + $0xc8] sm:$0xff]
  %v315 = vld [vmem:[%s2 + $0xd0] sm:$0xff]
  %v316 = vld [vmem:[%s2 + $0xd8] sm:$0xff]
  %v317 = vld [vmem:[%s2 + $0xe0] sm:$0xff]
  %v318 = vld [vmem:[%s2 + $0xe8] sm:$0xff]
  %v319 = vld [vmem:[%s2 + $0xf0] sm:$0xff]
  %v320 = vld [vmem:[%s2 + $0xf8] sm:$0xff]
  %v321 = vld [vmem:[%s2 + $0x100] sm:$0xff]
  %v322 = vld [vmem:[%s2 + $0x108] sm:$0xff]
  %v323 = vld [vmem:[%s2 + $0x110] sm:$0xff]
  %v324 = vld [vmem:[%s2 + $0x118] sm:$0xff]
  %v325 = vld [vmem:[%s2 + $0x120] sm:$0xff]
  %v326 = vld [vmem:[%s2 + $0x128] sm:$0xff]
  %v327 = vld [vmem:[%s2 + $0x130] sm:$0xff]
  %v328 = vld [vmem:[%s2 + $0x138] sm:$0xff]
  %v329 = vld [vmem:[%s2 + $0x140] sm:$0xff]
  %v330 = vld [vmem:[%s2 + $0x148] sm:$0xff]
  %v331 = vld [vmem:[%s2 + $0x150] sm:$0xff]
  %v332 = vld [vmem:[%s2 + $0x158] sm:$0xff]
  %v333 = vld [vmem:[%s2 + $0x160] sm:$0xff]
  %v334 = vld [vmem:[%s2 + $0x168] sm:$0xff]
  %v335 = vld [vmem:[%s2 + $0x170] sm:$0xff]
  %v336 = vld [vmem:[%s2 + $0x178] sm:$0xff]
  %v337 = vld [vmem:[%s2 + $0x180] sm:$0xff]
  %v338 = vld [vmem:[%s2 + $0x188] sm:$0xff]
  %v339 = vld [vmem:[%s2 + $0x190] sm:$0xff]
  %v340 = vld [vmem:[%s2 + $0x198] sm:$0xff]
  %v341 = vld [vmem:[%s2 + $0x1a0] sm:$0xff]
  %v342 = vld [vmem:[%s2 + $0x1a8] sm:$0xff]
  %v343 = vld [vmem:[%s2 + $0x1b0] sm:$0xff]
  %v344 = vld [vmem:[%s2 + $0x1b8] sm:$0xff]
  %v345 = vld [vmem:[%s2 + $0x1c0] sm:$0xff]
  %v346 = vld [vmem:[%s2 + $0x1c8] sm:$0xff]
  %v347 = vld [vmem:[%s2 + $0x1d0] sm:$0xff]
  %v348 = vld [vmem:[%s2 + $0x1d8] sm:$0xff]
  %v349 = vld [vmem:[%s2 + $0x1e0] sm:$0xff]
  %v350 = vld [vmem:[%s2 + $0x1e8] sm:$0xff]
  %v351 = vld [vmem:[%s2 + $0x1f0] sm:$0xff]
  %v352 = vld [vmem:[%s2 + $0x1f8] sm:$0xff]
  %353 = vmatprep.subr.mxu0 %v350
  %354 = vmatpush1.msra.mxu0 %v349
  %355 = vmatprep.subr.mxu0 %v346
  %356 = vmatpush1.msra.mxu0 %v345
  %357 = vmatprep.subr.mxu0 %v342
  %358 = vmatpush1.msra.mxu0 %v341
  %359 = vmatprep.subr.mxu0 %v338
  %360 = vmatpush1.msra.mxu0 %v337
  %361 = vmatprep.subr.mxu0 %v334
  %362 = vmatpush1.msra.mxu0 %v333
  %363 = vmatprep.subr.mxu0 %v330
  %364 = vmatpush1.msra.mxu0 %v329
  %365 = vmatprep.subr.mxu0 %v326
  %366 = vmatpush1.msra.mxu0 %v325
  %367 = vmatprep.subr.mxu0 %v322
  %368 = vmatpush1.msra.mxu0 %v321
  %369 = vmatprep.subr.mxu0 %v318
  %370 = vmatpush1.msra.mxu0 %v317
  %371 = vmatprep.subr.mxu0 %v314
  %372 = vmatpush1.msra.mxu0 %v313
  %373 = vmatprep.subr.mxu0 %v310
  %374 = vmatpush1.msra.mxu0 %v309
  %375 = vmatprep.subr.mxu0 %v306
  %376 = vmatpush1.msra.mxu0 %v305
  %377 = vmatprep.subr.mxu0 %v302
  %378 = vmatpush1.msra.mxu0 %v301
  %379 = vmatprep.subr.mxu0 %v298
  %380 = vmatpush1.msra.mxu0 %v297
  %381 = vmatprep.subr.mxu0 %v294
  %382 = vmatpush1.msra.mxu0 %v293
  %383 = vmatprep.subr.mxu0 %v290
  %384 = vmatpush1.msra.mxu0 %v289
  %385 = vmatprep.subr.mxu0 0.0
  %386 = vmatpush2.msra.mxu0 0.0
  %387 = vmatprep.subr.mxu0 0.0
  %388 = vmatpush2.msra.mxu0 0.0
  %389 = vmatprep.subr.mxu0 0.0
  %390 = vmatpush2.msra.mxu0 0.0
  %391 = vmatprep.subr.mxu0 0.0
  %392 = vmatpush2.msra.mxu0 0.0
  %393 = vmatprep.subr.mxu0 0.0
  %394 = vmatpush2.msra.mxu0 0.0
  %395 = vmatprep.subr.mxu0 0.0
  %396 = vmatpush2.msra.mxu0 0.0
  %397 = vmatprep.subr.mxu0 0.0
  %398 = vmatpush2.msra.mxu0 0.0
  %399 = vmatprep.subr.mxu0 0.0
  %400 = vmatpush2.msra.mxu0 0.0
  %401 = vmatprep.subr.mxu0 0.0
  %402 = vmatpush2.msra.mxu0 0.0
  %403 = vmatprep.subr.mxu0 0.0
  %404 = vmatpush2.msra.mxu0 0.0
  %405 = vmatprep.subr.mxu0 0.0
  %406 = vmatpush2.msra.mxu0 0.0
  %407 = vmatprep.subr.mxu0 0.0
  %408 = vmatpush2.msra.mxu0 0.0
  %409 = vmatprep.subr.mxu0 0.0
  %410 = vmatpush2.msra.mxu0 0.0
  %411 = vmatprep.subr.mxu0 0.0
  %412 = vmatpush2.msra.mxu0 0.0
  %413 = vmatprep.subr.mxu0 0.0
  %414 = vmatpush2.msra.mxu0 0.0
  %415 = vmatprep.subr.mxu0 0.0
  %416 = vmatpush2.msra.mxu0 0.0
  %417 = vmatprep.mubr.f32.mxu0 0.0
  %418 = vmatmul.mubr.f32.gmra.mxu0 %v288
  %v419 = vpop.f32.mrf.mxu0
  %v420 = vadd.f32 0.0, %v419
  %v421 = vpop.f32.mrf.mxu0
  %v422 = vadd.f32 0.0, %v421
  %423 = vdwg.mxu0
  %424 = vmatprep.subr.mxu0 %v352
  %425 = vmatpush1.msra.mxu0 %v351
  %426 = vmatprep.subr.mxu0 %v348
  %427 = vmatpush1.msra.mxu0 %v347
  %428 = vmatprep.subr.mxu0 %v344
  %429 = vmatpush1.msra.mxu0 %v343
  %430 = vmatprep.subr.mxu0 %v340
  %431 = vmatpush1.msra.mxu0 %v339
  %432 = vmatprep.subr.mxu0 %v336
  %433 = vmatpush1.msra.mxu0 %v335
  %434 = vmatprep.subr.mxu0 %v332
  %435 = vmatpush1.msra.mxu0 %v331
  %436 = vmatprep.subr.mxu0 %v328
  %437 = vmatpush1.msra.mxu0 %v327
  %438 = vmatprep.subr.mxu0 %v324
  %439 = vmatpush1.msra.mxu0 %v323
  %440 = vmatprep.subr.mxu0 %v320
  %441 = vmatpush1.msra.mxu0 %v319
  %442 = vmatprep.subr.mxu0 %v316
  %443 = vmatpush1.msra.mxu0 %v315
  %444 = vmatprep.subr.mxu0 %v312
  %445 = vmatpush1.msra.mxu0 %v311
  %446 = vmatprep.subr.mxu0 %v308
  %447 = vmatpush1.msra.mxu0 %v307
  %448 = vmatprep.subr.mxu0 %v304
  %449 = vmatpush1.msra.mxu0 %v303
  %450 = vmatprep.subr.mxu0 %v300
  %451 = vmatpush1.msra.mxu0 %v299
  %452 = vmatprep.subr.mxu0 %v296
  %453 = vmatpush1.msra.mxu0 %v295
  %454 = vmatprep.subr.mxu0 %v292
  %455 = vmatpush1.msra.mxu0 %v291
  %456 = vmatprep.subr.mxu0 0.0
  %457 = vmatpush2.msra.mxu0 0.0
  %458 = vmatprep.subr.mxu0 0.0
  %459 = vmatpush2.msra.mxu0 0.0
  %460 = vmatprep.subr.mxu0 0.0
  %461 = vmatpush2.msra.mxu0 0.0
  %462 = vmatprep.subr.mxu0 0.0
  %463 = vmatpush2.msra.mxu0 0.0
  %464 = vmatprep.subr.mxu0 0.0
  %465 = vmatpush2.msra.mxu0 0.0
  %466 = vmatprep.subr.mxu0 0.0
  %467 = vmatpush2.msra.mxu0 0.0
  %468 = vmatprep.subr.mxu0 0.0
  %469 = vmatpush2.msra.mxu0 0.0
  %470 = vmatprep.subr.mxu0 0.0
  %471 = vmatpush2.msra.mxu0 0.0
  %472 = vmatprep.subr.mxu0 0.0
  %473 = vmatpush2.msra.mxu0 0.0
  %474 = vmatprep.subr.mxu0 0.0
  %475 = vmatpush2.msra.mxu0 0.0
  %476 = vmatprep.subr.mxu0 0.0
  %477 = vmatpush2.msra.mxu0 0.0
  %478 = vmatprep.subr.mxu0 0.0
  %479 = vmatpush2.msra.mxu0 0.0
  %480 = vmatprep.subr.mxu0 0.0
  %481 = vmatpush2.msra.mxu0 0.0
  %482 = vmatprep.subr.mxu0 0.0
  %483 = vmatpush2.msra.mxu0 0.0
  %484 = vmatprep.subr.mxu0 0.0
  %485 = vmatpush2.msra.mxu0 0.0
  %486 = vmatprep.subr.mxu0 0.0
  %487 = vmatpush2.msra.mxu0 0.0
  %488 = vmatprep.mubr.f32.mxu0 0.0
  %489 = vmatmul.mubr.f32.gmra.mxu0 %v288
  %v490 = vpop.f32.mrf.mxu0
  %v491 = vadd.f32 0.0, %v490
  %v492 = vpop.f32.mrf.mxu0
  %v493 = vadd.f32 0.0, %v492
  %494 = vdwg.mxu0
  %v499 = vcombine.low %v420, %v422
  %v500 = vcombine.low %v491, %v493
  %v502 = vunpack.c.l.s4 1983009808
  %v503 = vunpack.c.0.s8 %v502
  %v504 = vlaneseq
  %v505 = vshrl.u32 %v504, 7
  %v506 = vsub.s32 %v503, %v505
  %v507 = vrot.slane %v499, %v506
  %v509 = vunpack.c.l.s4 1983009808
  %v510 = vunpack.c.0.s8 %v509
  %v511 = vlaneseq
  %v512 = vshrl.u32 %v511, 7
  %v513 = vsub.s32 %v510, %v512
  %v514 = vrot.slane %v500, %v513
  %v515 = vcombine.low %v507, %v514
  %v517 = vadd.f32 %v287, %v515
  %v518 = vld [vmem:[#allocation5] sm:$0x3]
  %v519 = vxor.u32 %v517, 2147483648
  %v520 = vmul.f32 %v519, 1.442695
  %v521 = vpow.pop %v520
  %v522 = vadd.f32 %v521, 1.0
  %v523 = vrcp.pop %v522
  %v524 = vmul.f32 1.0, %v523
  %v526 = vrot.slane %v517, 2
  %v528 = vxor.u32 %v526, 2147483648
  %v529 = vmul.f32 %v528, 1.442695
  %v530 = vpow.pop %v529
  %v531 = vadd.f32 %v530, 1.0
  %v532 = vrcp.pop %v531
  %v533 = vmul.f32 1.0, %v532
  %v534 = vrot.slane %v517, 4
  %v536 = vtanh.pop %v534
  %v537 = vrot.slane %v517, 6
  %v539 = vxor.u32 %v537, 2147483648
  %v540 = vmul.f32 %v539, 1.442695
  %v541 = vpow.pop %v540
  %v542 = vadd.f32 %v541, 1.0
  %v543 = vrcp.pop %v542
  %v544 = vmul.f32 1.0, %v543
  %v545 = vmul.f32 %v533, %v518
  %v546 = vmul.f32 %v524, %v536
  %v547 = vadd.f32 %v545, %v546
  %v548 = vtanh.pop %v547
  %v549 = vmul.f32 %v544, %v548
  %550 = vst [vmem:[#allocation4] sm:$0x3] %v549
  %551 = vst [vmem:[#allocation5] sm:$0x3] %v547
  %s552 = scalar_lea.vmem %s4, 12
  %553 = vst [vmem:[%s552] sm:$0x3] %v549
  %s554 = scalar_lea.vmem %s0, 16
  %v555 = vld [vmem:[%s554] sm:$0xff]
  %v556 = vld [vmem:[#allocation2] sm:$0x3]
  %v557 = vld [vmem:[%s1] sm:$0xff]
  %v558 = vld [vmem:[%s1 + $0x8] sm:$0xff]
  %v559 = vld [vmem:[%s1 + $0x10] sm:$0xff]
  %v560 = vld [vmem:[%s1 + $0x18] sm:$0xff]
  %v561 = vld [vmem:[%s1 + $0x20] sm:$0xff]
  %v562 = vld [vmem:[%s1 + $0x28] sm:$0xff]
  %v563 = vld [vmem:[%s1 + $0x30] sm:$0xff]
  %v564 = vld [vmem:[%s1 + $0x38] sm:$0xff]
  %v565 = vld [vmem:[%s1 + $0x40] sm:$0xff]
  %v566 = vld [vmem:[%s1 + $0x48] sm:$0xff]
  %v567 = vld [vmem:[%s1 + $0x50] sm:$0xff]
  %v568 = vld [vmem:[%s1 + $0x58] sm:$0xff]
  %v569 = vld [vmem:[%s1 + $0x60] sm:$0xff]
  %v570 = vld [vmem:[%s1 + $0x68] sm:$0xff]
  %v571 = vld [vmem:[%s1 + $0x70] sm:$0xff]
  %v572 = vld [vmem:[%s1 + $0x78] sm:$0xff]
  %v573 = vld [vmem:[%s1 + $0x80] sm:$0xff]
  %v574 = vld [vmem:[%s1 + $0x88] sm:$0xff]
  %v575 = vld [vmem:[%s1 + $0x90] sm:$0xff]
  %v576 = vld [vmem:[%s1 + $0x98] sm:$0xff]
  %v577 = vld [vmem:[%s1 + $0xa0] sm:$0xff]
  %v578 = vld [vmem:[%s1 + $0xa8] sm:$0xff]
  %v579 = vld [vmem:[%s1 + $0xb0] sm:$0xff]
  %v580 = vld [vmem:[%s1 + $0xb8] sm:$0xff]
  %v581 = vld [vmem:[%s1 + $0xc0] sm:$0xff]
  %v582 = vld [vmem:[%s1 + $0xc8] sm:$0xff]
  %v583 = vld [vmem:[%s1 + $0xd0] sm:$0xff]
  %v584 = vld [vmem:[%s1 + $0xd8] sm:$0xff]
  %v585 = vld [vmem:[%s1 + $0xe0] sm:$0xff]
  %v586 = vld [vmem:[%s1 + $0xe8] sm:$0xff]
  %v587 = vld [vmem:[%s1 + $0xf0] sm:$0xff]
  %v588 = vld [vmem:[%s1 + $0xf8] sm:$0xff]
  %v589 = vld [vmem:[%s1 + $0x100] sm:$0xff]
  %v590 = vld [vmem:[%s1 + $0x108] sm:$0xff]
  %v591 = vld [vmem:[%s1 + $0x110] sm:$0xff]
  %v592 = vld [vmem:[%s1 + $0x118] sm:$0xff]
  %v593 = vld [vmem:[%s1 + $0x120] sm:$0xff]
  %v594 = vld [vmem:[%s1 + $0x128] sm:$0xff]
  %v595 = vld [vmem:[%s1 + $0x130] sm:$0xff]
  %v596 = vld [vmem:[%s1 + $0x138] sm:$0xff]
  %v597 = vld [vmem:[%s1 + $0x140] sm:$0xff]
  %v598 = vld [vmem:[%s1 + $0x148] sm:$0xff]
  %v599 = vld [vmem:[%s1 + $0x150] sm:$0xff]
  %v600 = vld [vmem:[%s1 + $0x158] sm:$0xff]
  %v601 = vld [vmem:[%s1 + $0x160] sm:$0xff]
  %v602 = vld [vmem:[%s1 + $0x168] sm:$0xff]
  %v603 = vld [vmem:[%s1 + $0x170] sm:$0xff]
  %v604 = vld [vmem:[%s1 + $0x178] sm:$0xff]
  %v605 = vld [vmem:[%s1 + $0x180] sm:$0xff]
  %v606 = vld [vmem:[%s1 + $0x188] sm:$0xff]
  %v607 = vld [vmem:[%s1 + $0x190] sm:$0xff]
  %v608 = vld [vmem:[%s1 + $0x198] sm:$0xff]
  %v609 = vld [vmem:[%s1 + $0x1a0] sm:$0xff]
  %v610 = vld [vmem:[%s1 + $0x1a8] sm:$0xff]
  %v611 = vld [vmem:[%s1 + $0x1b0] sm:$0xff]
  %v612 = vld [vmem:[%s1 + $0x1b8] sm:$0xff]
  %v613 = vld [vmem:[%s1 + $0x1c0] sm:$0xff]
  %v614 = vld [vmem:[%s1 + $0x1c8] sm:$0xff]
  %v615 = vld [vmem:[%s1 + $0x1d0] sm:$0xff]
  %v616 = vld [vmem:[%s1 + $0x1d8] sm:$0xff]
  %v617 = vld [vmem:[%s1 + $0x1e0] sm:$0xff]
  %v618 = vld [vmem:[%s1 + $0x1e8] sm:$0xff]
  %v619 = vld [vmem:[%s1 + $0x1f0] sm:$0xff]
  %v620 = vld [vmem:[%s1 + $0x1f8] sm:$0xff]
  %621 = vmatprep.subr.mxu0 %v618
  %622 = vmatpush1.msra.mxu0 %v617
  %623 = vmatprep.subr.mxu0 %v614
  %624 = vmatpush1.msra.mxu0 %v613
  %625 = vmatprep.subr.mxu0 %v610
  %626 = vmatpush1.msra.mxu0 %v609
  %627 = vmatprep.subr.mxu0 %v606
  %628 = vmatpush1.msra.mxu0 %v605
  %629 = vmatprep.subr.mxu0 %v602
  %630 = vmatpush1.msra.mxu0 %v601
  %631 = vmatprep.subr.mxu0 %v598
  %632 = vmatpush1.msra.mxu0 %v597
  %633 = vmatprep.subr.mxu0 %v594
  %634 = vmatpush1.msra.mxu0 %v593
  %635 = vmatprep.subr.mxu0 %v590
  %636 = vmatpush1.msra.mxu0 %v589
  %637 = vmatprep.subr.mxu0 %v586
  %638 = vmatpush1.msra.mxu0 %v585
  %639 = vmatprep.subr.mxu0 %v582
  %640 = vmatpush1.msra.mxu0 %v581
  %641 = vmatprep.subr.mxu0 %v578
  %642 = vmatpush1.msra.mxu0 %v577
  %643 = vmatprep.subr.mxu0 %v574
  %644 = vmatpush1.msra.mxu0 %v573
  %645 = vmatprep.subr.mxu0 %v570
  %646 = vmatpush1.msra.mxu0 %v569
  %647 = vmatprep.subr.mxu0 %v566
  %648 = vmatpush1.msra.mxu0 %v565
  %649 = vmatprep.subr.mxu0 %v562
  %650 = vmatpush1.msra.mxu0 %v561
  %651 = vmatprep.subr.mxu0 %v558
  %652 = vmatpush1.msra.mxu0 %v557
  %653 = vmatprep.subr.mxu0 0.0
  %654 = vmatpush2.msra.mxu0 0.0
  %655 = vmatprep.subr.mxu0 0.0
  %656 = vmatpush2.msra.mxu0 0.0
  %657 = vmatprep.subr.mxu0 0.0
  %658 = vmatpush2.msra.mxu0 0.0
  %659 = vmatprep.subr.mxu0 0.0
  %660 = vmatpush2.msra.mxu0 0.0
  %661 = vmatprep.subr.mxu0 0.0
  %662 = vmatpush2.msra.mxu0 0.0
  %663 = vmatprep.subr.mxu0 0.0
  %664 = vmatpush2.msra.mxu0 0.0
  %665 = vmatprep.subr.mxu0 0.0
  %666 = vmatpush2.msra.mxu0 0.0
  %667 = vmatprep.subr.mxu0 0.0
  %668 = vmatpush2.msra.mxu0 0.0
  %669 = vmatprep.subr.mxu0 0.0
  %670 = vmatpush2.msra.mxu0 0.0
  %671 = vmatprep.subr.mxu0 0.0
  %672 = vmatpush2.msra.mxu0 0.0
  %673 = vmatprep.subr.mxu0 0.0
  %674 = vmatpush2.msra.mxu0 0.0
  %675 = vmatprep.subr.mxu0 0.0
  %676 = vmatpush2.msra.mxu0 0.0
  %677 = vmatprep.subr.mxu0 0.0
  %678 = vmatpush2.msra.mxu0 0.0
  %679 = vmatprep.subr.mxu0 0.0
  %680 = vmatpush2.msra.mxu0 0.0
  %681 = vmatprep.subr.mxu0 0.0
  %682 = vmatpush2.msra.mxu0 0.0
  %683 = vmatprep.subr.mxu0 0.0
  %684 = vmatpush2.msra.mxu0 0.0
  %685 = vmatprep.mubr.f32.mxu0 0.0
  %686 = vmatmul.mubr.f32.gmra.mxu0 %v556
  %v687 = vpop.f32.mrf.mxu0
  %v688 = vadd.f32 0.0, %v687
  %v689 = vpop.f32.mrf.mxu0
  %v690 = vadd.f32 0.0, %v689
  %691 = vdwg.mxu0
  %692 = vmatprep.subr.mxu0 %v620
  %693 = vmatpush1.msra.mxu0 %v619
  %694 = vmatprep.subr.mxu0 %v616
  %695 = vmatpush1.msra.mxu0 %v615
  %696 = vmatprep.subr.mxu0 %v612
  %697 = vmatpush1.msra.mxu0 %v611
  %698 = vmatprep.subr.mxu0 %v608
  %699 = vmatpush1.msra.mxu0 %v607
  %700 = vmatprep.subr.mxu0 %v604
  %701 = vmatpush1.msra.mxu0 %v603
  %702 = vmatprep.subr.mxu0 %v600
  %703 = vmatpush1.msra.mxu0 %v599
  %704 = vmatprep.subr.mxu0 %v596
  %705 = vmatpush1.msra.mxu0 %v595
  %706 = vmatprep.subr.mxu0 %v592
  %707 = vmatpush1.msra.mxu0 %v591
  %708 = vmatprep.subr.mxu0 %v588
  %709 = vmatpush1.msra.mxu0 %v587
  %710 = vmatprep.subr.mxu0 %v584
  %711 = vmatpush1.msra.mxu0 %v583
  %712 = vmatprep.subr.mxu0 %v580
  %713 = vmatpush1.msra.mxu0 %v579
  %714 = vmatprep.subr.mxu0 %v576
  %715 = vmatpush1.msra.mxu0 %v575
  %716 = vmatprep.subr.mxu0 %v572
  %717 = vmatpush1.msra.mxu0 %v571
  %718 = vmatprep.subr.mxu0 %v568
  %719 = vmatpush1.msra.mxu0 %v567
  %720 = vmatprep.subr.mxu0 %v564
  %721 = vmatpush1.msra.mxu0 %v563
  %722 = vmatprep.subr.mxu0 %v560
  %723 = vmatpush1.msra.mxu0 %v559
  %724 = vmatprep.subr.mxu0 0.0
  %725 = vmatpush2.msra.mxu0 0.0
  %726 = vmatprep.subr.mxu0 0.0
  %727 = vmatpush2.msra.mxu0 0.0
  %728 = vmatprep.subr.mxu0 0.0
  %729 = vmatpush2.msra.mxu0 0.0
  %730 = vmatprep.subr.mxu0 0.0
  %731 = vmatpush2.msra.mxu0 0.0
  %732 = vmatprep.subr.mxu0 0.0
  %733 = vmatpush2.msra.mxu0 0.0
  %734 = vmatprep.subr.mxu0 0.0
  %735 = vmatpush2.msra.mxu0 0.0
  %736 = vmatprep.subr.mxu0 0.0
  %737 = vmatpush2.msra.mxu0 0.0
  %738 = vmatprep.subr.mxu0 0.0
  %739 = vmatpush2.msra.mxu0 0.0
  %740 = vmatprep.subr.mxu0 0.0
  %741 = vmatpush2.msra.mxu0 0.0
  %742 = vmatprep.subr.mxu0 0.0
  %743 = vmatpush2.msra.mxu0 0.0
  %744 = vmatprep.subr.mxu0 0.0
  %745 = vmatpush2.msra.mxu0 0.0
  %746 = vmatprep.subr.mxu0 0.0
  %747 = vmatpush2.msra.mxu0 0.0
  %748 = vmatprep.subr.mxu0 0.0
  %749 = vmatpush2.msra.mxu0 0.0
  %750 = vmatprep.subr.mxu0 0.0
  %751 = vmatpush2.msra.mxu0 0.0
  %752 = vmatprep.subr.mxu0 0.0
  %753 = vmatpush2.msra.mxu0 0.0
  %754 = vmatprep.subr.mxu0 0.0
  %755 = vmatpush2.msra.mxu0 0.0
  %756 = vmatprep.mubr.f32.mxu0 0.0
  %757 = vmatmul.mubr.f32.gmra.mxu0 %v556
  %v758 = vpop.f32.mrf.mxu0
  %v759 = vadd.f32 0.0, %v758
  %v760 = vpop.f32.mrf.mxu0
  %v761 = vadd.f32 0.0, %v760
  %762 = vdwg.mxu0
  %v767 = vcombine.low %v688, %v690
  %v768 = vcombine.low %v759, %v761
  %v770 = vunpack.c.l.s4 1983009808
  %v771 = vunpack.c.0.s8 %v770
  %v772 = vlaneseq
  %v773 = vshrl.u32 %v772, 7
  %v774 = vsub.s32 %v771, %v773
  %v775 = vrot.slane %v767, %v774
  %v777 = vunpack.c.l.s4 1983009808
  %v778 = vunpack.c.0.s8 %v777
  %v779 = vlaneseq
  %v780 = vshrl.u32 %v779, 7
  %v781 = vsub.s32 %v778, %v780
  %v782 = vrot.slane %v768, %v781
  %v783 = vcombine.low %v775, %v782
  %v785 = vadd.f32 %v555, %v783
  %v786 = vld [vmem:[#allocation3] sm:$0x3]
  %v787 = vxor.u32 %v785, 2147483648
  %v788 = vmul.f32 %v787, 1.442695
  %v789 = vpow.pop %v788
  %v790 = vadd.f32 %v789, 1.0
  %v791 = vrcp.pop %v790
  %v792 = vmul.f32 1.0, %v791
  %v794 = vrot.slane %v785, 2
  %v796 = vxor.u32 %v794, 2147483648
  %v797 = vmul.f32 %v796, 1.442695
  %v798 = vpow.pop %v797
  %v799 = vadd.f32 %v798, 1.0
  %v800 = vrcp.pop %v799
  %v801 = vmul.f32 1.0, %v800
  %v802 = vrot.slane %v785, 4
  %v804 = vtanh.pop %v802
  %v805 = vrot.slane %v785, 6
  %v807 = vxor.u32 %v805, 2147483648
  %v808 = vmul.f32 %v807, 1.442695
  %v809 = vpow.pop %v808
  %v810 = vadd.f32 %v809, 1.0
  %v811 = vrcp.pop %v810
  %v812 = vmul.f32 1.0, %v811
  %v813 = vmul.f32 %v801, %v786
  %v814 = vmul.f32 %v792, %v804
  %v815 = vadd.f32 %v813, %v814
  %v816 = vtanh.pop %v815
  %v817 = vmul.f32 %v812, %v816
  %818 = vst [vmem:[#allocation2] sm:$0x3] %v817
  %819 = vst [vmem:[#allocation3] sm:$0x3] %v815
  %s820 = scalar_lea.vmem %s3, 2
  %821 = vst [vmem:[%s820] sm:$0x3] %v817
  %s822 = scalar_lea.vmem %s0, 80
  %v823 = vld [vmem:[%s822 + $0x8] sm:$0xff]
  %v824 = vld [vmem:[#allocation4] sm:$0x3]
  %v825 = vld [vmem:[%s2] sm:$0xff]
  %v826 = vld [vmem:[%s2 + $0x8] sm:$0xff]
  %v827 = vld [vmem:[%s2 + $0x10] sm:$0xff]
  %v828 = vld [vmem:[%s2 + $0x18] sm:$0xff]
  %v829 = vld [vmem:[%s2 + $0x20] sm:$0xff]
  %v830 = vld [vmem:[%s2 + $0x28] sm:$0xff]
  %v831 = vld [vmem:[%s2 + $0x30] sm:$0xff]
  %v832 = vld [vmem:[%s2 + $0x38] sm:$0xff]
  %v833 = vld [vmem:[%s2 + $0x40] sm:$0xff]
  %v834 = vld [vmem:[%s2 + $0x48] sm:$0xff]
  %v835 = vld [vmem:[%s2 + $0x50] sm:$0xff]
  %v836 = vld [vmem:[%s2 + $0x58] sm:$0xff]
  %v837 = vld [vmem:[%s2 + $0x60] sm:$0xff]
  %v838 = vld [vmem:[%s2 + $0x68] sm:$0xff]
  %v839 = vld [vmem:[%s2 + $0x70] sm:$0xff]
  %v840 = vld [vmem:[%s2 + $0x78] sm:$0xff]
  %v841 = vld [vmem:[%s2 + $0x80] sm:$0xff]
  %v842 = vld [vmem:[%s2 + $0x88] sm:$0xff]
  %v843 = vld [vmem:[%s2 + $0x90] sm:$0xff]
  %v844 = vld [vmem:[%s2 + $0x98] sm:$0xff]
  %v845 = vld [vmem:[%s2 + $0xa0] sm:$0xff]
  %v846 = vld [vmem:[%s2 + $0xa8] sm:$0xff]
  %v847 = vld [vmem:[%s2 + $0xb0] sm:$0xff]
  %v848 = vld [vmem:[%s2 + $0xb8] sm:$0xff]
  %v849 = vld [vmem:[%s2 + $0xc0] sm:$0xff]
  %v850 = vld [vmem:[%s2 + $0xc8] sm:$0xff]
  %v851 = vld [vmem:[%s2 + $0xd0] sm:$0xff]
  %v852 = vld [vmem:[%s2 + $0xd8] sm:$0xff]
  %v853 = vld [vmem:[%s2 + $0xe0] sm:$0xff]
  %v854 = vld [vmem:[%s2 + $0xe8] sm:$0xff]
  %v855 = vld [vmem:[%s2 + $0xf0] sm:$0xff]
  %v856 = vld [vmem:[%s2 + $0xf8] sm:$0xff]
  %v857 = vld [vmem:[%s2 + $0x100] sm:$0xff]
  %v858 = vld [vmem:[%s2 + $0x108] sm:$0xff]
  %v859 = vld [vmem:[%s2 + $0x110] sm:$0xff]
  %v860 = vld [vmem:[%s2 + $0x118] sm:$0xff]
  %v861 = vld [vmem:[%s2 + $0x120] sm:$0xff]
  %v862 = vld [vmem:[%s2 + $0x128] sm:$0xff]
  %v863 = vld [vmem:[%s2 + $0x130] sm:$0xff]
  %v864 = vld [vmem:[%s2 + $0x138] sm:$0xff]
  %v865 = vld [vmem:[%s2 + $0x140] sm:$0xff]
  %v866 = vld [vmem:[%s2 + $0x148] sm:$0xff]
  %v867 = vld [vmem:[%s2 + $0x150] sm:$0xff]
  %v868 = vld [vmem:[%s2 + $0x158] sm:$0xff]
  %v869 = vld [vmem:[%s2 + $0x160] sm:$0xff]
  %v870 = vld [vmem:[%s2 + $0x168] sm:$0xff]
  %v871 = vld [vmem:[%s2 + $0x170] sm:$0xff]
  %v872 = vld [vmem:[%s2 + $0x178] sm:$0xff]
  %v873 = vld [vmem:[%s2 + $0x180] sm:$0xff]
  %v874 = vld [vmem:[%s2 + $0x188] sm:$0xff]
  %v875 = vld [vmem:[%s2 + $0x190] sm:$0xff]
  %v876 = vld [vmem:[%s2 + $0x198] sm:$0xff]
  %v877 = vld [vmem:[%s2 + $0x1a0] sm:$0xff]
  %v878 = vld [vmem:[%s2 + $0x1a8] sm:$0xff]
  %v879 = vld [vmem:[%s2 + $0x1b0] sm:$0xff]
  %v880 = vld [vmem:[%s2 + $0x1b8] sm:$0xff]
  %v881 = vld [vmem:[%s2 + $0x1c0] sm:$0xff]
  %v882 = vld [vmem:[%s2 + $0x1c8] sm:$0xff]
  %v883 = vld [vmem:[%s2 + $0x1d0] sm:$0xff]
  %v884 = vld [vmem:[%s2 + $0x1d8] sm:$0xff]
  %v885 = vld [vmem:[%s2 + $0x1e0] sm:$0xff]
  %v886 = vld [vmem:[%s2 + $0x1e8] sm:$0xff]
  %v887 = vld [vmem:[%s2 + $0x1f0] sm:$0xff]
  %v888 = vld [vmem:[%s2 + $0x1f8] sm:$0xff]
  %889 = vmatprep.subr.mxu0 %v886
  %890 = vmatpush1.msra.mxu0 %v885
  %891 = vmatprep.subr.mxu0 %v882
  %892 = vmatpush1.msra.mxu0 %v881
  %893 = vmatprep.subr.mxu0 %v878
  %894 = vmatpush1.msra.mxu0 %v877
  %895 = vmatprep.subr.mxu0 %v874
  %896 = vmatpush1.msra.mxu0 %v873
  %897 = vmatprep.subr.mxu0 %v870
  %898 = vmatpush1.msra.mxu0 %v869
  %899 = vmatprep.subr.mxu0 %v866
  %900 = vmatpush1.msra.mxu0 %v865
  %901 = vmatprep.subr.mxu0 %v862
  %902 = vmatpush1.msra.mxu0 %v861
  %903 = vmatprep.subr.mxu0 %v858
  %904 = vmatpush1.msra.mxu0 %v857
  %905 = vmatprep.subr.mxu0 %v854
  %906 = vmatpush1.msra.mxu0 %v853
  %907 = vmatprep.subr.mxu0 %v850
  %908 = vmatpush1.msra.mxu0 %v849
  %909 = vmatprep.subr.mxu0 %v846
  %910 = vmatpush1.msra.mxu0 %v845
  %911 = vmatprep.subr.mxu0 %v842
  %912 = vmatpush1.msra.mxu0 %v841
  %913 = vmatprep.subr.mxu0 %v838
  %914 = vmatpush1.msra.mxu0 %v837
  %915 = vmatprep.subr.mxu0 %v834
  %916 = vmatpush1.msra.mxu0 %v833
  %917 = vmatprep.subr.mxu0 %v830
  %918 = vmatpush1.msra.mxu0 %v829
  %919 = vmatprep.subr.mxu0 %v826
  %920 = vmatpush1.msra.mxu0 %v825
  %921 = vmatprep.subr.mxu0 0.0
  %922 = vmatpush2.msra.mxu0 0.0
  %923 = vmatprep.subr.mxu0 0.0
  %924 = vmatpush2.msra.mxu0 0.0
  %925 = vmatprep.subr.mxu0 0.0
  %926 = vmatpush2.msra.mxu0 0.0
  %927 = vmatprep.subr.mxu0 0.0
  %928 = vmatpush2.msra.mxu0 0.0
  %929 = vmatprep.subr.mxu0 0.0
  %930 = vmatpush2.msra.mxu0 0.0
  %931 = vmatprep.subr.mxu0 0.0
  %932 = vmatpush2.msra.mxu0 0.0
  %933 = vmatprep.subr.mxu0 0.0
  %934 = vmatpush2.msra.mxu0 0.0
  %935 = vmatprep.subr.mxu0 0.0
  %936 = vmatpush2.msra.mxu0 0.0
  %937 = vmatprep.subr.mxu0 0.0
  %938 = vmatpush2.msra.mxu0 0.0
  %939 = vmatprep.subr.mxu0 0.0
  %940 = vmatpush2.msra.mxu0 0.0
  %941 = vmatprep.subr.mxu0 0.0
  %942 = vmatpush2.msra.mxu0 0.0
  %943 = vmatprep.subr.mxu0 0.0
  %944 = vmatpush2.msra.mxu0 0.0
  %945 = vmatprep.subr.mxu0 0.0
  %946 = vmatpush2.msra.mxu0 0.0
  %947 = vmatprep.subr.mxu0 0.0
  %948 = vmatpush2.msra.mxu0 0.0
  %949 = vmatprep.subr.mxu0 0.0
  %950 = vmatpush2.msra.mxu0 0.0
  %951 = vmatprep.subr.mxu0 0.0
  %952 = vmatpush2.msra.mxu0 0.0
  %953 = vmatprep.mubr.f32.mxu0 0.0
  %954 = vmatmul.mubr.f32.gmra.mxu0 %v824
  %v955 = vpop.f32.mrf.mxu0
  %v956 = vadd.f32 0.0, %v955
  %v957 = vpop.f32.mrf.mxu0
  %v958 = vadd.f32 0.0, %v957
  %959 = vdwg.mxu0
  %960 = vmatprep.subr.mxu0 %v888
  %961 = vmatpush1.msra.mxu0 %v887
  %962 = vmatprep.subr.mxu0 %v884
  %963 = vmatpush1.msra.mxu0 %v883
  %964 = vmatprep.subr.mxu0 %v880
  %965 = vmatpush1.msra.mxu0 %v879
  %966 = vmatprep.subr.mxu0 %v876
  %967 = vmatpush1.msra.mxu0 %v875
  %968 = vmatprep.subr.mxu0 %v872
  %969 = vmatpush1.msra.mxu0 %v871
  %970 = vmatprep.subr.mxu0 %v868
  %971 = vmatpush1.msra.mxu0 %v867
  %972 = vmatprep.subr.mxu0 %v864
  %973 = vmatpush1.msra.mxu0 %v863
  %974 = vmatprep.subr.mxu0 %v860
  %975 = vmatpush1.msra.mxu0 %v859
  %976 = vmatprep.subr.mxu0 %v856
  %977 = vmatpush1.msra.mxu0 %v855
  %978 = vmatprep.subr.mxu0 %v852
  %979 = vmatpush1.msra.mxu0 %v851
  %980 = vmatprep.subr.mxu0 %v848
  %981 = vmatpush1.msra.mxu0 %v847
  %982 = vmatprep.subr.mxu0 %v844
  %983 = vmatpush1.msra.mxu0 %v843
  %984 = vmatprep.subr.mxu0 %v840
  %985 = vmatpush1.msra.mxu0 %v839
  %986 = vmatprep.subr.mxu0 %v836
  %987 = vmatpush1.msra.mxu0 %v835
  %988 = vmatprep.subr.mxu0 %v832
  %989 = vmatpush1.msra.mxu0 %v831
  %990 = vmatprep.subr.mxu0 %v828
  %991 = vmatpush1.msra.mxu0 %v827
  %992 = vmatprep.subr.mxu0 0.0
  %993 = vmatpush2.msra.mxu0 0.0
  %994 = vmatprep.subr.mxu0 0.0
  %995 = vmatpush2.msra.mxu0 0.0
  %996 = vmatprep.subr.mxu0 0.0
  %997 = vmatpush2.msra.mxu0 0.0
  %998 = vmatprep.subr.mxu0 0.0
  %999 = vmatpush2.msra.mxu0 0.0
  %1000 = vmatprep.subr.mxu0 0.0
  %1001 = vmatpush2.msra.mxu0 0.0
  %1002 = vmatprep.subr.mxu0 0.0
  %1003 = vmatpush2.msra.mxu0 0.0
  %1004 = vmatprep.subr.mxu0 0.0
  %1005 = vmatpush2.msra.mxu0 0.0
  %1006 = vmatprep.subr.mxu0 0.0
  %1007 = vmatpush2.msra.mxu0 0.0
  %1008 = vmatprep.subr.mxu0 0.0
  %1009 = vmatpush2.msra.mxu0 0.0
  %1010 = vmatprep.subr.mxu0 0.0
  %1011 = vmatpush2.msra.mxu0 0.0
  %1012 = vmatprep.subr.mxu0 0.0
  %1013 = vmatpush2.msra.mxu0 0.0
  %1014 = vmatprep.subr.mxu0 0.0
  %1015 = vmatpush2.msra.mxu0 0.0
  %1016 = vmatprep.subr.mxu0 0.0
  %1017 = vmatpush2.msra.mxu0 0.0
  %1018 = vmatprep.subr.mxu0 0.0
  %1019 = vmatpush2.msra.mxu0 0.0
  %1020 = vmatprep.subr.mxu0 0.0
  %1021 = vmatpush2.msra.mxu0 0.0
  %1022 = vmatprep.subr.mxu0 0.0
  %1023 = vmatpush2.msra.mxu0 0.0
  %1024 = vmatprep.mubr.f32.mxu0 0.0
  %1025 = vmatmul.mubr.f32.gmra.mxu0 %v824
  %v1026 = vpop.f32.mrf.mxu0
  %v1027 = vadd.f32 0.0, %v1026
  %v1028 = vpop.f32.mrf.mxu0
  %v1029 = vadd.f32 0.0, %v1028
  %1030 = vdwg.mxu0
  %v1035 = vcombine.low %v956, %v958
  %v1036 = vcombine.low %v1027, %v1029
  %v1038 = vunpack.c.l.s4 1983009808
  %v1039 = vunpack.c.0.s8 %v1038
  %v1040 = vlaneseq
  %v1041 = vshrl.u32 %v1040, 7
  %v1042 = vsub.s32 %v1039, %v1041
  %v1043 = vrot.slane %v1035, %v1042
  %v1045 = vunpack.c.l.s4 1983009808
  %v1046 = vunpack.c.0.s8 %v1045
  %v1047 = vlaneseq
  %v1048 = vshrl.u32 %v1047, 7
  %v1049 = vsub.s32 %v1046, %v1048
  %v1050 = vrot.slane %v1036, %v1049
  %v1051 = vcombine.low %v1043, %v1050
  %v1053 = vadd.f32 %v823, %v1051
  %v1054 = vld [vmem:[#allocation5] sm:$0x3]
  %v1055 = vxor.u32 %v1053, 2147483648
  %v1056 = vmul.f32 %v1055, 1.442695
  %v1057 = vpow.pop %v1056
  %v1058 = vadd.f32 %v1057, 1.0
  %v1059 = vrcp.pop %v1058
  %v1060 = vmul.f32 1.0, %v1059
  %v1062 = vrot.slane %v1053, 2
  %v1064 = vxor.u32 %v1062, 2147483648
  %v1065 = vmul.f32 %v1064, 1.442695
  %v1066 = vpow.pop %v1065
  %v1067 = vadd.f32 %v1066, 1.0
  %v1068 = vrcp.pop %v1067
  %v1069 = vmul.f32 1.0, %v1068
  %v1070 = vrot.slane %v1053, 4
  %v1072 = vtanh.pop %v1070
  %v1073 = vrot.slane %v1053, 6
  %v1075 = vxor.u32 %v1073, 2147483648
  %v1076 = vmul.f32 %v1075, 1.442695
  %v1077 = vpow.pop %v1076
  %v1078 = vadd.f32 %v1077, 1.0
  %v1079 = vrcp.pop %v1078
  %v1080 = vmul.f32 1.0, %v1079
  %v1081 = vmul.f32 %v1069, %v1054
  %v1082 = vmul.f32 %v1060, %v1072
  %v1083 = vadd.f32 %v1081, %v1082
  %v1084 = vtanh.pop %v1083
  %v1085 = vmul.f32 %v1080, %v1084
  %1086 = vst [vmem:[#allocation4] sm:$0x3] %v1085
  %1087 = vst [vmem:[#allocation5] sm:$0x3] %v1083
  %s1088 = scalar_lea.vmem %s4, 10
  %1089 = vst [vmem:[%s1088] sm:$0x3] %v1085
  %s1090 = scalar_lea.vmem %s0, 32
  %v1091 = vld [vmem:[%s1090] sm:$0xff]
  %v1092 = vld [vmem:[#allocation2] sm:$0x3]
  %v1093 = vld [vmem:[%s1] sm:$0xff]
  %v1094 = vld [vmem:[%s1 + $0x8] sm:$0xff]
  %v1095 = vld [vmem:[%s1 + $0x10] sm:$0xff]
  %v1096 = vld [vmem:[%s1 + $0x18] sm:$0xff]
  %v1097 = vld [vmem:[%s1 + $0x20] sm:$0xff]
  %v1098 = vld [vmem:[%s1 + $0x28] sm:$0xff]
  %v1099 = vld [vmem:[%s1 + $0x30] sm:$0xff]
  %v1100 = vld [vmem:[%s1 + $0x38] sm:$0xff]
  %v1101 = vld [vmem:[%s1 + $0x40] sm:$0xff]
  %v1102 = vld [vmem:[%s1 + $0x48] sm:$0xff]
  %v1103 = vld [vmem:[%s1 + $0x50] sm:$0xff]
  %v1104 = vld [vmem:[%s1 + $0x58] sm:$0xff]
  %v1105 = vld [vmem:[%s1 + $0x60] sm:$0xff]
  %v1106 = vld [vmem:[%s1 + $0x68] sm:$0xff]
  %v1107 = vld [vmem:[%s1 + $0x70] sm:$0xff]
  %v1108 = vld [vmem:[%s1 + $0x78] sm:$0xff]
  %v1109 = vld [vmem:[%s1 + $0x80] sm:$0xff]
  %v1110 = vld [vmem:[%s1 + $0x88] sm:$0xff]
  %v1111 = vld [vmem:[%s1 + $0x90] sm:$0xff]
  %v1112 = vld [vmem:[%s1 + $0x98] sm:$0xff]
  %v1113 = vld [vmem:[%s1 + $0xa0] sm:$0xff]
  %v1114 = vld [vmem:[%s1 + $0xa8] sm:$0xff]
  %v1115 = vld [vmem:[%s1 + $0xb0] sm:$0xff]
  %v1116 = vld [vmem:[%s1 + $0xb8] sm:$0xff]
  %v1117 = vld [vmem:[%s1 + $0xc0] sm:$0xff]
  %v1118 = vld [vmem:[%s1 + $0xc8] sm:$0xff]
  %v1119 = vld [vmem:[%s1 + $0xd0] sm:$0xff]
  %v1120 = vld [vmem:[%s1 + $0xd8] sm:$0xff]
  %v1121 = vld [vmem:[%s1 + $0xe0] sm:$0xff]
  %v1122 = vld [vmem:[%s1 + $0xe8] sm:$0xff]
  %v1123 = vld [vmem:[%s1 + $0xf0] sm:$0xff]
  %v1124 = vld [vmem:[%s1 + $0xf8] sm:$0xff]
  %v1125 = vld [vmem:[%s1 + $0x100] sm:$0xff]
  %v1126 = vld [vmem:[%s1 + $0x108] sm:$0xff]
  %v1127 = vld [vmem:[%s1 + $0x110] sm:$0xff]
  %v1128 = vld [vmem:[%s1 + $0x118] sm:$0xff]
  %v1129 = vld [vmem:[%s1 + $0x120] sm:$0xff]
  %v1130 = vld [vmem:[%s1 + $0x128] sm:$0xff]
  %v1131 = vld [vmem:[%s1 + $0x130] sm:$0xff]
  %v1132 = vld [vmem:[%s1 + $0x138] sm:$0xff]
  %v1133 = vld [vmem:[%s1 + $0x140] sm:$0xff]
  %v1134 = vld [vmem:[%s1 + $0x148] sm:$0xff]
  %v1135 = vld [vmem:[%s1 + $0x150] sm:$0xff]
  %v1136 = vld [vmem:[%s1 + $0x158] sm:$0xff]
  %v1137 = vld [vmem:[%s1 + $0x160] sm:$0xff]
  %v1138 = vld [vmem:[%s1 + $0x168] sm:$0xff]
  %v1139 = vld [vmem:[%s1 + $0x170] sm:$0xff]
  %v1140 = vld [vmem:[%s1 + $0x178] sm:$0xff]
  %v1141 = vld [vmem:[%s1 + $0x180] sm:$0xff]
  %v1142 = vld [vmem:[%s1 + $0x188] sm:$0xff]
  %v1143 = vld [vmem:[%s1 + $0x190] sm:$0xff]
  %v1144 = vld [vmem:[%s1 + $0x198] sm:$0xff]
  %v1145 = vld [vmem:[%s1 + $0x1a0] sm:$0xff]
  %v1146 = vld [vmem:[%s1 + $0x1a8] sm:$0xff]
  %v1147 = vld [vmem:[%s1 + $0x1b0] sm:$0xff]
  %v1148 = vld [vmem:[%s1 + $0x1b8] sm:$0xff]
  %v1149 = vld [vmem:[%s1 + $0x1c0] sm:$0xff]
  %v1150 = vld [vmem:[%s1 + $0x1c8] sm:$0xff]
  %v1151 = vld [vmem:[%s1 + $0x1d0] sm:$0xff]
  %v1152 = vld [vmem:[%s1 + $0x1d8] sm:$0xff]
  %v1153 = vld [vmem:[%s1 + $0x1e0] sm:$0xff]
  %v1154 = vld [vmem:[%s1 + $0x1e8] sm:$0xff]
  %v1155 = vld [vmem:[%s1 + $0x1f0] sm:$0xff]
  %v1156 = vld [vmem:[%s1 + $0x1f8] sm:$0xff]
  %1157 = vmatprep.subr.mxu0 %v1154
  %1158 = vmatpush1.msra.mxu0 %v1153
  %1159 = vmatprep.subr.mxu0 %v1150
  %1160 = vmatpush1.msra.mxu0 %v1149
  %1161 = vmatprep.subr.mxu0 %v1146
  %1162 = vmatpush1.msra.mxu0 %v1145
  %1163 = vmatprep.subr.mxu0 %v1142
  %1164 = vmatpush1.msra.mxu0 %v1141
  %1165 = vmatprep.subr.mxu0 %v1138
  %1166 = vmatpush1.msra.mxu0 %v1137
  %1167 = vmatprep.subr.mxu0 %v1134
  %1168 = vmatpush1.msra.mxu0 %v1133
  %1169 = vmatprep.subr.mxu0 %v1130
  %1170 = vmatpush1.msra.mxu0 %v1129
  %1171 = vmatprep.subr.mxu0 %v1126
  %1172 = vmatpush1.msra.mxu0 %v1125
  %1173 = vmatprep.subr.mxu0 %v1122
  %1174 = vmatpush1.msra.mxu0 %v1121
  %1175 = vmatprep.subr.mxu0 %v1118
  %1176 = vmatpush1.msra.mxu0 %v1117
  %1177 = vmatprep.subr.mxu0 %v1114
  %1178 = vmatpush1.msra.mxu0 %v1113
  %1179 = vmatprep.subr.mxu0 %v1110
  %1180 = vmatpush1.msra.mxu0 %v1109
  %1181 = vmatprep.subr.mxu0 %v1106
  %1182 = vmatpush1.msra.mxu0 %v1105
  %1183 = vmatprep.subr.mxu0 %v1102
  %1184 = vmatpush1.msra.mxu0 %v1101
  %1185 = vmatprep.subr.mxu0 %v1098
  %1186 = vmatpush1.msra.mxu0 %v1097
  %1187 = vmatprep.subr.mxu0 %v1094
  %1188 = vmatpush1.msra.mxu0 %v1093
  %1189 = vmatprep.subr.mxu0 0.0
  %1190 = vmatpush2.msra.mxu0 0.0
  %1191 = vmatprep.subr.mxu0 0.0
  %1192 = vmatpush2.msra.mxu0 0.0
  %1193 = vmatprep.subr.mxu0 0.0
  %1194 = vmatpush2.msra.mxu0 0.0
  %1195 = vmatprep.subr.mxu0 0.0
  %1196 = vmatpush2.msra.mxu0 0.0
  %1197 = vmatprep.subr.mxu0 0.0
  %1198 = vmatpush2.msra.mxu0 0.0
  %1199 = vmatprep.subr.mxu0 0.0
  %1200 = vmatpush2.msra.mxu0 0.0
  %1201 = vmatprep.subr.mxu0 0.0
  %1202 = vmatpush2.msra.mxu0 0.0
  %1203 = vmatprep.subr.mxu0 0.0
  %1204 = vmatpush2.msra.mxu0 0.0
  %1205 = vmatprep.subr.mxu0 0.0
  %1206 = vmatpush2.msra.mxu0 0.0
  %1207 = vmatprep.subr.mxu0 0.0
  %1208 = vmatpush2.msra.mxu0 0.0
  %1209 = vmatprep.subr.mxu0 0.0
  %1210 = vmatpush2.msra.mxu0 0.0
  %1211 = vmatprep.subr.mxu0 0.0
  %1212 = vmatpush2.msra.mxu0 0.0
  %1213 = vmatprep.subr.mxu0 0.0
  %1214 = vmatpush2.msra.mxu0 0.0
  %1215 = vmatprep.subr.mxu0 0.0
  %1216 = vmatpush2.msra.mxu0 0.0
  %1217 = vmatprep.subr.mxu0 0.0
  %1218 = vmatpush2.msra.mxu0 0.0
  %1219 = vmatprep.subr.mxu0 0.0
  %1220 = vmatpush2.msra.mxu0 0.0
  %1221 = vmatprep.mubr.f32.mxu0 0.0
  %1222 = vmatmul.mubr.f32.gmra.mxu0 %v1092
  %v1223 = vpop.f32.mrf.mxu0
  %v1224 = vadd.f32 0.0, %v1223
  %v1225 = vpop.f32.mrf.mxu0
  %v1226 = vadd.f32 0.0, %v1225
  %1227 = vdwg.mxu0
  %1228 = vmatprep.subr.mxu0 %v1156
  %1229 = vmatpush1.msra.mxu0 %v1155
  %1230 = vmatprep.subr.mxu0 %v1152
  %1231 = vmatpush1.msra.mxu0 %v1151
  %1232 = vmatprep.subr.mxu0 %v1148
  %1233 = vmatpush1.msra.mxu0 %v1147
  %1234 = vmatprep.subr.mxu0 %v1144
  %1235 = vmatpush1.msra.mxu0 %v1143
  %1236 = vmatprep.subr.mxu0 %v1140
  %1237 = vmatpush1.msra.mxu0 %v1139
  %1238 = vmatprep.subr.mxu0 %v1136
  %1239 = vmatpush1.msra.mxu0 %v1135
  %1240 = vmatprep.subr.mxu0 %v1132
  %1241 = vmatpush1.msra.mxu0 %v1131
  %1242 = vmatprep.subr.mxu0 %v1128
  %1243 = vmatpush1.msra.mxu0 %v1127
  %1244 = vmatprep.subr.mxu0 %v1124
  %1245 = vmatpush1.msra.mxu0 %v1123
  %1246 = vmatprep.subr.mxu0 %v1120
  %1247 = vmatpush1.msra.mxu0 %v1119
  %1248 = vmatprep.subr.mxu0 %v1116
  %1249 = vmatpush1.msra.mxu0 %v1115
  %1250 = vmatprep.subr.mxu0 %v1112
  %1251 = vmatpush1.msra.mxu0 %v1111
  %1252 = vmatprep.subr.mxu0 %v1108
  %1253 = vmatpush1.msra.mxu0 %v1107
  %1254 = vmatprep.subr.mxu0 %v1104
  %1255 = vmatpush1.msra.mxu0 %v1103
  %1256 = vmatprep.subr.mxu0 %v1100
  %1257 = vmatpush1.msra.mxu0 %v1099
  %1258 = vmatprep.subr.mxu0 %v1096
  %1259 = vmatpush1.msra.mxu0 %v1095
  %1260 = vmatprep.subr.mxu0 0.0
  %1261 = vmatpush2.msra.mxu0 0.0
  %1262 = vmatprep.subr.mxu0 0.0
  %1263 = vmatpush2.msra.mxu0 0.0
  %1264 = vmatprep.subr.mxu0 0.0
  %1265 = vmatpush2.msra.mxu0 0.0
  %1266 = vmatprep.subr.mxu0 0.0
  %1267 = vmatpush2.msra.mxu0 0.0
  %1268 = vmatprep.subr.mxu0 0.0
  %1269 = vmatpush2.msra.mxu0 0.0
  %1270 = vmatprep.subr.mxu0 0.0
  %1271 = vmatpush2.msra.mxu0 0.0
  %1272 = vmatprep.subr.mxu0 0.0
  %1273 = vmatpush2.msra.mxu0 0.0
  %1274 = vmatprep.subr.mxu0 0.0
  %1275 = vmatpush2.msra.mxu0 0.0
  %1276 = vmatprep.subr.mxu0 0.0
  %1277 = vmatpush2.msra.mxu0 0.0
  %1278 = vmatprep.subr.mxu0 0.0
  %1279 = vmatpush2.msra.mxu0 0.0
  %1280 = vmatprep.subr.mxu0 0.0
  %1281 = vmatpush2.msra.mxu0 0.0
  %1282 = vmatprep.subr.mxu0 0.0
  %1283 = vmatpush2.msra.mxu0 0.0
  %1284 = vmatprep.subr.mxu0 0.0
  %1285 = vmatpush2.msra.mxu0 0.0
  %1286 = vmatprep.subr.mxu0 0.0
  %1287 = vmatpush2.msra.mxu0 0.0
  %1288 = vmatprep.subr.mxu0 0.0
  %1289 = vmatpush2.msra.mxu0 0.0
  %1290 = vmatprep.subr.mxu0 0.0
  %1291 = vmatpush2.msra.mxu0 0.0
  %1292 = vmatprep.mubr.f32.mxu0 0.0
  %1293 = vmatmul.mubr.f32.gmra.mxu0 %v1092
  %v1294 = vpop.f32.mrf.mxu0
  %v1295 = vadd.f32 0.0, %v1294
  %v1296 = vpop.f32.mrf.mxu0
  %v1297 = vadd.f32 0.0, %v1296
  %1298 = vdwg.mxu0
  %v1303 = vcombine.low %v1224, %v1226
  %v1304 = vcombine.low %v1295, %v1297
  %v1306 = vunpack.c.l.s4 1983009808
  %v1307 = vunpack.c.0.s8 %v1306
  %v1308 = vlaneseq
  %v1309 = vshrl.u32 %v1308, 7
  %v1310 = vsub.s32 %v1307, %v1309
  %v1311 = vrot.slane %v1303, %v1310
  %v1313 = vunpack.c.l.s4 1983009808
  %v1314 = vunpack.c.0.s8 %v1313
  %v1315 = vlaneseq
  %v1316 = vshrl.u32 %v1315, 7
  %v1317 = vsub.s32 %v1314, %v1316
  %v1318 = vrot.slane %v1304, %v1317
  %v1319 = vcombine.low %v1311, %v1318
  %v1321 = vadd.f32 %v1091, %v1319
  %v1322 = vld [vmem:[#allocation3] sm:$0x3]
  %v1323 = vxor.u32 %v1321, 2147483648
  %v1324 = vmul.f32 %v1323, 1.442695
  %v1325 = vpow.pop %v1324
  %v1326 = vadd.f32 %v1325, 1.0
  %v1327 = vrcp.pop %v1326
  %v1328 = vmul.f32 1.0, %v1327
  %v1330 = vrot.slane %v1321, 2
  %v1332 = vxor.u32 %v1330, 2147483648
  %v1333 = vmul.f32 %v1332, 1.442695
  %v1334 = vpow.pop %v1333
  %v1335 = vadd.f32 %v1334, 1.0
  %v1336 = vrcp.pop %v1335
  %v1337 = vmul.f32 1.0, %v1336
  %v1338 = vrot.slane %v1321, 4
  %v1340 = vtanh.pop %v1338
  %v1341 = vrot.slane %v1321, 6
  %v1343 = vxor.u32 %v1341, 2147483648
  %v1344 = vmul.f32 %v1343, 1.442695
  %v1345 = vpow.pop %v1344
  %v1346 = vadd.f32 %v1345, 1.0
  %v1347 = vrcp.pop %v1346
  %v1348 = vmul.f32 1.0, %v1347
  %v1349 = vmul.f32 %v1337, %v1322
  %v1350 = vmul.f32 %v1328, %v1340
  %v1351 = vadd.f32 %v1349, %v1350
  %v1352 = vtanh.pop %v1351
  %v1353 = vmul.f32 %v1348, %v1352
  %1354 = vst [vmem:[#allocation2] sm:$0x3] %v1353
  %1355 = vst [vmem:[#allocation3] sm:$0x3] %v1351
  %s1356 = scalar_lea.vmem %s3, 4
  %1357 = vst [vmem:[%s1356] sm:$0x3] %v1353
  %s1358 = scalar_lea.vmem %s0, 64
  %v1359 = vld [vmem:[%s1358 + $0x8] sm:$0xff]
  %v1360 = vld [vmem:[#allocation4] sm:$0x3]
  %v1361 = vld [vmem:[%s2] sm:$0xff]
  %v1362 = vld [vmem:[%s2 + $0x8] sm:$0xff]
  %v1363 = vld [vmem:[%s2 + $0x10] sm:$0xff]
  %v1364 = vld [vmem:[%s2 + $0x18] sm:$0xff]
  %v1365 = vld [vmem:[%s2 + $0x20] sm:$0xff]
  %v1366 = vld [vmem:[%s2 + $0x28] sm:$0xff]
  %v1367 = vld [vmem:[%s2 + $0x30] sm:$0xff]
  %v1368 = vld [vmem:[%s2 + $0x38] sm:$0xff]
  %v1369 = vld [vmem:[%s2 + $0x40] sm:$0xff]
  %v1370 = vld [vmem:[%s2 + $0x48] sm:$0xff]
  %v1371 = vld [vmem:[%s2 + $0x50] sm:$0xff]
  %v1372 = vld [vmem:[%s2 + $0x58] sm:$0xff]
  %v1373 = vld [vmem:[%s2 + $0x60] sm:$0xff]
  %v1374 = vld [vmem:[%s2 + $0x68] sm:$0xff]
  %v1375 = vld [vmem:[%s2 + $0x70] sm:$0xff]
  %v1376 = vld [vmem:[%s2 + $0x78] sm:$0xff]
  %v1377 = vld [vmem:[%s2 + $0x80] sm:$0xff]
  %v1378 = vld [vmem:[%s2 + $0x88] sm:$0xff]
  %v1379 = vld [vmem:[%s2 + $0x90] sm:$0xff]
  %v1380 = vld [vmem:[%s2 + $0x98] sm:$0xff]
  %v1381 = vld [vmem:[%s2 + $0xa0] sm:$0xff]
  %v1382 = vld [vmem:[%s2 + $0xa8] sm:$0xff]
  %v1383 = vld [vmem:[%s2 + $0xb0] sm:$0xff]
  %v1384 = vld [vmem:[%s2 + $0xb8] sm:$0xff]
  %v1385 = vld [vmem:[%s2 + $0xc0] sm:$0xff]
  %v1386 = vld [vmem:[%s2 + $0xc8] sm:$0xff]
  %v1387 = vld [vmem:[%s2 + $0xd0] sm:$0xff]
  %v1388 = vld [vmem:[%s2 + $0xd8] sm:$0xff]
  %v1389 = vld [vmem:[%s2 + $0xe0] sm:$0xff]
  %v1390 = vld [vmem:[%s2 + $0xe8] sm:$0xff]
  %v1391 = vld [vmem:[%s2 + $0xf0] sm:$0xff]
  %v1392 = vld [vmem:[%s2 + $0xf8] sm:$0xff]
  %v1393 = vld [vmem:[%s2 + $0x100] sm:$0xff]
  %v1394 = vld [vmem:[%s2 + $0x108] sm:$0xff]
  %v1395 = vld [vmem:[%s2 + $0x110] sm:$0xff]
  %v1396 = vld [vmem:[%s2 + $0x118] sm:$0xff]
  %v1397 = vld [vmem:[%s2 + $0x120] sm:$0xff]
  %v1398 = vld [vmem:[%s2 + $0x128] sm:$0xff]
  %v1399 = vld [vmem:[%s2 + $0x130] sm:$0xff]
  %v1400 = vld [vmem:[%s2 + $0x138] sm:$0xff]
  %v1401 = vld [vmem:[%s2 + $0x140] sm:$0xff]
  %v1402 = vld [vmem:[%s2 + $0x148] sm:$0xff]
  %v1403 = vld [vmem:[%s2 + $0x150] sm:$0xff]
  %v1404 = vld [vmem:[%s2 + $0x158] sm:$0xff]
  %v1405 = vld [vmem:[%s2 + $0x160] sm:$0xff]
  %v1406 = vld [vmem:[%s2 + $0x168] sm:$0xff]
  %v1407 = vld [vmem:[%s2 + $0x170] sm:$0xff]
  %v1408 = vld [vmem:[%s2 + $0x178] sm:$0xff]
  %v1409 = vld [vmem:[%s2 + $0x180] sm:$0xff]
  %v1410 = vld [vmem:[%s2 + $0x188] sm:$0xff]
  %v1411 = vld [vmem:[%s2 + $0x190] sm:$0xff]
  %v1412 = vld [vmem:[%s2 + $0x198] sm:$0xff]
  %v1413 = vld [vmem:[%s2 + $0x1a0] sm:$0xff]
  %v1414 = vld [vmem:[%s2 + $0x1a8] sm:$0xff]
  %v1415 = vld [vmem:[%s2 + $0x1b0] sm:$0xff]
  %v1416 = vld [vmem:[%s2 + $0x1b8] sm:$0xff]
  %v1417 = vld [vmem:[%s2 + $0x1c0] sm:$0xff]
  %v1418 = vld [vmem:[%s2 + $0x1c8] sm:$0xff]
  %v1419 = vld [vmem:[%s2 + $0x1d0] sm:$0xff]
  %v1420 = vld [vmem:[%s2 + $0x1d8] sm:$0xff]
  %v1421 = vld [vmem:[%s2 + $0x1e0] sm:$0xff]
  %v1422 = vld [vmem:[%s2 + $0x1e8] sm:$0xff]
  %v1423 = vld [vmem:[%s2 + $0x1f0] sm:$0xff]
  %v1424 = vld [vmem:[%s2 + $0x1f8] sm:$0xff]
  %1425 = vmatprep.subr.mxu0 %v1422
  %1426 = vmatpush1.msra.mxu0 %v1421
  %1427 = vmatprep.subr.mxu0 %v1418
  %1428 = vmatpush1.msra.mxu0 %v1417
  %1429 = vmatprep.subr.mxu0 %v1414
  %1430 = vmatpush1.msra.mxu0 %v1413
  %1431 = vmatprep.subr.mxu0 %v1410
  %1432 = vmatpush1.msra.mxu0 %v1409
  %1433 = vmatprep.subr.mxu0 %v1406
  %1434 = vmatpush1.msra.mxu0 %v1405
  %1435 = vmatprep.subr.mxu0 %v1402
  %1436 = vmatpush1.msra.mxu0 %v1401
  %1437 = vmatprep.subr.mxu0 %v1398
  %1438 = vmatpush1.msra.mxu0 %v1397
  %1439 = vmatprep.subr.mxu0 %v1394
  %1440 = vmatpush1.msra.mxu0 %v1393
  %1441 = vmatprep.subr.mxu0 %v1390
  %1442 = vmatpush1.msra.mxu0 %v1389
  %1443 = vmatprep.subr.mxu0 %v1386
  %1444 = vmatpush1.msra.mxu0 %v1385
  %1445 = vmatprep.subr.mxu0 %v1382
  %1446 = vmatpush1.msra.mxu0 %v1381
  %1447 = vmatprep.subr.mxu0 %v1378
  %1448 = vmatpush1.msra.mxu0 %v1377
  %1449 = vmatprep.subr.mxu0 %v1374
  %1450 = vmatpush1.msra.mxu0 %v1373
  %1451 = vmatprep.subr.mxu0 %v1370
  %1452 = vmatpush1.msra.mxu0 %v1369
  %1453 = vmatprep.subr.mxu0 %v1366
  %1454 = vmatpush1.msra.mxu0 %v1365
  %1455 = vmatprep.subr.mxu0 %v1362
  %1456 = vmatpush1.msra.mxu0 %v1361
  %1457 = vmatprep.subr.mxu0 0.0
  %1458 = vmatpush2.msra.mxu0 0.0
  %1459 = vmatprep.subr.mxu0 0.0
  %1460 = vmatpush2.msra.mxu0 0.0
  %1461 = vmatprep.subr.mxu0 0.0
  %1462 = vmatpush2.msra.mxu0 0.0
  %1463 = vmatprep.subr.mxu0 0.0
  %1464 = vmatpush2.msra.mxu0 0.0
  %1465 = vmatprep.subr.mxu0 0.0
  %1466 = vmatpush2.msra.mxu0 0.0
  %1467 = vmatprep.subr.mxu0 0.0
  %1468 = vmatpush2.msra.mxu0 0.0
  %1469 = vmatprep.subr.mxu0 0.0
  %1470 = vmatpush2.msra.mxu0 0.0
  %1471 = vmatprep.subr.mxu0 0.0
  %1472 = vmatpush2.msra.mxu0 0.0
  %1473 = vmatprep.subr.mxu0 0.0
  %1474 = vmatpush2.msra.mxu0 0.0
  %1475 = vmatprep.subr.mxu0 0.0
  %1476 = vmatpush2.msra.mxu0 0.0
  %1477 = vmatprep.subr.mxu0 0.0
  %1478 = vmatpush2.msra.mxu0 0.0
  %1479 = vmatprep.subr.mxu0 0.0
  %1480 = vmatpush2.msra.mxu0 0.0
  %1481 = vmatprep.subr.mxu0 0.0
  %1482 = vmatpush2.msra.mxu0 0.0
  %1483 = vmatprep.subr.mxu0 0.0
  %1484 = vmatpush2.msra.mxu0 0.0
  %1485 = vmatprep.subr.mxu0 0.0
  %1486 = vmatpush2.msra.mxu0 0.0
  %1487 = vmatprep.subr.mxu0 0.0
  %1488 = vmatpush2.msra.mxu0 0.0
  %1489 = vmatprep.mubr.f32.mxu0 0.0
  %1490 = vmatmul.mubr.f32.gmra.mxu0 %v1360
  %v1491 = vpop.f32.mrf.mxu0
  %v1492 = vadd.f32 0.0, %v1491
  %v1493 = vpop.f32.mrf.mxu0
  %v1494 = vadd.f32 0.0, %v1493
  %1495 = vdwg.mxu0
  %1496 = vmatprep.subr.mxu0 %v1424
  %1497 = vmatpush1.msra.mxu0 %v1423
  %1498 = vmatprep.subr.mxu0 %v1420
  %1499 = vmatpush1.msra.mxu0 %v1419
  %1500 = vmatprep.subr.mxu0 %v1416
  %1501 = vmatpush1.msra.mxu0 %v1415
  %1502 = vmatprep.subr.mxu0 %v1412
  %1503 = vmatpush1.msra.mxu0 %v1411
  %1504 = vmatprep.subr.mxu0 %v1408
  %1505 = vmatpush1.msra.mxu0 %v1407
  %1506 = vmatprep.subr.mxu0 %v1404
  %1507 = vmatpush1.msra.mxu0 %v1403
  %1508 = vmatprep.subr.mxu0 %v1400
  %1509 = vmatpush1.msra.mxu0 %v1399
  %1510 = vmatprep.subr.mxu0 %v1396
  %1511 = vmatpush1.msra.mxu0 %v1395
  %1512 = vmatprep.subr.mxu0 %v1392
  %1513 = vmatpush1.msra.mxu0 %v1391
  %1514 = vmatprep.subr.mxu0 %v1388
  %1515 = vmatpush1.msra.mxu0 %v1387
  %1516 = vmatprep.subr.mxu0 %v1384
  %1517 = vmatpush1.msra.mxu0 %v1383
  %1518 = vmatprep.subr.mxu0 %v1380
  %1519 = vmatpush1.msra.mxu0 %v1379
  %1520 = vmatprep.subr.mxu0 %v1376
  %1521 = vmatpush1.msra.mxu0 %v1375
  %1522 = vmatprep.subr.mxu0 %v1372
  %1523 = vmatpush1.msra.mxu0 %v1371
  %1524 = vmatprep.subr.mxu0 %v1368
  %1525 = vmatpush1.msra.mxu0 %v1367
  %1526 = vmatprep.subr.mxu0 %v1364
  %1527 = vmatpush1.msra.mxu0 %v1363
  %1528 = vmatprep.subr.mxu0 0.0
  %1529 = vmatpush2.msra.mxu0 0.0
  %1530 = vmatprep.subr.mxu0 0.0
  %1531 = vmatpush2.msra.mxu0 0.0
  %1532 = vmatprep.subr.mxu0 0.0
  %1533 = vmatpush2.msra.mxu0 0.0
  %1534 = vmatprep.subr.mxu0 0.0
  %1535 = vmatpush2.msra.mxu0 0.0
  %1536 = vmatprep.subr.mxu0 0.0
  %1537 = vmatpush2.msra.mxu0 0.0
  %1538 = vmatprep.subr.mxu0 0.0
  %1539 = vmatpush2.msra.mxu0 0.0
  %1540 = vmatprep.subr.mxu0 0.0
  %1541 = vmatpush2.msra.mxu0 0.0
  %1542 = vmatprep.subr.mxu0 0.0
  %1543 = vmatpush2.msra.mxu0 0.0
  %1544 = vmatprep.subr.mxu0 0.0
  %1545 = vmatpush2.msra.mxu0 0.0
  %1546 = vmatprep.subr.mxu0 0.0
  %1547 = vmatpush2.msra.mxu0 0.0
  %1548 = vmatprep.subr.mxu0 0.0
  %1549 = vmatpush2.msra.mxu0 0.0
  %1550 = vmatprep.subr.mxu0 0.0
  %1551 = vmatpush2.msra.mxu0 0.0
  %1552 = vmatprep.subr.mxu0 0.0
  %1553 = vmatpush2.msra.mxu0 0.0
  %1554 = vmatprep.subr.mxu0 0.0
  %1555 = vmatpush2.msra.mxu0 0.0
  %1556 = vmatprep.subr.mxu0 0.0
  %1557 = vmatpush2.msra.mxu0 0.0
  %1558 = vmatprep.subr.mxu0 0.0
  %1559 = vmatpush2.msra.mxu0 0.0
  %1560 = vmatprep.mubr.f32.mxu0 0.0
  %1561 = vmatmul.mubr.f32.gmra.mxu0 %v1360
  %v1562 = vpop.f32.mrf.mxu0
  %v1563 = vadd.f32 0.0, %v1562
  %v1564 = vpop.f32.mrf.mxu0
  %v1565 = vadd.f32 0.0, %v1564
  %1566 = vdwg.mxu0
  %v1571 = vcombine.low %v1492, %v1494
  %v1572 = vcombine.low %v1563, %v1565
  %v1574 = vunpack.c.l.s4 1983009808
  %v1575 = vunpack.c.0.s8 %v1574
  %v1576 = vlaneseq
  %v1577 = vshrl.u32 %v1576, 7
  %v1578 = vsub.s32 %v1575, %v1577
  %v1579 = vrot.slane %v1571, %v1578
  %v1581 = vunpack.c.l.s4 1983009808
  %v1582 = vunpack.c.0.s8 %v1581
  %v1583 = vlaneseq
  %v1584 = vshrl.u32 %v1583, 7
  %v1585 = vsub.s32 %v1582, %v1584
  %v1586 = vrot.slane %v1572, %v1585
  %v1587 = vcombine.low %v1579, %v1586
  %v1589 = vadd.f32 %v1359, %v1587
  %v1590 = vld [vmem:[#allocation5] sm:$0x3]
  %v1591 = vxor.u32 %v1589, 2147483648
  %v1592 = vmul.f32 %v1591, 1.442695
  %v1593 = vpow.pop %v1592
  %v1594 = vadd.f32 %v1593, 1.0
  %v1595 = vrcp.pop %v1594
  %v1596 = vmul.f32 1.0, %v1595
  %v1598 = vrot.slane %v1589, 2
  %v1600 = vxor.u32 %v1598, 2147483648
  %v1601 = vmul.f32 %v1600, 1.442695
  %v1602 = vpow.pop %v1601
  %v1603 = vadd.f32 %v1602, 1.0
  %v1604 = vrcp.pop %v1603
  %v1605 = vmul.f32 1.0, %v1604
  %v1606 = vrot.slane %v1589, 4
  %v1608 = vtanh.pop %v1606
  %v1609 = vrot.slane %v1589, 6
  %v1611 = vxor.u32 %v1609, 2147483648
  %v1612 = vmul.f32 %v1611, 1.442695
  %v1613 = vpow.pop %v1612
  %v1614 = vadd.f32 %v1613, 1.0
  %v1615 = vrcp.pop %v1614
  %v1616 = vmul.f32 1.0, %v1615
  %v1617 = vmul.f32 %v1605, %v1590
  %v1618 = vmul.f32 %v1596, %v1608
  %v1619 = vadd.f32 %v1617, %v1618
  %v1620 = vtanh.pop %v1619
  %v1621 = vmul.f32 %v1616, %v1620
  %1622 = vst [vmem:[#allocation4] sm:$0x3] %v1621
  %1623 = vst [vmem:[#allocation5] sm:$0x3] %v1619
  %s1624 = scalar_lea.vmem %s4, 8
  %1625 = vst [vmem:[%s1624] sm:$0x3] %v1621
  %s1626 = scalar_lea.vmem %s0, 48
  %v1627 = vld [vmem:[%s1626] sm:$0xff]
  %v1628 = vld [vmem:[#allocation2] sm:$0x3]
  %v1629 = vld [vmem:[%s1] sm:$0xff]
  %v1630 = vld [vmem:[%s1 + $0x8] sm:$0xff]
  %v1631 = vld [vmem:[%s1 + $0x10] sm:$0xff]
  %v1632 = vld [vmem:[%s1 + $0x18] sm:$0xff]
  %v1633 = vld [vmem:[%s1 + $0x20] sm:$0xff]
  %v1634 = vld [vmem:[%s1 + $0x28] sm:$0xff]
  %v1635 = vld [vmem:[%s1 + $0x30] sm:$0xff]
  %v1636 = vld [vmem:[%s1 + $0x38] sm:$0xff]
  %v1637 = vld [vmem:[%s1 + $0x40] sm:$0xff]
  %v1638 = vld [vmem:[%s1 + $0x48] sm:$0xff]
  %v1639 = vld [vmem:[%s1 + $0x50] sm:$0xff]
  %v1640 = vld [vmem:[%s1 + $0x58] sm:$0xff]
  %v1641 = vld [vmem:[%s1 + $0x60] sm:$0xff]
  %v1642 = vld [vmem:[%s1 + $0x68] sm:$0xff]
  %v1643 = vld [vmem:[%s1 + $0x70] sm:$0xff]
  %v1644 = vld [vmem:[%s1 + $0x78] sm:$0xff]
  %v1645 = vld [vmem:[%s1 + $0x80] sm:$0xff]
  %v1646 = vld [vmem:[%s1 + $0x88] sm:$0xff]
  %v1647 = vld [vmem:[%s1 + $0x90] sm:$0xff]
  %v1648 = vld [vmem:[%s1 + $0x98] sm:$0xff]
  %v1649 = vld [vmem:[%s1 + $0xa0] sm:$0xff]
  %v1650 = vld [vmem:[%s1 + $0xa8] sm:$0xff]
  %v1651 = vld [vmem:[%s1 + $0xb0] sm:$0xff]
  %v1652 = vld [vmem:[%s1 + $0xb8] sm:$0xff]
  %v1653 = vld [vmem:[%s1 + $0xc0] sm:$0xff]
  %v1654 = vld [vmem:[%s1 + $0xc8] sm:$0xff]
  %v1655 = vld [vmem:[%s1 + $0xd0] sm:$0xff]
  %v1656 = vld [vmem:[%s1 + $0xd8] sm:$0xff]
  %v1657 = vld [vmem:[%s1 + $0xe0] sm:$0xff]
  %v1658 = vld [vmem:[%s1 + $0xe8] sm:$0xff]
  %v1659 = vld [vmem:[%s1 + $0xf0] sm:$0xff]
  %v1660 = vld [vmem:[%s1 + $0xf8] sm:$0xff]
  %v1661 = vld [vmem:[%s1 + $0x100] sm:$0xff]
  %v1662 = vld [vmem:[%s1 + $0x108] sm:$0xff]
  %v1663 = vld [vmem:[%s1 + $0x110] sm:$0xff]
  %v1664 = vld [vmem:[%s1 + $0x118] sm:$0xff]
  %v1665 = vld [vmem:[%s1 + $0x120] sm:$0xff]
  %v1666 = vld [vmem:[%s1 + $0x128] sm:$0xff]
  %v1667 = vld [vmem:[%s1 + $0x130] sm:$0xff]
  %v1668 = vld [vmem:[%s1 + $0x138] sm:$0xff]
  %v1669 = vld [vmem:[%s1 + $0x140] sm:$0xff]
  %v1670 = vld [vmem:[%s1 + $0x148] sm:$0xff]
  %v1671 = vld [vmem:[%s1 + $0x150] sm:$0xff]
  %v1672 = vld [vmem:[%s1 + $0x158] sm:$0xff]
  %v1673 = vld [vmem:[%s1 + $0x160] sm:$0xff]
  %v1674 = vld [vmem:[%s1 + $0x168] sm:$0xff]
  %v1675 = vld [vmem:[%s1 + $0x170] sm:$0xff]
  %v1676 = vld [vmem:[%s1 + $0x178] sm:$0xff]
  %v1677 = vld [vmem:[%s1 + $0x180] sm:$0xff]
  %v1678 = vld [vmem:[%s1 + $0x188] sm:$0xff]
  %v1679 = vld [vmem:[%s1 + $0x190] sm:$0xff]
  %v1680 = vld [vmem:[%s1 + $0x198] sm:$0xff]
  %v1681 = vld [vmem:[%s1 + $0x1a0] sm:$0xff]
  %v1682 = vld [vmem:[%s1 + $0x1a8] sm:$0xff]
  %v1683 = vld [vmem:[%s1 + $0x1b0] sm:$0xff]
  %v1684 = vld [vmem:[%s1 + $0x1b8] sm:$0xff]
  %v1685 = vld [vmem:[%s1 + $0x1c0] sm:$0xff]
  %v1686 = vld [vmem:[%s1 + $0x1c8] sm:$0xff]
  %v1687 = vld [vmem:[%s1 + $0x1d0] sm:$0xff]
  %v1688 = vld [vmem:[%s1 + $0x1d8] sm:$0xff]
  %v1689 = vld [vmem:[%s1 + $0x1e0] sm:$0xff]
  %v1690 = vld [vmem:[%s1 + $0x1e8] sm:$0xff]
  %v1691 = vld [vmem:[%s1 + $0x1f0] sm:$0xff]
  %v1692 = vld [vmem:[%s1 + $0x1f8] sm:$0xff]
  %1693 = vmatprep.subr.mxu0 %v1690
  %1694 = vmatpush1.msra.mxu0 %v1689
  %1695 = vmatprep.subr.mxu0 %v1686
  %1696 = vmatpush1.msra.mxu0 %v1685
  %1697 = vmatprep.subr.mxu0 %v1682
  %1698 = vmatpush1.msra.mxu0 %v1681
  %1699 = vmatprep.subr.mxu0 %v1678
  %1700 = vmatpush1.msra.mxu0 %v1677
  %1701 = vmatprep.subr.mxu0 %v1674
  %1702 = vmatpush1.msra.mxu0 %v1673
  %1703 = vmatprep.subr.mxu0 %v1670
  %1704 = vmatpush1.msra.mxu0 %v1669
  %1705 = vmatprep.subr.mxu0 %v1666
  %1706 = vmatpush1.msra.mxu0 %v1665
  %1707 = vmatprep.subr.mxu0 %v1662
  %1708 = vmatpush1.msra.mxu0 %v1661
  %1709 = vmatprep.subr.mxu0 %v1658
  %1710 = vmatpush1.msra.mxu0 %v1657
  %1711 = vmatprep.subr.mxu0 %v1654
  %1712 = vmatpush1.msra.mxu0 %v1653
  %1713 = vmatprep.subr.mxu0 %v1650
  %1714 = vmatpush1.msra.mxu0 %v1649
  %1715 = vmatprep.subr.mxu0 %v1646
  %1716 = vmatpush1.msra.mxu0 %v1645
  %1717 = vmatprep.subr.mxu0 %v1642
  %1718 = vmatpush1.msra.mxu0 %v1641
  %1719 = vmatprep.subr.mxu0 %v1638
  %1720 = vmatpush1.msra.mxu0 %v1637
  %1721 = vmatprep.subr.mxu0 %v1634
  %1722 = vmatpush1.msra.mxu0 %v1633
  %1723 = vmatprep.subr.mxu0 %v1630
  %1724 = vmatpush1.msra.mxu0 %v1629
  %1725 = vmatprep.subr.mxu0 0.0
  %1726 = vmatpush2.msra.mxu0 0.0
  %1727 = vmatprep.subr.mxu0 0.0
  %1728 = vmatpush2.msra.mxu0 0.0
  %1729 = vmatprep.subr.mxu0 0.0
  %1730 = vmatpush2.msra.mxu0 0.0
  %1731 = vmatprep.subr.mxu0 0.0
  %1732 = vmatpush2.msra.mxu0 0.0
  %1733 = vmatprep.subr.mxu0 0.0
  %1734 = vmatpush2.msra.mxu0 0.0
  %1735 = vmatprep.subr.mxu0 0.0
  %1736 = vmatpush2.msra.mxu0 0.0
  %1737 = vmatprep.subr.mxu0 0.0
  %1738 = vmatpush2.msra.mxu0 0.0
  %1739 = vmatprep.subr.mxu0 0.0
  %1740 = vmatpush2.msra.mxu0 0.0
  %1741 = vmatprep.subr.mxu0 0.0
  %1742 = vmatpush2.msra.mxu0 0.0
  %1743 = vmatprep.subr.mxu0 0.0
  %1744 = vmatpush2.msra.mxu0 0.0
  %1745 = vmatprep.subr.mxu0 0.0
  %1746 = vmatpush2.msra.mxu0 0.0
  %1747 = vmatprep.subr.mxu0 0.0
  %1748 = vmatpush2.msra.mxu0 0.0
  %1749 = vmatprep.subr.mxu0 0.0
  %1750 = vmatpush2.msra.mxu0 0.0
  %1751 = vmatprep.subr.mxu0 0.0
  %1752 = vmatpush2.msra.mxu0 0.0
  %1753 = vmatprep.subr.mxu0 0.0
  %1754 = vmatpush2.msra.mxu0 0.0
  %1755 = vmatprep.subr.mxu0 0.0
  %1756 = vmatpush2.msra.mxu0 0.0
  %1757 = vmatprep.mubr.f32.mxu0 0.0
  %1758 = vmatmul.mubr.f32.gmra.mxu0 %v1628
  %v1759 = vpop.f32.mrf.mxu0
  %v1760 = vadd.f32 0.0, %v1759
  %v1761 = vpop.f32.mrf.mxu0
  %v1762 = vadd.f32 0.0, %v1761
  %1763 = vdwg.mxu0
  %1764 = vmatprep.subr.mxu0 %v1692
  %1765 = vmatpush1.msra.mxu0 %v1691
  %1766 = vmatprep.subr.mxu0 %v1688
  %1767 = vmatpush1.msra.mxu0 %v1687
  %1768 = vmatprep.subr.mxu0 %v1684
  %1769 = vmatpush1.msra.mxu0 %v1683
  %1770 = vmatprep.subr.mxu0 %v1680
  %1771 = vmatpush1.msra.mxu0 %v1679
  %1772 = vmatprep.subr.mxu0 %v1676
  %1773 = vmatpush1.msra.mxu0 %v1675
  %1774 = vmatprep.subr.mxu0 %v1672
  %1775 = vmatpush1.msra.mxu0 %v1671
  %1776 = vmatprep.subr.mxu0 %v1668
  %1777 = vmatpush1.msra.mxu0 %v1667
  %1778 = vmatprep.subr.mxu0 %v1664
  %1779 = vmatpush1.msra.mxu0 %v1663
  %1780 = vmatprep.subr.mxu0 %v1660
  %1781 = vmatpush1.msra.mxu0 %v1659
  %1782 = vmatprep.subr.mxu0 %v1656
  %1783 = vmatpush1.msra.mxu0 %v1655
  %1784 = vmatprep.subr.mxu0 %v1652
  %1785 = vmatpush1.msra.mxu0 %v1651
  %1786 = vmatprep.subr.mxu0 %v1648
  %1787 = vmatpush1.msra.mxu0 %v1647
  %1788 = vmatprep.subr.mxu0 %v1644
  %1789 = vmatpush1.msra.mxu0 %v1643
  %1790 = vmatprep.subr.mxu0 %v1640
  %1791 = vmatpush1.msra.mxu0 %v1639
  %1792 = vmatprep.subr.mxu0 %v1636
  %1793 = vmatpush1.msra.mxu0 %v1635
  %1794 = vmatprep.subr.mxu0 %v1632
  %1795 = vmatpush1.msra.mxu0 %v1631
  %1796 = vmatprep.subr.mxu0 0.0
  %1797 = vmatpush2.msra.mxu0 0.0
  %1798 = vmatprep.subr.mxu0 0.0
  %1799 = vmatpush2.msra.mxu0 0.0
  %1800 = vmatprep.subr.mxu0 0.0
  %1801 = vmatpush2.msra.mxu0 0.0
  %1802 = vmatprep.subr.mxu0 0.0
  %1803 = vmatpush2.msra.mxu0 0.0
  %1804 = vmatprep.subr.mxu0 0.0
  %1805 = vmatpush2.msra.mxu0 0.0
  %1806 = vmatprep.subr.mxu0 0.0
  %1807 = vmatpush2.msra.mxu0 0.0
  %1808 = vmatprep.subr.mxu0 0.0
  %1809 = vmatpush2.msra.mxu0 0.0
  %1810 = vmatprep.subr.mxu0 0.0
  %1811 = vmatpush2.msra.mxu0 0.0
  %1812 = vmatprep.subr.mxu0 0.0
  %1813 = vmatpush2.msra.mxu0 0.0
  %1814 = vmatprep.subr.mxu0 0.0
  %1815 = vmatpush2.msra.mxu0 0.0
  %1816 = vmatprep.subr.mxu0 0.0
  %1817 = vmatpush2.msra.mxu0 0.0
  %1818 = vmatprep.subr.mxu0 0.0
  %1819 = vmatpush2.msra.mxu0 0.0
  %1820 = vmatprep.subr.mxu0 0.0
  %1821 = vmatpush2.msra.mxu0 0.0
  %1822 = vmatprep.subr.mxu0 0.0
  %1823 = vmatpush2.msra.mxu0 0.0
  %1824 = vmatprep.subr.mxu0 0.0
  %1825 = vmatpush2.msra.mxu0 0.0
  %1826 = vmatprep.subr.mxu0 0.0
  %1827 = vmatpush2.msra.mxu0 0.0
  %1828 = vmatprep.mubr.f32.mxu0 0.0
  %1829 = vmatmul.mubr.f32.gmra.mxu0 %v1628
  %v1830 = vpop.f32.mrf.mxu0
  %v1831 = vadd.f32 0.0, %v1830
  %v1832 = vpop.f32.mrf.mxu0
  %v1833 = vadd.f32 0.0, %v1832
  %1834 = vdwg.mxu0
  %v1839 = vcombine.low %v1760, %v1762
  %v1840 = vcombine.low %v1831, %v1833
  %v1842 = vunpack.c.l.s4 1983009808
  %v1843 = vunpack.c.0.s8 %v1842
  %v1844 = vlaneseq
  %v1845 = vshrl.u32 %v1844, 7
  %v1846 = vsub.s32 %v1843, %v1845
  %v1847 = vrot.slane %v1839, %v1846
  %v1849 = vunpack.c.l.s4 1983009808
  %v1850 = vunpack.c.0.s8 %v1849
  %v1851 = vlaneseq
  %v1852 = vshrl.u32 %v1851, 7
  %v1853 = vsub.s32 %v1850, %v1852
  %v1854 = vrot.slane %v1840, %v1853
  %v1855 = vcombine.low %v1847, %v1854
  %v1857 = vadd.f32 %v1627, %v1855
  %v1858 = vld [vmem:[#allocation3] sm:$0x3]
  %v1859 = vxor.u32 %v1857, 2147483648
  %v1860 = vmul.f32 %v1859, 1.442695
  %v1861 = vpow.pop %v1860
  %v1862 = vadd.f32 %v1861, 1.0
  %v1863 = vrcp.pop %v1862
  %v1864 = vmul.f32 1.0, %v1863
  %v1866 = vrot.slane %v1857, 2
  %v1868 = vxor.u32 %v1866, 2147483648
  %v1869 = vmul.f32 %v1868, 1.442695
  %v1870 = vpow.pop %v1869
  %v1871 = vadd.f32 %v1870, 1.0
  %v1872 = vrcp.pop %v1871
  %v1873 = vmul.f32 1.0, %v1872
  %v1874 = vrot.slane %v1857, 4
  %v1876 = vtanh.pop %v1874
  %v1877 = vrot.slane %v1857, 6
  %v1879 = vxor.u32 %v1877, 2147483648
  %v1880 = vmul.f32 %v1879, 1.442695
  %v1881 = vpow.pop %v1880
  %v1882 = vadd.f32 %v1881, 1.0
  %v1883 = vrcp.pop %v1882
  %v1884 = vmul.f32 1.0, %v1883
  %v1885 = vmul.f32 %v1873, %v1858
  %v1886 = vmul.f32 %v1864, %v1876
  %v1887 = vadd.f32 %v1885, %v1886
  %v1888 = vtanh.pop %v1887
  %v1889 = vmul.f32 %v1884, %v1888
  %1890 = vst [vmem:[#allocation2] sm:$0x3] %v1889
  %1891 = vst [vmem:[#allocation3] sm:$0x3] %v1887
  %s1892 = scalar_lea.vmem %s3, 6
  %1893 = vst [vmem:[%s1892] sm:$0x3] %v1889
  %v1894 = vld [vmem:[%s1626 + $0x8] sm:$0xff]
  %v1895 = vld [vmem:[#allocation4] sm:$0x3]
  %v1896 = vld [vmem:[%s2] sm:$0xff]
  %v1897 = vld [vmem:[%s2 + $0x8] sm:$0xff]
  %v1898 = vld [vmem:[%s2 + $0x10] sm:$0xff]
  %v1899 = vld [vmem:[%s2 + $0x18] sm:$0xff]
  %v1900 = vld [vmem:[%s2 + $0x20] sm:$0xff]
  %v1901 = vld [vmem:[%s2 + $0x28] sm:$0xff]
  %v1902 = vld [vmem:[%s2 + $0x30] sm:$0xff]
  %v1903 = vld [vmem:[%s2 + $0x38] sm:$0xff]
  %v1904 = vld [vmem:[%s2 + $0x40] sm:$0xff]
  %v1905 = vld [vmem:[%s2 + $0x48] sm:$0xff]
  %v1906 = vld [vmem:[%s2 + $0x50] sm:$0xff]
  %v1907 = vld [vmem:[%s2 + $0x58] sm:$0xff]
  %v1908 = vld [vmem:[%s2 + $0x60] sm:$0xff]
  %v1909 = vld [vmem:[%s2 + $0x68] sm:$0xff]
  %v1910 = vld [vmem:[%s2 + $0x70] sm:$0xff]
  %v1911 = vld [vmem:[%s2 + $0x78] sm:$0xff]
  %v1912 = vld [vmem:[%s2 + $0x80] sm:$0xff]
  %v1913 = vld [vmem:[%s2 + $0x88] sm:$0xff]
  %v1914 = vld [vmem:[%s2 + $0x90] sm:$0xff]
  %v1915 = vld [vmem:[%s2 + $0x98] sm:$0xff]
  %v1916 = vld [vmem:[%s2 + $0xa0] sm:$0xff]
  %v1917 = vld [vmem:[%s2 + $0xa8] sm:$0xff]
  %v1918 = vld [vmem:[%s2 + $0xb0] sm:$0xff]
  %v1919 = vld [vmem:[%s2 + $0xb8] sm:$0xff]
  %v1920 = vld [vmem:[%s2 + $0xc0] sm:$0xff]
  %v1921 = vld [vmem:[%s2 + $0xc8] sm:$0xff]
  %v1922 = vld [vmem:[%s2 + $0xd0] sm:$0xff]
  %v1923 = vld [vmem:[%s2 + $0xd8] sm:$0xff]
  %v1924 = vld [vmem:[%s2 + $0xe0] sm:$0xff]
  %v1925 = vld [vmem:[%s2 + $0xe8] sm:$0xff]
  %v1926 = vld [vmem:[%s2 + $0xf0] sm:$0xff]
  %v1927 = vld [vmem:[%s2 + $0xf8] sm:$0xff]
  %v1928 = vld [vmem:[%s2 + $0x100] sm:$0xff]
  %v1929 = vld [vmem:[%s2 + $0x108] sm:$0xff]
  %v1930 = vld [vmem:[%s2 + $0x110] sm:$0xff]
  %v1931 = vld [vmem:[%s2 + $0x118] sm:$0xff]
  %v1932 = vld [vmem:[%s2 + $0x120] sm:$0xff]
  %v1933 = vld [vmem:[%s2 + $0x128] sm:$0xff]
  %v1934 = vld [vmem:[%s2 + $0x130] sm:$0xff]
  %v1935 = vld [vmem:[%s2 + $0x138] sm:$0xff]
  %v1936 = vld [vmem:[%s2 + $0x140] sm:$0xff]
  %v1937 = vld [vmem:[%s2 + $0x148] sm:$0xff]
  %v1938 = vld [vmem:[%s2 + $0x150] sm:$0xff]
  %v1939 = vld [vmem:[%s2 + $0x158] sm:$0xff]
  %v1940 = vld [vmem:[%s2 + $0x160] sm:$0xff]
  %v1941 = vld [vmem:[%s2 + $0x168] sm:$0xff]
  %v1942 = vld [vmem:[%s2 + $0x170] sm:$0xff]
  %v1943 = vld [vmem:[%s2 + $0x178] sm:$0xff]
  %v1944 = vld [vmem:[%s2 + $0x180] sm:$0xff]
  %v1945 = vld [vmem:[%s2 + $0x188] sm:$0xff]
  %v1946 = vld [vmem:[%s2 + $0x190] sm:$0xff]
  %v1947 = vld [vmem:[%s2 + $0x198] sm:$0xff]
  %v1948 = vld [vmem:[%s2 + $0x1a0] sm:$0xff]
  %v1949 = vld [vmem:[%s2 + $0x1a8] sm:$0xff]
  %v1950 = vld [vmem:[%s2 + $0x1b0] sm:$0xff]
  %v1951 = vld [vmem:[%s2 + $0x1b8] sm:$0xff]
  %v1952 = vld [vmem:[%s2 + $0x1c0] sm:$0xff]
  %v1953 = vld [vmem:[%s2 + $0x1c8] sm:$0xff]
  %v1954 = vld [vmem:[%s2 + $0x1d0] sm:$0xff]
  %v1955 = vld [vmem:[%s2 + $0x1d8] sm:$0xff]
  %v1956 = vld [vmem:[%s2 + $0x1e0] sm:$0xff]
  %v1957 = vld [vmem:[%s2 + $0x1e8] sm:$0xff]
  %v1958 = vld [vmem:[%s2 + $0x1f0] sm:$0xff]
  %v1959 = vld [vmem:[%s2 + $0x1f8] sm:$0xff]
  %1960 = vmatprep.subr.mxu0 %v1957
  %1961 = vmatpush1.msra.mxu0 %v1956
  %1962 = vmatprep.subr.mxu0 %v1953
  %1963 = vmatpush1.msra.mxu0 %v1952
  %1964 = vmatprep.subr.mxu0 %v1949
  %1965 = vmatpush1.msra.mxu0 %v1948
  %1966 = vmatprep.subr.mxu0 %v1945
  %1967 = vmatpush1.msra.mxu0 %v1944
  %1968 = vmatprep.subr.mxu0 %v1941
  %1969 = vmatpush1.msra.mxu0 %v1940
  %1970 = vmatprep.subr.mxu0 %v1937
  %1971 = vmatpush1.msra.mxu0 %v1936
  %1972 = vmatprep.subr.mxu0 %v1933
  %1973 = vmatpush1.msra.mxu0 %v1932
  %1974 = vmatprep.subr.mxu0 %v1929
  %1975 = vmatpush1.msra.mxu0 %v1928
  %1976 = vmatprep.subr.mxu0 %v1925
  %1977 = vmatpush1.msra.mxu0 %v1924
  %1978 = vmatprep.subr.mxu0 %v1921
  %1979 = vmatpush1.msra.mxu0 %v1920
  %1980 = vmatprep.subr.mxu0 %v1917
  %1981 = vmatpush1.msra.mxu0 %v1916
  %1982 = vmatprep.subr.mxu0 %v1913
  %1983 = vmatpush1.msra.mxu0 %v1912
  %1984 = vmatprep.subr.mxu0 %v1909
  %1985 = vmatpush1.msra.mxu0 %v1908
  %1986 = vmatprep.subr.mxu0 %v1905
  %1987 = vmatpush1.msra.mxu0 %v1904
  %1988 = vmatprep.subr.mxu0 %v1901
  %1989 = vmatpush1.msra.mxu0 %v1900
  %1990 = vmatprep.subr.mxu0 %v1897
  %1991 = vmatpush1.msra.mxu0 %v1896
  %1992 = vmatprep.subr.mxu0 0.0
  %1993 = vmatpush2.msra.mxu0 0.0
  %1994 = vmatprep.subr.mxu0 0.0
  %1995 = vmatpush2.msra.mxu0 0.0
  %1996 = vmatprep.subr.mxu0 0.0
  %1997 = vmatpush2.msra.mxu0 0.0
  %1998 = vmatprep.subr.mxu0 0.0
  %1999 = vmatpush2.msra.mxu0 0.0
  %2000 = vmatprep.subr.mxu0 0.0
  %2001 = vmatpush2.msra.mxu0 0.0
  %2002 = vmatprep.subr.mxu0 0.0
  %2003 = vmatpush2.msra.mxu0 0.0
  %2004 = vmatprep.subr.mxu0 0.0
  %2005 = vmatpush2.msra.mxu0 0.0
  %2006 = vmatprep.subr.mxu0 0.0
  %2007 = vmatpush2.msra.mxu0 0.0
  %2008 = vmatprep.subr.mxu0 0.0
  %2009 = vmatpush2.msra.mxu0 0.0
  %2010 = vmatprep.subr.mxu0 0.0
  %2011 = vmatpush2.msra.mxu0 0.0
  %2012 = vmatprep.subr.mxu0 0.0
  %2013 = vmatpush2.msra.mxu0 0.0
  %2014 = vmatprep.subr.mxu0 0.0
  %2015 = vmatpush2.msra.mxu0 0.0
  %2016 = vmatprep.subr.mxu0 0.0
  %2017 = vmatpush2.msra.mxu0 0.0
  %2018 = vmatprep.subr.mxu0 0.0
  %2019 = vmatpush2.msra.mxu0 0.0
  %2020 = vmatprep.subr.mxu0 0.0
  %2021 = vmatpush2.msra.mxu0 0.0
  %2022 = vmatprep.subr.mxu0 0.0
  %2023 = vmatpush2.msra.mxu0 0.0
  %2024 = vmatprep.mubr.f32.mxu0 0.0
  %2025 = vmatmul.mubr.f32.gmra.mxu0 %v1895
  %v2026 = vpop.f32.mrf.mxu0
  %v2027 = vadd.f32 0.0, %v2026
  %v2028 = vpop.f32.mrf.mxu0
  %v2029 = vadd.f32 0.0, %v2028
  %2030 = vdwg.mxu0
  %2031 = vmatprep.subr.mxu0 %v1959
  %2032 = vmatpush1.msra.mxu0 %v1958
  %2033 = vmatprep.subr.mxu0 %v1955
  %2034 = vmatpush1.msra.mxu0 %v1954
  %2035 = vmatprep.subr.mxu0 %v1951
  %2036 = vmatpush1.msra.mxu0 %v1950
  %2037 = vmatprep.subr.mxu0 %v1947
  %2038 = vmatpush1.msra.mxu0 %v1946
  %2039 = vmatprep.subr.mxu0 %v1943
  %2040 = vmatpush1.msra.mxu0 %v1942
  %2041 = vmatprep.subr.mxu0 %v1939
  %2042 = vmatpush1.msra.mxu0 %v1938
  %2043 = vmatprep.subr.mxu0 %v1935
  %2044 = vmatpush1.msra.mxu0 %v1934
  %2045 = vmatprep.subr.mxu0 %v1931
  %2046 = vmatpush1.msra.mxu0 %v1930
  %2047 = vmatprep.subr.mxu0 %v1927
  %2048 = vmatpush1.msra.mxu0 %v1926
  %2049 = vmatprep.subr.mxu0 %v1923
  %2050 = vmatpush1.msra.mxu0 %v1922
  %2051 = vmatprep.subr.mxu0 %v1919
  %2052 = vmatpush1.msra.mxu0 %v1918
  %2053 = vmatprep.subr.mxu0 %v1915
  %2054 = vmatpush1.msra.mxu0 %v1914
  %2055 = vmatprep.subr.mxu0 %v1911
  %2056 = vmatpush1.msra.mxu0 %v1910
  %2057 = vmatprep.subr.mxu0 %v1907
  %2058 = vmatpush1.msra.mxu0 %v1906
  %2059 = vmatprep.subr.mxu0 %v1903
  %2060 = vmatpush1.msra.mxu0 %v1902
  %2061 = vmatprep.subr.mxu0 %v1899
  %2062 = vmatpush1.msra.mxu0 %v1898
  %2063 = vmatprep.subr.mxu0 0.0
  %2064 = vmatpush2.msra.mxu0 0.0
  %2065 = vmatprep.subr.mxu0 0.0
  %2066 = vmatpush2.msra.mxu0 0.0
  %2067 = vmatprep.subr.mxu0 0.0
  %2068 = vmatpush2.msra.mxu0 0.0
  %2069 = vmatprep.subr.mxu0 0.0
  %2070 = vmatpush2.msra.mxu0 0.0
  %2071 = vmatprep.subr.mxu0 0.0
  %2072 = vmatpush2.msra.mxu0 0.0
  %2073 = vmatprep.subr.mxu0 0.0
  %2074 = vmatpush2.msra.mxu0 0.0
  %2075 = vmatprep.subr.mxu0 0.0
  %2076 = vmatpush2.msra.mxu0 0.0
  %2077 = vmatprep.subr.mxu0 0.0
  %2078 = vmatpush2.msra.mxu0 0.0
  %2079 = vmatprep.subr.mxu0 0.0
  %2080 = vmatpush2.msra.mxu0 0.0
  %2081 = vmatprep.subr.mxu0 0.0
  %2082 = vmatpush2.msra.mxu0 0.0
  %2083 = vmatprep.subr.mxu0 0.0
  %2084 = vmatpush2.msra.mxu0 0.0
  %2085 = vmatprep.subr.mxu0 0.0
  %2086 = vmatpush2.msra.mxu0 0.0
  %2087 = vmatprep.subr.mxu0 0.0
  %2088 = vmatpush2.msra.mxu0 0.0
  %2089 = vmatprep.subr.mxu0 0.0
  %2090 = vmatpush2.msra.mxu0 0.0
  %2091 = vmatprep.subr.mxu0 0.0
  %2092 = vmatpush2.msra.mxu0 0.0
  %2093 = vmatprep.subr.mxu0 0.0
  %2094 = vmatpush2.msra.mxu0 0.0
  %2095 = vmatprep.mubr.f32.mxu0 0.0
  %2096 = vmatmul.mubr.f32.gmra.mxu0 %v1895
  %v2097 = vpop.f32.mrf.mxu0
  %v2098 = vadd.f32 0.0, %v2097
  %v2099 = vpop.f32.mrf.mxu0
  %v2100 = vadd.f32 0.0, %v2099
  %2101 = vdwg.mxu0
  %v2106 = vcombine.low %v2027, %v2029
  %v2107 = vcombine.low %v2098, %v2100
  %v2109 = vunpack.c.l.s4 1983009808
  %v2110 = vunpack.c.0.s8 %v2109
  %v2111 = vlaneseq
  %v2112 = vshrl.u32 %v2111, 7
  %v2113 = vsub.s32 %v2110, %v2112
  %v2114 = vrot.slane %v2106, %v2113
  %v2116 = vunpack.c.l.s4 1983009808
  %v2117 = vunpack.c.0.s8 %v2116
  %v2118 = vlaneseq
  %v2119 = vshrl.u32 %v2118, 7
  %v2120 = vsub.s32 %v2117, %v2119
  %v2121 = vrot.slane %v2107, %v2120
  %v2122 = vcombine.low %v2114, %v2121
  %v2124 = vadd.f32 %v1894, %v2122
  %v2125 = vld [vmem:[#allocation5] sm:$0x3]
  %v2126 = vxor.u32 %v2124, 2147483648
  %v2127 = vmul.f32 %v2126, 1.442695
  %v2128 = vpow.pop %v2127
  %v2129 = vadd.f32 %v2128, 1.0
  %v2130 = vrcp.pop %v2129
  %v2131 = vmul.f32 1.0, %v2130
  %v2133 = vrot.slane %v2124, 2
  %v2135 = vxor.u32 %v2133, 2147483648
  %v2136 = vmul.f32 %v2135, 1.442695
  %v2137 = vpow.pop %v2136
  %v2138 = vadd.f32 %v2137, 1.0
  %v2139 = vrcp.pop %v2138
  %v2140 = vmul.f32 1.0, %v2139
  %v2141 = vrot.slane %v2124, 4
  %v2143 = vtanh.pop %v2141
  %v2144 = vrot.slane %v2124, 6
  %v2146 = vxor.u32 %v2144, 2147483648
  %v2147 = vmul.f32 %v2146, 1.442695
  %v2148 = vpow.pop %v2147
  %v2149 = vadd.f32 %v2148, 1.0
  %v2150 = vrcp.pop %v2149
  %v2151 = vmul.f32 1.0, %v2150
  %v2152 = vmul.f32 %v2140, %v2125
  %v2153 = vmul.f32 %v2131, %v2143
  %v2154 = vadd.f32 %v2152, %v2153
  %v2155 = vtanh.pop %v2154
  %v2156 = vmul.f32 %v2151, %v2155
  %2157 = vst [vmem:[#allocation4] sm:$0x3] %v2156
  %2158 = vst [vmem:[#allocation5] sm:$0x3] %v2154
  %s2159 = scalar_lea.vmem %s4, 6
  %2160 = vst [vmem:[%s2159] sm:$0x3] %v2156
  %v2161 = vld [vmem:[%s1358] sm:$0xff]
  %v2162 = vld [vmem:[#allocation2] sm:$0x3]
  %v2163 = vld [vmem:[%s1] sm:$0xff]
  %v2164 = vld [vmem:[%s1 + $0x8] sm:$0xff]
  %v2165 = vld [vmem:[%s1 + $0x10] sm:$0xff]
  %v2166 = vld [vmem:[%s1 + $0x18] sm:$0xff]
  %v2167 = vld [vmem:[%s1 + $0x20] sm:$0xff]
  %v2168 = vld [vmem:[%s1 + $0x28] sm:$0xff]
  %v2169 = vld [vmem:[%s1 + $0x30] sm:$0xff]
  %v2170 = vld [vmem:[%s1 + $0x38] sm:$0xff]
  %v2171 = vld [vmem:[%s1 + $0x40] sm:$0xff]
  %v2172 = vld [vmem:[%s1 + $0x48] sm:$0xff]
  %v2173 = vld [vmem:[%s1 + $0x50] sm:$0xff]
  %v2174 = vld [vmem:[%s1 + $0x58] sm:$0xff]
  %v2175 = vld [vmem:[%s1 + $0x60] sm:$0xff]
  %v2176 = vld [vmem:[%s1 + $0x68] sm:$0xff]
  %v2177 = vld [vmem:[%s1 + $0x70] sm:$0xff]
  %v2178 = vld [vmem:[%s1 + $0x78] sm:$0xff]
  %v2179 = vld [vmem:[%s1 + $0x80] sm:$0xff]
  %v2180 = vld [vmem:[%s1 + $0x88] sm:$0xff]
  %v2181 = vld [vmem:[%s1 + $0x90] sm:$0xff]
  %v2182 = vld [vmem:[%s1 + $0x98] sm:$0xff]
  %v2183 = vld [vmem:[%s1 + $0xa0] sm:$0xff]
  %v2184 = vld [vmem:[%s1 + $0xa8] sm:$0xff]
  %v2185 = vld [vmem:[%s1 + $0xb0] sm:$0xff]
  %v2186 = vld [vmem:[%s1 + $0xb8] sm:$0xff]
  %v2187 = vld [vmem:[%s1 + $0xc0] sm:$0xff]
  %v2188 = vld [vmem:[%s1 + $0xc8] sm:$0xff]
  %v2189 = vld [vmem:[%s1 + $0xd0] sm:$0xff]
  %v2190 = vld [vmem:[%s1 + $0xd8] sm:$0xff]
  %v2191 = vld [vmem:[%s1 + $0xe0] sm:$0xff]
  %v2192 = vld [vmem:[%s1 + $0xe8] sm:$0xff]
  %v2193 = vld [vmem:[%s1 + $0xf0] sm:$0xff]
  %v2194 = vld [vmem:[%s1 + $0xf8] sm:$0xff]
  %v2195 = vld [vmem:[%s1 + $0x100] sm:$0xff]
  %v2196 = vld [vmem:[%s1 + $0x108] sm:$0xff]
  %v2197 = vld [vmem:[%s1 + $0x110] sm:$0xff]
  %v2198 = vld [vmem:[%s1 + $0x118] sm:$0xff]
  %v2199 = vld [vmem:[%s1 + $0x120] sm:$0xff]
  %v2200 = vld [vmem:[%s1 + $0x128] sm:$0xff]
  %v2201 = vld [vmem:[%s1 + $0x130] sm:$0xff]
  %v2202 = vld [vmem:[%s1 + $0x138] sm:$0xff]
  %v2203 = vld [vmem:[%s1 + $0x140] sm:$0xff]
  %v2204 = vld [vmem:[%s1 + $0x148] sm:$0xff]
  %v2205 = vld [vmem:[%s1 + $0x150] sm:$0xff]
  %v2206 = vld [vmem:[%s1 + $0x158] sm:$0xff]
  %v2207 = vld [vmem:[%s1 + $0x160] sm:$0xff]
  %v2208 = vld [vmem:[%s1 + $0x168] sm:$0xff]
  %v2209 = vld [vmem:[%s1 + $0x170] sm:$0xff]
  %v2210 = vld [vmem:[%s1 + $0x178] sm:$0xff]
  %v2211 = vld [vmem:[%s1 + $0x180] sm:$0xff]
  %v2212 = vld [vmem:[%s1 + $0x188] sm:$0xff]
  %v2213 = vld [vmem:[%s1 + $0x190] sm:$0xff]
  %v2214 = vld [vmem:[%s1 + $0x198] sm:$0xff]
  %v2215 = vld [vmem:[%s1 + $0x1a0] sm:$0xff]
  %v2216 = vld [vmem:[%s1 + $0x1a8] sm:$0xff]
  %v2217 = vld [vmem:[%s1 + $0x1b0] sm:$0xff]
  %v2218 = vld [vmem:[%s1 + $0x1b8] sm:$0xff]
  %v2219 = vld [vmem:[%s1 + $0x1c0] sm:$0xff]
  %v2220 = vld [vmem:[%s1 + $0x1c8] sm:$0xff]
  %v2221 = vld [vmem:[%s1 + $0x1d0] sm:$0xff]
  %v2222 = vld [vmem:[%s1 + $0x1d8] sm:$0xff]
  %v2223 = vld [vmem:[%s1 + $0x1e0] sm:$0xff]
  %v2224 = vld [vmem:[%s1 + $0x1e8] sm:$0xff]
  %v2225 = vld [vmem:[%s1 + $0x1f0] sm:$0xff]
  %v2226 = vld [vmem:[%s1 + $0x1f8] sm:$0xff]
  %2227 = vmatprep.subr.mxu0 %v2224
  %2228 = vmatpush1.msra.mxu0 %v2223
  %2229 = vmatprep.subr.mxu0 %v2220
  %2230 = vmatpush1.msra.mxu0 %v2219
  %2231 = vmatprep.subr.mxu0 %v2216
  %2232 = vmatpush1.msra.mxu0 %v2215
  %2233 = vmatprep.subr.mxu0 %v2212
  %2234 = vmatpush1.msra.mxu0 %v2211
  %2235 = vmatprep.subr.mxu0 %v2208
  %2236 = vmatpush1.msra.mxu0 %v2207
  %2237 = vmatprep.subr.mxu0 %v2204
  %2238 = vmatpush1.msra.mxu0 %v2203
  %2239 = vmatprep.subr.mxu0 %v2200
  %2240 = vmatpush1.msra.mxu0 %v2199
  %2241 = vmatprep.subr.mxu0 %v2196
  %2242 = vmatpush1.msra.mxu0 %v2195
  %2243 = vmatprep.subr.mxu0 %v2192
  %2244 = vmatpush1.msra.mxu0 %v2191
  %2245 = vmatprep.subr.mxu0 %v2188
  %2246 = vmatpush1.msra.mxu0 %v2187
  %2247 = vmatprep.subr.mxu0 %v2184
  %2248 = vmatpush1.msra.mxu0 %v2183
  %2249 = vmatprep.subr.mxu0 %v2180
  %2250 = vmatpush1.msra.mxu0 %v2179
  %2251 = vmatprep.subr.mxu0 %v2176
  %2252 = vmatpush1.msra.mxu0 %v2175
  %2253 = vmatprep.subr.mxu0 %v2172
  %2254 = vmatpush1.msra.mxu0 %v2171
  %2255 = vmatprep.subr.mxu0 %v2168
  %2256 = vmatpush1.msra.mxu0 %v2167
  %2257 = vmatprep.subr.mxu0 %v2164
  %2258 = vmatpush1.msra.mxu0 %v2163
  %2259 = vmatprep.subr.mxu0 0.0
  %2260 = vmatpush2.msra.mxu0 0.0
  %2261 = vmatprep.subr.mxu0 0.0
  %2262 = vmatpush2.msra.mxu0 0.0
  %2263 = vmatprep.subr.mxu0 0.0
  %2264 = vmatpush2.msra.mxu0 0.0
  %2265 = vmatprep.subr.mxu0 0.0
  %2266 = vmatpush2.msra.mxu0 0.0
  %2267 = vmatprep.subr.mxu0 0.0
  %2268 = vmatpush2.msra.mxu0 0.0
  %2269 = vmatprep.subr.mxu0 0.0
  %2270 = vmatpush2.msra.mxu0 0.0
  %2271 = vmatprep.subr.mxu0 0.0
  %2272 = vmatpush2.msra.mxu0 0.0
  %2273 = vmatprep.subr.mxu0 0.0
  %2274 = vmatpush2.msra.mxu0 0.0
  %2275 = vmatprep.subr.mxu0 0.0
  %2276 = vmatpush2.msra.mxu0 0.0
  %2277 = vmatprep.subr.mxu0 0.0
  %2278 = vmatpush2.msra.mxu0 0.0
  %2279 = vmatprep.subr.mxu0 0.0
  %2280 = vmatpush2.msra.mxu0 0.0
  %2281 = vmatprep.subr.mxu0 0.0
  %2282 = vmatpush2.msra.mxu0 0.0
  %2283 = vmatprep.subr.mxu0 0.0
  %2284 = vmatpush2.msra.mxu0 0.0
  %2285 = vmatprep.subr.mxu0 0.0
  %2286 = vmatpush2.msra.mxu0 0.0
  %2287 = vmatprep.subr.mxu0 0.0
  %2288 = vmatpush2.msra.mxu0 0.0
  %2289 = vmatprep.subr.mxu0 0.0
  %2290 = vmatpush2.msra.mxu0 0.0
  %2291 = vmatprep.mubr.f32.mxu0 0.0
  %2292 = vmatmul.mubr.f32.gmra.mxu0 %v2162
  %v2293 = vpop.f32.mrf.mxu0
  %v2294 = vadd.f32 0.0, %v2293
  %v2295 = vpop.f32.mrf.mxu0
  %v2296 = vadd.f32 0.0, %v2295
  %2297 = vdwg.mxu0
  %2298 = vmatprep.subr.mxu0 %v2226
  %2299 = vmatpush1.msra.mxu0 %v2225
  %2300 = vmatprep.subr.mxu0 %v2222
  %2301 = vmatpush1.msra.mxu0 %v2221
  %2302 = vmatprep.subr.mxu0 %v2218
  %2303 = vmatpush1.msra.mxu0 %v2217
  %2304 = vmatprep.subr.mxu0 %v2214
  %2305 = vmatpush1.msra.mxu0 %v2213
  %2306 = vmatprep.subr.mxu0 %v2210
  %2307 = vmatpush1.msra.mxu0 %v2209
  %2308 = vmatprep.subr.mxu0 %v2206
  %2309 = vmatpush1.msra.mxu0 %v2205
  %2310 = vmatprep.subr.mxu0 %v2202
  %2311 = vmatpush1.msra.mxu0 %v2201
  %2312 = vmatprep.subr.mxu0 %v2198
  %2313 = vmatpush1.msra.mxu0 %v2197
  %2314 = vmatprep.subr.mxu0 %v2194
  %2315 = vmatpush1.msra.mxu0 %v2193
  %2316 = vmatprep.subr.mxu0 %v2190
  %2317 = vmatpush1.msra.mxu0 %v2189
  %2318 = vmatprep.subr.mxu0 %v2186
  %2319 = vmatpush1.msra.mxu0 %v2185
  %2320 = vmatprep.subr.mxu0 %v2182
  %2321 = vmatpush1.msra.mxu0 %v2181
  %2322 = vmatprep.subr.mxu0 %v2178
  %2323 = vmatpush1.msra.mxu0 %v2177
  %2324 = vmatprep.subr.mxu0 %v2174
  %2325 = vmatpush1.msra.mxu0 %v2173
  %2326 = vmatprep.subr.mxu0 %v2170
  %2327 = vmatpush1.msra.mxu0 %v2169
  %2328 = vmatprep.subr.mxu0 %v2166
  %2329 = vmatpush1.msra.mxu0 %v2165
  %2330 = vmatprep.subr.mxu0 0.0
  %2331 = vmatpush2.msra.mxu0 0.0
  %2332 = vmatprep.subr.mxu0 0.0
  %2333 = vmatpush2.msra.mxu0 0.0
  %2334 = vmatprep.subr.mxu0 0.0
  %2335 = vmatpush2.msra.mxu0 0.0
  %2336 = vmatprep.subr.mxu0 0.0
  %2337 = vmatpush2.msra.mxu0 0.0
  %2338 = vmatprep.subr.mxu0 0.0
  %2339 = vmatpush2.msra.mxu0 0.0
  %2340 = vmatprep.subr.mxu0 0.0
  %2341 = vmatpush2.msra.mxu0 0.0
  %2342 = vmatprep.subr.mxu0 0.0
  %2343 = vmatpush2.msra.mxu0 0.0
  %2344 = vmatprep.subr.mxu0 0.0
  %2345 = vmatpush2.msra.mxu0 0.0
  %2346 = vmatprep.subr.mxu0 0.0
  %2347 = vmatpush2.msra.mxu0 0.0
  %2348 = vmatprep.subr.mxu0 0.0
  %2349 = vmatpush2.msra.mxu0 0.0
  %2350 = vmatprep.subr.mxu0 0.0
  %2351 = vmatpush2.msra.mxu0 0.0
  %2352 = vmatprep.subr.mxu0 0.0
  %2353 = vmatpush2.msra.mxu0 0.0
  %2354 = vmatprep.subr.mxu0 0.0
  %2355 = vmatpush2.msra.mxu0 0.0
  %2356 = vmatprep.subr.mxu0 0.0
  %2357 = vmatpush2.msra.mxu0 0.0
  %2358 = vmatprep.subr.mxu0 0.0
  %2359 = vmatpush2.msra.mxu0 0.0
  %2360 = vmatprep.subr.mxu0 0.0
  %2361 = vmatpush2.msra.mxu0 0.0
  %2362 = vmatprep.mubr.f32.mxu0 0.0
  %2363 = vmatmul.mubr.f32.gmra.mxu0 %v2162
  %v2364 = vpop.f32.mrf.mxu0
  %v2365 = vadd.f32 0.0, %v2364
  %v2366 = vpop.f32.mrf.mxu0
  %v2367 = vadd.f32 0.0, %v2366
  %2368 = vdwg.mxu0
  %v2373 = vcombine.low %v2294, %v2296
  %v2374 = vcombine.low %v2365, %v2367
  %v2376 = vunpack.c.l.s4 1983009808
  %v2377 = vunpack.c.0.s8 %v2376
  %v2378 = vlaneseq
  %v2379 = vshrl.u32 %v2378, 7
  %v2380 = vsub.s32 %v2377, %v2379
  %v2381 = vrot.slane %v2373, %v2380
  %v2383 = vunpack.c.l.s4 1983009808
  %v2384 = vunpack.c.0.s8 %v2383
  %v2385 = vlaneseq
  %v2386 = vshrl.u32 %v2385, 7
  %v2387 = vsub.s32 %v2384, %v2386
  %v2388 = vrot.slane %v2374, %v2387
  %v2389 = vcombine.low %v2381, %v2388
  %v2391 = vadd.f32 %v2161, %v2389
  %v2392 = vld [vmem:[#allocation3] sm:$0x3]
  %v2393 = vxor.u32 %v2391, 2147483648
  %v2394 = vmul.f32 %v2393, 1.442695
  %v2395 = vpow.pop %v2394
  %v2396 = vadd.f32 %v2395, 1.0
  %v2397 = vrcp.pop %v2396
  %v2398 = vmul.f32 1.0, %v2397
  %v2400 = vrot.slane %v2391, 2
  %v2402 = vxor.u32 %v2400, 2147483648
  %v2403 = vmul.f32 %v2402, 1.442695
  %v2404 = vpow.pop %v2403
  %v2405 = vadd.f32 %v2404, 1.0
  %v2406 = vrcp.pop %v2405
  %v2407 = vmul.f32 1.0, %v2406
  %v2408 = vrot.slane %v2391, 4
  %v2410 = vtanh.pop %v2408
  %v2411 = vrot.slane %v2391, 6
  %v2413 = vxor.u32 %v2411, 2147483648
  %v2414 = vmul.f32 %v2413, 1.442695
  %v2415 = vpow.pop %v2414
  %v2416 = vadd.f32 %v2415, 1.0
  %v2417 = vrcp.pop %v2416
  %v2418 = vmul.f32 1.0, %v2417
  %v2419 = vmul.f32 %v2407, %v2392
  %v2420 = vmul.f32 %v2398, %v2410
  %v2421 = vadd.f32 %v2419, %v2420
  %v2422 = vtanh.pop %v2421
  %v2423 = vmul.f32 %v2418, %v2422
  %2424 = vst [vmem:[#allocation2] sm:$0x3] %v2423
  %2425 = vst [vmem:[#allocation3] sm:$0x3] %v2421
  %s2426 = scalar_lea.vmem %s3, 8
  %2427 = vst [vmem:[%s2426] sm:$0x3] %v2423
  %v2428 = vld [vmem:[%s1090 + $0x8] sm:$0xff]
  %v2429 = vld [vmem:[#allocation4] sm:$0x3]
  %v2430 = vld [vmem:[%s2] sm:$0xff]
  %v2431 = vld [vmem:[%s2 + $0x8] sm:$0xff]
  %v2432 = vld [vmem:[%s2 + $0x10] sm:$0xff]
  %v2433 = vld [vmem:[%s2 + $0x18] sm:$0xff]
  %v2434 = vld [vmem:[%s2 + $0x20] sm:$0xff]
  %v2435 = vld [vmem:[%s2 + $0x28] sm:$0xff]
  %v2436 = vld [vmem:[%s2 + $0x30] sm:$0xff]
  %v2437 = vld [vmem:[%s2 + $0x38] sm:$0xff]
  %v2438 = vld [vmem:[%s2 + $0x40] sm:$0xff]
  %v2439 = vld [vmem:[%s2 + $0x48] sm:$0xff]
  %v2440 = vld [vmem:[%s2 + $0x50] sm:$0xff]
  %v2441 = vld [vmem:[%s2 + $0x58] sm:$0xff]
  %v2442 = vld [vmem:[%s2 + $0x60] sm:$0xff]
  %v2443 = vld [vmem:[%s2 + $0x68] sm:$0xff]
  %v2444 = vld [vmem:[%s2 + $0x70] sm:$0xff]
  %v2445 = vld [vmem:[%s2 + $0x78] sm:$0xff]
  %v2446 = vld [vmem:[%s2 + $0x80] sm:$0xff]
  %v2447 = vld [vmem:[%s2 + $0x88] sm:$0xff]
  %v2448 = vld [vmem:[%s2 + $0x90] sm:$0xff]
  %v2449 = vld [vmem:[%s2 + $0x98] sm:$0xff]
  %v2450 = vld [vmem:[%s2 + $0xa0] sm:$0xff]
  %v2451 = vld [vmem:[%s2 + $0xa8] sm:$0xff]
  %v2452 = vld [vmem:[%s2 + $0xb0] sm:$0xff]
  %v2453 = vld [vmem:[%s2 + $0xb8] sm:$0xff]
  %v2454 = vld [vmem:[%s2 + $0xc0] sm:$0xff]
  %v2455 = vld [vmem:[%s2 + $0xc8] sm:$0xff]
  %v2456 = vld [vmem:[%s2 + $0xd0] sm:$0xff]
  %v2457 = vld [vmem:[%s2 + $0xd8] sm:$0xff]
  %v2458 = vld [vmem:[%s2 + $0xe0] sm:$0xff]
  %v2459 = vld [vmem:[%s2 + $0xe8] sm:$0xff]
  %v2460 = vld [vmem:[%s2 + $0xf0] sm:$0xff]
  %v2461 = vld [vmem:[%s2 + $0xf8] sm:$0xff]
  %v2462 = vld [vmem:[%s2 + $0x100] sm:$0xff]
  %v2463 = vld [vmem:[%s2 + $0x108] sm:$0xff]
  %v2464 = vld [vmem:[%s2 + $0x110] sm:$0xff]
  %v2465 = vld [vmem:[%s2 + $0x118] sm:$0xff]
  %v2466 = vld [vmem:[%s2 + $0x120] sm:$0xff]
  %v2467 = vld [vmem:[%s2 + $0x128] sm:$0xff]
  %v2468 = vld [vmem:[%s2 + $0x130] sm:$0xff]
  %v2469 = vld [vmem:[%s2 + $0x138] sm:$0xff]
  %v2470 = vld [vmem:[%s2 + $0x140] sm:$0xff]
  %v2471 = vld [vmem:[%s2 + $0x148] sm:$0xff]
  %v2472 = vld [vmem:[%s2 + $0x150] sm:$0xff]
  %v2473 = vld [vmem:[%s2 + $0x158] sm:$0xff]
  %v2474 = vld [vmem:[%s2 + $0x160] sm:$0xff]
  %v2475 = vld [vmem:[%s2 + $0x168] sm:$0xff]
  %v2476 = vld [vmem:[%s2 + $0x170] sm:$0xff]
  %v2477 = vld [vmem:[%s2 + $0x178] sm:$0xff]
  %v2478 = vld [vmem:[%s2 + $0x180] sm:$0xff]
  %v2479 = vld [vmem:[%s2 + $0x188] sm:$0xff]
  %v2480 = vld [vmem:[%s2 + $0x190] sm:$0xff]
  %v2481 = vld [vmem:[%s2 + $0x198] sm:$0xff]
  %v2482 = vld [vmem:[%s2 + $0x1a0] sm:$0xff]
  %v2483 = vld [vmem:[%s2 + $0x1a8] sm:$0xff]
  %v2484 = vld [vmem:[%s2 + $0x1b0] sm:$0xff]
  %v2485 = vld [vmem:[%s2 + $0x1b8] sm:$0xff]
  %v2486 = vld [vmem:[%s2 + $0x1c0] sm:$0xff]
  %v2487 = vld [vmem:[%s2 + $0x1c8] sm:$0xff]
  %v2488 = vld [vmem:[%s2 + $0x1d0] sm:$0xff]
  %v2489 = vld [vmem:[%s2 + $0x1d8] sm:$0xff]
  %v2490 = vld [vmem:[%s2 + $0x1e0] sm:$0xff]
  %v2491 = vld [vmem:[%s2 + $0x1e8] sm:$0xff]
  %v2492 = vld [vmem:[%s2 + $0x1f0] sm:$0xff]
  %v2493 = vld [vmem:[%s2 + $0x1f8] sm:$0xff]
  %2494 = vmatprep.subr.mxu0 %v2491
  %2495 = vmatpush1.msra.mxu0 %v2490
  %2496 = vmatprep.subr.mxu0 %v2487
  %2497 = vmatpush1.msra.mxu0 %v2486
  %2498 = vmatprep.subr.mxu0 %v2483
  %2499 = vmatpush1.msra.mxu0 %v2482
  %2500 = vmatprep.subr.mxu0 %v2479
  %2501 = vmatpush1.msra.mxu0 %v2478
  %2502 = vmatprep.subr.mxu0 %v2475
  %2503 = vmatpush1.msra.mxu0 %v2474
  %2504 = vmatprep.subr.mxu0 %v2471
  %2505 = vmatpush1.msra.mxu0 %v2470
  %2506 = vmatprep.subr.mxu0 %v2467
  %2507 = vmatpush1.msra.mxu0 %v2466
  %2508 = vmatprep.subr.mxu0 %v2463
  %2509 = vmatpush1.msra.mxu0 %v2462
  %2510 = vmatprep.subr.mxu0 %v2459
  %2511 = vmatpush1.msra.mxu0 %v2458
  %2512 = vmatprep.subr.mxu0 %v2455
  %2513 = vmatpush1.msra.mxu0 %v2454
  %2514 = vmatprep.subr.mxu0 %v2451
  %2515 = vmatpush1.msra.mxu0 %v2450
  %2516 = vmatprep.subr.mxu0 %v2447
  %2517 = vmatpush1.msra.mxu0 %v2446
  %2518 = vmatprep.subr.mxu0 %v2443
  %2519 = vmatpush1.msra.mxu0 %v2442
  %2520 = vmatprep.subr.mxu0 %v2439
  %2521 = vmatpush1.msra.mxu0 %v2438
  %2522 = vmatprep.subr.mxu0 %v2435
  %2523 = vmatpush1.msra.mxu0 %v2434
  %2524 = vmatprep.subr.mxu0 %v2431
  %2525 = vmatpush1.msra.mxu0 %v2430
  %2526 = vmatprep.subr.mxu0 0.0
  %2527 = vmatpush2.msra.mxu0 0.0
  %2528 = vmatprep.subr.mxu0 0.0
  %2529 = vmatpush2.msra.mxu0 0.0
  %2530 = vmatprep.subr.mxu0 0.0
  %2531 = vmatpush2.msra.mxu0 0.0
  %2532 = vmatprep.subr.mxu0 0.0
  %2533 = vmatpush2.msra.mxu0 0.0
  %2534 = vmatprep.subr.mxu0 0.0
  %2535 = vmatpush2.msra.mxu0 0.0
  %2536 = vmatprep.subr.mxu0 0.0
  %2537 = vmatpush2.msra.mxu0 0.0
  %2538 = vmatprep.subr.mxu0 0.0
  %2539 = vmatpush2.msra.mxu0 0.0
  %2540 = vmatprep.subr.mxu0 0.0
  %2541 = vmatpush2.msra.mxu0 0.0
  %2542 = vmatprep.subr.mxu0 0.0
  %2543 = vmatpush2.msra.mxu0 0.0
  %2544 = vmatprep.subr.mxu0 0.0
  %2545 = vmatpush2.msra.mxu0 0.0
  %2546 = vmatprep.subr.mxu0 0.0
  %2547 = vmatpush2.msra.mxu0 0.0
  %2548 = vmatprep.subr.mxu0 0.0
  %2549 = vmatpush2.msra.mxu0 0.0
  %2550 = vmatprep.subr.mxu0 0.0
  %2551 = vmatpush2.msra.mxu0 0.0
  %2552 = vmatprep.subr.mxu0 0.0
  %2553 = vmatpush2.msra.mxu0 0.0
  %2554 = vmatprep.subr.mxu0 0.0
  %2555 = vmatpush2.msra.mxu0 0.0
  %2556 = vmatprep.subr.mxu0 0.0
  %2557 = vmatpush2.msra.mxu0 0.0
  %2558 = vmatprep.mubr.f32.mxu0 0.0
  %2559 = vmatmul.mubr.f32.gmra.mxu0 %v2429
  %v2560 = vpop.f32.mrf.mxu0
  %v2561 = vadd.f32 0.0, %v2560
  %v2562 = vpop.f32.mrf.mxu0
  %v2563 = vadd.f32 0.0, %v2562
  %2564 = vdwg.mxu0
  %2565 = vmatprep.subr.mxu0 %v2493
  %2566 = vmatpush1.msra.mxu0 %v2492
  %2567 = vmatprep.subr.mxu0 %v2489
  %2568 = vmatpush1.msra.mxu0 %v2488
  %2569 = vmatprep.subr.mxu0 %v2485
  %2570 = vmatpush1.msra.mxu0 %v2484
  %2571 = vmatprep.subr.mxu0 %v2481
  %2572 = vmatpush1.msra.mxu0 %v2480
  %2573 = vmatprep.subr.mxu0 %v2477
  %2574 = vmatpush1.msra.mxu0 %v2476
  %2575 = vmatprep.subr.mxu0 %v2473
  %2576 = vmatpush1.msra.mxu0 %v2472
  %2577 = vmatprep.subr.mxu0 %v2469
  %2578 = vmatpush1.msra.mxu0 %v2468
  %2579 = vmatprep.subr.mxu0 %v2465
  %2580 = vmatpush1.msra.mxu0 %v2464
  %2581 = vmatprep.subr.mxu0 %v2461
  %2582 = vmatpush1.msra.mxu0 %v2460
  %2583 = vmatprep.subr.mxu0 %v2457
  %2584 = vmatpush1.msra.mxu0 %v2456
  %2585 = vmatprep.subr.mxu0 %v2453
  %2586 = vmatpush1.msra.mxu0 %v2452
  %2587 = vmatprep.subr.mxu0 %v2449
  %2588 = vmatpush1.msra.mxu0 %v2448
  %2589 = vmatprep.subr.mxu0 %v2445
  %2590 = vmatpush1.msra.mxu0 %v2444
  %2591 = vmatprep.subr.mxu0 %v2441
  %2592 = vmatpush1.msra.mxu0 %v2440
  %2593 = vmatprep.subr.mxu0 %v2437
  %2594 = vmatpush1.msra.mxu0 %v2436
  %2595 = vmatprep.subr.mxu0 %v2433
  %2596 = vmatpush1.msra.mxu0 %v2432
  %2597 = vmatprep.subr.mxu0 0.0
  %2598 = vmatpush2.msra.mxu0 0.0
  %2599 = vmatprep.subr.mxu0 0.0
  %2600 = vmatpush2.msra.mxu0 0.0
  %2601 = vmatprep.subr.mxu0 0.0
  %2602 = vmatpush2.msra.mxu0 0.0
  %2603 = vmatprep.subr.mxu0 0.0
  %2604 = vmatpush2.msra.mxu0 0.0
  %2605 = vmatprep.subr.mxu0 0.0
  %2606 = vmatpush2.msra.mxu0 0.0
  %2607 = vmatprep.subr.mxu0 0.0
  %2608 = vmatpush2.msra.mxu0 0.0
  %2609 = vmatprep.subr.mxu0 0.0
  %2610 = vmatpush2.msra.mxu0 0.0
  %2611 = vmatprep.subr.mxu0 0.0
  %2612 = vmatpush2.msra.mxu0 0.0
  %2613 = vmatprep.subr.mxu0 0.0
  %2614 = vmatpush2.msra.mxu0 0.0
  %2615 = vmatprep.subr.mxu0 0.0
  %2616 = vmatpush2.msra.mxu0 0.0
  %2617 = vmatprep.subr.mxu0 0.0
  %2618 = vmatpush2.msra.mxu0 0.0
  %2619 = vmatprep.subr.mxu0 0.0
  %2620 = vmatpush2.msra.mxu0 0.0
  %2621 = vmatprep.subr.mxu0 0.0
  %2622 = vmatpush2.msra.mxu0 0.0
  %2623 = vmatprep.subr.mxu0 0.0
  %2624 = vmatpush2.msra.mxu0 0.0
  %2625 = vmatprep.subr.mxu0 0.0
  %2626 = vmatpush2.msra.mxu0 0.0
  %2627 = vmatprep.subr.mxu0 0.0
  %2628 = vmatpush2.msra.mxu0 0.0
  %2629 = vmatprep.mubr.f32.mxu0 0.0
  %2630 = vmatmul.mubr.f32.gmra.mxu0 %v2429
  %v2631 = vpop.f32.mrf.mxu0
  %v2632 = vadd.f32 0.0, %v2631
  %v2633 = vpop.f32.mrf.mxu0
  %v2634 = vadd.f32 0.0, %v2633
  %2635 = vdwg.mxu0
  %v2640 = vcombine.low %v2561, %v2563
  %v2641 = vcombine.low %v2632, %v2634
  %v2643 = vunpack.c.l.s4 1983009808
  %v2644 = vunpack.c.0.s8 %v2643
  %v2645 = vlaneseq
  %v2646 = vshrl.u32 %v2645, 7
  %v2647 = vsub.s32 %v2644, %v2646
  %v2648 = vrot.slane %v2640, %v2647
  %v2650 = vunpack.c.l.s4 1983009808
  %v2651 = vunpack.c.0.s8 %v2650
  %v2652 = vlaneseq
  %v2653 = vshrl.u32 %v2652, 7
  %v2654 = vsub.s32 %v2651, %v2653
  %v2655 = vrot.slane %v2641, %v2654
  %v2656 = vcombine.low %v2648, %v2655
  %v2658 = vadd.f32 %v2428, %v2656
  %v2659 = vld [vmem:[#allocation5] sm:$0x3]
  %v2660 = vxor.u32 %v2658, 2147483648
  %v2661 = vmul.f32 %v2660, 1.442695
  %v2662 = vpow.pop %v2661
  %v2663 = vadd.f32 %v2662, 1.0
  %v2664 = vrcp.pop %v2663
  %v2665 = vmul.f32 1.0, %v2664
  %v2667 = vrot.slane %v2658, 2
  %v2669 = vxor.u32 %v2667, 2147483648
  %v2670 = vmul.f32 %v2669, 1.442695
  %v2671 = vpow.pop %v2670
  %v2672 = vadd.f32 %v2671, 1.0
  %v2673 = vrcp.pop %v2672
  %v2674 = vmul.f32 1.0, %v2673
  %v2675 = vrot.slane %v2658, 4
  %v2677 = vtanh.pop %v2675
  %v2678 = vrot.slane %v2658, 6
  %v2680 = vxor.u32 %v2678, 2147483648
  %v2681 = vmul.f32 %v2680, 1.442695
  %v2682 = vpow.pop %v2681
  %v2683 = vadd.f32 %v2682, 1.0
  %v2684 = vrcp.pop %v2683
  %v2685 = vmul.f32 1.0, %v2684
  %v2686 = vmul.f32 %v2674, %v2659
  %v2687 = vmul.f32 %v2665, %v2677
  %v2688 = vadd.f32 %v2686, %v2687
  %v2689 = vtanh.pop %v2688
  %v2690 = vmul.f32 %v2685, %v2689
  %2691 = vst [vmem:[#allocation4] sm:$0x3] %v2690
  %2692 = vst [vmem:[#allocation5] sm:$0x3] %v2688
  %s2693 = scalar_lea.vmem %s4, 4
  %2694 = vst [vmem:[%s2693] sm:$0x3] %v2690
  %v2695 = vld [vmem:[%s822] sm:$0xff]
  %v2696 = vld [vmem:[#allocation2] sm:$0x3]
  %v2697 = vld [vmem:[%s1] sm:$0xff]
  %v2698 = vld [vmem:[%s1 + $0x8] sm:$0xff]
  %v2699 = vld [vmem:[%s1 + $0x10] sm:$0xff]
  %v2700 = vld [vmem:[%s1 + $0x18] sm:$0xff]
  %v2701 = vld [vmem:[%s1 + $0x20] sm:$0xff]
  %v2702 = vld [vmem:[%s1 + $0x28] sm:$0xff]
  %v2703 = vld [vmem:[%s1 + $0x30] sm:$0xff]
  %v2704 = vld [vmem:[%s1 + $0x38] sm:$0xff]
  %v2705 = vld [vmem:[%s1 + $0x40] sm:$0xff]
  %v2706 = vld [vmem:[%s1 + $0x48] sm:$0xff]
  %v2707 = vld [vmem:[%s1 + $0x50] sm:$0xff]
  %v2708 = vld [vmem:[%s1 + $0x58] sm:$0xff]
  %v2709 = vld [vmem:[%s1 + $0x60] sm:$0xff]
  %v2710 = vld [vmem:[%s1 + $0x68] sm:$0xff]
  %v2711 = vld [vmem:[%s1 + $0x70] sm:$0xff]
  %v2712 = vld [vmem:[%s1 + $0x78] sm:$0xff]
  %v2713 = vld [vmem:[%s1 + $0x80] sm:$0xff]
  %v2714 = vld [vmem:[%s1 + $0x88] sm:$0xff]
  %v2715 = vld [vmem:[%s1 + $0x90] sm:$0xff]
  %v2716 = vld [vmem:[%s1 + $0x98] sm:$0xff]
  %v2717 = vld [vmem:[%s1 + $0xa0] sm:$0xff]
  %v2718 = vld [vmem:[%s1 + $0xa8] sm:$0xff]
  %v2719 = vld [vmem:[%s1 + $0xb0] sm:$0xff]
  %v2720 = vld [vmem:[%s1 + $0xb8] sm:$0xff]
  %v2721 = vld [vmem:[%s1 + $0xc0] sm:$0xff]
  %v2722 = vld [vmem:[%s1 + $0xc8] sm:$0xff]
  %v2723 = vld [vmem:[%s1 + $0xd0] sm:$0xff]
  %v2724 = vld [vmem:[%s1 + $0xd8] sm:$0xff]
  %v2725 = vld [vmem:[%s1 + $0xe0] sm:$0xff]
  %v2726 = vld [vmem:[%s1 + $0xe8] sm:$0xff]
  %v2727 = vld [vmem:[%s1 + $0xf0] sm:$0xff]
  %v2728 = vld [vmem:[%s1 + $0xf8] sm:$0xff]
  %v2729 = vld [vmem:[%s1 + $0x100] sm:$0xff]
  %v2730 = vld [vmem:[%s1 + $0x108] sm:$0xff]
  %v2731 = vld [vmem:[%s1 + $0x110] sm:$0xff]
  %v2732 = vld [vmem:[%s1 + $0x118] sm:$0xff]
  %v2733 = vld [vmem:[%s1 + $0x120] sm:$0xff]
  %v2734 = vld [vmem:[%s1 + $0x128] sm:$0xff]
  %v2735 = vld [vmem:[%s1 + $0x130] sm:$0xff]
  %v2736 = vld [vmem:[%s1 + $0x138] sm:$0xff]
  %v2737 = vld [vmem:[%s1 + $0x140] sm:$0xff]
  %v2738 = vld [vmem:[%s1 + $0x148] sm:$0xff]
  %v2739 = vld [vmem:[%s1 + $0x150] sm:$0xff]
  %v2740 = vld [vmem:[%s1 + $0x158] sm:$0xff]
  %v2741 = vld [vmem:[%s1 + $0x160] sm:$0xff]
  %v2742 = vld [vmem:[%s1 + $0x168] sm:$0xff]
  %v2743 = vld [vmem:[%s1 + $0x170] sm:$0xff]
  %v2744 = vld [vmem:[%s1 + $0x178] sm:$0xff]
  %v2745 = vld [vmem:[%s1 + $0x180] sm:$0xff]
  %v2746 = vld [vmem:[%s1 + $0x188] sm:$0xff]
  %v2747 = vld [vmem:[%s1 + $0x190] sm:$0xff]
  %v2748 = vld [vmem:[%s1 + $0x198] sm:$0xff]
  %v2749 = vld [vmem:[%s1 + $0x1a0] sm:$0xff]
  %v2750 = vld [vmem:[%s1 + $0x1a8] sm:$0xff]
  %v2751 = vld [vmem:[%s1 + $0x1b0] sm:$0xff]
  %v2752 = vld [vmem:[%s1 + $0x1b8] sm:$0xff]
  %v2753 = vld [vmem:[%s1 + $0x1c0] sm:$0xff]
  %v2754 = vld [vmem:[%s1 + $0x1c8] sm:$0xff]
  %v2755 = vld [vmem:[%s1 + $0x1d0] sm:$0xff]
  %v2756 = vld [vmem:[%s1 + $0x1d8] sm:$0xff]
  %v2757 = vld [vmem:[%s1 + $0x1e0] sm:$0xff]
  %v2758 = vld [vmem:[%s1 + $0x1e8] sm:$0xff]
  %v2759 = vld [vmem:[%s1 + $0x1f0] sm:$0xff]
  %v2760 = vld [vmem:[%s1 + $0x1f8] sm:$0xff]
  %2761 = vmatprep.subr.mxu0 %v2758
  %2762 = vmatpush1.msra.mxu0 %v2757
  %2763 = vmatprep.subr.mxu0 %v2754
  %2764 = vmatpush1.msra.mxu0 %v2753
  %2765 = vmatprep.subr.mxu0 %v2750
  %2766 = vmatpush1.msra.mxu0 %v2749
  %2767 = vmatprep.subr.mxu0 %v2746
  %2768 = vmatpush1.msra.mxu0 %v2745
  %2769 = vmatprep.subr.mxu0 %v2742
  %2770 = vmatpush1.msra.mxu0 %v2741
  %2771 = vmatprep.subr.mxu0 %v2738
  %2772 = vmatpush1.msra.mxu0 %v2737
  %2773 = vmatprep.subr.mxu0 %v2734
  %2774 = vmatpush1.msra.mxu0 %v2733
  %2775 = vmatprep.subr.mxu0 %v2730
  %2776 = vmatpush1.msra.mxu0 %v2729
  %2777 = vmatprep.subr.mxu0 %v2726
  %2778 = vmatpush1.msra.mxu0 %v2725
  %2779 = vmatprep.subr.mxu0 %v2722
  %2780 = vmatpush1.msra.mxu0 %v2721
  %2781 = vmatprep.subr.mxu0 %v2718
  %2782 = vmatpush1.msra.mxu0 %v2717
  %2783 = vmatprep.subr.mxu0 %v2714
  %2784 = vmatpush1.msra.mxu0 %v2713
  %2785 = vmatprep.subr.mxu0 %v2710
  %2786 = vmatpush1.msra.mxu0 %v2709
  %2787 = vmatprep.subr.mxu0 %v2706
  %2788 = vmatpush1.msra.mxu0 %v2705
  %2789 = vmatprep.subr.mxu0 %v2702
  %2790 = vmatpush1.msra.mxu0 %v2701
  %2791 = vmatprep.subr.mxu0 %v2698
  %2792 = vmatpush1.msra.mxu0 %v2697
  %2793 = vmatprep.subr.mxu0 0.0
  %2794 = vmatpush2.msra.mxu0 0.0
  %2795 = vmatprep.subr.mxu0 0.0
  %2796 = vmatpush2.msra.mxu0 0.0
  %2797 = vmatprep.subr.mxu0 0.0
  %2798 = vmatpush2.msra.mxu0 0.0
  %2799 = vmatprep.subr.mxu0 0.0
  %2800 = vmatpush2.msra.mxu0 0.0
  %2801 = vmatprep.subr.mxu0 0.0
  %2802 = vmatpush2.msra.mxu0 0.0
  %2803 = vmatprep.subr.mxu0 0.0
  %2804 = vmatpush2.msra.mxu0 0.0
  %2805 = vmatprep.subr.mxu0 0.0
  %2806 = vmatpush2.msra.mxu0 0.0
  %2807 = vmatprep.subr.mxu0 0.0
  %2808 = vmatpush2.msra.mxu0 0.0
  %2809 = vmatprep.subr.mxu0 0.0
  %2810 = vmatpush2.msra.mxu0 0.0
  %2811 = vmatprep.subr.mxu0 0.0
  %2812 = vmatpush2.msra.mxu0 0.0
  %2813 = vmatprep.subr.mxu0 0.0
  %2814 = vmatpush2.msra.mxu0 0.0
  %2815 = vmatprep.subr.mxu0 0.0
  %2816 = vmatpush2.msra.mxu0 0.0
  %2817 = vmatprep.subr.mxu0 0.0
  %2818 = vmatpush2.msra.mxu0 0.0
  %2819 = vmatprep.subr.mxu0 0.0
  %2820 = vmatpush2.msra.mxu0 0.0
  %2821 = vmatprep.subr.mxu0 0.0
  %2822 = vmatpush2.msra.mxu0 0.0
  %2823 = vmatprep.subr.mxu0 0.0
  %2824 = vmatpush2.msra.mxu0 0.0
  %2825 = vmatprep.mubr.f32.mxu0 0.0
  %2826 = vmatmul.mubr.f32.gmra.mxu0 %v2696
  %v2827 = vpop.f32.mrf.mxu0
  %v2828 = vadd.f32 0.0, %v2827
  %v2829 = vpop.f32.mrf.mxu0
  %v2830 = vadd.f32 0.0, %v2829
  %2831 = vdwg.mxu0
  %2832 = vmatprep.subr.mxu0 %v2760
  %2833 = vmatpush1.msra.mxu0 %v2759
  %2834 = vmatprep.subr.mxu0 %v2756
  %2835 = vmatpush1.msra.mxu0 %v2755
  %2836 = vmatprep.subr.mxu0 %v2752
  %2837 = vmatpush1.msra.mxu0 %v2751
  %2838 = vmatprep.subr.mxu0 %v2748
  %2839 = vmatpush1.msra.mxu0 %v2747
  %2840 = vmatprep.subr.mxu0 %v2744
  %2841 = vmatpush1.msra.mxu0 %v2743
  %2842 = vmatprep.subr.mxu0 %v2740
  %2843 = vmatpush1.msra.mxu0 %v2739
  %2844 = vmatprep.subr.mxu0 %v2736
  %2845 = vmatpush1.msra.mxu0 %v2735
  %2846 = vmatprep.subr.mxu0 %v2732
  %2847 = vmatpush1.msra.mxu0 %v2731
  %2848 = vmatprep.subr.mxu0 %v2728
  %2849 = vmatpush1.msra.mxu0 %v2727
  %2850 = vmatprep.subr.mxu0 %v2724
  %2851 = vmatpush1.msra.mxu0 %v2723
  %2852 = vmatprep.subr.mxu0 %v2720
  %2853 = vmatpush1.msra.mxu0 %v2719
  %2854 = vmatprep.subr.mxu0 %v2716
  %2855 = vmatpush1.msra.mxu0 %v2715
  %2856 = vmatprep.subr.mxu0 %v2712
  %2857 = vmatpush1.msra.mxu0 %v2711
  %2858 = vmatprep.subr.mxu0 %v2708
  %2859 = vmatpush1.msra.mxu0 %v2707
  %2860 = vmatprep.subr.mxu0 %v2704
  %2861 = vmatpush1.msra.mxu0 %v2703
  %2862 = vmatprep.subr.mxu0 %v2700
  %2863 = vmatpush1.msra.mxu0 %v2699
  %2864 = vmatprep.subr.mxu0 0.0
  %2865 = vmatpush2.msra.mxu0 0.0
  %2866 = vmatprep.subr.mxu0 0.0
  %2867 = vmatpush2.msra.mxu0 0.0
  %2868 = vmatprep.subr.mxu0 0.0
  %2869 = vmatpush2.msra.mxu0 0.0
  %2870 = vmatprep.subr.mxu0 0.0
  %2871 = vmatpush2.msra.mxu0 0.0
  %2872 = vmatprep.subr.mxu0 0.0
  %2873 = vmatpush2.msra.mxu0 0.0
  %2874 = vmatprep.subr.mxu0 0.0
  %2875 = vmatpush2.msra.mxu0 0.0
  %2876 = vmatprep.subr.mxu0 0.0
  %2877 = vmatpush2.msra.mxu0 0.0
  %2878 = vmatprep.subr.mxu0 0.0
  %2879 = vmatpush2.msra.mxu0 0.0
  %2880 = vmatprep.subr.mxu0 0.0
  %2881 = vmatpush2.msra.mxu0 0.0
  %2882 = vmatprep.subr.mxu0 0.0
  %2883 = vmatpush2.msra.mxu0 0.0
  %2884 = vmatprep.subr.mxu0 0.0
  %2885 = vmatpush2.msra.mxu0 0.0
  %2886 = vmatprep.subr.mxu0 0.0
  %2887 = vmatpush2.msra.mxu0 0.0
  %2888 = vmatprep.subr.mxu0 0.0
  %2889 = vmatpush2.msra.mxu0 0.0
  %2890 = vmatprep.subr.mxu0 0.0
  %2891 = vmatpush2.msra.mxu0 0.0
  %2892 = vmatprep.subr.mxu0 0.0
  %2893 = vmatpush2.msra.mxu0 0.0
  %2894 = vmatprep.subr.mxu0 0.0
  %2895 = vmatpush2.msra.mxu0 0.0
  %2896 = vmatprep.mubr.f32.mxu0 0.0
  %2897 = vmatmul.mubr.f32.gmra.mxu0 %v2696
  %v2898 = vpop.f32.mrf.mxu0
  %v2899 = vadd.f32 0.0, %v2898
  %v2900 = vpop.f32.mrf.mxu0
  %v2901 = vadd.f32 0.0, %v2900
  %2902 = vdwg.mxu0
  %v2907 = vcombine.low %v2828, %v2830
  %v2908 = vcombine.low %v2899, %v2901
  %v2910 = vunpack.c.l.s4 1983009808
  %v2911 = vunpack.c.0.s8 %v2910
  %v2912 = vlaneseq
  %v2913 = vshrl.u32 %v2912, 7
  %v2914 = vsub.s32 %v2911, %v2913
  %v2915 = vrot.slane %v2907, %v2914
  %v2917 = vunpack.c.l.s4 1983009808
  %v2918 = vunpack.c.0.s8 %v2917
  %v2919 = vlaneseq
  %v2920 = vshrl.u32 %v2919, 7
  %v2921 = vsub.s32 %v2918, %v2920
  %v2922 = vrot.slane %v2908, %v2921
  %v2923 = vcombine.low %v2915, %v2922
  %v2925 = vadd.f32 %v2695, %v2923
  %v2926 = vld [vmem:[#allocation3] sm:$0x3]
  %v2927 = vxor.u32 %v2925, 2147483648
  %v2928 = vmul.f32 %v2927, 1.442695
  %v2929 = vpow.pop %v2928
  %v2930 = vadd.f32 %v2929, 1.0
  %v2931 = vrcp.pop %v2930
  %v2932 = vmul.f32 1.0, %v2931
  %v2934 = vrot.slane %v2925, 2
  %v2936 = vxor.u32 %v2934, 2147483648
  %v2937 = vmul.f32 %v2936, 1.442695
  %v2938 = vpow.pop %v2937
  %v2939 = vadd.f32 %v2938, 1.0
  %v2940 = vrcp.pop %v2939
  %v2941 = vmul.f32 1.0, %v2940
  %v2942 = vrot.slane %v2925, 4
  %v2944 = vtanh.pop %v2942
  %v2945 = vrot.slane %v2925, 6
  %v2947 = vxor.u32 %v2945, 2147483648
  %v2948 = vmul.f32 %v2947, 1.442695
  %v2949 = vpow.pop %v2948
  %v2950 = vadd.f32 %v2949, 1.0
  %v2951 = vrcp.pop %v2950
  %v2952 = vmul.f32 1.0, %v2951
  %v2953 = vmul.f32 %v2941, %v2926
  %v2954 = vmul.f32 %v2932, %v2944
  %v2955 = vadd.f32 %v2953, %v2954
  %v2956 = vtanh.pop %v2955
  %v2957 = vmul.f32 %v2952, %v2956
  %2958 = vst [vmem:[#allocation2] sm:$0x3] %v2957
  %2959 = vst [vmem:[#allocation3] sm:$0x3] %v2955
  %s2960 = scalar_lea.vmem %s3, 10
  %2961 = vst [vmem:[%s2960] sm:$0x3] %v2957
  %v2962 = vld [vmem:[%s554 + $0x8] sm:$0xff]
  %v2963 = vld [vmem:[#allocation4] sm:$0x3]
  %v2964 = vld [vmem:[%s2] sm:$0xff]
  %v2965 = vld [vmem:[%s2 + $0x8] sm:$0xff]
  %v2966 = vld [vmem:[%s2 + $0x10] sm:$0xff]
  %v2967 = vld [vmem:[%s2 + $0x18] sm:$0xff]
  %v2968 = vld [vmem:[%s2 + $0x20] sm:$0xff]
  %v2969 = vld [vmem:[%s2 + $0x28] sm:$0xff]
  %v2970 = vld [vmem:[%s2 + $0x30] sm:$0xff]
  %v2971 = vld [vmem:[%s2 + $0x38] sm:$0xff]
  %v2972 = vld [vmem:[%s2 + $0x40] sm:$0xff]
  %v2973 = vld [vmem:[%s2 + $0x48] sm:$0xff]
  %v2974 = vld [vmem:[%s2 + $0x50] sm:$0xff]
  %v2975 = vld [vmem:[%s2 + $0x58] sm:$0xff]
  %v2976 = vld [vmem:[%s2 + $0x60] sm:$0xff]
  %v2977 = vld [vmem:[%s2 + $0x68] sm:$0xff]
  %v2978 = vld [vmem:[%s2 + $0x70] sm:$0xff]
  %v2979 = vld [vmem:[%s2 + $0x78] sm:$0xff]
  %v2980 = vld [vmem:[%s2 + $0x80] sm:$0xff]
  %v2981 = vld [vmem:[%s2 + $0x88] sm:$0xff]
  %v2982 = vld [vmem:[%s2 + $0x90] sm:$0xff]
  %v2983 = vld [vmem:[%s2 + $0x98] sm:$0xff]
  %v2984 = vld [vmem:[%s2 + $0xa0] sm:$0xff]
  %v2985 = vld [vmem:[%s2 + $0xa8] sm:$0xff]
  %v2986 = vld [vmem:[%s2 + $0xb0] sm:$0xff]
  %v2987 = vld [vmem:[%s2 + $0xb8] sm:$0xff]
  %v2988 = vld [vmem:[%s2 + $0xc0] sm:$0xff]
  %v2989 = vld [vmem:[%s2 + $0xc8] sm:$0xff]
  %v2990 = vld [vmem:[%s2 + $0xd0] sm:$0xff]
  %v2991 = vld [vmem:[%s2 + $0xd8] sm:$0xff]
  %v2992 = vld [vmem:[%s2 + $0xe0] sm:$0xff]
  %v2993 = vld [vmem:[%s2 + $0xe8] sm:$0xff]
  %v2994 = vld [vmem:[%s2 + $0xf0] sm:$0xff]
  %v2995 = vld [vmem:[%s2 + $0xf8] sm:$0xff]
  %v2996 = vld [vmem:[%s2 + $0x100] sm:$0xff]
  %v2997 = vld [vmem:[%s2 + $0x108] sm:$0xff]
  %v2998 = vld [vmem:[%s2 + $0x110] sm:$0xff]
  %v2999 = vld [vmem:[%s2 + $0x118] sm:$0xff]
  %v3000 = vld [vmem:[%s2 + $0x120] sm:$0xff]
  %v3001 = vld [vmem:[%s2 + $0x128] sm:$0xff]
  %v3002 = vld [vmem:[%s2 + $0x130] sm:$0xff]
  %v3003 = vld [vmem:[%s2 + $0x138] sm:$0xff]
  %v3004 = vld [vmem:[%s2 + $0x140] sm:$0xff]
  %v3005 = vld [vmem:[%s2 + $0x148] sm:$0xff]
  %v3006 = vld [vmem:[%s2 + $0x150] sm:$0xff]
  %v3007 = vld [vmem:[%s2 + $0x158] sm:$0xff]
  %v3008 = vld [vmem:[%s2 + $0x160] sm:$0xff]
  %v3009 = vld [vmem:[%s2 + $0x168] sm:$0xff]
  %v3010 = vld [vmem:[%s2 + $0x170] sm:$0xff]
  %v3011 = vld [vmem:[%s2 + $0x178] sm:$0xff]
  %v3012 = vld [vmem:[%s2 + $0x180] sm:$0xff]
  %v3013 = vld [vmem:[%s2 + $0x188] sm:$0xff]
  %v3014 = vld [vmem:[%s2 + $0x190] sm:$0xff]
  %v3015 = vld [vmem:[%s2 + $0x198] sm:$0xff]
  %v3016 = vld [vmem:[%s2 + $0x1a0] sm:$0xff]
  %v3017 = vld [vmem:[%s2 + $0x1a8] sm:$0xff]
  %v3018 = vld [vmem:[%s2 + $0x1b0] sm:$0xff]
  %v3019 = vld [vmem:[%s2 + $0x1b8] sm:$0xff]
  %v3020 = vld [vmem:[%s2 + $0x1c0] sm:$0xff]
  %v3021 = vld [vmem:[%s2 + $0x1c8] sm:$0xff]
  %v3022 = vld [vmem:[%s2 + $0x1d0] sm:$0xff]
  %v3023 = vld [vmem:[%s2 + $0x1d8] sm:$0xff]
  %v3024 = vld [vmem:[%s2 + $0x1e0] sm:$0xff]
  %v3025 = vld [vmem:[%s2 + $0x1e8] sm:$0xff]
  %v3026 = vld [vmem:[%s2 + $0x1f0] sm:$0xff]
  %v3027 = vld [vmem:[%s2 + $0x1f8] sm:$0xff]
  %3028 = vmatprep.subr.mxu0 %v3025
  %3029 = vmatpush1.msra.mxu0 %v3024
  %3030 = vmatprep.subr.mxu0 %v3021
  %3031 = vmatpush1.msra.mxu0 %v3020
  %3032 = vmatprep.subr.mxu0 %v3017
  %3033 = vmatpush1.msra.mxu0 %v3016
  %3034 = vmatprep.subr.mxu0 %v3013
  %3035 = vmatpush1.msra.mxu0 %v3012
  %3036 = vmatprep.subr.mxu0 %v3009
  %3037 = vmatpush1.msra.mxu0 %v3008
  %3038 = vmatprep.subr.mxu0 %v3005
  %3039 = vmatpush1.msra.mxu0 %v3004
  %3040 = vmatprep.subr.mxu0 %v3001
  %3041 = vmatpush1.msra.mxu0 %v3000
  %3042 = vmatprep.subr.mxu0 %v2997
  %3043 = vmatpush1.msra.mxu0 %v2996
  %3044 = vmatprep.subr.mxu0 %v2993
  %3045 = vmatpush1.msra.mxu0 %v2992
  %3046 = vmatprep.subr.mxu0 %v2989
  %3047 = vmatpush1.msra.mxu0 %v2988
  %3048 = vmatprep.subr.mxu0 %v2985
  %3049 = vmatpush1.msra.mxu0 %v2984
  %3050 = vmatprep.subr.mxu0 %v2981
  %3051 = vmatpush1.msra.mxu0 %v2980
  %3052 = vmatprep.subr.mxu0 %v2977
  %3053 = vmatpush1.msra.mxu0 %v2976
  %3054 = vmatprep.subr.mxu0 %v2973
  %3055 = vmatpush1.msra.mxu0 %v2972
  %3056 = vmatprep.subr.mxu0 %v2969
  %3057 = vmatpush1.msra.mxu0 %v2968
  %3058 = vmatprep.subr.mxu0 %v2965
  %3059 = vmatpush1.msra.mxu0 %v2964
  %3060 = vmatprep.subr.mxu0 0.0
  %3061 = vmatpush2.msra.mxu0 0.0
  %3062 = vmatprep.subr.mxu0 0.0
  %3063 = vmatpush2.msra.mxu0 0.0
  %3064 = vmatprep.subr.mxu0 0.0
  %3065 = vmatpush2.msra.mxu0 0.0
  %3066 = vmatprep.subr.mxu0 0.0
  %3067 = vmatpush2.msra.mxu0 0.0
  %3068 = vmatprep.subr.mxu0 0.0
  %3069 = vmatpush2.msra.mxu0 0.0
  %3070 = vmatprep.subr.mxu0 0.0
  %3071 = vmatpush2.msra.mxu0 0.0
  %3072 = vmatprep.subr.mxu0 0.0
  %3073 = vmatpush2.msra.mxu0 0.0
  %3074 = vmatprep.subr.mxu0 0.0
  %3075 = vmatpush2.msra.mxu0 0.0
  %3076 = vmatprep.subr.mxu0 0.0
  %3077 = vmatpush2.msra.mxu0 0.0
  %3078 = vmatprep.subr.mxu0 0.0
  %3079 = vmatpush2.msra.mxu0 0.0
  %3080 = vmatprep.subr.mxu0 0.0
  %3081 = vmatpush2.msra.mxu0 0.0
  %3082 = vmatprep.subr.mxu0 0.0
  %3083 = vmatpush2.msra.mxu0 0.0
  %3084 = vmatprep.subr.mxu0 0.0
  %3085 = vmatpush2.msra.mxu0 0.0
  %3086 = vmatprep.subr.mxu0 0.0
  %3087 = vmatpush2.msra.mxu0 0.0
  %3088 = vmatprep.subr.mxu0 0.0
  %3089 = vmatpush2.msra.mxu0 0.0
  %3090 = vmatprep.subr.mxu0 0.0
  %3091 = vmatpush2.msra.mxu0 0.0
  %3092 = vmatprep.mubr.f32.mxu0 0.0
  %3093 = vmatmul.mubr.f32.gmra.mxu0 %v2963
  %v3094 = vpop.f32.mrf.mxu0
  %v3095 = vadd.f32 0.0, %v3094
  %v3096 = vpop.f32.mrf.mxu0
  %v3097 = vadd.f32 0.0, %v3096
  %3098 = vdwg.mxu0
  %3099 = vmatprep.subr.mxu0 %v3027
  %3100 = vmatpush1.msra.mxu0 %v3026
  %3101 = vmatprep.subr.mxu0 %v3023
  %3102 = vmatpush1.msra.mxu0 %v3022
  %3103 = vmatprep.subr.mxu0 %v3019
  %3104 = vmatpush1.msra.mxu0 %v3018
  %3105 = vmatprep.subr.mxu0 %v3015
  %3106 = vmatpush1.msra.mxu0 %v3014
  %3107 = vmatprep.subr.mxu0 %v3011
  %3108 = vmatpush1.msra.mxu0 %v3010
  %3109 = vmatprep.subr.mxu0 %v3007
  %3110 = vmatpush1.msra.mxu0 %v3006
  %3111 = vmatprep.subr.mxu0 %v3003
  %3112 = vmatpush1.msra.mxu0 %v3002
  %3113 = vmatprep.subr.mxu0 %v2999
  %3114 = vmatpush1.msra.mxu0 %v2998
  %3115 = vmatprep.subr.mxu0 %v2995
  %3116 = vmatpush1.msra.mxu0 %v2994
  %3117 = vmatprep.subr.mxu0 %v2991
  %3118 = vmatpush1.msra.mxu0 %v2990
  %3119 = vmatprep.subr.mxu0 %v2987
  %3120 = vmatpush1.msra.mxu0 %v2986
  %3121 = vmatprep.subr.mxu0 %v2983
  %3122 = vmatpush1.msra.mxu0 %v2982
  %3123 = vmatprep.subr.mxu0 %v2979
  %3124 = vmatpush1.msra.mxu0 %v2978
  %3125 = vmatprep.subr.mxu0 %v2975
  %3126 = vmatpush1.msra.mxu0 %v2974
  %3127 = vmatprep.subr.mxu0 %v2971
  %3128 = vmatpush1.msra.mxu0 %v2970
  %3129 = vmatprep.subr.mxu0 %v2967
  %3130 = vmatpush1.msra.mxu0 %v2966
  %3131 = vmatprep.subr.mxu0 0.0
  %3132 = vmatpush2.msra.mxu0 0.0
  %3133 = vmatprep.subr.mxu0 0.0
  %3134 = vmatpush2.msra.mxu0 0.0
  %3135 = vmatprep.subr.mxu0 0.0
  %3136 = vmatpush2.msra.mxu0 0.0
  %3137 = vmatprep.subr.mxu0 0.0
  %3138 = vmatpush2.msra.mxu0 0.0
  %3139 = vmatprep.subr.mxu0 0.0
  %3140 = vmatpush2.msra.mxu0 0.0
  %3141 = vmatprep.subr.mxu0 0.0
  %3142 = vmatpush2.msra.mxu0 0.0
  %3143 = vmatprep.subr.mxu0 0.0
  %3144 = vmatpush2.msra.mxu0 0.0
  %3145 = vmatprep.subr.mxu0 0.0
  %3146 = vmatpush2.msra.mxu0 0.0
  %3147 = vmatprep.subr.mxu0 0.0
  %3148 = vmatpush2.msra.mxu0 0.0
  %3149 = vmatprep.subr.mxu0 0.0
  %3150 = vmatpush2.msra.mxu0 0.0
  %3151 = vmatprep.subr.mxu0 0.0
  %3152 = vmatpush2.msra.mxu0 0.0
  %3153 = vmatprep.subr.mxu0 0.0
  %3154 = vmatpush2.msra.mxu0 0.0
  %3155 = vmatprep.subr.mxu0 0.0
  %3156 = vmatpush2.msra.mxu0 0.0
  %3157 = vmatprep.subr.mxu0 0.0
  %3158 = vmatpush2.msra.mxu0 0.0
  %3159 = vmatprep.subr.mxu0 0.0
  %3160 = vmatpush2.msra.mxu0 0.0
  %3161 = vmatprep.subr.mxu0 0.0
  %3162 = vmatpush2.msra.mxu0 0.0
  %3163 = vmatprep.mubr.f32.mxu0 0.0
  %3164 = vmatmul.mubr.f32.gmra.mxu0 %v2963
  %v3165 = vpop.f32.mrf.mxu0
  %v3166 = vadd.f32 0.0, %v3165
  %v3167 = vpop.f32.mrf.mxu0
  %v3168 = vadd.f32 0.0, %v3167
  %3169 = vdwg.mxu0
  %v3174 = vcombine.low %v3095, %v3097
  %v3175 = vcombine.low %v3166, %v3168
  %v3177 = vunpack.c.l.s4 1983009808
  %v3178 = vunpack.c.0.s8 %v3177
  %v3179 = vlaneseq
  %v3180 = vshrl.u32 %v3179, 7
  %v3181 = vsub.s32 %v3178, %v3180
  %v3182 = vrot.slane %v3174, %v3181
  %v3184 = vunpack.c.l.s4 1983009808
  %v3185 = vunpack.c.0.s8 %v3184
  %v3186 = vlaneseq
  %v3187 = vshrl.u32 %v3186, 7
  %v3188 = vsub.s32 %v3185, %v3187
  %v3189 = vrot.slane %v3175, %v3188
  %v3190 = vcombine.low %v3182, %v3189
  %v3192 = vadd.f32 %v2962, %v3190
  %v3193 = vld [vmem:[#allocation5] sm:$0x3]
  %v3194 = vxor.u32 %v3192, 2147483648
  %v3195 = vmul.f32 %v3194, 1.442695
  %v3196 = vpow.pop %v3195
  %v3197 = vadd.f32 %v3196, 1.0
  %v3198 = vrcp.pop %v3197
  %v3199 = vmul.f32 1.0, %v3198
  %v3201 = vrot.slane %v3192, 2
  %v3203 = vxor.u32 %v3201, 2147483648
  %v3204 = vmul.f32 %v3203, 1.442695
  %v3205 = vpow.pop %v3204
  %v3206 = vadd.f32 %v3205, 1.0
  %v3207 = vrcp.pop %v3206
  %v3208 = vmul.f32 1.0, %v3207
  %v3209 = vrot.slane %v3192, 4
  %v3211 = vtanh.pop %v3209
  %v3212 = vrot.slane %v3192, 6
  %v3214 = vxor.u32 %v3212, 2147483648
  %v3215 = vmul.f32 %v3214, 1.442695
  %v3216 = vpow.pop %v3215
  %v3217 = vadd.f32 %v3216, 1.0
  %v3218 = vrcp.pop %v3217
  %v3219 = vmul.f32 1.0, %v3218
  %v3220 = vmul.f32 %v3208, %v3193
  %v3221 = vmul.f32 %v3199, %v3211
  %v3222 = vadd.f32 %v3220, %v3221
  %v3223 = vtanh.pop %v3222
  %v3224 = vmul.f32 %v3219, %v3223
  %3225 = vst [vmem:[#allocation4] sm:$0x3] %v3224
  %3226 = vst [vmem:[#allocation5] sm:$0x3] %v3222
  %s3227 = scalar_lea.vmem %s4, 2
  %3228 = vst [vmem:[%s3227] sm:$0x3] %v3224
  %v3229 = vld [vmem:[%s286] sm:$0xff]
  %v3230 = vld [vmem:[#allocation2] sm:$0x3]
  %v3231 = vld [vmem:[%s1] sm:$0xff]
  %v3232 = vld [vmem:[%s1 + $0x8] sm:$0xff]
  %v3233 = vld [vmem:[%s1 + $0x10] sm:$0xff]
  %v3234 = vld [vmem:[%s1 + $0x18] sm:$0xff]
  %v3235 = vld [vmem:[%s1 + $0x20] sm:$0xff]
  %v3236 = vld [vmem:[%s1 + $0x28] sm:$0xff]
  %v3237 = vld [vmem:[%s1 + $0x30] sm:$0xff]
  %v3238 = vld [vmem:[%s1 + $0x38] sm:$0xff]
  %v3239 = vld [vmem:[%s1 + $0x40] sm:$0xff]
  %v3240 = vld [vmem:[%s1 + $0x48] sm:$0xff]
  %v3241 = vld [vmem:[%s1 + $0x50] sm:$0xff]
  %v3242 = vld [vmem:[%s1 + $0x58] sm:$0xff]
  %v3243 = vld [vmem:[%s1 + $0x60] sm:$0xff]
  %v3244 = vld [vmem:[%s1 + $0x68] sm:$0xff]
  %v3245 = vld [vmem:[%s1 + $0x70] sm:$0xff]
  %v3246 = vld [vmem:[%s1 + $0x78] sm:$0xff]
  %v3247 = vld [vmem:[%s1 + $0x80] sm:$0xff]
  %v3248 = vld [vmem:[%s1 + $0x88] sm:$0xff]
  %v3249 = vld [vmem:[%s1 + $0x90] sm:$0xff]
  %v3250 = vld [vmem:[%s1 + $0x98] sm:$0xff]
  %v3251 = vld [vmem:[%s1 + $0xa0] sm:$0xff]
  %v3252 = vld [vmem:[%s1 + $0xa8] sm:$0xff]
  %v3253 = vld [vmem:[%s1 + $0xb0] sm:$0xff]
  %v3254 = vld [vmem:[%s1 + $0xb8] sm:$0xff]
  %v3255 = vld [vmem:[%s1 + $0xc0] sm:$0xff]
  %v3256 = vld [vmem:[%s1 + $0xc8] sm:$0xff]
  %v3257 = vld [vmem:[%s1 + $0xd0] sm:$0xff]
  %v3258 = vld [vmem:[%s1 + $0xd8] sm:$0xff]
  %v3259 = vld [vmem:[%s1 + $0xe0] sm:$0xff]
  %v3260 = vld [vmem:[%s1 + $0xe8] sm:$0xff]
  %v3261 = vld [vmem:[%s1 + $0xf0] sm:$0xff]
  %v3262 = vld [vmem:[%s1 + $0xf8] sm:$0xff]
  %v3263 = vld [vmem:[%s1 + $0x100] sm:$0xff]
  %v3264 = vld [vmem:[%s1 + $0x108] sm:$0xff]
  %v3265 = vld [vmem:[%s1 + $0x110] sm:$0xff]
  %v3266 = vld [vmem:[%s1 + $0x118] sm:$0xff]
  %v3267 = vld [vmem:[%s1 + $0x120] sm:$0xff]
  %v3268 = vld [vmem:[%s1 + $0x128] sm:$0xff]
  %v3269 = vld [vmem:[%s1 + $0x130] sm:$0xff]
  %v3270 = vld [vmem:[%s1 + $0x138] sm:$0xff]
  %v3271 = vld [vmem:[%s1 + $0x140] sm:$0xff]
  %v3272 = vld [vmem:[%s1 + $0x148] sm:$0xff]
  %v3273 = vld [vmem:[%s1 + $0x150] sm:$0xff]
  %v3274 = vld [vmem:[%s1 + $0x158] sm:$0xff]
  %v3275 = vld [vmem:[%s1 + $0x160] sm:$0xff]
  %v3276 = vld [vmem:[%s1 + $0x168] sm:$0xff]
  %v3277 = vld [vmem:[%s1 + $0x170] sm:$0xff]
  %v3278 = vld [vmem:[%s1 + $0x178] sm:$0xff]
  %v3279 = vld [vmem:[%s1 + $0x180] sm:$0xff]
  %v3280 = vld [vmem:[%s1 + $0x188] sm:$0xff]
  %v3281 = vld [vmem:[%s1 + $0x190] sm:$0xff]
  %v3282 = vld [vmem:[%s1 + $0x198] sm:$0xff]
  %v3283 = vld [vmem:[%s1 + $0x1a0] sm:$0xff]
  %v3284 = vld [vmem:[%s1 + $0x1a8] sm:$0xff]
  %v3285 = vld [vmem:[%s1 + $0x1b0] sm:$0xff]
  %v3286 = vld [vmem:[%s1 + $0x1b8] sm:$0xff]
  %v3287 = vld [vmem:[%s1 + $0x1c0] sm:$0xff]
  %v3288 = vld [vmem:[%s1 + $0x1c8] sm:$0xff]
  %v3289 = vld [vmem:[%s1 + $0x1d0] sm:$0xff]
  %v3290 = vld [vmem:[%s1 + $0x1d8] sm:$0xff]
  %v3291 = vld [vmem:[%s1 + $0x1e0] sm:$0xff]
  %v3292 = vld [vmem:[%s1 + $0x1e8] sm:$0xff]
  %v3293 = vld [vmem:[%s1 + $0x1f0] sm:$0xff]
  %v3294 = vld [vmem:[%s1 + $0x1f8] sm:$0xff]
  %3295 = vmatprep.subr.mxu0 %v3292
  %3296 = vmatpush1.msra.mxu0 %v3291
  %3297 = vmatprep.subr.mxu0 %v3288
  %3298 = vmatpush1.msra.mxu0 %v3287
  %3299 = vmatprep.subr.mxu0 %v3284
  %3300 = vmatpush1.msra.mxu0 %v3283
  %3301 = vmatprep.subr.mxu0 %v3280
  %3302 = vmatpush1.msra.mxu0 %v3279
  %3303 = vmatprep.subr.mxu0 %v3276
  %3304 = vmatpush1.msra.mxu0 %v3275
  %3305 = vmatprep.subr.mxu0 %v3272
  %3306 = vmatpush1.msra.mxu0 %v3271
  %3307 = vmatprep.subr.mxu0 %v3268
  %3308 = vmatpush1.msra.mxu0 %v3267
  %3309 = vmatprep.subr.mxu0 %v3264
  %3310 = vmatpush1.msra.mxu0 %v3263
  %3311 = vmatprep.subr.mxu0 %v3260
  %3312 = vmatpush1.msra.mxu0 %v3259
  %3313 = vmatprep.subr.mxu0 %v3256
  %3314 = vmatpush1.msra.mxu0 %v3255
  %3315 = vmatprep.subr.mxu0 %v3252
  %3316 = vmatpush1.msra.mxu0 %v3251
  %3317 = vmatprep.subr.mxu0 %v3248
  %3318 = vmatpush1.msra.mxu0 %v3247
  %3319 = vmatprep.subr.mxu0 %v3244
  %3320 = vmatpush1.msra.mxu0 %v3243
  %3321 = vmatprep.subr.mxu0 %v3240
  %3322 = vmatpush1.msra.mxu0 %v3239
  %3323 = vmatprep.subr.mxu0 %v3236
  %3324 = vmatpush1.msra.mxu0 %v3235
  %3325 = vmatprep.subr.mxu0 %v3232
  %3326 = vmatpush1.msra.mxu0 %v3231
  %3327 = vmatprep.subr.mxu0 0.0
  %3328 = vmatpush2.msra.mxu0 0.0
  %3329 = vmatprep.subr.mxu0 0.0
  %3330 = vmatpush2.msra.mxu0 0.0
  %3331 = vmatprep.subr.mxu0 0.0
  %3332 = vmatpush2.msra.mxu0 0.0
  %3333 = vmatprep.subr.mxu0 0.0
  %3334 = vmatpush2.msra.mxu0 0.0
  %3335 = vmatprep.subr.mxu0 0.0
  %3336 = vmatpush2.msra.mxu0 0.0
  %3337 = vmatprep.subr.mxu0 0.0
  %3338 = vmatpush2.msra.mxu0 0.0
  %3339 = vmatprep.subr.mxu0 0.0
  %3340 = vmatpush2.msra.mxu0 0.0
  %3341 = vmatprep.subr.mxu0 0.0
  %3342 = vmatpush2.msra.mxu0 0.0
  %3343 = vmatprep.subr.mxu0 0.0
  %3344 = vmatpush2.msra.mxu0 0.0
  %3345 = vmatprep.subr.mxu0 0.0
  %3346 = vmatpush2.msra.mxu0 0.0
  %3347 = vmatprep.subr.mxu0 0.0
  %3348 = vmatpush2.msra.mxu0 0.0
  %3349 = vmatprep.subr.mxu0 0.0
  %3350 = vmatpush2.msra.mxu0 0.0
  %3351 = vmatprep.subr.mxu0 0.0
  %3352 = vmatpush2.msra.mxu0 0.0
  %3353 = vmatprep.subr.mxu0 0.0
  %3354 = vmatpush2.msra.mxu0 0.0
  %3355 = vmatprep.subr.mxu0 0.0
  %3356 = vmatpush2.msra.mxu0 0.0
  %3357 = vmatprep.subr.mxu0 0.0
  %3358 = vmatpush2.msra.mxu0 0.0
  %3359 = vmatprep.mubr.f32.mxu0 0.0
  %3360 = vmatmul.mubr.f32.gmra.mxu0 %v3230
  %v3361 = vpop.f32.mrf.mxu0
  %v3362 = vadd.f32 0.0, %v3361
  %v3363 = vpop.f32.mrf.mxu0
  %v3364 = vadd.f32 0.0, %v3363
  %3365 = vdwg.mxu0
  %3366 = vmatprep.subr.mxu0 %v3294
  %3367 = vmatpush1.msra.mxu0 %v3293
  %3368 = vmatprep.subr.mxu0 %v3290
  %3369 = vmatpush1.msra.mxu0 %v3289
  %3370 = vmatprep.subr.mxu0 %v3286
  %3371 = vmatpush1.msra.mxu0 %v3285
  %3372 = vmatprep.subr.mxu0 %v3282
  %3373 = vmatpush1.msra.mxu0 %v3281
  %3374 = vmatprep.subr.mxu0 %v3278
  %3375 = vmatpush1.msra.mxu0 %v3277
  %3376 = vmatprep.subr.mxu0 %v3274
  %3377 = vmatpush1.msra.mxu0 %v3273
  %3378 = vmatprep.subr.mxu0 %v3270
  %3379 = vmatpush1.msra.mxu0 %v3269
  %3380 = vmatprep.subr.mxu0 %v3266
  %3381 = vmatpush1.msra.mxu0 %v3265
  %3382 = vmatprep.subr.mxu0 %v3262
  %3383 = vmatpush1.msra.mxu0 %v3261
  %3384 = vmatprep.subr.mxu0 %v3258
  %3385 = vmatpush1.msra.mxu0 %v3257
  %3386 = vmatprep.subr.mxu0 %v3254
  %3387 = vmatpush1.msra.mxu0 %v3253
  %3388 = vmatprep.subr.mxu0 %v3250
  %3389 = vmatpush1.msra.mxu0 %v3249
  %3390 = vmatprep.subr.mxu0 %v3246
  %3391 = vmatpush1.msra.mxu0 %v3245
  %3392 = vmatprep.subr.mxu0 %v3242
  %3393 = vmatpush1.msra.mxu0 %v3241
  %3394 = vmatprep.subr.mxu0 %v3238
  %3395 = vmatpush1.msra.mxu0 %v3237
  %3396 = vmatprep.subr.mxu0 %v3234
  %3397 = vmatpush1.msra.mxu0 %v3233
  %3398 = vmatprep.subr.mxu0 0.0
  %3399 = vmatpush2.msra.mxu0 0.0
  %3400 = vmatprep.subr.mxu0 0.0
  %3401 = vmatpush2.msra.mxu0 0.0
  %3402 = vmatprep.subr.mxu0 0.0
  %3403 = vmatpush2.msra.mxu0 0.0
  %3404 = vmatprep.subr.mxu0 0.0
  %3405 = vmatpush2.msra.mxu0 0.0
  %3406 = vmatprep.subr.mxu0 0.0
  %3407 = vmatpush2.msra.mxu0 0.0
  %3408 = vmatprep.subr.mxu0 0.0
  %3409 = vmatpush2.msra.mxu0 0.0
  %3410 = vmatprep.subr.mxu0 0.0
  %3411 = vmatpush2.msra.mxu0 0.0
  %3412 = vmatprep.subr.mxu0 0.0
  %3413 = vmatpush2.msra.mxu0 0.0
  %3414 = vmatprep.subr.mxu0 0.0
  %3415 = vmatpush2.msra.mxu0 0.0
  %3416 = vmatprep.subr.mxu0 0.0
  %3417 = vmatpush2.msra.mxu0 0.0
  %3418 = vmatprep.subr.mxu0 0.0
  %3419 = vmatpush2.msra.mxu0 0.0
  %3420 = vmatprep.subr.mxu0 0.0
  %3421 = vmatpush2.msra.mxu0 0.0
  %3422 = vmatprep.subr.mxu0 0.0
  %3423 = vmatpush2.msra.mxu0 0.0
  %3424 = vmatprep.subr.mxu0 0.0
  %3425 = vmatpush2.msra.mxu0 0.0
  %3426 = vmatprep.subr.mxu0 0.0
  %3427 = vmatpush2.msra.mxu0 0.0
  %3428 = vmatprep.subr.mxu0 0.0
  %3429 = vmatpush2.msra.mxu0 0.0
  %3430 = vmatprep.mubr.f32.mxu0 0.0
  %3431 = vmatmul.mubr.f32.gmra.mxu0 %v3230
  %v3432 = vpop.f32.mrf.mxu0
  %v3433 = vadd.f32 0.0, %v3432
  %v3434 = vpop.f32.mrf.mxu0
  %v3435 = vadd.f32 0.0, %v3434
  %3436 = vdwg.mxu0
  %v3441 = vcombine.low %v3362, %v3364
  %v3442 = vcombine.low %v3433, %v3435
  %v3444 = vunpack.c.l.s4 1983009808
  %v3445 = vunpack.c.0.s8 %v3444
  %v3446 = vlaneseq
  %v3447 = vshrl.u32 %v3446, 7
  %v3448 = vsub.s32 %v3445, %v3447
  %v3449 = vrot.slane %v3441, %v3448
  %v3451 = vunpack.c.l.s4 1983009808
  %v3452 = vunpack.c.0.s8 %v3451
  %v3453 = vlaneseq
  %v3454 = vshrl.u32 %v3453, 7
  %v3455 = vsub.s32 %v3452, %v3454
  %v3456 = vrot.slane %v3442, %v3455
  %v3457 = vcombine.low %v3449, %v3456
  %v3459 = vadd.f32 %v3229, %v3457
  %v3460 = vld [vmem:[#allocation3] sm:$0x3]
  %v3461 = vxor.u32 %v3459, 2147483648
  %v3462 = vmul.f32 %v3461, 1.442695
  %v3463 = vpow.pop %v3462
  %v3464 = vadd.f32 %v3463, 1.0
  %v3465 = vrcp.pop %v3464
  %v3466 = vmul.f32 1.0, %v3465
  %v3468 = vrot.slane %v3459, 2
  %v3470 = vxor.u32 %v3468, 2147483648
  %v3471 = vmul.f32 %v3470, 1.442695
  %v3472 = vpow.pop %v3471
  %v3473 = vadd.f32 %v3472, 1.0
  %v3474 = vrcp.pop %v3473
  %v3475 = vmul.f32 1.0, %v3474
  %v3476 = vrot.slane %v3459, 4
  %v3478 = vtanh.pop %v3476
  %v3479 = vrot.slane %v3459, 6
  %v3481 = vxor.u32 %v3479, 2147483648
  %v3482 = vmul.f32 %v3481, 1.442695
  %v3483 = vpow.pop %v3482
  %v3484 = vadd.f32 %v3483, 1.0
  %v3485 = vrcp.pop %v3484
  %v3486 = vmul.f32 1.0, %v3485
  %v3487 = vmul.f32 %v3475, %v3460
  %v3488 = vmul.f32 %v3466, %v3478
  %v3489 = vadd.f32 %v3487, %v3488
  %v3490 = vtanh.pop %v3489
  %v3491 = vmul.f32 %v3486, %v3490
  %3492 = vst [vmem:[#allocation2] sm:$0x3] %v3491
  %3493 = vst [vmem:[#allocation3] sm:$0x3] %v3489
  %s3494 = scalar_lea.vmem %s3, 12
  %3495 = vst [vmem:[%s3494] sm:$0x3] %v3491
  %v3496 = vld [vmem:[%s0 + $0x8] sm:$0xff]
  %v3497 = vld [vmem:[#allocation4] sm:$0x3]
  %v3498 = vld [vmem:[%s2] sm:$0xff]
  %v3499 = vld [vmem:[%s2 + $0x8] sm:$0xff]
  %v3500 = vld [vmem:[%s2 + $0x10] sm:$0xff]
  %v3501 = vld [vmem:[%s2 + $0x18] sm:$0xff]
  %v3502 = vld [vmem:[%s2 + $0x20] sm:$0xff]
  %v3503 = vld [vmem:[%s2 + $0x28] sm:$0xff]
  %v3504 = vld [vmem:[%s2 + $0x30] sm:$0xff]
  %v3505 = vld [vmem:[%s2 + $0x38] sm:$0xff]
  %v3506 = vld [vmem:[%s2 + $0x40] sm:$0xff]
  %v3507 = vld [vmem:[%s2 + $0x48] sm:$0xff]
  %v3508 = vld [vmem:[%s2 + $0x50] sm:$0xff]
  %v3509 = vld [vmem:[%s2 + $0x58] sm:$0xff]
  %v3510 = vld [vmem:[%s2 + $0x60] sm:$0xff]
  %v3511 = vld [vmem:[%s2 + $0x68] sm:$0xff]
  %v3512 = vld [vmem:[%s2 + $0x70] sm:$0xff]
  %v3513 = vld [vmem:[%s2 + $0x78] sm:$0xff]
  %v3514 = vld [vmem:[%s2 + $0x80] sm:$0xff]
  %v3515 = vld [vmem:[%s2 + $0x88] sm:$0xff]
  %v3516 = vld [vmem:[%s2 + $0x90] sm:$0xff]
  %v3517 = vld [vmem:[%s2 + $0x98] sm:$0xff]
  %v3518 = vld [vmem:[%s2 + $0xa0] sm:$0xff]
  %v3519 = vld [vmem:[%s2 + $0xa8] sm:$0xff]
  %v3520 = vld [vmem:[%s2 + $0xb0] sm:$0xff]
  %v3521 = vld [vmem:[%s2 + $0xb8] sm:$0xff]
  %v3522 = vld [vmem:[%s2 + $0xc0] sm:$0xff]
  %v3523 = vld [vmem:[%s2 + $0xc8] sm:$0xff]
  %v3524 = vld [vmem:[%s2 + $0xd0] sm:$0xff]
  %v3525 = vld [vmem:[%s2 + $0xd8] sm:$0xff]
  %v3526 = vld [vmem:[%s2 + $0xe0] sm:$0xff]
  %v3527 = vld [vmem:[%s2 + $0xe8] sm:$0xff]
  %v3528 = vld [vmem:[%s2 + $0xf0] sm:$0xff]
  %v3529 = vld [vmem:[%s2 + $0xf8] sm:$0xff]
  %v3530 = vld [vmem:[%s2 + $0x100] sm:$0xff]
  %v3531 = vld [vmem:[%s2 + $0x108] sm:$0xff]
  %v3532 = vld [vmem:[%s2 + $0x110] sm:$0xff]
  %v3533 = vld [vmem:[%s2 + $0x118] sm:$0xff]
  %v3534 = vld [vmem:[%s2 + $0x120] sm:$0xff]
  %v3535 = vld [vmem:[%s2 + $0x128] sm:$0xff]
  %v3536 = vld [vmem:[%s2 + $0x130] sm:$0xff]
  %v3537 = vld [vmem:[%s2 + $0x138] sm:$0xff]
  %v3538 = vld [vmem:[%s2 + $0x140] sm:$0xff]
  %v3539 = vld [vmem:[%s2 + $0x148] sm:$0xff]
  %v3540 = vld [vmem:[%s2 + $0x150] sm:$0xff]
  %v3541 = vld [vmem:[%s2 + $0x158] sm:$0xff]
  %v3542 = vld [vmem:[%s2 + $0x160] sm:$0xff]
  %v3543 = vld [vmem:[%s2 + $0x168] sm:$0xff]
  %v3544 = vld [vmem:[%s2 + $0x170] sm:$0xff]
  %v3545 = vld [vmem:[%s2 + $0x178] sm:$0xff]
  %v3546 = vld [vmem:[%s2 + $0x180] sm:$0xff]
  %v3547 = vld [vmem:[%s2 + $0x188] sm:$0xff]
  %v3548 = vld [vmem:[%s2 + $0x190] sm:$0xff]
  %v3549 = vld [vmem:[%s2 + $0x198] sm:$0xff]
  %v3550 = vld [vmem:[%s2 + $0x1a0] sm:$0xff]
  %v3551 = vld [vmem:[%s2 + $0x1a8] sm:$0xff]
  %v3552 = vld [vmem:[%s2 + $0x1b0] sm:$0xff]
  %v3553 = vld [vmem:[%s2 + $0x1b8] sm:$0xff]
  %v3554 = vld [vmem:[%s2 + $0x1c0] sm:$0xff]
  %v3555 = vld [vmem:[%s2 + $0x1c8] sm:$0xff]
  %v3556 = vld [vmem:[%s2 + $0x1d0] sm:$0xff]
  %v3557 = vld [vmem:[%s2 + $0x1d8] sm:$0xff]
  %v3558 = vld [vmem:[%s2 + $0x1e0] sm:$0xff]
  %v3559 = vld [vmem:[%s2 + $0x1e8] sm:$0xff]
  %v3560 = vld [vmem:[%s2 + $0x1f0] sm:$0xff]
  %v3561 = vld [vmem:[%s2 + $0x1f8] sm:$0xff]
  %3562 = vmatprep.subr.mxu0 %v3559
  %3563 = vmatpush1.msra.mxu0 %v3558
  %3564 = vmatprep.subr.mxu0 %v3555
  %3565 = vmatpush1.msra.mxu0 %v3554
  %3566 = vmatprep.subr.mxu0 %v3551
  %3567 = vmatpush1.msra.mxu0 %v3550
  %3568 = vmatprep.subr.mxu0 %v3547
  %3569 = vmatpush1.msra.mxu0 %v3546
  %3570 = vmatprep.subr.mxu0 %v3543
  %3571 = vmatpush1.msra.mxu0 %v3542
  %3572 = vmatprep.subr.mxu0 %v3539
  %3573 = vmatpush1.msra.mxu0 %v3538
  %3574 = vmatprep.subr.mxu0 %v3535
  %3575 = vmatpush1.msra.mxu0 %v3534
  %3576 = vmatprep.subr.mxu0 %v3531
  %3577 = vmatpush1.msra.mxu0 %v3530
  %3578 = vmatprep.subr.mxu0 %v3527
  %3579 = vmatpush1.msra.mxu0 %v3526
  %3580 = vmatprep.subr.mxu0 %v3523
  %3581 = vmatpush1.msra.mxu0 %v3522
  %3582 = vmatprep.subr.mxu0 %v3519
  %3583 = vmatpush1.msra.mxu0 %v3518
  %3584 = vmatprep.subr.mxu0 %v3515
  %3585 = vmatpush1.msra.mxu0 %v3514
  %3586 = vmatprep.subr.mxu0 %v3511
  %3587 = vmatpush1.msra.mxu0 %v3510
  %3588 = vmatprep.subr.mxu0 %v3507
  %3589 = vmatpush1.msra.mxu0 %v3506
  %3590 = vmatprep.subr.mxu0 %v3503
  %3591 = vmatpush1.msra.mxu0 %v3502
  %3592 = vmatprep.subr.mxu0 %v3499
  %3593 = vmatpush1.msra.mxu0 %v3498
  %3594 = vmatprep.subr.mxu0 0.0
  %3595 = vmatpush2.msra.mxu0 0.0
  %3596 = vmatprep.subr.mxu0 0.0
  %3597 = vmatpush2.msra.mxu0 0.0
  %3598 = vmatprep.subr.mxu0 0.0
  %3599 = vmatpush2.msra.mxu0 0.0
  %3600 = vmatprep.subr.mxu0 0.0
  %3601 = vmatpush2.msra.mxu0 0.0
  %3602 = vmatprep.subr.mxu0 0.0
  %3603 = vmatpush2.msra.mxu0 0.0
  %3604 = vmatprep.subr.mxu0 0.0
  %3605 = vmatpush2.msra.mxu0 0.0
  %3606 = vmatprep.subr.mxu0 0.0
  %3607 = vmatpush2.msra.mxu0 0.0
  %3608 = vmatprep.subr.mxu0 0.0
  %3609 = vmatpush2.msra.mxu0 0.0
  %3610 = vmatprep.subr.mxu0 0.0
  %3611 = vmatpush2.msra.mxu0 0.0
  %3612 = vmatprep.subr.mxu0 0.0
  %3613 = vmatpush2.msra.mxu0 0.0
  %3614 = vmatprep.subr.mxu0 0.0
  %3615 = vmatpush2.msra.mxu0 0.0
  %3616 = vmatprep.subr.mxu0 0.0
  %3617 = vmatpush2.msra.mxu0 0.0
  %3618 = vmatprep.subr.mxu0 0.0
  %3619 = vmatpush2.msra.mxu0 0.0
  %3620 = vmatprep.subr.mxu0 0.0
  %3621 = vmatpush2.msra.mxu0 0.0
  %3622 = vmatprep.subr.mxu0 0.0
  %3623 = vmatpush2.msra.mxu0 0.0
  %3624 = vmatprep.subr.mxu0 0.0
  %3625 = vmatpush2.msra.mxu0 0.0
  %3626 = vmatprep.mubr.f32.mxu0 0.0
  %3627 = vmatmul.mubr.f32.gmra.mxu0 %v3497
  %v3628 = vpop.f32.mrf.mxu0
  %v3629 = vadd.f32 0.0, %v3628
  %v3630 = vpop.f32.mrf.mxu0
  %v3631 = vadd.f32 0.0, %v3630
  %3632 = vdwg.mxu0
  %3633 = vmatprep.subr.mxu0 %v3561
  %3634 = vmatpush1.msra.mxu0 %v3560
  %3635 = vmatprep.subr.mxu0 %v3557
  %3636 = vmatpush1.msra.mxu0 %v3556
  %3637 = vmatprep.subr.mxu0 %v3553
  %3638 = vmatpush1.msra.mxu0 %v3552
  %3639 = vmatprep.subr.mxu0 %v3549
  %3640 = vmatpush1.msra.mxu0 %v3548
  %3641 = vmatprep.subr.mxu0 %v3545
  %3642 = vmatpush1.msra.mxu0 %v3544
  %3643 = vmatprep.subr.mxu0 %v3541
  %3644 = vmatpush1.msra.mxu0 %v3540
  %3645 = vmatprep.subr.mxu0 %v3537
  %3646 = vmatpush1.msra.mxu0 %v3536
  %3647 = vmatprep.subr.mxu0 %v3533
  %3648 = vmatpush1.msra.mxu0 %v3532
  %3649 = vmatprep.subr.mxu0 %v3529
  %3650 = vmatpush1.msra.mxu0 %v3528
  %3651 = vmatprep.subr.mxu0 %v3525
  %3652 = vmatpush1.msra.mxu0 %v3524
  %3653 = vmatprep.subr.mxu0 %v3521
  %3654 = vmatpush1.msra.mxu0 %v3520
  %3655 = vmatprep.subr.mxu0 %v3517
  %3656 = vmatpush1.msra.mxu0 %v3516
  %3657 = vmatprep.subr.mxu0 %v3513
  %3658 = vmatpush1.msra.mxu0 %v3512
  %3659 = vmatprep.subr.mxu0 %v3509
  %3660 = vmatpush1.msra.mxu0 %v3508
  %3661 = vmatprep.subr.mxu0 %v3505
  %3662 = vmatpush1.msra.mxu0 %v3504
  %3663 = vmatprep.subr.mxu0 %v3501
  %3664 = vmatpush1.msra.mxu0 %v3500
  %3665 = vmatprep.subr.mxu0 0.0
  %3666 = vmatpush2.msra.mxu0 0.0
  %3667 = vmatprep.subr.mxu0 0.0
  %3668 = vmatpush2.msra.mxu0 0.0
  %3669 = vmatprep.subr.mxu0 0.0
  %3670 = vmatpush2.msra.mxu0 0.0
  %3671 = vmatprep.subr.mxu0 0.0
  %3672 = vmatpush2.msra.mxu0 0.0
  %3673 = vmatprep.subr.mxu0 0.0
  %3674 = vmatpush2.msra.mxu0 0.0
  %3675 = vmatprep.subr.mxu0 0.0
  %3676 = vmatpush2.msra.mxu0 0.0
  %3677 = vmatprep.subr.mxu0 0.0
  %3678 = vmatpush2.msra.mxu0 0.0
  %3679 = vmatprep.subr.mxu0 0.0
  %3680 = vmatpush2.msra.mxu0 0.0
  %3681 = vmatprep.subr.mxu0 0.0
  %3682 = vmatpush2.msra.mxu0 0.0
  %3683 = vmatprep.subr.mxu0 0.0
  %3684 = vmatpush2.msra.mxu0 0.0
  %3685 = vmatprep.subr.mxu0 0.0
  %3686 = vmatpush2.msra.mxu0 0.0
  %3687 = vmatprep.subr.mxu0 0.0
  %3688 = vmatpush2.msra.mxu0 0.0
  %3689 = vmatprep.subr.mxu0 0.0
  %3690 = vmatpush2.msra.mxu0 0.0
  %3691 = vmatprep.subr.mxu0 0.0
  %3692 = vmatpush2.msra.mxu0 0.0
  %3693 = vmatprep.subr.mxu0 0.0
  %3694 = vmatpush2.msra.mxu0 0.0
  %3695 = vmatprep.subr.mxu0 0.0
  %3696 = vmatpush2.msra.mxu0 0.0
  %3697 = vmatprep.mubr.f32.mxu0 0.0
  %3698 = vmatmul.mubr.f32.gmra.mxu0 %v3497
  %v3699 = vpop.f32.mrf.mxu0
  %v3700 = vadd.f32 0.0, %v3699
  %v3701 = vpop.f32.mrf.mxu0
  %v3702 = vadd.f32 0.0, %v3701
  %3703 = vdwg.mxu0
  %v3708 = vcombine.low %v3629, %v3631
  %v3709 = vcombine.low %v3700, %v3702
  %v3711 = vunpack.c.l.s4 1983009808
  %v3712 = vunpack.c.0.s8 %v3711
  %v3713 = vlaneseq
  %v3714 = vshrl.u32 %v3713, 7
  %v3715 = vsub.s32 %v3712, %v3714
  %v3716 = vrot.slane %v3708, %v3715
  %v3718 = vunpack.c.l.s4 1983009808
  %v3719 = vunpack.c.0.s8 %v3718
  %v3720 = vlaneseq
  %v3721 = vshrl.u32 %v3720, 7
  %v3722 = vsub.s32 %v3719, %v3721
  %v3723 = vrot.slane %v3709, %v3722
  %v3724 = vcombine.low %v3716, %v3723
  %v3726 = vadd.f32 %v3496, %v3724
  %v3727 = vld [vmem:[#allocation5] sm:$0x3]
  %v3728 = vxor.u32 %v3726, 2147483648
  %v3729 = vmul.f32 %v3728, 1.442695
  %v3730 = vpow.pop %v3729
  %v3731 = vadd.f32 %v3730, 1.0
  %v3732 = vrcp.pop %v3731
  %v3733 = vmul.f32 1.0, %v3732
  %v3735 = vrot.slane %v3726, 2
  %v3737 = vxor.u32 %v3735, 2147483648
  %v3738 = vmul.f32 %v3737, 1.442695
  %v3739 = vpow.pop %v3738
  %v3740 = vadd.f32 %v3739, 1.0
  %v3741 = vrcp.pop %v3740
  %v3742 = vmul.f32 1.0, %v3741
  %v3743 = vrot.slane %v3726, 4
  %v3745 = vtanh.pop %v3743
  %v3746 = vrot.slane %v3726, 6
  %v3748 = vxor.u32 %v3746, 2147483648
  %v3749 = vmul.f32 %v3748, 1.442695
  %v3750 = vpow.pop %v3749
  %v3751 = vadd.f32 %v3750, 1.0
  %v3752 = vrcp.pop %v3751
  %v3753 = vmul.f32 1.0, %v3752
  %v3754 = vmul.f32 %v3742, %v3727
  %v3755 = vmul.f32 %v3733, %v3745
  %v3756 = vadd.f32 %v3754, %v3755
  %v3757 = vtanh.pop %v3756
  %v3758 = vmul.f32 %v3753, %v3757
  %3759 = vst [vmem:[#allocation4] sm:$0x3] %v3758
  %3760 = vst [vmem:[#allocation5] sm:$0x3] %v3756
  %3761 = vst [vmem:[%s4] sm:$0x3] %v3758
  // Predicated region
  $region14: #{_lambda_.22} parent=0 // pred_check
    _
  $region15: #{_lambda_.22} parent=0 // pred_check_branch
    %3763 = sbr.rel (0) target = $region17
  $region16: #{_lambda_.22} parent=0 // pred_region
    _
  $region17: #{_lambda_.22} parent=0 // pred_fallthru
    _
  // Predicated region
  $region18: #{_lambda_.22} parent=0 // pred_check
    _
  $region19: #{_lambda_.22} parent=0 // pred_check_branch
    %3765 = sbr.rel (0) target = $region21
  $region20: #{_lambda_.22} parent=0 // pred_region
    _
  $region21: #{_lambda_.22} parent=0 // pred_fallthru
    _
  // Predicated region
  $region22: #{_lambda_.22} parent=0 // pred_check
    _
  $region23: #{_lambda_.22} parent=0 // pred_check_branch
    %3767 = sbr.rel (0) target = $region25
  $region24: #{_lambda_.22} parent=0 // pred_region
    _
  $region25: #{_lambda_.22} parent=0 // pred_fallthru
    _
  // Predicated region
  $region26: #{_lambda_.22} parent=0 // pred_check
    _
  $region27: #{_lambda_.22} parent=0 // pred_check_branch
    %3769 = sbr.rel (0) target = $region29
  $region28: #{_lambda_.22} parent=0 // pred_region
    _
  $region29: #{_lambda_.22} parent=0 // pred_fallthru
    _

</llo_original>
